<compile_context>
chip_gen: v6e
topology: v6e:2x2x1
jax: 0.10.0
libtpu: 0.0.40
codegen_flags: <defaults>
</compile_context>

<pallas_src>
import functools

import numpy as np
import jax
import jax.numpy as jnp
from jax import lax
from jax.experimental import pallas as pl
from jax.experimental.pallas import tpu as pltpu


LN_EPS = 1e-5
ROW_TILE = 256          # rows per grid step for token-parallel kernels
HIDDEN_CHUNK = 2048     # max MLP hidden columns handled per grid step
ATTN_VMEM_BUDGET = 16 * 1024 * 1024


def _default_vmem_limit():
    try:
        cap = int(pltpu.get_tpu_info().vmem_capacity_bytes)
    except Exception:  # pragma: no cover - conservative fallback
        cap = 128 * 1024 * 1024
    # leave headroom below physical VMEM (v7x: 64 MiB, v5e/v6e: 128 MiB)
    return int(min(max(cap - (16 << 20), 32 << 20), 64 << 20))


_VMEM_LIMIT = _default_vmem_limit()


def _cparams(semantics):
    return pltpu.CompilerParams(dimension_semantics=tuple(semantics),
                                vmem_limit_bytes=_VMEM_LIMIT)


def _round_up(x, m):
    return ((x + m - 1) // m) * m


def _gelu(y):
    # exact (erf) GELU, matching torch.nn.GELU default; keep in f32
    return 0.5 * y * (1.0 + lax.erf(y * (1.0 / np.sqrt(2.0))))


def _row_tiling(M, target=ROW_TILE):
    if M <= target:
        return M, M
    tm = _round_up(target, 8)
    return tm, _round_up(M, tm)


def _pad_rows(x2d, Mp):
    M = x2d.shape[0]
    if Mp == M:
        return x2d
    return jnp.pad(x2d, ((0, Mp - M), (0, 0)))


def _hidden_chunk(Hd, cap=HIDDEN_CHUNK):
    if Hd <= cap:
        return Hd
    for c in range(cap, 0, -128):
        if Hd % c == 0:
            return c
    return Hd


def _choose_w_tile(B_, nW, N, Dh):
    """Largest window tile that divides B_, is mask-compatible and fits VMEM."""
    per_win = (3 * N * Dh * 2 * 2      # qkv block, bf16, double buffered
               + N * Dh * 2 * 2        # output block
               + 2 * N * N * 4         # scores + probs (f32)
               + N * N * 4)            # mask block (f32)
    cap = max(1, min(256, ATTN_VMEM_BUDGET // per_win))
    best = 1
    for t in range(1, min(B_, cap) + 1):
        if B_ % t == 0 and (t % nW == 0 or nW % t == 0):
            best = t
    return best


# ----------------------------------------------------------------------------
# Pallas kernels
# ----------------------------------------------------------------------------

def _ln_linear_kernel(x_ref, g_ref, b_ref, w_ref, bias_ref, o_ref):
    x = x_ref[...].astype(jnp.float32)
    mu = jnp.mean(x, axis=-1, keepdims=True)
    var = jnp.mean((x - mu) ** 2, axis=-1, keepdims=True)
    xn = (x - mu) * lax.rsqrt(var + LN_EPS)
    xn = (xn * g_ref[...] + b_ref[...]).astype(jnp.bfloat16)
    y = jnp.dot(xn, w_ref[...], preferred_element_type=jnp.float32) + bias_ref[...]
    o_ref[...] = y.astype(o_ref.dtype)


def _linear_ln_kernel(x_ref, w_ref, bias_ref, g_ref, b_ref, o_ref):
    # linear followed by layernorm (patch embedding)
    x = x_ref[...].astype(jnp.bfloat16)
    y = jnp.dot(x, w_ref[...], preferred_element_type=jnp.float32) + bias_ref[...]
    mu = jnp.mean(y, axis=-1, keepdims=True)
    var = jnp.mean((y - mu) ** 2, axis=-1, keepdims=True)
    yn = (y - mu) * lax.rsqrt(var + LN_EPS)
    o_ref[...] = (yn * g_ref[...] + b_ref[...]).astype(o_ref.dtype)


def _linear_residual_kernel(x_ref, sc_ref, w_ref, bias_ref, o_ref):
    y = jnp.dot(x_ref[...].astype(jnp.bfloat16), w_ref[...],
                preferred_element_type=jnp.float32) + bias_ref[...]
    o_ref[...] = (sc_ref[...].astype(jnp.float32) + y).astype(o_ref.dtype)


def _ln_mlp_residual_kernel(x_ref, g_ref, b_ref, w1_ref, b1_ref, w2_ref, b2_ref,
                            o_ref, acc_ref):
    k = pl.program_id(1)
    x = x_ref[...].astype(jnp.float32)
    mu = jnp.mean(x, axis=-1, keepdims=True)
    var = jnp.mean((x - mu) ** 2, axis=-1, keepdims=True)
    xn = (x - mu) * lax.rsqrt(var + LN_EPS)
    xn = (xn * g_ref[...] + b_ref[...]).astype(jnp.bfloat16)
    h = jnp.dot(xn, w1_ref[...], preferred_element_type=jnp.float32) + b1_ref[...]
    h = _gelu(h).astype(jnp.bfloat16)
    y = jnp.dot(h, w2_ref[...], preferred_element_type=jnp.float32)

    @pl.when(k == 0)
    def _():
        acc_ref[...] = x + b2_ref[...]          # residual + fc2 bias (added once)

    acc_ref[...] += y

    @pl.when(k == pl.num_programs(1) - 1)
    def _():
        o_ref[...] = acc_ref[...].astype(o_ref.dtype)


def _attn_kernel(qkv_ref, bias_ref, *rest, scale):
    # qkv_ref:  (3, 1, Wt, N, Dh)   one head, Wt windows per grid step
    # bias_ref: (1, N, N)           this head's relative-position bias
    # mask_ref: (Wt, N, N)          shift mask (absent for W-MSA blocks)
    # o_ref:    (1, Wt, N, Dh)
    if len(rest) == 2:
        mask_ref, o_ref = rest
    else:
        (o_ref,) = rest
        mask_ref = None
    q = qkv_ref[0, 0]
    k = qkv_ref[1, 0]
    v = qkv_ref[2, 0]
    s = jnp.einsum("wqd,wkd->wqk", q, k, preferred_element_type=jnp.float32)
    s = s * scale + bias_ref[0].astype(jnp.float32)[None, :, :]
    if mask_ref is not None:
        s = s + mask_ref[...].astype(jnp.float32)
    s = s - jnp.max(s, axis=-1, keepdims=True)
    p = jnp.exp(s)
    p = p * pl.reciprocal(jnp.sum(p, axis=-1, keepdims=True), approx=True)
    o = jnp.einsum("wqk,wkd->wqd", p.astype(v.dtype), v,
                   preferred_element_type=jnp.float32)
    o_ref[0] = o.astype(o_ref.dtype)


def _norm_pool_head_kernel(x_ref, g_ref, b_ref, w_ref, hb_ref, o_ref):
    x = x_ref[...].astype(jnp.float32)                          # (bt, L, C)
    mu = jnp.mean(x, axis=-1, keepdims=True)
    var = jnp.mean((x - mu) ** 2, axis=-1, keepdims=True)
    xn = (x - mu) * lax.rsqrt(var + LN_EPS)
    xn = xn * g_ref[...] + b_ref[...]
    pooled = jnp.mean(xn, axis=1)                               # (bt, C)
    y = jnp.dot(pooled.astype(jnp.bfloat16), w_ref[...],
                preferred_element_type=jnp.float32) + hb_ref[...]
    o_ref[...] = y.astype(o_ref.dtype)


# ----------------------------------------------------------------------------
# Kernel wrappers (row-tiled, weights VMEM-resident, 'parallel' grid axes)
# ----------------------------------------------------------------------------

def ln_linear(x2d, g, b, w, bias, out_dtype=None):
    M, K = x2d.shape
    N = w.shape[1]
    out_dtype = out_dtype if out_dtype is not None else x2d.dtype
    tm, Mp = _row_tiling(M)
    xp = _pad_rows(x2d, Mp)
    out = pl.pallas_call(
        _ln_linear_kernel,
        out_shape=jax.ShapeDtypeStruct((Mp, N), out_dtype),
        grid=(Mp // tm,),
        in_specs=[pl.BlockSpec((tm, K), lambda i: (i, 0)),
                  pl.BlockSpec((1, K), lambda i: (0, 0)),
                  pl.BlockSpec((1, K), lambda i: (0, 0)),
                  pl.BlockSpec((K, N), lambda i: (0, 0)),
                  pl.BlockSpec((1, N), lambda i: (0, 0))],
        out_specs=pl.BlockSpec((tm, N), lambda i: (i, 0)),
        compiler_params=_cparams(("parallel",)),
    )(xp, g.reshape(1, -1), b.reshape(1, -1), w, bias.reshape(1, -1))
    return out[:M] if Mp != M else out


def linear_ln(x2d, w, bias, g, b):
    M, K = x2d.shape
    N = w.shape[1]
    tm, Mp = _row_tiling(M)
    xp = _pad_rows(x2d, Mp)
    out = pl.pallas_call(
        _linear_ln_kernel,
        out_shape=jax.ShapeDtypeStruct((Mp, N), jnp.float32),
        grid=(Mp // tm,),
        in_specs=[pl.BlockSpec((tm, K), lambda i: (i, 0)),
                  pl.BlockSpec((K, N), lambda i: (0, 0)),
                  pl.BlockSpec((1, N), lambda i: (0, 0)),
                  pl.BlockSpec((1, N), lambda i: (0, 0)),
                  pl.BlockSpec((1, N), lambda i: (0, 0))],
        out_specs=pl.BlockSpec((tm, N), lambda i: (i, 0)),
        compiler_params=_cparams(("parallel",)),
    )(xp, w, bias.reshape(1, -1), g.reshape(1, -1), b.reshape(1, -1))
    return out[:M] if Mp != M else out


def linear_residual(x2d, shortcut2d, w, bias):
    M, K = x2d.shape
    N = w.shape[1]
    tm, Mp = _row_tiling(M)
    xp = _pad_rows(x2d, Mp)
    sp = _pad_rows(shortcut2d, Mp)
    out = pl.pallas_call(
        _linear_residual_kernel,
        out_shape=jax.ShapeDtypeStruct((Mp, N), jnp.float32),
        grid=(Mp // tm,),
        in_specs=[pl.BlockSpec((tm, K), lambda i: (i, 0)),
                  pl.BlockSpec((tm, N), lambda i: (i, 0)),
                  pl.BlockSpec((K, N), lambda i: (0, 0)),
                  pl.BlockSpec((1, N), lambda i: (0, 0))],
        out_specs=pl.BlockSpec((tm, N), lambda i: (i, 0)),
        compiler_params=_cparams(("parallel",)),
    )(xp, sp, w, bias.reshape(1, -1))
    return out[:M] if Mp != M else out


def ln_mlp_residual(x2d, g, b, w1, b1, w2, b2):
    M, C = x2d.shape
    Hd = w1.shape[1]
    tm, Mp = _row_tiling(M)
    hc = _hidden_chunk(Hd)
    n_hc = Hd // hc
    xp = _pad_rows(x2d, Mp)
    out = pl.pallas_call(
        _ln_mlp_residual_kernel,
        out_shape=jax.ShapeDtypeStruct((Mp, C), jnp.float32),
        grid=(Mp // tm, n_hc),
        in_specs=[pl.BlockSpec((tm, C), lambda i, k: (i, 0)),
                  pl.BlockSpec((1, C), lambda i, k: (0, 0)),
                  pl.BlockSpec((1, C), lambda i, k: (0, 0)),
                  pl.BlockSpec((C, hc), lambda i, k: (0, k)),
                  pl.BlockSpec((1, hc), lambda i, k: (0, k)),
                  pl.BlockSpec((hc, C), lambda i, k: (k, 0)),
                  pl.BlockSpec((1, C), lambda i, k: (0, 0))],
        out_specs=pl.BlockSpec((tm, C), lambda i, k: (i, 0)),
        scratch_shapes=[pltpu.VMEM((tm, C), jnp.float32)],
        compiler_params=_cparams(("parallel", "arbitrary")),
    )(xp, g.reshape(1, -1), b.reshape(1, -1),
      w1, b1.reshape(1, -1), w2, b2.reshape(1, -1))
    return out[:M] if Mp != M else out


def attn_core(qkv5, rel_bias, mask, *, scale):
    # qkv5: (3, nH, B_, N, Dh) bf16; rel_bias: (nH, N, N) f32
    # mask: None (W-MSA) or (nW, N, N) f32 (SW-MSA)
    _, nH, B_, N, Dh = qkv5.shape
    nW = 1 if mask is None else mask.shape[0]
    w_tile = _choose_w_tile(B_, nW, N, Dh)

    in_specs = [pl.BlockSpec((3, 1, w_tile, N, Dh), lambda i, h: (0, h, i, 0, 0)),
                pl.BlockSpec((1, N, N), lambda i, h: (h, 0, 0))]
    args = [qkv5, rel_bias]
    if mask is not None:
        if w_tile % nW == 0:
            mask_t = jnp.tile(mask, (w_tile // nW, 1, 1))
            in_specs.append(pl.BlockSpec((w_tile, N, N), lambda i, h: (0, 0, 0)))
            args.append(mask_t)
        else:
            n_mt = nW // w_tile
            in_specs.append(
                pl.BlockSpec((w_tile, N, N), lambda i, h: (i % n_mt, 0, 0)))
            args.append(mask)

    return pl.pallas_call(
        functools.partial(_attn_kernel, scale=scale),
        out_shape=jax.ShapeDtypeStruct((nH, B_, N, Dh), qkv5.dtype),
        grid=(B_ // w_tile, nH),
        in_specs=in_specs,
        out_specs=pl.BlockSpec((1, w_tile, N, Dh), lambda i, h: (h, i, 0, 0)),
        compiler_params=_cparams(("parallel", "parallel")),
    )(*args)


def norm_pool_head(x, g, b, head_w, head_b):
    B, L, C = x.shape
    n_cls = head_w.shape[1]
    n_pad = max(_round_up(n_cls, 128), 128)      # lane-dense output, slice after
    w_p = jnp.pad(head_w, ((0, 0), (0, n_pad - n_cls)))
    b_p = jnp.pad(head_b, (0, n_pad - n_cls))
    bt = B if B <= 8 else 8
    Bp = _round_up(B, bt)
    xp = x if Bp == B else jnp.pad(x, ((0, Bp - B), (0, 0), (0, 0)))
    out = pl.pallas_call(
        _norm_pool_head_kernel,
        out_shape=jax.ShapeDtypeStruct((Bp, n_pad), jnp.float32),
        grid=(Bp // bt,),
        in_specs=[pl.BlockSpec((bt, L, C), lambda i: (i, 0, 0)),
                  pl.BlockSpec((1, C), lambda i: (0, 0)),
                  pl.BlockSpec((1, C), lambda i: (0, 0)),
                  pl.BlockSpec((C, n_pad), lambda i: (0, 0)),
                  pl.BlockSpec((1, n_pad), lambda i: (0, 0))],
        out_specs=pl.BlockSpec((bt, n_pad), lambda i: (i, 0)),
        compiler_params=_cparams(("parallel",)),
    )(xp, g.reshape(1, -1), b.reshape(1, -1), w_p, b_p.reshape(1, -1))
    return out[:B, :n_cls]


# ----------------------------------------------------------------------------
# Glue: window helpers, masks, relative position bias (host / XLA data movement)
# ----------------------------------------------------------------------------

def window_partition(x, ws):
    B, H, W, C = x.shape
    x = x.reshape(B, H // ws, ws, W // ws, ws, C)
    x = jnp.transpose(x, (0, 1, 3, 2, 4, 5))
    return x.reshape(-1, ws, ws, C)


def window_reverse(windows, ws, H, W):
    B = windows.shape[0] // ((H // ws) * (W // ws))
    x = windows.reshape(B, H // ws, W // ws, ws, ws, -1)
    x = jnp.transpose(x, (0, 1, 3, 2, 4, 5))
    return x.reshape(B, H, W, -1)


def relative_position_index(ws):
    coords = np.stack(np.meshgrid(np.arange(ws), np.arange(ws), indexing="ij"))
    coords_flatten = coords.reshape(2, -1)
    rel = coords_flatten[:, :, None] - coords_flatten[:, None, :]
    rel = rel.transpose(1, 2, 0).astype(np.int64)
    rel[:, :, 0] += ws - 1
    rel[:, :, 1] += ws - 1
    rel[:, :, 0] *= 2 * ws - 1
    return rel.sum(-1)                                    # numpy (N, N)


def create_mask(H, W, window_size, shift_size):
    Hp = int(np.ceil(H / window_size)) * window_size
    Wp = int(np.ceil(W / window_size)) * window_size
    img_mask = np.zeros((1, Hp, Wp, 1), np.float32)
    slices = (slice(0, -window_size),
              slice(-window_size, -shift_size),
              slice(-shift_size, None))
    cnt = 0
    for h in slices:
        for w in slices:
            img_mask[:, h, w, :] = cnt
            cnt += 1
    mw = img_mask.reshape(1, Hp // window_size, window_size,
                          Wp // window_size, window_size, 1)
    mw = mw.transpose(0, 1, 3, 2, 4, 5).reshape(-1, window_size * window_size)
    attn_mask = mw[:, None, :] - mw[:, :, None]
    attn_mask = np.where(attn_mask != 0, -100.0, 0.0).astype(np.float32)
    return jnp.asarray(attn_mask)                         # (nW, N, N)


# ----------------------------------------------------------------------------
# Model pieces
# ----------------------------------------------------------------------------

def swin_block(x, H, W, p, num_heads, window_size, shift_size, attn_mask):
    B, L, C = x.shape
    ws = window_size
    N = ws * ws
    head_dim = C // num_heads
    scale = head_dim ** (-0.5)
    shortcut2d = x.reshape(B * L, C)                       # f32 residual path

    # fused LayerNorm1 + QKV projection (per-token op: commutes with the
    # pad / roll / window-partition permutations applied below); bf16 output
    qkv = ln_linear(shortcut2d, p["norm1_g"], p["norm1_b"],
                    p["qkv_w"], p["qkv_b"], out_dtype=jnp.bfloat16)
    qkv = qkv.reshape(B, H, W, 3 * C)

    pad_r = (ws - W % ws) % ws
    pad_b = (ws - H % ws) % ws
    Hp, Wp = H + pad_b, W + pad_r
    if pad_r > 0 or pad_b > 0:
        # TODO(synk): fold this border fixup into the QKV kernel (iota predicate)
        qkv = jnp.pad(qkv, ((0, 0), (0, pad_b), (0, pad_r), (0, 0)))
        valid = (jnp.arange(Hp) < H)[:, None] & (jnp.arange(Wp) < W)[None, :]
        qkv = jnp.where(valid[None, :, :, None], qkv,
                        p["qkv_b"].astype(qkv.dtype)[None, None, None, :])

    if shift_size > 0:
        qkv = jnp.roll(qkv, (-shift_size, -shift_size), axis=(1, 2))
        mask = attn_mask
    else:
        mask = None                                        # W-MSA: no mask stream

    qkv_win = window_partition(qkv, ws)                    # (B_, ws, ws, 3C)
    B_ = qkv_win.shape[0]
    qkv5 = qkv_win.reshape(B_, N, 3, num_heads, head_dim)
    qkv5 = jnp.transpose(qkv5, (2, 3, 0, 1, 4))            # (3, nH, B_, N, Dh)

    attn = attn_core(qkv5, p["rel_bias"], mask, scale=scale)   # (nH, B_, N, Dh)
    attn = jnp.transpose(attn, (1, 2, 0, 3)).reshape(B_, ws, ws, C)
    xsp = window_reverse(attn, ws, Hp, Wp)
    if shift_size > 0:
        xsp = jnp.roll(xsp, (shift_size, shift_size), axis=(1, 2))
    if pad_r > 0 or pad_b > 0:
        xsp = xsp[:, :H, :W, :]

    # fused attention output projection + residual add (bf16 matmul, f32 out)
    x2d = linear_residual(xsp.reshape(B * L, C), shortcut2d,
                          p["proj_w"], p["proj_b"])

    # fused LayerNorm2 + MLP(GELU) + residual add, hidden-chunked
    x2d = ln_mlp_residual(x2d, p["norm2_g"], p["norm2_b"],
                          p["fc1_w"], p["fc1_b"], p["fc2_w"], p["fc2_b"])
    return x2d.reshape(B, L, C)


def patch_merging(x, H, W, p):
    B, L, C = x.shape
    x = x.reshape(B, H, W, C)
    if H % 2 == 1 or W % 2 == 1:
        x = jnp.pad(x, ((0, 0), (0, H % 2), (0, W % 2), (0, 0)))
    x0 = x[:, 0::2, 0::2, :]
    x1 = x[:, 1::2, 0::2, :]
    x2 = x[:, 0::2, 1::2, :]
    x3 = x[:, 1::2, 1::2, :]
    x = jnp.concatenate([x0, x1, x2, x3], axis=-1)
    Hh, Wh = x.shape[1], x.shape[2]
    x = x.reshape(B * Hh * Wh, 4 * C)
    # fused LayerNorm(4C) + bias-free reduction
    x = ln_linear(x, p["norm_g"], p["norm_b"], p["red_w"],
                  jnp.zeros((2 * C,), jnp.float32), out_dtype=jnp.float32)
    return x.reshape(B, Hh * Wh, 2 * C)


def swin_forward(x_nchw, params, cfg):
    patch = cfg["patch_size"]
    window_size = cfg["window_size"]
    embed_dim = cfg["embed_dim"]
    depths = cfg["depths"]
    num_heads = cfg["num_heads"]
    num_layers = len(depths)

    # ---- patch embedding (conv k=s=patch == patches @ W), fused with LN ----
    B, Cin, H, W = x_nchw.shape
    pad_h = (patch - H % patch) % patch
    pad_w = (patch - W % patch) % patch
    x = x_nchw
    if pad_h or pad_w:
        x = jnp.pad(x, ((0, 0), (0, 0), (0, pad_h), (0, pad_w)))
    Hp, Wp = H + pad_h, W + pad_w
    nh, nw = Hp // patch, Wp // patch
    patches = x.reshape(B, Cin, nh, patch, nw, patch)
    patches = patches.transpose(0, 2, 4, 1, 3, 5).reshape(
        B * nh * nw, Cin * patch * patch)
    tok = linear_ln(patches, params["patch_w"], params["patch_b"],
                    params["patch_norm_g"], params["patch_norm_b"])
    x = tok.reshape(B, nh * nw, embed_dim)
    H, W = nh, nw

    # ---- stages ----
    for i_layer in range(num_layers):
        layer = params["layers"][i_layer]
        shift = window_size // 2
        attn_mask = create_mask(H, W, window_size, shift)
        for i_blk, bp in enumerate(layer["blocks"]):
            shift_size = 0 if i_blk % 2 == 0 else shift
            x = swin_block(x, H, W, bp, num_heads[i_layer],
                           window_size, shift_size, attn_mask)
        if layer["downsample"] is not None:
            x = patch_merging(x, H, W, layer["downsample"])
            H, W = (H + 1) // 2, (W + 1) // 2

    # ---- fused final norm + avg-pool + classification head ----
    return norm_pool_head(x, params["norm_g"], params["norm_b"],
                          params["head_w"], params["head_b"])


# ----------------------------------------------------------------------------
# Deterministic parameter init (synthetic; matches shapes of the PyTorch module)
# ----------------------------------------------------------------------------

def init_params(key, cfg):
    patch = cfg["patch_size"]
    in_chans = cfg["in_chans"]
    embed_dim = cfg["embed_dim"]
    depths = cfg["depths"]
    num_heads = cfg["num_heads"]
    window_size = cfg["window_size"]
    mlp_ratio = cfg["mlp_ratio"]
    num_classes = cfg["num_classes"]
    num_layers = len(depths)

    keys = iter(jax.random.split(key, 256))

    def tn(shape, std=0.02):
        return std * jax.random.truncated_normal(next(keys), -2.0, 2.0,
                                                 shape, jnp.float32)

    def tn16(shape, std=0.02):
        return tn(shape, std).astype(jnp.bfloat16)        # bf16 MXU weights

    rel_idx = relative_position_index(window_size)        # numpy (N, N)
    N_tok = window_size * window_size
    N_rel = (2 * window_size - 1) * (2 * window_size - 1)

    params = {
        # TODO(synk): PyTorch Conv2d default (kaiming-uniform) init not reproduced; synthetic trunc-normal used.
        "patch_w": tn16((in_chans * patch * patch, embed_dim)),
        "patch_b": jnp.zeros((embed_dim,), jnp.float32),
        "patch_norm_g": jnp.ones((embed_dim,), jnp.float32),
        "patch_norm_b": jnp.zeros((embed_dim,), jnp.float32),
        "layers": [],
    }

    for i_layer in range(num_layers):
        dim = int(embed_dim * 2 ** i_layer)
        hidden = int(dim * mlp_ratio)
        nH = num_heads[i_layer]
        blocks = []
        for _ in range(depths[i_layer]):
            table = tn((N_rel, nH))
            # precompute the gathered (nH, N, N) bias once at init (hoisted)
            rel_bias = jnp.transpose(
                table[rel_idx.reshape(-1)].reshape(N_tok, N_tok, nH), (2, 0, 1))
            blocks.append({
                "norm1_g": jnp.ones((dim,), jnp.float32),
                "norm1_b": jnp.zeros((dim,), jnp.float32),
                "qkv_w": tn16((dim, 3 * dim)),
                "qkv_b": jnp.zeros((3 * dim,), jnp.float32),
                "rel_bias": rel_bias,
                "proj_w": tn16((dim, dim)),
                "proj_b": jnp.zeros((dim,), jnp.float32),
                "norm2_g": jnp.ones((dim,), jnp.float32),
                "norm2_b": jnp.zeros((dim,), jnp.float32),
                "fc1_w": tn16((dim, hidden)),
                "fc1_b": jnp.zeros((hidden,), jnp.float32),
                "fc2_w": tn16((hidden, dim)),
                "fc2_b": jnp.zeros((dim,), jnp.float32),
            })
        downsample = None
        if i_layer < num_layers - 1:
            downsample = {
                "norm_g": jnp.ones((4 * dim,), jnp.float32),
                "norm_b": jnp.zeros((4 * dim,), jnp.float32),
                "red_w": tn16((4 * dim, 2 * dim)),
            }
        params["layers"].append({"blocks": blocks, "downsample": downsample})

    c_last = int(embed_dim * 2 ** (num_layers - 1))
    params["norm_g"] = jnp.ones((c_last,), jnp.float32)
    params["norm_b"] = jnp.zeros((c_last,), jnp.float32)
    params["head_w"] = tn16((c_last, num_classes))
    params["head_b"] = jnp.zeros((num_classes,), jnp.float32)
    return params


# ----------------------------------------------------------------------------
# Main
# ----------------------------------------------------------------------------

if __name__ == "__main__":
    cfg = dict(
        patch_size=4,
        in_chans=3,
        num_classes=10,
        embed_dim=32,
        depths=(2, 2),
        num_heads=(2, 4),
        window_size=4,
        mlp_ratio=4.0,
    )

    key = jax.random.PRNGKey(0)
    k_x, k_p = jax.random.split(key)
    x = jax.random.normal(k_x, (2, 3, 32, 32), jnp.float32)   # NCHW, like PyTorch

    params = init_params(k_p, cfg)

    fwd = jax.jit(functools.partial(swin_forward, cfg=cfg))
    logits = fwd(x, params)
    jax.block_until_ready(logits)

    assert logits.shape == (2, cfg["num_classes"])
    assert bool(jnp.all(jnp.isfinite(logits)))
    print("KERNEL_OK")
</pallas_src>

<mosaic_0001>
module attributes {stable_mosaic.version = 11 : i64} {
  func.func @_ln_linear_kernel(%arg0: i32, %arg1: memref<128x32xf32, #tpu.memory_space<vmem>>, %arg2: memref<1x32xf32, #tpu.memory_space<vmem>>, %arg3: memref<1x32xf32, #tpu.memory_space<vmem>>, %arg4: memref<32x96xbf16, #tpu.memory_space<vmem>>, %arg5: memref<1x96xf32, #tpu.memory_space<vmem>>, %arg6: memref<128x96xbf16, #tpu.memory_space<vmem>>) attributes {dimension_semantics = [#tpu.dimension_semantics<parallel>], iteration_bounds = array<i64: 1>, scalar_prefetch = 0 : i64, scratch_operands = 0 : i64, tpu.core_type = #tpu.core_type<tc>, window_params = [{transform_indices = @transform_0, window_bounds = array<i64: 128, 32>}, {pipeline_mode = #tpu.pipeline_mode<synchronous>, transform_indices = @transform_1, window_bounds = array<i64: 1, 32>}, {pipeline_mode = #tpu.pipeline_mode<synchronous>, transform_indices = @transform_2, window_bounds = array<i64: 1, 32>}, {pipeline_mode = #tpu.pipeline_mode<synchronous>, transform_indices = @transform_3, window_bounds = array<i64: 32, 96>}, {pipeline_mode = #tpu.pipeline_mode<synchronous>, transform_indices = @transform_4, window_bounds = array<i64: 1, 96>}, {transform_indices = @transform_5, window_bounds = array<i64: 128, 96>}]} {
    %c0 = arith.constant 0 : index
    %c0_0 = arith.constant 0 : index
    %0 = vector.load %arg1[%c0, %c0_0] : memref<128x32xf32, #tpu.memory_space<vmem>>, vector<128x32xf32>
    %cst = arith.constant dense<0.000000e+00> : vector<128xf32>
    %1 = vector.multi_reduction <add>, %0, %cst [1] : vector<128x32xf32> to vector<128xf32>
    %2 = vector.shape_cast %1 : vector<128xf32> to vector<128x1xf32>
    %cst_1 = arith.constant 3.200000e+01 : f32
    %3 = vector.broadcast %cst_1 : f32 to vector<128x1xf32>
    %4 = arith.divf %2, %3 : vector<128x1xf32>
    %5 = vector.broadcast %4 : vector<128x1xf32> to vector<128x32xf32>
    %6 = arith.subf %0, %5 : vector<128x32xf32>
    %7 = arith.mulf %6, %6 : vector<128x32xf32>
    %cst_2 = arith.constant dense<0.000000e+00> : vector<128xf32>
    %8 = vector.multi_reduction <add>, %7, %cst_2 [1] : vector<128x32xf32> to vector<128xf32>
    %9 = vector.shape_cast %8 : vector<128xf32> to vector<128x1xf32>
    %cst_3 = arith.constant 3.200000e+01 : f32
    %10 = vector.broadcast %cst_3 : f32 to vector<128x1xf32>
    %11 = arith.divf %9, %10 : vector<128x1xf32>
    %12 = vector.broadcast %4 : vector<128x1xf32> to vector<128x32xf32>
    %13 = arith.subf %0, %12 : vector<128x32xf32>
    %cst_4 = arith.constant 9.99999974E-6 : f32
    %14 = vector.broadcast %cst_4 : f32 to vector<128x1xf32>
    %15 = arith.addf %11, %14 : vector<128x1xf32>
    %16 = math.rsqrt %15 : vector<128x1xf32>
    %17 = vector.broadcast %16 : vector<128x1xf32> to vector<128x32xf32>
    %18 = arith.mulf %13, %17 : vector<128x32xf32>
    %c0_5 = arith.constant 0 : index
    %c0_6 = arith.constant 0 : index
    %19 = vector.load %arg2[%c0_5, %c0_6] : memref<1x32xf32, #tpu.memory_space<vmem>>, vector<1x32xf32>
    %20 = vector.broadcast %19 : vector<1x32xf32> to vector<128x32xf32>
    %21 = arith.mulf %18, %20 : vector<128x32xf32>
    %c0_7 = arith.constant 0 : index
    %c0_8 = arith.constant 0 : index
    %22 = vector.load %arg3[%c0_7, %c0_8] : memref<1x32xf32, #tpu.memory_space<vmem>>, vector<1x32xf32>
    %23 = vector.broadcast %22 : vector<1x32xf32> to vector<128x32xf32>
    %24 = arith.addf %21, %23 : vector<128x32xf32>
    %25 = arith.truncf %24 : vector<128x32xf32> to vector<128x32xbf16>
    %c0_9 = arith.constant 0 : index
    %c0_10 = arith.constant 0 : index
    %26 = vector.load %arg4[%c0_9, %c0_10] : memref<32x96xbf16, #tpu.memory_space<vmem>>, vector<32x96xbf16>
    %cst_11 = arith.constant dense<0.000000e+00> : vector<128x96xf32>
    %27 = tpu.matmul %25, %26, %cst_11 {dimension_numbers = #tpu.dot_dimension_numbers<[1], [0], [0], [1], [0, 0, 1, 1], [], []>} : vector<128x32xbf16>, vector<32x96xbf16>, vector<128x96xf32> -> vector<128x96xf32>
    %c0_12 = arith.constant 0 : index
    %c0_13 = arith.constant 0 : index
    %28 = vector.load %arg5[%c0_12, %c0_13] : memref<1x96xf32, #tpu.memory_space<vmem>>, vector<1x96xf32>
    %29 = vector.broadcast %28 : vector<1x96xf32> to vector<128x96xf32>
    %30 = arith.addf %27, %29 : vector<128x96xf32>
    %31 = arith.truncf %30 : vector<128x96xf32> to vector<128x96xbf16>
    %c0_14 = arith.constant 0 : index
    %c0_15 = arith.constant 0 : index
    %32 = vector.load %arg6[%c0_14, %c0_15] : memref<128x96xbf16, #tpu.memory_space<vmem>>, vector<128x96xbf16>
    tpu.vector_store %arg6[%c0_14, %c0_15], %31 {strides = array<i32>} : memref<128x96xbf16, #tpu.memory_space<vmem>>, vector<128x96xbf16>,
    return
  }
  func.func @transform_0(%arg0: i32) -> (i32, i32) {
    %c0_i32 = arith.constant 0 : i32
    %c0_i32_0 = arith.constant 0 : i32
    return %arg0, %c0_i32 : i32, i32
  }
  func.func @transform_1(%arg0: i32) -> (i32, i32) {
    %c0_i32 = arith.constant 0 : i32
    %c0_i32_0 = arith.constant 0 : i32
    %c0_i32_1 = arith.constant 0 : i32
    return %c0_i32, %c0_i32_0 : i32, i32
  }
  func.func @transform_2(%arg0: i32) -> (i32, i32) {
    %c0_i32 = arith.constant 0 : i32
    %c0_i32_0 = arith.constant 0 : i32
    %c0_i32_1 = arith.constant 0 : i32
    return %c0_i32, %c0_i32_0 : i32, i32
  }
  func.func @transform_3(%arg0: i32) -> (i32, i32) {
    %c0_i32 = arith.constant 0 : i32
    %c0_i32_0 = arith.constant 0 : i32
    %c0_i32_1 = arith.constant 0 : i32
    return %c0_i32, %c0_i32_0 : i32, i32
  }
  func.func @transform_4(%arg0: i32) -> (i32, i32) {
    %c0_i32 = arith.constant 0 : i32
    %c0_i32_0 = arith.constant 0 : i32
    %c0_i32_1 = arith.constant 0 : i32
    return %c0_i32, %c0_i32_0 : i32, i32
  }
  func.func @transform_5(%arg0: i32) -> (i32, i32) {
    %c0_i32 = arith.constant 0 : i32
    %c0_i32_0 = arith.constant 0 : i32
    return %arg0, %c0_i32 : i32, i32
  }
}

module attributes {stable_mosaic.version = 11 : i64} {
  func.func @_linear_ln_kernel(%arg0: i32, %arg1: memref<128x48xf32, #tpu.memory_space<vmem>>, %arg2: memref<48x32xbf16, #tpu.memory_space<vmem>>, %arg3: memref<1x32xf32, #tpu.memory_space<vmem>>, %arg4: memref<1x32xf32, #tpu.memory_space<vmem>>, %arg5: memref<1x32xf32, #tpu.memory_space<vmem>>, %arg6: memref<128x32xf32, #tpu.memory_space<vmem>>) attributes {dimension_semantics = [#tpu.dimension_semantics<parallel>], iteration_bounds = array<i64: 1>, scalar_prefetch = 0 : i64, scratch_operands = 0 : i64, tpu.core_type = #tpu.core_type<tc>, window_params = [{transform_indices = @transform_0, window_bounds = array<i64: 128, 48>}, {pipeline_mode = #tpu.pipeline_mode<synchronous>, transform_indices = @transform_1, window_bounds = array<i64: 48, 32>}, {pipeline_mode = #tpu.pipeline_mode<synchronous>, transform_indices = @transform_2, window_bounds = array<i64: 1, 32>}, {pipeline_mode = #tpu.pipeline_mode<synchronous>, transform_indices = @transform_3, window_bounds = array<i64: 1, 32>}, {pipeline_mode = #tpu.pipeline_mode<synchronous>, transform_indices = @transform_4, window_bounds = array<i64: 1, 32>}, {transform_indices = @transform_5, window_bounds = array<i64: 128, 32>}]} {
    %c0 = arith.constant 0 : index
    %c0_0 = arith.constant 0 : index
    %0 = vector.load %arg1[%c0, %c0_0] : memref<128x48xf32, #tpu.memory_space<vmem>>, vector<128x48xf32>
    %1 = arith.truncf %0 : vector<128x48xf32> to vector<128x48xbf16>
    %c0_1 = arith.constant 0 : index
    %c0_2 = arith.constant 0 : index
    %2 = vector.load %arg2[%c0_1, %c0_2] : memref<48x32xbf16, #tpu.memory_space<vmem>>, vector<48x32xbf16>
    %cst = arith.constant dense<0.000000e+00> : vector<128x32xf32>
    %3 = tpu.matmul %1, %2, %cst {dimension_numbers = #tpu.dot_dimension_numbers<[1], [0], [0], [1], [0, 0, 1, 1], [], []>} : vector<128x48xbf16>, vector<48x32xbf16>, vector<128x32xf32> -> vector<128x32xf32>
    %c0_3 = arith.constant 0 : index
    %c0_4 = arith.constant 0 : index
    %4 = vector.load %arg3[%c0_3, %c0_4] : memref<1x32xf32, #tpu.memory_space<vmem>>, vector<1x32xf32>
    %5 = vector.broadcast %4 : vector<1x32xf32> to vector<128x32xf32>
    %6 = arith.addf %3, %5 : vector<128x32xf32>
    %cst_5 = arith.constant dense<0.000000e+00> : vector<128xf32>
    %7 = vector.multi_reduction <add>, %6, %cst_5 [1] : vector<128x32xf32> to vector<128xf32>
    %8 = vector.shape_cast %7 : vector<128xf32> to vector<128x1xf32>
    %cst_6 = arith.constant 3.200000e+01 : f32
    %9 = vector.broadcast %cst_6 : f32 to vector<128x1xf32>
    %10 = arith.divf %8, %9 : vector<128x1xf32>
    %11 = vector.broadcast %10 : vector<128x1xf32> to vector<128x32xf32>
    %12 = arith.subf %6, %11 : vector<128x32xf32>
    %13 = arith.mulf %12, %12 : vector<128x32xf32>
    %cst_7 = arith.constant dense<0.000000e+00> : vector<128xf32>
    %14 = vector.multi_reduction <add>, %13, %cst_7 [1] : vector<128x32xf32> to vector<128xf32>
    %15 = vector.shape_cast %14 : vector<128xf32> to vector<128x1xf32>
    %cst_8 = arith.constant 3.200000e+01 : f32
    %16 = vector.broadcast %cst_8 : f32 to vector<128x1xf32>
    %17 = arith.divf %15, %16 : vector<128x1xf32>
    %18 = vector.broadcast %10 : vector<128x1xf32> to vector<128x32xf32>
    %19 = arith.subf %6, %18 : vector<128x32xf32>
    %cst_9 = arith.constant 9.99999974E-6 : f32
    %20 = vector.broadcast %cst_9 : f32 to vector<128x1xf32>
    %21 = arith.addf %17, %20 : vector<128x1xf32>
    %22 = math.rsqrt %21 : vector<128x1xf32>
    %23 = vector.broadcast %22 : vector<128x1xf32> to vector<128x32xf32>
    %24 = arith.mulf %19, %23 : vector<128x32xf32>
    %c0_10 = arith.constant 0 : index
    %c0_11 = arith.constant 0 : index
    %25 = vector.load %arg4[%c0_10, %c0_11] : memref<1x32xf32, #tpu.memory_space<vmem>>, vector<1x32xf32>
    %26 = vector.broadcast %25 : vector<1x32xf32> to vector<128x32xf32>
    %27 = arith.mulf %24, %26 : vector<128x32xf32>
    %c0_12 = arith.constant 0 : index
    %c0_13 = arith.constant 0 : index
    %28 = vector.load %arg5[%c0_12, %c0_13] : memref<1x32xf32, #tpu.memory_space<vmem>>, vector<1x32xf32>
    %29 = vector.broadcast %28 : vector<1x32xf32> to vector<128x32xf32>
    %30 = arith.addf %27, %29 : vector<128x32xf32>
    %c0_14 = arith.constant 0 : index
    %c0_15 = arith.constant 0 : index
    %31 = vector.load %arg6[%c0_14, %c0_15] : memref<128x32xf32, #tpu.memory_space<vmem>>, vector<128x32xf32>
    tpu.vector_store %arg6[%c0_14, %c0_15], %30 {strides = array<i32>} : memref<128x32xf32, #tpu.memory_space<vmem>>, vector<128x32xf32>,
    return
  }
  func.func @transform_0(%arg0: i32) -> (i32, i32) {
    %c0_i32 = arith.constant 0 : i32
    %c0_i32_0 = arith.constant 0 : i32
    return %arg0, %c0_i32 : i32, i32
  }
  func.func @transform_1(%arg0: i32) -> (i32, i32) {
    %c0_i32 = arith.constant 0 : i32
    %c0_i32_0 = arith.constant 0 : i32
    %c0_i32_1 = arith.constant 0 : i32
    return %c0_i32, %c0_i32_0 : i32, i32
  }
  func.func @transform_2(%arg0: i32) -> (i32, i32) {
    %c0_i32 = arith.constant 0 : i32
    %c0_i32_0 = arith.constant 0 : i32
    %c0_i32_1 = arith.constant 0 : i32
    return %c0_i32, %c0_i32_0 : i32, i32
  }
  func.func @transform_3(%arg0: i32) -> (i32, i32) {
    %c0_i32 = arith.constant 0 : i32
    %c0_i32_0 = arith.constant 0 : i32
    %c0_i32_1 = arith.constant 0 : i32
    return %c0_i32, %c0_i32_0 : i32, i32
  }
  func.func @transform_4(%arg0: i32) -> (i32, i32) {
    %c0_i32 = arith.constant 0 : i32
    %c0_i32_0 = arith.constant 0 : i32
    %c0_i32_1 = arith.constant 0 : i32
    return %c0_i32, %c0_i32_0 : i32, i32
  }
  func.func @transform_5(%arg0: i32) -> (i32, i32) {
    %c0_i32 = arith.constant 0 : i32
    %c0_i32_0 = arith.constant 0 : i32
    return %arg0, %c0_i32 : i32, i32
  }
}

module attributes {stable_mosaic.version = 11 : i64} {
  func.func @_attn_kernel(%arg0: i32, %arg1: i32, %arg2: memref<3x1x8x16x16xbf16, #tpu.memory_space<vmem>>, %arg3: memref<1x16x16xf32, #tpu.memory_space<vmem>>, %arg4: memref<1x8x16x16xbf16, #tpu.memory_space<vmem>>) attributes {dimension_semantics = [#tpu.dimension_semantics<parallel>, #tpu.dimension_semantics<parallel>], iteration_bounds = array<i64: 1, 2>, scalar_prefetch = 0 : i64, scratch_operands = 0 : i64, tpu.core_type = #tpu.core_type<tc>, window_params = [{transform_indices = @transform_0, window_bounds = array<i64: 3, 1, 8, 16, 16>}, {transform_indices = @transform_1, window_bounds = array<i64: 1, 16, 16>}, {transform_indices = @transform_2, window_bounds = array<i64: 1, 8, 16, 16>}]} {
    %c0 = arith.constant 0 : index
    %c0_0 = arith.constant 0 : index
    %c0_1 = arith.constant 0 : index
    %c0_2 = arith.constant 0 : index
    %c0_3 = arith.constant 0 : index
    %0 = vector.load %arg2[%c0, %c0_0, %c0_1, %c0_2, %c0_3] : memref<3x1x8x16x16xbf16, #tpu.memory_space<vmem>>, vector<1x1x8x16x16xbf16>
    %1 = vector.shape_cast %0 : vector<1x1x8x16x16xbf16> to vector<8x16x16xbf16>
    %c1 = arith.constant 1 : index
    %c0_4 = arith.constant 0 : index
    %c0_5 = arith.constant 0 : index
    %c0_6 = arith.constant 0 : index
    %c0_7 = arith.constant 0 : index
    %2 = vector.load %arg2[%c1, %c0_4, %c0_5, %c0_6, %c0_7] : memref<3x1x8x16x16xbf16, #tpu.memory_space<vmem>>, vector<1x1x8x16x16xbf16>
    %3 = vector.shape_cast %2 : vector<1x1x8x16x16xbf16> to vector<8x16x16xbf16>
    %c2 = arith.constant 2 : index
    %c0_8 = arith.constant 0 : index
    %c0_9 = arith.constant 0 : index
    %c0_10 = arith.constant 0 : index
    %c0_11 = arith.constant 0 : index
    %4 = vector.load %arg2[%c2, %c0_8, %c0_9, %c0_10, %c0_11] : memref<3x1x8x16x16xbf16, #tpu.memory_space<vmem>>, vector<1x1x8x16x16xbf16>
    %5 = vector.shape_cast %4 : vector<1x1x8x16x16xbf16> to vector<8x16x16xbf16>
    "tpu.trace_start"() <{level = 10 : i32, message = "wqd,wkd->wqk"}> : () -> ()
    %cst = arith.constant dense<0.000000e+00> : vector<8x16x16xf32>
    %6 = tpu.matmul %1, %3, %cst {dimension_numbers = #tpu.dot_dimension_numbers<[2], [2], [1], [1], [0, 0, 0, 1, 1, 1], [0], [0]>} : vector<8x16x16xbf16>, vector<8x16x16xbf16>, vector<8x16x16xf32> -> vector<8x16x16xf32>
    "tpu.trace_stop"() : () -> ()
    %cst_12 = arith.constant 2.500000e-01 : f32
    %7 = vector.broadcast %cst_12 : f32 to vector<8x16x16xf32>
    %8 = arith.mulf %6, %7 : vector<8x16x16xf32>
    %c0_13 = arith.constant 0 : index
    %c0_14 = arith.constant 0 : index
    %c0_15 = arith.constant 0 : index
    %9 = vector.load %arg3[%c0_13, %c0_14, %c0_15] : memref<1x16x16xf32, #tpu.memory_space<vmem>>, vector<1x16x16xf32>
    %10 = vector.shape_cast %9 : vector<1x16x16xf32> to vector<16x16xf32>
    %11 = vector.shape_cast %10 : vector<16x16xf32> to vector<1x16x16xf32>
    %12 = vector.broadcast %11 : vector<1x16x16xf32> to vector<8x16x16xf32>
    %13 = arith.addf %8, %12 : vector<8x16x16xf32>
    %cst_16 = arith.constant dense<0xFF800000> : vector<8x16xf32>
    %14 = vector.multi_reduction <maximumf>, %13, %cst_16 [2] : vector<8x16x16xf32> to vector<8x16xf32>
    %15 = vector.shape_cast %14 : vector<8x16xf32> to vector<8x16x1xf32>
    %16 = vector.broadcast %15 : vector<8x16x1xf32> to vector<8x16x16xf32>
    %17 = arith.subf %13, %16 : vector<8x16x16xf32>
    %18 = math.exp %17 : vector<8x16x16xf32>
    %cst_17 = arith.constant dense<0.000000e+00> : vector<8x16xf32>
    %19 = vector.multi_reduction <add>, %18, %cst_17 [2] : vector<8x16x16xf32> to vector<8x16xf32>
    %20 = vector.shape_cast %19 : vector<8x16xf32> to vector<8x16x1xf32>
    %21 = tpu.reciprocal %20 {approx = true} : vector<8x16x1xf32> -> vector<8x16x1xf32>
    %22 = vector.broadcast %21 : vector<8x16x1xf32> to vector<8x16x16xf32>
    %23 = arith.mulf %18, %22 : vector<8x16x16xf32>
    %24 = arith.truncf %23 : vector<8x16x16xf32> to vector<8x16x16xbf16>
    "tpu.trace_start"() <{level = 10 : i32, message = "wqk,wkd->wqd"}> : () -> ()
    %cst_18 = arith.constant dense<0.000000e+00> : vector<8x16x16xf32>
    %25 = tpu.matmul %24, %5, %cst_18 {dimension_numbers = #tpu.dot_dimension_numbers<[2], [1], [1], [2], [0, 0, 0, 1, 1, 2], [0], [0]>} : vector<8x16x16xbf16>, vector<8x16x16xbf16>, vector<8x16x16xf32> -> vector<8x16x16xf32>
    "tpu.trace_stop"() : () -> ()
    %26 = arith.truncf %25 : vector<8x16x16xf32> to vector<8x16x16xbf16>
    %c0_19 = arith.constant 0 : index
    %c0_20 = arith.constant 0 : index
    %c0_21 = arith.constant 0 : index
    %c0_22 = arith.constant 0 : index
    %27 = vector.load %arg4[%c0_19, %c0_20, %c0_21, %c0_22] : memref<1x8x16x16xbf16, #tpu.memory_space<vmem>>, vector<1x8x16x16xbf16>
    %28 = vector.shape_cast %27 : vector<1x8x16x16xbf16> to vector<8x16x16xbf16>
    %29 = vector.shape_cast %26 : vector<8x16x16xbf16> to vector<1x8x16x16xbf16>
    tpu.vector_store %arg4[%c0_19, %c0_20, %c0_21, %c0_22], %29 {strides = array<i32>} : memref<1x8x16x16xbf16, #tpu.memory_space<vmem>>, vector<1x8x16x16xbf16>,
    return
  }
  func.func @transform_0(%arg0: i32, %arg1: i32) -> (i32, i32, i32, i32, i32) {
    %c0_i32 = arith.constant 0 : i32
    %c0_i32_0 = arith.constant 0 : i32
    %c0_i32_1 = arith.constant 0 : i32
    %c0_i32_2 = arith.constant 0 : i32
    return %c0_i32, %arg1, %arg0, %c0_i32_0, %c0_i32_1 : i32, i32, i32, i32, i32
  }
  func.func @transform_1(%arg0: i32, %arg1: i32) -> (i32, i32, i32) {
    %c0_i32 = arith.constant 0 : i32
    %c0_i32_0 = arith.constant 0 : i32
    %c0_i32_1 = arith.constant 0 : i32
    return %arg1, %c0_i32, %c0_i32_0 : i32, i32, i32
  }
  func.func @transform_2(%arg0: i32, %arg1: i32) -> (i32, i32, i32, i32) {
    %c0_i32 = arith.constant 0 : i32
    %c0_i32_0 = arith.constant 0 : i32
    %c0_i32_1 = arith.constant 0 : i32
    return %arg1, %arg0, %c0_i32, %c0_i32_0 : i32, i32, i32, i32
  }
}

module attributes {stable_mosaic.version = 11 : i64} {
  func.func @_linear_residual_kernel(%arg0: i32, %arg1: memref<128x32xbf16, #tpu.memory_space<vmem>>, %arg2: memref<128x32xf32, #tpu.memory_space<vmem>>, %arg3: memref<32x32xbf16, #tpu.memory_space<vmem>>, %arg4: memref<1x32xf32, #tpu.memory_space<vmem>>, %arg5: memref<128x32xf32, #tpu.memory_space<vmem>>) attributes {dimension_semantics = [#tpu.dimension_semantics<parallel>], iteration_bounds = array<i64: 1>, scalar_prefetch = 0 : i64, scratch_operands = 0 : i64, tpu.core_type = #tpu.core_type<tc>, window_params = [{transform_indices = @transform_0, window_bounds = array<i64: 128, 32>}, {transform_indices = @transform_1, window_bounds = array<i64: 128, 32>}, {pipeline_mode = #tpu.pipeline_mode<synchronous>, transform_indices = @transform_2, window_bounds = array<i64: 32, 32>}, {pipeline_mode = #tpu.pipeline_mode<synchronous>, transform_indices = @transform_3, window_bounds = array<i64: 1, 32>}, {transform_indices = @transform_4, window_bounds = array<i64: 128, 32>}]} {
    %c0 = arith.constant 0 : index
    %c0_0 = arith.constant 0 : index
    %0 = vector.load %arg1[%c0, %c0_0] : memref<128x32xbf16, #tpu.memory_space<vmem>>, vector<128x32xbf16>
    %c0_1 = arith.constant 0 : index
    %c0_2 = arith.constant 0 : index
    %1 = vector.load %arg3[%c0_1, %c0_2] : memref<32x32xbf16, #tpu.memory_space<vmem>>, vector<32x32xbf16>
    %cst = arith.constant dense<0.000000e+00> : vector<128x32xf32>
    %2 = tpu.matmul %0, %1, %cst {dimension_numbers = #tpu.dot_dimension_numbers<[1], [0], [0], [1], [0, 0, 1, 1], [], []>} : vector<128x32xbf16>, vector<32x32xbf16>, vector<128x32xf32> -> vector<128x32xf32>
    %c0_3 = arith.constant 0 : index
    %c0_4 = arith.constant 0 : index
    %3 = vector.load %arg4[%c0_3, %c0_4] : memref<1x32xf32, #tpu.memory_space<vmem>>, vector<1x32xf32>
    %4 = vector.broadcast %3 : vector<1x32xf32> to vector<128x32xf32>
    %5 = arith.addf %2, %4 : vector<128x32xf32>
    %c0_5 = arith.constant 0 : index
    %c0_6 = arith.constant 0 : index
    %6 = vector.load %arg2[%c0_5, %c0_6] : memref<128x32xf32, #tpu.memory_space<vmem>>, vector<128x32xf32>
    %7 = arith.addf %6, %5 : vector<128x32xf32>
    %c0_7 = arith.constant 0 : index
    %c0_8 = arith.constant 0 : index
    %8 = vector.load %arg5[%c0_7, %c0_8] : memref<128x32xf32, #tpu.memory_space<vmem>>, vector<128x32xf32>
    tpu.vector_store %arg5[%c0_7, %c0_8], %7 {strides = array<i32>} : memref<128x32xf32, #tpu.memory_space<vmem>>, vector<128x32xf32>,
    return
  }
  func.func @transform_0(%arg0: i32) -> (i32, i32) {
    %c0_i32 = arith.constant 0 : i32
    %c0_i32_0 = arith.constant 0 : i32
    return %arg0, %c0_i32 : i32, i32
  }
  func.func @transform_1(%arg0: i32) -> (i32, i32) {
    %c0_i32 = arith.constant 0 : i32
    %c0_i32_0 = arith.constant 0 : i32
    return %arg0, %c0_i32 : i32, i32
  }
  func.func @transform_2(%arg0: i32) -> (i32, i32) {
    %c0_i32 = arith.constant 0 : i32
    %c0_i32_0 = arith.constant 0 : i32
    %c0_i32_1 = arith.constant 0 : i32
    return %c0_i32, %c0_i32_0 : i32, i32
  }
  func.func @transform_3(%arg0: i32) -> (i32, i32) {
    %c0_i32 = arith.constant 0 : i32
    %c0_i32_0 = arith.constant 0 : i32
    %c0_i32_1 = arith.constant 0 : i32
    return %c0_i32, %c0_i32_0 : i32, i32
  }
  func.func @transform_4(%arg0: i32) -> (i32, i32) {
    %c0_i32 = arith.constant 0 : i32
    %c0_i32_0 = arith.constant 0 : i32
    return %arg0, %c0_i32 : i32, i32
  }
}

module attributes {stable_mosaic.version = 11 : i64} {
  func.func @_ln_mlp_residual_kernel(%arg0: i32, %arg1: i32, %arg2: memref<128x32xf32, #tpu.memory_space<vmem>>, %arg3: memref<1x32xf32, #tpu.memory_space<vmem>>, %arg4: memref<1x32xf32, #tpu.memory_space<vmem>>, %arg5: memref<32x128xbf16, #tpu.memory_space<vmem>>, %arg6: memref<1x128xf32, #tpu.memory_space<vmem>>, %arg7: memref<128x32xbf16, #tpu.memory_space<vmem>>, %arg8: memref<1x32xf32, #tpu.memory_space<vmem>>, %arg9: memref<128x32xf32, #tpu.memory_space<vmem>>, %arg10: memref<128x32xf32, #tpu.memory_space<vmem>>) attributes {dimension_semantics = [#tpu.dimension_semantics<parallel>, #tpu.dimension_semantics<arbitrary>], iteration_bounds = array<i64: 1, 1>, scalar_prefetch = 0 : i64, scratch_operands = 1 : i64, tpu.core_type = #tpu.core_type<tc>, window_params = [{transform_indices = @transform_0, window_bounds = array<i64: 128, 32>}, {pipeline_mode = #tpu.pipeline_mode<synchronous>, transform_indices = @transform_1, window_bounds = array<i64: 1, 32>}, {pipeline_mode = #tpu.pipeline_mode<synchronous>, transform_indices = @transform_2, window_bounds = array<i64: 1, 32>}, {transform_indices = @transform_3, window_bounds = array<i64: 32, 128>}, {transform_indices = @transform_4, window_bounds = array<i64: 1, 128>}, {transform_indices = @transform_5, window_bounds = array<i64: 128, 32>}, {pipeline_mode = #tpu.pipeline_mode<synchronous>, transform_indices = @transform_6, window_bounds = array<i64: 1, 32>}, {transform_indices = @transform_7, window_bounds = array<i64: 128, 32>}]} {
    %c0 = arith.constant 0 : index
    %c0_0 = arith.constant 0 : index
    %0 = vector.load %arg2[%c0, %c0_0] : memref<128x32xf32, #tpu.memory_space<vmem>>, vector<128x32xf32>
    %cst = arith.constant dense<0.000000e+00> : vector<128xf32>
    %1 = vector.multi_reduction <add>, %0, %cst [1] : vector<128x32xf32> to vector<128xf32>
    %2 = vector.shape_cast %1 : vector<128xf32> to vector<128x1xf32>
    %cst_1 = arith.constant 3.200000e+01 : f32
    %3 = vector.broadcast %cst_1 : f32 to vector<128x1xf32>
    %4 = arith.divf %2, %3 : vector<128x1xf32>
    %5 = vector.broadcast %4 : vector<128x1xf32> to vector<128x32xf32>
    %6 = arith.subf %0, %5 : vector<128x32xf32>
    %7 = arith.mulf %6, %6 : vector<128x32xf32>
    %cst_2 = arith.constant dense<0.000000e+00> : vector<128xf32>
    %8 = vector.multi_reduction <add>, %7, %cst_2 [1] : vector<128x32xf32> to vector<128xf32>
    %9 = vector.shape_cast %8 : vector<128xf32> to vector<128x1xf32>
    %cst_3 = arith.constant 3.200000e+01 : f32
    %10 = vector.broadcast %cst_3 : f32 to vector<128x1xf32>
    %11 = arith.divf %9, %10 : vector<128x1xf32>
    %12 = vector.broadcast %4 : vector<128x1xf32> to vector<128x32xf32>
    %13 = arith.subf %0, %12 : vector<128x32xf32>
    %cst_4 = arith.constant 9.99999974E-6 : f32
    %14 = vector.broadcast %cst_4 : f32 to vector<128x1xf32>
    %15 = arith.addf %11, %14 : vector<128x1xf32>
    %16 = math.rsqrt %15 : vector<128x1xf32>
    %17 = vector.broadcast %16 : vector<128x1xf32> to vector<128x32xf32>
    %18 = arith.mulf %13, %17 : vector<128x32xf32>
    %c0_5 = arith.constant 0 : index
    %c0_6 = arith.constant 0 : index
    %19 = vector.load %arg3[%c0_5, %c0_6] : memref<1x32xf32, #tpu.memory_space<vmem>>, vector<1x32xf32>
    %20 = vector.broadcast %19 : vector<1x32xf32> to vector<128x32xf32>
    %21 = arith.mulf %18, %20 : vector<128x32xf32>
    %c0_7 = arith.constant 0 : index
    %c0_8 = arith.constant 0 : index
    %22 = vector.load %arg4[%c0_7, %c0_8] : memref<1x32xf32, #tpu.memory_space<vmem>>, vector<1x32xf32>
    %23 = vector.broadcast %22 : vector<1x32xf32> to vector<128x32xf32>
    %24 = arith.addf %21, %23 : vector<128x32xf32>
    %25 = arith.truncf %24 : vector<128x32xf32> to vector<128x32xbf16>
    %c0_9 = arith.constant 0 : index
    %c0_10 = arith.constant 0 : index
    %26 = vector.load %arg5[%c0_9, %c0_10] : memref<32x128xbf16, #tpu.memory_space<vmem>>, vector<32x128xbf16>
    %cst_11 = arith.constant dense<0.000000e+00> : vector<128x128xf32>
    %27 = tpu.matmul %25, %26, %cst_11 {dimension_numbers = #tpu.dot_dimension_numbers<[1], [0], [0], [1], [0, 0, 1, 1], [], []>} : vector<128x32xbf16>, vector<32x128xbf16>, vector<128x128xf32> -> vector<128x128xf32>
    %c0_12 = arith.constant 0 : index
    %c0_13 = arith.constant 0 : index
    %28 = vector.load %arg6[%c0_12, %c0_13] : memref<1x128xf32, #tpu.memory_space<vmem>>, vector<1x128xf32>
    %29 = vector.broadcast %28 : vector<1x128xf32> to vector<128x128xf32>
    %30 = arith.addf %27, %29 : vector<128x128xf32>
    %cst_14 = arith.constant 5.000000e-01 : f32
    %31 = vector.broadcast %cst_14 : f32 to vector<128x128xf32>
    %32 = arith.mulf %31, %30 : vector<128x128xf32>
    %cst_15 = arith.constant 0.707106769 : f32
    %33 = vector.broadcast %cst_15 : f32 to vector<128x128xf32>
    %34 = arith.mulf %30, %33 : vector<128x128xf32>
    %35 = math.erf %34 : vector<128x128xf32>
    %cst_16 = arith.constant 1.000000e+00 : f32
    %36 = vector.broadcast %cst_16 : f32 to vector<128x128xf32>
    %37 = arith.addf %36, %35 : vector<128x128xf32>
    %38 = arith.mulf %32, %37 : vector<128x128xf32>
    %39 = arith.truncf %38 : vector<128x128xf32> to vector<128x128xbf16>
    %c0_17 = arith.constant 0 : index
    %c0_18 = arith.constant 0 : index
    %40 = vector.load %arg7[%c0_17, %c0_18] : memref<128x32xbf16, #tpu.memory_space<vmem>>, vector<128x32xbf16>
    %cst_19 = arith.constant dense<0.000000e+00> : vector<128x32xf32>
    %41 = tpu.matmul %39, %40, %cst_19 {dimension_numbers = #tpu.dot_dimension_numbers<[1], [0], [0], [1], [0, 0, 1, 1], [], []>} : vector<128x128xbf16>, vector<128x32xbf16>, vector<128x32xf32> -> vector<128x32xf32>
    %c0_i32 = arith.constant 0 : i32
    %42 = arith.cmpi eq, %arg1, %c0_i32 : i32
    %43 = arith.extui %42 : i1 to i32
    %c0_i32_20 = arith.constant 0 : i32
    %44 = arith.cmpi ne, %43, %c0_i32_20 : i32
    scf.if %44 {
      %c0_27 = arith.constant 0 : index
      %c0_28 = arith.constant 0 : index
      %51 = vector.load %arg8[%c0_27, %c0_28] : memref<1x32xf32, #tpu.memory_space<vmem>>, vector<1x32xf32>
      %52 = vector.broadcast %51 : vector<1x32xf32> to vector<128x32xf32>
      %53 = arith.addf %0, %52 : vector<128x32xf32>
      %c0_29 = arith.constant 0 : index
      %c0_30 = arith.constant 0 : index
      %54 = vector.load %arg10[%c0_29, %c0_30] : memref<128x32xf32, #tpu.memory_space<vmem>>, vector<128x32xf32>
      tpu.vector_store %arg10[%c0_29, %c0_30], %53 {strides = array<i32>} : memref<128x32xf32, #tpu.memory_space<vmem>>, vector<128x32xf32>,
    } else {
    }
    %c0_21 = arith.constant 0 : index
    %c0_22 = arith.constant 0 : index
    %45 = vector.load %arg10[%c0_21, %c0_22] : memref<128x32xf32, #tpu.memory_space<vmem>>, vector<128x32xf32>
    %46 = arith.addf %45, %41 : vector<128x32xf32>
    %c0_23 = arith.constant 0 : index
    %c0_24 = arith.constant 0 : index
    %47 = vector.load %arg10[%c0_23, %c0_24] : memref<128x32xf32, #tpu.memory_space<vmem>>, vector<128x32xf32>
    tpu.vector_store %arg10[%c0_23, %c0_24], %46 {strides = array<i32>} : memref<128x32xf32, #tpu.memory_space<vmem>>, vector<128x32xf32>,
    %c0_i32_25 = arith.constant 0 : i32
    %48 = arith.cmpi eq, %arg1, %c0_i32_25 : i32
    %49 = arith.extui %48 : i1 to i32
    %c0_i32_26 = arith.constant 0 : i32
    %50 = arith.cmpi ne, %49, %c0_i32_26 : i32
    scf.if %50 {
      %c0_27 = arith.constant 0 : index
      %c0_28 = arith.constant 0 : index
      %51 = vector.load %arg10[%c0_27, %c0_28] : memref<128x32xf32, #tpu.memory_space<vmem>>, vector<128x32xf32>
      %c0_29 = arith.constant 0 : index
      %c0_30 = arith.constant 0 : index
      %52 = vector.load %arg9[%c0_29, %c0_30] : memref<128x32xf32, #tpu.memory_space<vmem>>, vector<128x32xf32>
      tpu.vector_store %arg9[%c0_29, %c0_30], %51 {strides = array<i32>} : memref<128x32xf32, #tpu.memory_space<vmem>>, vector<128x32xf32>,
    } else {
    }
    return
  }
  func.func @transform_0(%arg0: i32, %arg1: i32) -> (i32, i32) {
    %c0_i32 = arith.constant 0 : i32
    %c0_i32_0 = arith.constant 0 : i32
    return %arg0, %c0_i32 : i32, i32
  }
  func.func @transform_1(%arg0: i32, %arg1: i32) -> (i32, i32) {
    %c0_i32 = arith.constant 0 : i32
    %c0_i32_0 = arith.constant 0 : i32
    %c0_i32_1 = arith.constant 0 : i32
    return %c0_i32, %c0_i32_0 : i32, i32
  }
  func.func @transform_2(%arg0: i32, %arg1: i32) -> (i32, i32) {
    %c0_i32 = arith.constant 0 : i32
    %c0_i32_0 = arith.constant 0 : i32
    %c0_i32_1 = arith.constant 0 : i32
    return %c0_i32, %c0_i32_0 : i32, i32
  }
  func.func @transform_3(%arg0: i32, %arg1: i32) -> (i32, i32) {
    %c0_i32 = arith.constant 0 : i32
    %c0_i32_0 = arith.constant 0 : i32
    return %c0_i32, %arg1 : i32, i32
  }
  func.func @transform_4(%arg0: i32, %arg1: i32) -> (i32, i32) {
    %c0_i32 = arith.constant 0 : i32
    %c0_i32_0 = arith.constant 0 : i32
    return %c0_i32, %arg1 : i32, i32
  }
  func.func @transform_5(%arg0: i32, %arg1: i32) -> (i32, i32) {
    %c0_i32 = arith.constant 0 : i32
    %c0_i32_0 = arith.constant 0 : i32
    return %arg1, %c0_i32 : i32, i32
  }
  func.func @transform_6(%arg0: i32, %arg1: i32) -> (i32, i32) {
    %c0_i32 = arith.constant 0 : i32
    %c0_i32_0 = arith.constant 0 : i32
    %c0_i32_1 = arith.constant 0 : i32
    return %c0_i32, %c0_i32_0 : i32, i32
  }
  func.func @transform_7(%arg0: i32, %arg1: i32) -> (i32, i32) {
    %c0_i32 = arith.constant 0 : i32
    %c0_i32_0 = arith.constant 0 : i32
    return %arg0, %c0_i32 : i32, i32
  }
}

module attributes {stable_mosaic.version = 11 : i64} {
  func.func @_attn_kernel(%arg0: i32, %arg1: i32, %arg2: memref<3x1x8x16x16xbf16, #tpu.memory_space<vmem>>, %arg3: memref<1x16x16xf32, #tpu.memory_space<vmem>>, %arg4: memref<8x16x16xf32, #tpu.memory_space<vmem>>, %arg5: memref<1x8x16x16xbf16, #tpu.memory_space<vmem>>) attributes {dimension_semantics = [#tpu.dimension_semantics<parallel>, #tpu.dimension_semantics<parallel>], iteration_bounds = array<i64: 1, 2>, scalar_prefetch = 0 : i64, scratch_operands = 0 : i64, tpu.core_type = #tpu.core_type<tc>, window_params = [{transform_indices = @transform_0, window_bounds = array<i64: 3, 1, 8, 16, 16>}, {transform_indices = @transform_1, window_bounds = array<i64: 1, 16, 16>}, {pipeline_mode = #tpu.pipeline_mode<synchronous>, transform_indices = @transform_2, window_bounds = array<i64: 8, 16, 16>}, {transform_indices = @transform_3, window_bounds = array<i64: 1, 8, 16, 16>}]} {
    %c0 = arith.constant 0 : index
    %c0_0 = arith.constant 0 : index
    %c0_1 = arith.constant 0 : index
    %c0_2 = arith.constant 0 : index
    %c0_3 = arith.constant 0 : index
    %0 = vector.load %arg2[%c0, %c0_0, %c0_1, %c0_2, %c0_3] : memref<3x1x8x16x16xbf16, #tpu.memory_space<vmem>>, vector<1x1x8x16x16xbf16>
    %1 = vector.shape_cast %0 : vector<1x1x8x16x16xbf16> to vector<8x16x16xbf16>
    %c1 = arith.constant 1 : index
    %c0_4 = arith.constant 0 : index
    %c0_5 = arith.constant 0 : index
    %c0_6 = arith.constant 0 : index
    %c0_7 = arith.constant 0 : index
    %2 = vector.load %arg2[%c1, %c0_4, %c0_5, %c0_6, %c0_7] : memref<3x1x8x16x16xbf16, #tpu.memory_space<vmem>>, vector<1x1x8x16x16xbf16>
    %3 = vector.shape_cast %2 : vector<1x1x8x16x16xbf16> to vector<8x16x16xbf16>
    %c2 = arith.constant 2 : index
    %c0_8 = arith.constant 0 : index
    %c0_9 = arith.constant 0 : index
    %c0_10 = arith.constant 0 : index
    %c0_11 = arith.constant 0 : index
    %4 = vector.load %arg2[%c2, %c0_8, %c0_9, %c0_10, %c0_11] : memref<3x1x8x16x16xbf16, #tpu.memory_space<vmem>>, vector<1x1x8x16x16xbf16>
    %5 = vector.shape_cast %4 : vector<1x1x8x16x16xbf16> to vector<8x16x16xbf16>
    "tpu.trace_start"() <{level = 10 : i32, message = "wqd,wkd->wqk"}> : () -> ()
    %cst = arith.constant dense<0.000000e+00> : vector<8x16x16xf32>
    %6 = tpu.matmul %1, %3, %cst {dimension_numbers = #tpu.dot_dimension_numbers<[2], [2], [1], [1], [0, 0, 0, 1, 1, 1], [0], [0]>} : vector<8x16x16xbf16>, vector<8x16x16xbf16>, vector<8x16x16xf32> -> vector<8x16x16xf32>
    "tpu.trace_stop"() : () -> ()
    %cst_12 = arith.constant 2.500000e-01 : f32
    %7 = vector.broadcast %cst_12 : f32 to vector<8x16x16xf32>
    %8 = arith.mulf %6, %7 : vector<8x16x16xf32>
    %c0_13 = arith.constant 0 : index
    %c0_14 = arith.constant 0 : index
    %c0_15 = arith.constant 0 : index
    %9 = vector.load %arg3[%c0_13, %c0_14, %c0_15] : memref<1x16x16xf32, #tpu.memory_space<vmem>>, vector<1x16x16xf32>
    %10 = vector.shape_cast %9 : vector<1x16x16xf32> to vector<16x16xf32>
    %11 = vector.shape_cast %10 : vector<16x16xf32> to vector<1x16x16xf32>
    %12 = vector.broadcast %11 : vector<1x16x16xf32> to vector<8x16x16xf32>
    %13 = arith.addf %8, %12 : vector<8x16x16xf32>
    %c0_16 = arith.constant 0 : index
    %c0_17 = arith.constant 0 : index
    %c0_18 = arith.constant 0 : index
    %14 = vector.load %arg4[%c0_16, %c0_17, %c0_18] : memref<8x16x16xf32, #tpu.memory_space<vmem>>, vector<8x16x16xf32>
    %15 = arith.addf %13, %14 : vector<8x16x16xf32>
    %cst_19 = arith.constant dense<0xFF800000> : vector<8x16xf32>
    %16 = vector.multi_reduction <maximumf>, %15, %cst_19 [2] : vector<8x16x16xf32> to vector<8x16xf32>
    %17 = vector.shape_cast %16 : vector<8x16xf32> to vector<8x16x1xf32>
    %18 = vector.broadcast %17 : vector<8x16x1xf32> to vector<8x16x16xf32>
    %19 = arith.subf %15, %18 : vector<8x16x16xf32>
    %20 = math.exp %19 : vector<8x16x16xf32>
    %cst_20 = arith.constant dense<0.000000e+00> : vector<8x16xf32>
    %21 = vector.multi_reduction <add>, %20, %cst_20 [2] : vector<8x16x16xf32> to vector<8x16xf32>
    %22 = vector.shape_cast %21 : vector<8x16xf32> to vector<8x16x1xf32>
    %23 = tpu.reciprocal %22 {approx = true} : vector<8x16x1xf32> -> vector<8x16x1xf32>
    %24 = vector.broadcast %23 : vector<8x16x1xf32> to vector<8x16x16xf32>
    %25 = arith.mulf %20, %24 : vector<8x16x16xf32>
    %26 = arith.truncf %25 : vector<8x16x16xf32> to vector<8x16x16xbf16>
    "tpu.trace_start"() <{level = 10 : i32, message = "wqk,wkd->wqd"}> : () -> ()
    %cst_21 = arith.constant dense<0.000000e+00> : vector<8x16x16xf32>
    %27 = tpu.matmul %26, %5, %cst_21 {dimension_numbers = #tpu.dot_dimension_numbers<[2], [1], [1], [2], [0, 0, 0, 1, 1, 2], [0], [0]>} : vector<8x16x16xbf16>, vector<8x16x16xbf16>, vector<8x16x16xf32> -> vector<8x16x16xf32>
    "tpu.trace_stop"() : () -> ()
    %28 = arith.truncf %27 : vector<8x16x16xf32> to vector<8x16x16xbf16>
    %c0_22 = arith.constant 0 : index
    %c0_23 = arith.constant 0 : index
    %c0_24 = arith.constant 0 : index
    %c0_25 = arith.constant 0 : index
    %29 = vector.load %arg5[%c0_22, %c0_23, %c0_24, %c0_25] : memref<1x8x16x16xbf16, #tpu.memory_space<vmem>>, vector<1x8x16x16xbf16>
    %30 = vector.shape_cast %29 : vector<1x8x16x16xbf16> to vector<8x16x16xbf16>
    %31 = vector.shape_cast %28 : vector<8x16x16xbf16> to vector<1x8x16x16xbf16>
    tpu.vector_store %arg5[%c0_22, %c0_23, %c0_24, %c0_25], %31 {strides = array<i32>} : memref<1x8x16x16xbf16, #tpu.memory_space<vmem>>, vector<1x8x16x16xbf16>,
    return
  }
  func.func @transform_0(%arg0: i32, %arg1: i32) -> (i32, i32, i32, i32, i32) {
    %c0_i32 = arith.constant 0 : i32
    %c0_i32_0 = arith.constant 0 : i32
    %c0_i32_1 = arith.constant 0 : i32
    %c0_i32_2 = arith.constant 0 : i32
    return %c0_i32, %arg1, %arg0, %c0_i32_0, %c0_i32_1 : i32, i32, i32, i32, i32
  }
  func.func @transform_1(%arg0: i32, %arg1: i32) -> (i32, i32, i32) {
    %c0_i32 = arith.constant 0 : i32
    %c0_i32_0 = arith.constant 0 : i32
    %c0_i32_1 = arith.constant 0 : i32
    return %arg1, %c0_i32, %c0_i32_0 : i32, i32, i32
  }
  func.func @transform_2(%arg0: i32, %arg1: i32) -> (i32, i32, i32) {
    %c0_i32 = arith.constant 0 : i32
    %c0_i32_0 = arith.constant 0 : i32
    %c0_i32_1 = arith.constant 0 : i32
    %c0_i32_2 = arith.constant 0 : i32
    return %c0_i32, %c0_i32_0, %c0_i32_1 : i32, i32, i32
  }
  func.func @transform_3(%arg0: i32, %arg1: i32) -> (i32, i32, i32, i32) {
    %c0_i32 = arith.constant 0 : i32
    %c0_i32_0 = arith.constant 0 : i32
    %c0_i32_1 = arith.constant 0 : i32
    return %arg1, %arg0, %c0_i32, %c0_i32_0 : i32, i32, i32, i32
  }
}

module attributes {stable_mosaic.version = 11 : i64} {
  func.func @_ln_linear_kernel(%arg0: i32, %arg1: memref<32x128xf32, #tpu.memory_space<vmem>>, %arg2: memref<1x128xf32, #tpu.memory_space<vmem>>, %arg3: memref<1x128xf32, #tpu.memory_space<vmem>>, %arg4: memref<128x64xbf16, #tpu.memory_space<vmem>>, %arg5: memref<1x64xf32, #tpu.memory_space<vmem>>, %arg6: memref<32x64xf32, #tpu.memory_space<vmem>>) attributes {dimension_semantics = [#tpu.dimension_semantics<parallel>], iteration_bounds = array<i64: 1>, scalar_prefetch = 0 : i64, scratch_operands = 0 : i64, tpu.core_type = #tpu.core_type<tc>, window_params = [{transform_indices = @transform_0, window_bounds = array<i64: 32, 128>}, {pipeline_mode = #tpu.pipeline_mode<synchronous>, transform_indices = @transform_1, window_bounds = array<i64: 1, 128>}, {pipeline_mode = #tpu.pipeline_mode<synchronous>, transform_indices = @transform_2, window_bounds = array<i64: 1, 128>}, {pipeline_mode = #tpu.pipeline_mode<synchronous>, transform_indices = @transform_3, window_bounds = array<i64: 128, 64>}, {pipeline_mode = #tpu.pipeline_mode<synchronous>, transform_indices = @transform_4, window_bounds = array<i64: 1, 64>}, {transform_indices = @transform_5, window_bounds = array<i64: 32, 64>}]} {
    %c0 = arith.constant 0 : index
    %c0_0 = arith.constant 0 : index
    %0 = vector.load %arg1[%c0, %c0_0] : memref<32x128xf32, #tpu.memory_space<vmem>>, vector<32x128xf32>
    %cst = arith.constant dense<0.000000e+00> : vector<32xf32>
    %1 = vector.multi_reduction <add>, %0, %cst [1] : vector<32x128xf32> to vector<32xf32>
    %2 = vector.shape_cast %1 : vector<32xf32> to vector<32x1xf32>
    %cst_1 = arith.constant 1.280000e+02 : f32
    %3 = vector.broadcast %cst_1 : f32 to vector<32x1xf32>
    %4 = arith.divf %2, %3 : vector<32x1xf32>
    %5 = vector.broadcast %4 : vector<32x1xf32> to vector<32x128xf32>
    %6 = arith.subf %0, %5 : vector<32x128xf32>
    %7 = arith.mulf %6, %6 : vector<32x128xf32>
    %cst_2 = arith.constant dense<0.000000e+00> : vector<32xf32>
    %8 = vector.multi_reduction <add>, %7, %cst_2 [1] : vector<32x128xf32> to vector<32xf32>
    %9 = vector.shape_cast %8 : vector<32xf32> to vector<32x1xf32>
    %cst_3 = arith.constant 1.280000e+02 : f32
    %10 = vector.broadcast %cst_3 : f32 to vector<32x1xf32>
    %11 = arith.divf %9, %10 : vector<32x1xf32>
    %12 = vector.broadcast %4 : vector<32x1xf32> to vector<32x128xf32>
    %13 = arith.subf %0, %12 : vector<32x128xf32>
    %cst_4 = arith.constant 9.99999974E-6 : f32
    %14 = vector.broadcast %cst_4 : f32 to vector<32x1xf32>
    %15 = arith.addf %11, %14 : vector<32x1xf32>
    %16 = math.rsqrt %15 : vector<32x1xf32>
    %17 = vector.broadcast %16 : vector<32x1xf32> to vector<32x128xf32>
    %18 = arith.mulf %13, %17 : vector<32x128xf32>
    %c0_5 = arith.constant 0 : index
    %c0_6 = arith.constant 0 : index
    %19 = vector.load %arg2[%c0_5, %c0_6] : memref<1x128xf32, #tpu.memory_space<vmem>>, vector<1x128xf32>
    %20 = vector.broadcast %19 : vector<1x128xf32> to vector<32x128xf32>
    %21 = arith.mulf %18, %20 : vector<32x128xf32>
    %c0_7 = arith.constant 0 : index
    %c0_8 = arith.constant 0 : index
    %22 = vector.load %arg3[%c0_7, %c0_8] : memref<1x128xf32, #tpu.memory_space<vmem>>, vector<1x128xf32>
    %23 = vector.broadcast %22 : vector<1x128xf32> to vector<32x128xf32>
    %24 = arith.addf %21, %23 : vector<32x128xf32>
    %25 = arith.truncf %24 : vector<32x128xf32> to vector<32x128xbf16>
    %c0_9 = arith.constant 0 : index
    %c0_10 = arith.constant 0 : index
    %26 = vector.load %arg4[%c0_9, %c0_10] : memref<128x64xbf16, #tpu.memory_space<vmem>>, vector<128x64xbf16>
    %cst_11 = arith.constant dense<0.000000e+00> : vector<32x64xf32>
    %27 = tpu.matmul %25, %26, %cst_11 {dimension_numbers = #tpu.dot_dimension_numbers<[1], [0], [0], [1], [0, 0, 1, 1], [], []>} : vector<32x128xbf16>, vector<128x64xbf16>, vector<32x64xf32> -> vector<32x64xf32>
    %c0_12 = arith.constant 0 : index
    %c0_13 = arith.constant 0 : index
    %28 = vector.load %arg5[%c0_12, %c0_13] : memref<1x64xf32, #tpu.memory_space<vmem>>, vector<1x64xf32>
    %29 = vector.broadcast %28 : vector<1x64xf32> to vector<32x64xf32>
    %30 = arith.addf %27, %29 : vector<32x64xf32>
    %c0_14 = arith.constant 0 : index
    %c0_15 = arith.constant 0 : index
    %31 = vector.load %arg6[%c0_14, %c0_15] : memref<32x64xf32, #tpu.memory_space<vmem>>, vector<32x64xf32>
    tpu.vector_store %arg6[%c0_14, %c0_15], %30 {strides = array<i32>} : memref<32x64xf32, #tpu.memory_space<vmem>>, vector<32x64xf32>,
    return
  }
  func.func @transform_0(%arg0: i32) -> (i32, i32) {
    %c0_i32 = arith.constant 0 : i32
    %c0_i32_0 = arith.constant 0 : i32
    return %arg0, %c0_i32 : i32, i32
  }
  func.func @transform_1(%arg0: i32) -> (i32, i32) {
    %c0_i32 = arith.constant 0 : i32
    %c0_i32_0 = arith.constant 0 : i32
    %c0_i32_1 = arith.constant 0 : i32
    return %c0_i32, %c0_i32_0 : i32, i32
  }
  func.func @transform_2(%arg0: i32) -> (i32, i32) {
    %c0_i32 = arith.constant 0 : i32
    %c0_i32_0 = arith.constant 0 : i32
    %c0_i32_1 = arith.constant 0 : i32
    return %c0_i32, %c0_i32_0 : i32, i32
  }
  func.func @transform_3(%arg0: i32) -> (i32, i32) {
    %c0_i32 = arith.constant 0 : i32
    %c0_i32_0 = arith.constant 0 : i32
    %c0_i32_1 = arith.constant 0 : i32
    return %c0_i32, %c0_i32_0 : i32, i32
  }
  func.func @transform_4(%arg0: i32) -> (i32, i32) {
    %c0_i32 = arith.constant 0 : i32
    %c0_i32_0 = arith.constant 0 : i32
    %c0_i32_1 = arith.constant 0 : i32
    return %c0_i32, %c0_i32_0 : i32, i32
  }
  func.func @transform_5(%arg0: i32) -> (i32, i32) {
    %c0_i32 = arith.constant 0 : i32
    %c0_i32_0 = arith.constant 0 : i32
    return %arg0, %c0_i32 : i32, i32
  }
}

module attributes {stable_mosaic.version = 11 : i64} {
  func.func @_ln_linear_kernel(%arg0: i32, %arg1: memref<32x64xf32, #tpu.memory_space<vmem>>, %arg2: memref<1x64xf32, #tpu.memory_space<vmem>>, %arg3: memref<1x64xf32, #tpu.memory_space<vmem>>, %arg4: memref<64x192xbf16, #tpu.memory_space<vmem>>, %arg5: memref<1x192xf32, #tpu.memory_space<vmem>>, %arg6: memref<32x192xbf16, #tpu.memory_space<vmem>>) attributes {dimension_semantics = [#tpu.dimension_semantics<parallel>], iteration_bounds = array<i64: 1>, scalar_prefetch = 0 : i64, scratch_operands = 0 : i64, tpu.core_type = #tpu.core_type<tc>, window_params = [{transform_indices = @transform_0, window_bounds = array<i64: 32, 64>}, {pipeline_mode = #tpu.pipeline_mode<synchronous>, transform_indices = @transform_1, window_bounds = array<i64: 1, 64>}, {pipeline_mode = #tpu.pipeline_mode<synchronous>, transform_indices = @transform_2, window_bounds = array<i64: 1, 64>}, {pipeline_mode = #tpu.pipeline_mode<synchronous>, transform_indices = @transform_3, window_bounds = array<i64: 64, 192>}, {pipeline_mode = #tpu.pipeline_mode<synchronous>, transform_indices = @transform_4, window_bounds = array<i64: 1, 192>}, {transform_indices = @transform_5, window_bounds = array<i64: 32, 192>}]} {
    %c0 = arith.constant 0 : index
    %c0_0 = arith.constant 0 : index
    %0 = vector.load %arg1[%c0, %c0_0] : memref<32x64xf32, #tpu.memory_space<vmem>>, vector<32x64xf32>
    %cst = arith.constant dense<0.000000e+00> : vector<32xf32>
    %1 = vector.multi_reduction <add>, %0, %cst [1] : vector<32x64xf32> to vector<32xf32>
    %2 = vector.shape_cast %1 : vector<32xf32> to vector<32x1xf32>
    %cst_1 = arith.constant 6.400000e+01 : f32
    %3 = vector.broadcast %cst_1 : f32 to vector<32x1xf32>
    %4 = arith.divf %2, %3 : vector<32x1xf32>
    %5 = vector.broadcast %4 : vector<32x1xf32> to vector<32x64xf32>
    %6 = arith.subf %0, %5 : vector<32x64xf32>
    %7 = arith.mulf %6, %6 : vector<32x64xf32>
    %cst_2 = arith.constant dense<0.000000e+00> : vector<32xf32>
    %8 = vector.multi_reduction <add>, %7, %cst_2 [1] : vector<32x64xf32> to vector<32xf32>
    %9 = vector.shape_cast %8 : vector<32xf32> to vector<32x1xf32>
    %cst_3 = arith.constant 6.400000e+01 : f32
    %10 = vector.broadcast %cst_3 : f32 to vector<32x1xf32>
    %11 = arith.divf %9, %10 : vector<32x1xf32>
    %12 = vector.broadcast %4 : vector<32x1xf32> to vector<32x64xf32>
    %13 = arith.subf %0, %12 : vector<32x64xf32>
    %cst_4 = arith.constant 9.99999974E-6 : f32
    %14 = vector.broadcast %cst_4 : f32 to vector<32x1xf32>
    %15 = arith.addf %11, %14 : vector<32x1xf32>
    %16 = math.rsqrt %15 : vector<32x1xf32>
    %17 = vector.broadcast %16 : vector<32x1xf32> to vector<32x64xf32>
    %18 = arith.mulf %13, %17 : vector<32x64xf32>
    %c0_5 = arith.constant 0 : index
    %c0_6 = arith.constant 0 : index
    %19 = vector.load %arg2[%c0_5, %c0_6] : memref<1x64xf32, #tpu.memory_space<vmem>>, vector<1x64xf32>
    %20 = vector.broadcast %19 : vector<1x64xf32> to vector<32x64xf32>
    %21 = arith.mulf %18, %20 : vector<32x64xf32>
    %c0_7 = arith.constant 0 : index
    %c0_8 = arith.constant 0 : index
    %22 = vector.load %arg3[%c0_7, %c0_8] : memref<1x64xf32, #tpu.memory_space<vmem>>, vector<1x64xf32>
    %23 = vector.broadcast %22 : vector<1x64xf32> to vector<32x64xf32>
    %24 = arith.addf %21, %23 : vector<32x64xf32>
    %25 = arith.truncf %24 : vector<32x64xf32> to vector<32x64xbf16>
    %c0_9 = arith.constant 0 : index
    %c0_10 = arith.constant 0 : index
    %26 = vector.load %arg4[%c0_9, %c0_10] : memref<64x192xbf16, #tpu.memory_space<vmem>>, vector<64x192xbf16>
    %cst_11 = arith.constant dense<0.000000e+00> : vector<32x192xf32>
    %27 = tpu.matmul %25, %26, %cst_11 {dimension_numbers = #tpu.dot_dimension_numbers<[1], [0], [0], [1], [0, 0, 1, 1], [], []>} : vector<32x64xbf16>, vector<64x192xbf16>, vector<32x192xf32> -> vector<32x192xf32>
    %c0_12 = arith.constant 0 : index
    %c0_13 = arith.constant 0 : index
    %28 = vector.load %arg5[%c0_12, %c0_13] : memref<1x192xf32, #tpu.memory_space<vmem>>, vector<1x192xf32>
    %29 = vector.broadcast %28 : vector<1x192xf32> to vector<32x192xf32>
    %30 = arith.addf %27, %29 : vector<32x192xf32>
    %31 = arith.truncf %30 : vector<32x192xf32> to vector<32x192xbf16>
    %c0_14 = arith.constant 0 : index
    %c0_15 = arith.constant 0 : index
    %32 = vector.load %arg6[%c0_14, %c0_15] : memref<32x192xbf16, #tpu.memory_space<vmem>>, vector<32x192xbf16>
    tpu.vector_store %arg6[%c0_14, %c0_15], %31 {strides = array<i32>} : memref<32x192xbf16, #tpu.memory_space<vmem>>, vector<32x192xbf16>,
    return
  }
  func.func @transform_0(%arg0: i32) -> (i32, i32) {
    %c0_i32 = arith.constant 0 : i32
    %c0_i32_0 = arith.constant 0 : i32
    return %arg0, %c0_i32 : i32, i32
  }
  func.func @transform_1(%arg0: i32) -> (i32, i32) {
    %c0_i32 = arith.constant 0 : i32
    %c0_i32_0 = arith.constant 0 : i32
    %c0_i32_1 = arith.constant 0 : i32
    return %c0_i32, %c0_i32_0 : i32, i32
  }
  func.func @transform_2(%arg0: i32) -> (i32, i32) {
    %c0_i32 = arith.constant 0 : i32
    %c0_i32_0 = arith.constant 0 : i32
    %c0_i32_1 = arith.constant 0 : i32
    return %c0_i32, %c0_i32_0 : i32, i32
  }
  func.func @transform_3(%arg0: i32) -> (i32, i32) {
    %c0_i32 = arith.constant 0 : i32
    %c0_i32_0 = arith.constant 0 : i32
    %c0_i32_1 = arith.constant 0 : i32
    return %c0_i32, %c0_i32_0 : i32, i32
  }
  func.func @transform_4(%arg0: i32) -> (i32, i32) {
    %c0_i32 = arith.constant 0 : i32
    %c0_i32_0 = arith.constant 0 : i32
    %c0_i32_1 = arith.constant 0 : i32
    return %c0_i32, %c0_i32_0 : i32, i32
  }
  func.func @transform_5(%arg0: i32) -> (i32, i32) {
    %c0_i32 = arith.constant 0 : i32
    %c0_i32_0 = arith.constant 0 : i32
    return %arg0, %c0_i32 : i32, i32
  }
}

module attributes {stable_mosaic.version = 11 : i64} {
  func.func @_attn_kernel(%arg0: i32, %arg1: i32, %arg2: memref<3x1x2x16x16xbf16, #tpu.memory_space<vmem>>, %arg3: memref<1x16x16xf32, #tpu.memory_space<vmem>>, %arg4: memref<1x2x16x16xbf16, #tpu.memory_space<vmem>>) attributes {dimension_semantics = [#tpu.dimension_semantics<parallel>, #tpu.dimension_semantics<parallel>], iteration_bounds = array<i64: 1, 4>, scalar_prefetch = 0 : i64, scratch_operands = 0 : i64, tpu.core_type = #tpu.core_type<tc>, window_params = [{transform_indices = @transform_0, window_bounds = array<i64: 3, 1, 2, 16, 16>}, {transform_indices = @transform_1, window_bounds = array<i64: 1, 16, 16>}, {transform_indices = @transform_2, window_bounds = array<i64: 1, 2, 16, 16>}]} {
    %c0 = arith.constant 0 : index
    %c0_0 = arith.constant 0 : index
    %c0_1 = arith.constant 0 : index
    %c0_2 = arith.constant 0 : index
    %c0_3 = arith.constant 0 : index
    %0 = vector.load %arg2[%c0, %c0_0, %c0_1, %c0_2, %c0_3] : memref<3x1x2x16x16xbf16, #tpu.memory_space<vmem>>, vector<1x1x2x16x16xbf16>
    %1 = vector.shape_cast %0 : vector<1x1x2x16x16xbf16> to vector<2x16x16xbf16>
    %c1 = arith.constant 1 : index
    %c0_4 = arith.constant 0 : index
    %c0_5 = arith.constant 0 : index
    %c0_6 = arith.constant 0 : index
    %c0_7 = arith.constant 0 : index
    %2 = vector.load %arg2[%c1, %c0_4, %c0_5, %c0_6, %c0_7] : memref<3x1x2x16x16xbf16, #tpu.memory_space<vmem>>, vector<1x1x2x16x16xbf16>
    %3 = vector.shape_cast %2 : vector<1x1x2x16x16xbf16> to vector<2x16x16xbf16>
    %c2 = arith.constant 2 : index
    %c0_8 = arith.constant 0 : index
    %c0_9 = arith.constant 0 : index
    %c0_10 = arith.constant 0 : index
    %c0_11 = arith.constant 0 : index
    %4 = vector.load %arg2[%c2, %c0_8, %c0_9, %c0_10, %c0_11] : memref<3x1x2x16x16xbf16, #tpu.memory_space<vmem>>, vector<1x1x2x16x16xbf16>
    %5 = vector.shape_cast %4 : vector<1x1x2x16x16xbf16> to vector<2x16x16xbf16>
    "tpu.trace_start"() <{level = 10 : i32, message = "wqd,wkd->wqk"}> : () -> ()
    %cst = arith.constant dense<0.000000e+00> : vector<2x16x16xf32>
    %6 = tpu.matmul %1, %3, %cst {dimension_numbers = #tpu.dot_dimension_numbers<[2], [2], [1], [1], [0, 0, 0, 1, 1, 1], [0], [0]>} : vector<2x16x16xbf16>, vector<2x16x16xbf16>, vector<2x16x16xf32> -> vector<2x16x16xf32>
    "tpu.trace_stop"() : () -> ()
    %cst_12 = arith.constant 2.500000e-01 : f32
    %7 = vector.broadcast %cst_12 : f32 to vector<2x16x16xf32>
    %8 = arith.mulf %6, %7 : vector<2x16x16xf32>
    %c0_13 = arith.constant 0 : index
    %c0_14 = arith.constant 0 : index
    %c0_15 = arith.constant 0 : index
    %9 = vector.load %arg3[%c0_13, %c0_14, %c0_15] : memref<1x16x16xf32, #tpu.memory_space<vmem>>, vector<1x16x16xf32>
    %10 = vector.shape_cast %9 : vector<1x16x16xf32> to vector<16x16xf32>
    %11 = vector.shape_cast %10 : vector<16x16xf32> to vector<1x16x16xf32>
    %12 = vector.broadcast %11 : vector<1x16x16xf32> to vector<2x16x16xf32>
    %13 = arith.addf %8, %12 : vector<2x16x16xf32>
    %cst_16 = arith.constant dense<0xFF800000> : vector<2x16xf32>
    %14 = vector.multi_reduction <maximumf>, %13, %cst_16 [2] : vector<2x16x16xf32> to vector<2x16xf32>
    %15 = vector.shape_cast %14 : vector<2x16xf32> to vector<2x16x1xf32>
    %16 = vector.broadcast %15 : vector<2x16x1xf32> to vector<2x16x16xf32>
    %17 = arith.subf %13, %16 : vector<2x16x16xf32>
    %18 = math.exp %17 : vector<2x16x16xf32>
    %cst_17 = arith.constant dense<0.000000e+00> : vector<2x16xf32>
    %19 = vector.multi_reduction <add>, %18, %cst_17 [2] : vector<2x16x16xf32> to vector<2x16xf32>
    %20 = vector.shape_cast %19 : vector<2x16xf32> to vector<2x16x1xf32>
    %21 = tpu.reciprocal %20 {approx = true} : vector<2x16x1xf32> -> vector<2x16x1xf32>
    %22 = vector.broadcast %21 : vector<2x16x1xf32> to vector<2x16x16xf32>
    %23 = arith.mulf %18, %22 : vector<2x16x16xf32>
    %24 = arith.truncf %23 : vector<2x16x16xf32> to vector<2x16x16xbf16>
    "tpu.trace_start"() <{level = 10 : i32, message = "wqk,wkd->wqd"}> : () -> ()
    %cst_18 = arith.constant dense<0.000000e+00> : vector<2x16x16xf32>
    %25 = tpu.matmul %24, %5, %cst_18 {dimension_numbers = #tpu.dot_dimension_numbers<[2], [1], [1], [2], [0, 0, 0, 1, 1, 2], [0], [0]>} : vector<2x16x16xbf16>, vector<2x16x16xbf16>, vector<2x16x16xf32> -> vector<2x16x16xf32>
    "tpu.trace_stop"() : () -> ()
    %26 = arith.truncf %25 : vector<2x16x16xf32> to vector<2x16x16xbf16>
    %c0_19 = arith.constant 0 : index
    %c0_20 = arith.constant 0 : index
    %c0_21 = arith.constant 0 : index
    %c0_22 = arith.constant 0 : index
    %27 = vector.load %arg4[%c0_19, %c0_20, %c0_21, %c0_22] : memref<1x2x16x16xbf16, #tpu.memory_space<vmem>>, vector<1x2x16x16xbf16>
    %28 = vector.shape_cast %27 : vector<1x2x16x16xbf16> to vector<2x16x16xbf16>
    %29 = vector.shape_cast %26 : vector<2x16x16xbf16> to vector<1x2x16x16xbf16>
    tpu.vector_store %arg4[%c0_19, %c0_20, %c0_21, %c0_22], %29 {strides = array<i32>} : memref<1x2x16x16xbf16, #tpu.memory_space<vmem>>, vector<1x2x16x16xbf16>,
    return
  }
  func.func @transform_0(%arg0: i32, %arg1: i32) -> (i32, i32, i32, i32, i32) {
    %c0_i32 = arith.constant 0 : i32
    %c0_i32_0 = arith.constant 0 : i32
    %c0_i32_1 = arith.constant 0 : i32
    %c0_i32_2 = arith.constant 0 : i32
    return %c0_i32, %arg1, %arg0, %c0_i32_0, %c0_i32_1 : i32, i32, i32, i32, i32
  }
  func.func @transform_1(%arg0: i32, %arg1: i32) -> (i32, i32, i32) {
    %c0_i32 = arith.constant 0 : i32
    %c0_i32_0 = arith.constant 0 : i32
    %c0_i32_1 = arith.constant 0 : i32
    return %arg1, %c0_i32, %c0_i32_0 : i32, i32, i32
  }
  func.func @transform_2(%arg0: i32, %arg1: i32) -> (i32, i32, i32, i32) {
    %c0_i32 = arith.constant 0 : i32
    %c0_i32_0 = arith.constant 0 : i32
    %c0_i32_1 = arith.constant 0 : i32
    return %arg1, %arg0, %c0_i32, %c0_i32_0 : i32, i32, i32, i32
  }
}

module attributes {stable_mosaic.version = 11 : i64} {
  func.func @_linear_residual_kernel(%arg0: i32, %arg1: memref<32x64xbf16, #tpu.memory_space<vmem>>, %arg2: memref<32x64xf32, #tpu.memory_space<vmem>>, %arg3: memref<64x64xbf16, #tpu.memory_space<vmem>>, %arg4: memref<1x64xf32, #tpu.memory_space<vmem>>, %arg5: memref<32x64xf32, #tpu.memory_space<vmem>>) attributes {dimension_semantics = [#tpu.dimension_semantics<parallel>], iteration_bounds = array<i64: 1>, scalar_prefetch = 0 : i64, scratch_operands = 0 : i64, tpu.core_type = #tpu.core_type<tc>, window_params = [{transform_indices = @transform_0, window_bounds = array<i64: 32, 64>}, {transform_indices = @transform_1, window_bounds = array<i64: 32, 64>}, {pipeline_mode = #tpu.pipeline_mode<synchronous>, transform_indices = @transform_2, window_bounds = array<i64: 64, 64>}, {pipeline_mode = #tpu.pipeline_mode<synchronous>, transform_indices = @transform_3, window_bounds = array<i64: 1, 64>}, {transform_indices = @transform_4, window_bounds = array<i64: 32, 64>}]} {
    %c0 = arith.constant 0 : index
    %c0_0 = arith.constant 0 : index
    %0 = vector.load %arg1[%c0, %c0_0] : memref<32x64xbf16, #tpu.memory_space<vmem>>, vector<32x64xbf16>
    %c0_1 = arith.constant 0 : index
    %c0_2 = arith.constant 0 : index
    %1 = vector.load %arg3[%c0_1, %c0_2] : memref<64x64xbf16, #tpu.memory_space<vmem>>, vector<64x64xbf16>
    %cst = arith.constant dense<0.000000e+00> : vector<32x64xf32>
    %2 = tpu.matmul %0, %1, %cst {dimension_numbers = #tpu.dot_dimension_numbers<[1], [0], [0], [1], [0, 0, 1, 1], [], []>} : vector<32x64xbf16>, vector<64x64xbf16>, vector<32x64xf32> -> vector<32x64xf32>
    %c0_3 = arith.constant 0 : index
    %c0_4 = arith.constant 0 : index
    %3 = vector.load %arg4[%c0_3, %c0_4] : memref<1x64xf32, #tpu.memory_space<vmem>>, vector<1x64xf32>
    %4 = vector.broadcast %3 : vector<1x64xf32> to vector<32x64xf32>
    %5 = arith.addf %2, %4 : vector<32x64xf32>
    %c0_5 = arith.constant 0 : index
    %c0_6 = arith.constant 0 : index
    %6 = vector.load %arg2[%c0_5, %c0_6] : memref<32x64xf32, #tpu.memory_space<vmem>>, vector<32x64xf32>
    %7 = arith.addf %6, %5 : vector<32x64xf32>
    %c0_7 = arith.constant 0 : index
    %c0_8 = arith.constant 0 : index
    %8 = vector.load %arg5[%c0_7, %c0_8] : memref<32x64xf32, #tpu.memory_space<vmem>>, vector<32x64xf32>
    tpu.vector_store %arg5[%c0_7, %c0_8], %7 {strides = array<i32>} : memref<32x64xf32, #tpu.memory_space<vmem>>, vector<32x64xf32>,
    return
  }
  func.func @transform_0(%arg0: i32) -> (i32, i32) {
    %c0_i32 = arith.constant 0 : i32
    %c0_i32_0 = arith.constant 0 : i32
    return %arg0, %c0_i32 : i32, i32
  }
  func.func @transform_1(%arg0: i32) -> (i32, i32) {
    %c0_i32 = arith.constant 0 : i32
    %c0_i32_0 = arith.constant 0 : i32
    return %arg0, %c0_i32 : i32, i32
  }
  func.func @transform_2(%arg0: i32) -> (i32, i32) {
    %c0_i32 = arith.constant 0 : i32
    %c0_i32_0 = arith.constant 0 : i32
    %c0_i32_1 = arith.constant 0 : i32
    return %c0_i32, %c0_i32_0 : i32, i32
  }
  func.func @transform_3(%arg0: i32) -> (i32, i32) {
    %c0_i32 = arith.constant 0 : i32
    %c0_i32_0 = arith.constant 0 : i32
    %c0_i32_1 = arith.constant 0 : i32
    return %c0_i32, %c0_i32_0 : i32, i32
  }
  func.func @transform_4(%arg0: i32) -> (i32, i32) {
    %c0_i32 = arith.constant 0 : i32
    %c0_i32_0 = arith.constant 0 : i32
    return %arg0, %c0_i32 : i32, i32
  }
}

module attributes {stable_mosaic.version = 11 : i64} {
  func.func @_ln_mlp_residual_kernel(%arg0: i32, %arg1: i32, %arg2: memref<32x64xf32, #tpu.memory_space<vmem>>, %arg3: memref<1x64xf32, #tpu.memory_space<vmem>>, %arg4: memref<1x64xf32, #tpu.memory_space<vmem>>, %arg5: memref<64x256xbf16, #tpu.memory_space<vmem>>, %arg6: memref<1x256xf32, #tpu.memory_space<vmem>>, %arg7: memref<256x64xbf16, #tpu.memory_space<vmem>>, %arg8: memref<1x64xf32, #tpu.memory_space<vmem>>, %arg9: memref<32x64xf32, #tpu.memory_space<vmem>>, %arg10: memref<32x64xf32, #tpu.memory_space<vmem>>) attributes {dimension_semantics = [#tpu.dimension_semantics<parallel>, #tpu.dimension_semantics<arbitrary>], iteration_bounds = array<i64: 1, 1>, scalar_prefetch = 0 : i64, scratch_operands = 1 : i64, tpu.core_type = #tpu.core_type<tc>, window_params = [{transform_indices = @transform_0, window_bounds = array<i64: 32, 64>}, {pipeline_mode = #tpu.pipeline_mode<synchronous>, transform_indices = @transform_1, window_bounds = array<i64: 1, 64>}, {pipeline_mode = #tpu.pipeline_mode<synchronous>, transform_indices = @transform_2, window_bounds = array<i64: 1, 64>}, {transform_indices = @transform_3, window_bounds = array<i64: 64, 256>}, {transform_indices = @transform_4, window_bounds = array<i64: 1, 256>}, {transform_indices = @transform_5, window_bounds = array<i64: 256, 64>}, {pipeline_mode = #tpu.pipeline_mode<synchronous>, transform_indices = @transform_6, window_bounds = array<i64: 1, 64>}, {transform_indices = @transform_7, window_bounds = array<i64: 32, 64>}]} {
    %c0 = arith.constant 0 : index
    %c0_0 = arith.constant 0 : index
    %0 = vector.load %arg2[%c0, %c0_0] : memref<32x64xf32, #tpu.memory_space<vmem>>, vector<32x64xf32>
    %cst = arith.constant dense<0.000000e+00> : vector<32xf32>
    %1 = vector.multi_reduction <add>, %0, %cst [1] : vector<32x64xf32> to vector<32xf32>
    %2 = vector.shape_cast %1 : vector<32xf32> to vector<32x1xf32>
    %cst_1 = arith.constant 6.400000e+01 : f32
    %3 = vector.broadcast %cst_1 : f32 to vector<32x1xf32>
    %4 = arith.divf %2, %3 : vector<32x1xf32>
    %5 = vector.broadcast %4 : vector<32x1xf32> to vector<32x64xf32>
    %6 = arith.subf %0, %5 : vector<32x64xf32>
    %7 = arith.mulf %6, %6 : vector<32x64xf32>
    %cst_2 = arith.constant dense<0.000000e+00> : vector<32xf32>
    %8 = vector.multi_reduction <add>, %7, %cst_2 [1] : vector<32x64xf32> to vector<32xf32>
    %9 = vector.shape_cast %8 : vector<32xf32> to vector<32x1xf32>
    %cst_3 = arith.constant 6.400000e+01 : f32
    %10 = vector.broadcast %cst_3 : f32 to vector<32x1xf32>
    %11 = arith.divf %9, %10 : vector<32x1xf32>
    %12 = vector.broadcast %4 : vector<32x1xf32> to vector<32x64xf32>
    %13 = arith.subf %0, %12 : vector<32x64xf32>
    %cst_4 = arith.constant 9.99999974E-6 : f32
    %14 = vector.broadcast %cst_4 : f32 to vector<32x1xf32>
    %15 = arith.addf %11, %14 : vector<32x1xf32>
    %16 = math.rsqrt %15 : vector<32x1xf32>
    %17 = vector.broadcast %16 : vector<32x1xf32> to vector<32x64xf32>
    %18 = arith.mulf %13, %17 : vector<32x64xf32>
    %c0_5 = arith.constant 0 : index
    %c0_6 = arith.constant 0 : index
    %19 = vector.load %arg3[%c0_5, %c0_6] : memref<1x64xf32, #tpu.memory_space<vmem>>, vector<1x64xf32>
    %20 = vector.broadcast %19 : vector<1x64xf32> to vector<32x64xf32>
    %21 = arith.mulf %18, %20 : vector<32x64xf32>
    %c0_7 = arith.constant 0 : index
    %c0_8 = arith.constant 0 : index
    %22 = vector.load %arg4[%c0_7, %c0_8] : memref<1x64xf32, #tpu.memory_space<vmem>>, vector<1x64xf32>
    %23 = vector.broadcast %22 : vector<1x64xf32> to vector<32x64xf32>
    %24 = arith.addf %21, %23 : vector<32x64xf32>
    %25 = arith.truncf %24 : vector<32x64xf32> to vector<32x64xbf16>
    %c0_9 = arith.constant 0 : index
    %c0_10 = arith.constant 0 : index
    %26 = vector.load %arg5[%c0_9, %c0_10] : memref<64x256xbf16, #tpu.memory_space<vmem>>, vector<64x256xbf16>
    %cst_11 = arith.constant dense<0.000000e+00> : vector<32x256xf32>
    %27 = tpu.matmul %25, %26, %cst_11 {dimension_numbers = #tpu.dot_dimension_numbers<[1], [0], [0], [1], [0, 0, 1, 1], [], []>} : vector<32x64xbf16>, vector<64x256xbf16>, vector<32x256xf32> -> vector<32x256xf32>
    %c0_12 = arith.constant 0 : index
    %c0_13 = arith.constant 0 : index
    %28 = vector.load %arg6[%c0_12, %c0_13] : memref<1x256xf32, #tpu.memory_space<vmem>>, vector<1x256xf32>
    %29 = vector.broadcast %28 : vector<1x256xf32> to vector<32x256xf32>
    %30 = arith.addf %27, %29 : vector<32x256xf32>
    %cst_14 = arith.constant 5.000000e-01 : f32
    %31 = vector.broadcast %cst_14 : f32 to vector<32x256xf32>
    %32 = arith.mulf %31, %30 : vector<32x256xf32>
    %cst_15 = arith.constant 0.707106769 : f32
    %33 = vector.broadcast %cst_15 : f32 to vector<32x256xf32>
    %34 = arith.mulf %30, %33 : vector<32x256xf32>
    %35 = math.erf %34 : vector<32x256xf32>
    %cst_16 = arith.constant 1.000000e+00 : f32
    %36 = vector.broadcast %cst_16 : f32 to vector<32x256xf32>
    %37 = arith.addf %36, %35 : vector<32x256xf32>
    %38 = arith.mulf %32, %37 : vector<32x256xf32>
    %39 = arith.truncf %38 : vector<32x256xf32> to vector<32x256xbf16>
    %c0_17 = arith.constant 0 : index
    %c0_18 = arith.constant 0 : index
    %40 = vector.load %arg7[%c0_17, %c0_18] : memref<256x64xbf16, #tpu.memory_space<vmem>>, vector<256x64xbf16>
    %cst_19 = arith.constant dense<0.000000e+00> : vector<32x64xf32>
    %41 = tpu.matmul %39, %40, %cst_19 {dimension_numbers = #tpu.dot_dimension_numbers<[1], [0], [0], [1], [0, 0, 1, 1], [], []>} : vector<32x256xbf16>, vector<256x64xbf16>, vector<32x64xf32> -> vector<32x64xf32>
    %c0_i32 = arith.constant 0 : i32
    %42 = arith.cmpi eq, %arg1, %c0_i32 : i32
    %43 = arith.extui %42 : i1 to i32
    %c0_i32_20 = arith.constant 0 : i32
    %44 = arith.cmpi ne, %43, %c0_i32_20 : i32
    scf.if %44 {
      %c0_27 = arith.constant 0 : index
      %c0_28 = arith.constant 0 : index
      %51 = vector.load %arg8[%c0_27, %c0_28] : memref<1x64xf32, #tpu.memory_space<vmem>>, vector<1x64xf32>
      %52 = vector.broadcast %51 : vector<1x64xf32> to vector<32x64xf32>
      %53 = arith.addf %0, %52 : vector<32x64xf32>
      %c0_29 = arith.constant 0 : index
      %c0_30 = arith.constant 0 : index
      %54 = vector.load %arg10[%c0_29, %c0_30] : memref<32x64xf32, #tpu.memory_space<vmem>>, vector<32x64xf32>
      tpu.vector_store %arg10[%c0_29, %c0_30], %53 {strides = array<i32>} : memref<32x64xf32, #tpu.memory_space<vmem>>, vector<32x64xf32>,
    } else {
    }
    %c0_21 = arith.constant 0 : index
    %c0_22 = arith.constant 0 : index
    %45 = vector.load %arg10[%c0_21, %c0_22] : memref<32x64xf32, #tpu.memory_space<vmem>>, vector<32x64xf32>
    %46 = arith.addf %45, %41 : vector<32x64xf32>
    %c0_23 = arith.constant 0 : index
    %c0_24 = arith.constant 0 : index
    %47 = vector.load %arg10[%c0_23, %c0_24] : memref<32x64xf32, #tpu.memory_space<vmem>>, vector<32x64xf32>
    tpu.vector_store %arg10[%c0_23, %c0_24], %46 {strides = array<i32>} : memref<32x64xf32, #tpu.memory_space<vmem>>, vector<32x64xf32>,
    %c0_i32_25 = arith.constant 0 : i32
    %48 = arith.cmpi eq, %arg1, %c0_i32_25 : i32
    %49 = arith.extui %48 : i1 to i32
    %c0_i32_26 = arith.constant 0 : i32
    %50 = arith.cmpi ne, %49, %c0_i32_26 : i32
    scf.if %50 {
      %c0_27 = arith.constant 0 : index
      %c0_28 = arith.constant 0 : index
      %51 = vector.load %arg10[%c0_27, %c0_28] : memref<32x64xf32, #tpu.memory_space<vmem>>, vector<32x64xf32>
      %c0_29 = arith.constant 0 : index
      %c0_30 = arith.constant 0 : index
      %52 = vector.load %arg9[%c0_29, %c0_30] : memref<32x64xf32, #tpu.memory_space<vmem>>, vector<32x64xf32>
      tpu.vector_store %arg9[%c0_29, %c0_30], %51 {strides = array<i32>} : memref<32x64xf32, #tpu.memory_space<vmem>>, vector<32x64xf32>,
    } else {
    }
    return
  }
  func.func @transform_0(%arg0: i32, %arg1: i32) -> (i32, i32) {
    %c0_i32 = arith.constant 0 : i32
    %c0_i32_0 = arith.constant 0 : i32
    return %arg0, %c0_i32 : i32, i32
  }
  func.func @transform_1(%arg0: i32, %arg1: i32) -> (i32, i32) {
    %c0_i32 = arith.constant 0 : i32
    %c0_i32_0 = arith.constant 0 : i32
    %c0_i32_1 = arith.constant 0 : i32
    return %c0_i32, %c0_i32_0 : i32, i32
  }
  func.func @transform_2(%arg0: i32, %arg1: i32) -> (i32, i32) {
    %c0_i32 = arith.constant 0 : i32
    %c0_i32_0 = arith.constant 0 : i32
    %c0_i32_1 = arith.constant 0 : i32
    return %c0_i32, %c0_i32_0 : i32, i32
  }
  func.func @transform_3(%arg0: i32, %arg1: i32) -> (i32, i32) {
    %c0_i32 = arith.constant 0 : i32
    %c0_i32_0 = arith.constant 0 : i32
    return %c0_i32, %arg1 : i32, i32
  }
  func.func @transform_4(%arg0: i32, %arg1: i32) -> (i32, i32) {
    %c0_i32 = arith.constant 0 : i32
    %c0_i32_0 = arith.constant 0 : i32
    return %c0_i32, %arg1 : i32, i32
  }
  func.func @transform_5(%arg0: i32, %arg1: i32) -> (i32, i32) {
    %c0_i32 = arith.constant 0 : i32
    %c0_i32_0 = arith.constant 0 : i32
    return %arg1, %c0_i32 : i32, i32
  }
  func.func @transform_6(%arg0: i32, %arg1: i32) -> (i32, i32) {
    %c0_i32 = arith.constant 0 : i32
    %c0_i32_0 = arith.constant 0 : i32
    %c0_i32_1 = arith.constant 0 : i32
    return %c0_i32, %c0_i32_0 : i32, i32
  }
  func.func @transform_7(%arg0: i32, %arg1: i32) -> (i32, i32) {
    %c0_i32 = arith.constant 0 : i32
    %c0_i32_0 = arith.constant 0 : i32
    return %arg0, %c0_i32 : i32, i32
  }
}

module attributes {stable_mosaic.version = 11 : i64} {
  func.func @_attn_kernel(%arg0: i32, %arg1: i32, %arg2: memref<3x1x2x16x16xbf16, #tpu.memory_space<vmem>>, %arg3: memref<1x16x16xf32, #tpu.memory_space<vmem>>, %arg4: memref<2x16x16xf32, #tpu.memory_space<vmem>>, %arg5: memref<1x2x16x16xbf16, #tpu.memory_space<vmem>>) attributes {dimension_semantics = [#tpu.dimension_semantics<parallel>, #tpu.dimension_semantics<parallel>], iteration_bounds = array<i64: 1, 4>, scalar_prefetch = 0 : i64, scratch_operands = 0 : i64, tpu.core_type = #tpu.core_type<tc>, window_params = [{transform_indices = @transform_0, window_bounds = array<i64: 3, 1, 2, 16, 16>}, {transform_indices = @transform_1, window_bounds = array<i64: 1, 16, 16>}, {pipeline_mode = #tpu.pipeline_mode<synchronous>, transform_indices = @transform_2, window_bounds = array<i64: 2, 16, 16>}, {transform_indices = @transform_3, window_bounds = array<i64: 1, 2, 16, 16>}]} {
    %c0 = arith.constant 0 : index
    %c0_0 = arith.constant 0 : index
    %c0_1 = arith.constant 0 : index
    %c0_2 = arith.constant 0 : index
    %c0_3 = arith.constant 0 : index
    %0 = vector.load %arg2[%c0, %c0_0, %c0_1, %c0_2, %c0_3] : memref<3x1x2x16x16xbf16, #tpu.memory_space<vmem>>, vector<1x1x2x16x16xbf16>
    %1 = vector.shape_cast %0 : vector<1x1x2x16x16xbf16> to vector<2x16x16xbf16>
    %c1 = arith.constant 1 : index
    %c0_4 = arith.constant 0 : index
    %c0_5 = arith.constant 0 : index
    %c0_6 = arith.constant 0 : index
    %c0_7 = arith.constant 0 : index
    %2 = vector.load %arg2[%c1, %c0_4, %c0_5, %c0_6, %c0_7] : memref<3x1x2x16x16xbf16, #tpu.memory_space<vmem>>, vector<1x1x2x16x16xbf16>
    %3 = vector.shape_cast %2 : vector<1x1x2x16x16xbf16> to vector<2x16x16xbf16>
    %c2 = arith.constant 2 : index
    %c0_8 = arith.constant 0 : index
    %c0_9 = arith.constant 0 : index
    %c0_10 = arith.constant 0 : index
    %c0_11 = arith.constant 0 : index
    %4 = vector.load %arg2[%c2, %c0_8, %c0_9, %c0_10, %c0_11] : memref<3x1x2x16x16xbf16, #tpu.memory_space<vmem>>, vector<1x1x2x16x16xbf16>
    %5 = vector.shape_cast %4 : vector<1x1x2x16x16xbf16> to vector<2x16x16xbf16>
    "tpu.trace_start"() <{level = 10 : i32, message = "wqd,wkd->wqk"}> : () -> ()
    %cst = arith.constant dense<0.000000e+00> : vector<2x16x16xf32>
    %6 = tpu.matmul %1, %3, %cst {dimension_numbers = #tpu.dot_dimension_numbers<[2], [2], [1], [1], [0, 0, 0, 1, 1, 1], [0], [0]>} : vector<2x16x16xbf16>, vector<2x16x16xbf16>, vector<2x16x16xf32> -> vector<2x16x16xf32>
    "tpu.trace_stop"() : () -> ()
    %cst_12 = arith.constant 2.500000e-01 : f32
    %7 = vector.broadcast %cst_12 : f32 to vector<2x16x16xf32>
    %8 = arith.mulf %6, %7 : vector<2x16x16xf32>
    %c0_13 = arith.constant 0 : index
    %c0_14 = arith.constant 0 : index
    %c0_15 = arith.constant 0 : index
    %9 = vector.load %arg3[%c0_13, %c0_14, %c0_15] : memref<1x16x16xf32, #tpu.memory_space<vmem>>, vector<1x16x16xf32>
    %10 = vector.shape_cast %9 : vector<1x16x16xf32> to vector<16x16xf32>
    %11 = vector.shape_cast %10 : vector<16x16xf32> to vector<1x16x16xf32>
    %12 = vector.broadcast %11 : vector<1x16x16xf32> to vector<2x16x16xf32>
    %13 = arith.addf %8, %12 : vector<2x16x16xf32>
    %c0_16 = arith.constant 0 : index
    %c0_17 = arith.constant 0 : index
    %c0_18 = arith.constant 0 : index
    %14 = vector.load %arg4[%c0_16, %c0_17, %c0_18] : memref<2x16x16xf32, #tpu.memory_space<vmem>>, vector<2x16x16xf32>
    %15 = arith.addf %13, %14 : vector<2x16x16xf32>
    %cst_19 = arith.constant dense<0xFF800000> : vector<2x16xf32>
    %16 = vector.multi_reduction <maximumf>, %15, %cst_19 [2] : vector<2x16x16xf32> to vector<2x16xf32>
    %17 = vector.shape_cast %16 : vector<2x16xf32> to vector<2x16x1xf32>
    %18 = vector.broadcast %17 : vector<2x16x1xf32> to vector<2x16x16xf32>
    %19 = arith.subf %15, %18 : vector<2x16x16xf32>
    %20 = math.exp %19 : vector<2x16x16xf32>
    %cst_20 = arith.constant dense<0.000000e+00> : vector<2x16xf32>
    %21 = vector.multi_reduction <add>, %20, %cst_20 [2] : vector<2x16x16xf32> to vector<2x16xf32>
    %22 = vector.shape_cast %21 : vector<2x16xf32> to vector<2x16x1xf32>
    %23 = tpu.reciprocal %22 {approx = true} : vector<2x16x1xf32> -> vector<2x16x1xf32>
    %24 = vector.broadcast %23 : vector<2x16x1xf32> to vector<2x16x16xf32>
    %25 = arith.mulf %20, %24 : vector<2x16x16xf32>
    %26 = arith.truncf %25 : vector<2x16x16xf32> to vector<2x16x16xbf16>
    "tpu.trace_start"() <{level = 10 : i32, message = "wqk,wkd->wqd"}> : () -> ()
    %cst_21 = arith.constant dense<0.000000e+00> : vector<2x16x16xf32>
    %27 = tpu.matmul %26, %5, %cst_21 {dimension_numbers = #tpu.dot_dimension_numbers<[2], [1], [1], [2], [0, 0, 0, 1, 1, 2], [0], [0]>} : vector<2x16x16xbf16>, vector<2x16x16xbf16>, vector<2x16x16xf32> -> vector<2x16x16xf32>
    "tpu.trace_stop"() : () -> ()
    %28 = arith.truncf %27 : vector<2x16x16xf32> to vector<2x16x16xbf16>
    %c0_22 = arith.constant 0 : index
    %c0_23 = arith.constant 0 : index
    %c0_24 = arith.constant 0 : index
    %c0_25 = arith.constant 0 : index
    %29 = vector.load %arg5[%c0_22, %c0_23, %c0_24, %c0_25] : memref<1x2x16x16xbf16, #tpu.memory_space<vmem>>, vector<1x2x16x16xbf16>
    %30 = vector.shape_cast %29 : vector<1x2x16x16xbf16> to vector<2x16x16xbf16>
    %31 = vector.shape_cast %28 : vector<2x16x16xbf16> to vector<1x2x16x16xbf16>
    tpu.vector_store %arg5[%c0_22, %c0_23, %c0_24, %c0_25], %31 {strides = array<i32>} : memref<1x2x16x16xbf16, #tpu.memory_space<vmem>>, vector<1x2x16x16xbf16>,
    return
  }
  func.func @transform_0(%arg0: i32, %arg1: i32) -> (i32, i32, i32, i32, i32) {
    %c0_i32 = arith.constant 0 : i32
    %c0_i32_0 = arith.constant 0 : i32
    %c0_i32_1 = arith.constant 0 : i32
    %c0_i32_2 = arith.constant 0 : i32
    return %c0_i32, %arg1, %arg0, %c0_i32_0, %c0_i32_1 : i32, i32, i32, i32, i32
  }
  func.func @transform_1(%arg0: i32, %arg1: i32) -> (i32, i32, i32) {
    %c0_i32 = arith.constant 0 : i32
    %c0_i32_0 = arith.constant 0 : i32
    %c0_i32_1 = arith.constant 0 : i32
    return %arg1, %c0_i32, %c0_i32_0 : i32, i32, i32
  }
  func.func @transform_2(%arg0: i32, %arg1: i32) -> (i32, i32, i32) {
    %c0_i32 = arith.constant 0 : i32
    %c0_i32_0 = arith.constant 0 : i32
    %c0_i32_1 = arith.constant 0 : i32
    %c0_i32_2 = arith.constant 0 : i32
    return %c0_i32, %c0_i32_0, %c0_i32_1 : i32, i32, i32
  }
  func.func @transform_3(%arg0: i32, %arg1: i32) -> (i32, i32, i32, i32) {
    %c0_i32 = arith.constant 0 : i32
    %c0_i32_0 = arith.constant 0 : i32
    %c0_i32_1 = arith.constant 0 : i32
    return %arg1, %arg0, %c0_i32, %c0_i32_0 : i32, i32, i32, i32
  }
}

module attributes {stable_mosaic.version = 11 : i64} {
  func.func @_norm_pool_head_kernel(%arg0: i32, %arg1: memref<2x16x64xf32, #tpu.memory_space<vmem>>, %arg2: memref<1x64xf32, #tpu.memory_space<vmem>>, %arg3: memref<1x64xf32, #tpu.memory_space<vmem>>, %arg4: memref<64x128xbf16, #tpu.memory_space<vmem>>, %arg5: memref<1x128xf32, #tpu.memory_space<vmem>>, %arg6: memref<2x128xf32, #tpu.memory_space<vmem>>) attributes {dimension_semantics = [#tpu.dimension_semantics<parallel>], iteration_bounds = array<i64: 1>, scalar_prefetch = 0 : i64, scratch_operands = 0 : i64, tpu.core_type = #tpu.core_type<tc>, window_params = [{transform_indices = @transform_0, window_bounds = array<i64: 2, 16, 64>}, {pipeline_mode = #tpu.pipeline_mode<synchronous>, transform_indices = @transform_1, window_bounds = array<i64: 1, 64>}, {pipeline_mode = #tpu.pipeline_mode<synchronous>, transform_indices = @transform_2, window_bounds = array<i64: 1, 64>}, {pipeline_mode = #tpu.pipeline_mode<synchronous>, transform_indices = @transform_3, window_bounds = array<i64: 64, 128>}, {pipeline_mode = #tpu.pipeline_mode<synchronous>, transform_indices = @transform_4, window_bounds = array<i64: 1, 128>}, {transform_indices = @transform_5, window_bounds = array<i64: 2, 128>}]} {
    %c0 = arith.constant 0 : index
    %c0_0 = arith.constant 0 : index
    %c0_1 = arith.constant 0 : index
    %0 = vector.load %arg1[%c0, %c0_0, %c0_1] : memref<2x16x64xf32, #tpu.memory_space<vmem>>, vector<2x16x64xf32>
    %cst = arith.constant dense<0.000000e+00> : vector<2x16xf32>
    %1 = vector.multi_reduction <add>, %0, %cst [2] : vector<2x16x64xf32> to vector<2x16xf32>
    %2 = vector.shape_cast %1 : vector<2x16xf32> to vector<2x16x1xf32>
    %cst_2 = arith.constant 6.400000e+01 : f32
    %3 = vector.broadcast %cst_2 : f32 to vector<2x16x1xf32>
    %4 = arith.divf %2, %3 : vector<2x16x1xf32>
    %5 = vector.broadcast %4 : vector<2x16x1xf32> to vector<2x16x64xf32>
    %6 = arith.subf %0, %5 : vector<2x16x64xf32>
    %7 = arith.mulf %6, %6 : vector<2x16x64xf32>
    %cst_3 = arith.constant dense<0.000000e+00> : vector<2x16xf32>
    %8 = vector.multi_reduction <add>, %7, %cst_3 [2] : vector<2x16x64xf32> to vector<2x16xf32>
    %9 = vector.shape_cast %8 : vector<2x16xf32> to vector<2x16x1xf32>
    %cst_4 = arith.constant 6.400000e+01 : f32
    %10 = vector.broadcast %cst_4 : f32 to vector<2x16x1xf32>
    %11 = arith.divf %9, %10 : vector<2x16x1xf32>
    %12 = vector.broadcast %4 : vector<2x16x1xf32> to vector<2x16x64xf32>
    %13 = arith.subf %0, %12 : vector<2x16x64xf32>
    %cst_5 = arith.constant 9.99999974E-6 : f32
    %14 = vector.broadcast %cst_5 : f32 to vector<2x16x1xf32>
    %15 = arith.addf %11, %14 : vector<2x16x1xf32>
    %16 = math.rsqrt %15 : vector<2x16x1xf32>
    %17 = vector.broadcast %16 : vector<2x16x1xf32> to vector<2x16x64xf32>
    %18 = arith.mulf %13, %17 : vector<2x16x64xf32>
    %c0_6 = arith.constant 0 : index
    %c0_7 = arith.constant 0 : index
    %19 = vector.load %arg2[%c0_6, %c0_7] : memref<1x64xf32, #tpu.memory_space<vmem>>, vector<1x64xf32>
    %20 = vector.shape_cast %19 : vector<1x64xf32> to vector<1x1x64xf32>
    %21 = vector.broadcast %20 : vector<1x1x64xf32> to vector<2x16x64xf32>
    %22 = arith.mulf %18, %21 : vector<2x16x64xf32>
    %c0_8 = arith.constant 0 : index
    %c0_9 = arith.constant 0 : index
    %23 = vector.load %arg3[%c0_8, %c0_9] : memref<1x64xf32, #tpu.memory_space<vmem>>, vector<1x64xf32>
    %24 = vector.shape_cast %23 : vector<1x64xf32> to vector<1x1x64xf32>
    %25 = vector.broadcast %24 : vector<1x1x64xf32> to vector<2x16x64xf32>
    %26 = arith.addf %22, %25 : vector<2x16x64xf32>
    %cst_10 = arith.constant dense<0.000000e+00> : vector<2x64xf32>
    %27 = vector.multi_reduction <add>, %26, %cst_10 [1] : vector<2x16x64xf32> to vector<2x64xf32>
    %cst_11 = arith.constant 1.600000e+01 : f32
    %28 = vector.broadcast %cst_11 : f32 to vector<2x64xf32>
    %29 = arith.divf %27, %28 : vector<2x64xf32>
    %30 = arith.truncf %29 : vector<2x64xf32> to vector<2x64xbf16>
    %c0_12 = arith.constant 0 : index
    %c0_13 = arith.constant 0 : index
    %31 = vector.load %arg4[%c0_12, %c0_13] : memref<64x128xbf16, #tpu.memory_space<vmem>>, vector<64x128xbf16>
    %cst_14 = arith.constant dense<0.000000e+00> : vector<2x128xf32>
    %32 = tpu.matmul %30, %31, %cst_14 {dimension_numbers = #tpu.dot_dimension_numbers<[1], [0], [0], [1], [0, 0, 1, 1], [], []>} : vector<2x64xbf16>, vector<64x128xbf16>, vector<2x128xf32> -> vector<2x128xf32>
    %c0_15 = arith.constant 0 : index
    %c0_16 = arith.constant 0 : index
    %33 = vector.load %arg5[%c0_15, %c0_16] : memref<1x128xf32, #tpu.memory_space<vmem>>, vector<1x128xf32>
    %34 = vector.broadcast %33 : vector<1x128xf32> to vector<2x128xf32>
    %35 = arith.addf %32, %34 : vector<2x128xf32>
    %c0_17 = arith.constant 0 : index
    %c0_18 = arith.constant 0 : index
    %36 = vector.load %arg6[%c0_17, %c0_18] : memref<2x128xf32, #tpu.memory_space<vmem>>, vector<2x128xf32>
    tpu.vector_store %arg6[%c0_17, %c0_18], %35 {strides = array<i32>} : memref<2x128xf32, #tpu.memory_space<vmem>>, vector<2x128xf32>,
    return
  }
  func.func @transform_0(%arg0: i32) -> (i32, i32, i32) {
    %c0_i32 = arith.constant 0 : i32
    %c0_i32_0 = arith.constant 0 : i32
    %c0_i32_1 = arith.constant 0 : i32
    return %arg0, %c0_i32, %c0_i32_0 : i32, i32, i32
  }
  func.func @transform_1(%arg0: i32) -> (i32, i32) {
    %c0_i32 = arith.constant 0 : i32
    %c0_i32_0 = arith.constant 0 : i32
    %c0_i32_1 = arith.constant 0 : i32
    return %c0_i32, %c0_i32_0 : i32, i32
  }
  func.func @transform_2(%arg0: i32) -> (i32, i32) {
    %c0_i32 = arith.constant 0 : i32
    %c0_i32_0 = arith.constant 0 : i32
    %c0_i32_1 = arith.constant 0 : i32
    return %c0_i32, %c0_i32_0 : i32, i32
  }
  func.func @transform_3(%arg0: i32) -> (i32, i32) {
    %c0_i32 = arith.constant 0 : i32
    %c0_i32_0 = arith.constant 0 : i32
    %c0_i32_1 = arith.constant 0 : i32
    return %c0_i32, %c0_i32_0 : i32, i32
  }
  func.func @transform_4(%arg0: i32) -> (i32, i32) {
    %c0_i32 = arith.constant 0 : i32
    %c0_i32_0 = arith.constant 0 : i32
    %c0_i32_1 = arith.constant 0 : i32
    return %c0_i32, %c0_i32_0 : i32, i32
  }
  func.func @transform_5(%arg0: i32) -> (i32, i32) {
    %c0_i32 = arith.constant 0 : i32
    %c0_i32_0 = arith.constant 0 : i32
    return %arg0, %c0_i32 : i32, i32
  }
}

</mosaic_0001>

<llo_original>
// kernel: swin_forward.19
$region0: #{swin_forward.19}
  #allocation0 [shape = 'u32[]', space=smem, size = 0x4, offset = 0x4, fixed_abs, tag = 'smem constant byte address 0x4 - core index']
  #allocation1 [shape = 'u32[144,128]{1,0:T(1,128)}', space=vmem, size = 0x12000, scoped, tag = 'internal scratch']
  %s0 = inlined_call_operand.vmem [shape: f32[128,48], index: 0, kind: input, shape index: {}]
  %s1 = inlined_call_operand.vmem [shape: bf16[48,32], index: 1, kind: input, shape index: {}]
  %s2 = inlined_call_operand.vmem [shape: f32[1,32], index: 2, kind: input, shape index: {}]
  %s3 = inlined_call_operand.vmem [shape: f32[1,32], index: 3, kind: input, shape index: {}]
  %s4 = inlined_call_operand.vmem [shape: f32[1,32], index: 4, kind: input, shape index: {}]
  %s5 = inlined_call_operand.vmem [shape: f32[128,32], index: 5, kind: output, shape index: {}]
  %s6 = sld [smem:[#allocation0]]
  $region30: #{swin_forward.19} parent=0
    _
  %s8 = ssub.s32 1, %s6
  %s9 = scalar_select 0, %s8, %s6
  // Predicated region
  $region2: #{swin_forward.19} parent=0 // pred_check
    _
  $region3: #{swin_forward.19} parent=0 // pred_check_branch
    %11 = sbr.rel (0) target = $region5
  $region4: #{swin_forward.19} parent=0 // pred_region
    _
  $region5: #{swin_forward.19} parent=0 // pred_fallthru
    _
  // Predicated region
  $region6: #{swin_forward.19} parent=0 // pred_check
    _
  $region7: #{swin_forward.19} parent=0 // pred_check_branch
    %13 = sbr.rel (0) target = $region9
  $region8: #{swin_forward.19} parent=0 // pred_region
    _
  $region9: #{swin_forward.19} parent=0 // pred_fallthru
    _
  // Predicated region
  $region10: #{swin_forward.19} parent=0 // pred_check
    _
  $region11: #{swin_forward.19} parent=0 // pred_check_branch
    %15 = sbr.rel (0) target = $region13
  $region12: #{swin_forward.19} parent=0 // pred_region
    _
  $region13: #{swin_forward.19} parent=0 // pred_fallthru
    _
  // Predicated region
  $region14: #{swin_forward.19} parent=0 // pred_check
    _
  $region15: #{swin_forward.19} parent=0 // pred_check_branch
    %17 = sbr.rel (0) target = $region17
  $region16: #{swin_forward.19} parent=0 // pred_region
    _
  $region17: #{swin_forward.19} parent=0 // pred_fallthru
    _
  // Predicated region
  $region18: #{swin_forward.19} parent=0 // pred_check
    _
  $region19: #{swin_forward.19} parent=0 // pred_check_branch
    %19 = sbr.rel (0) target = $region21
  $region20: #{swin_forward.19} parent=0 // pred_region
    _
  $region21: #{swin_forward.19} parent=0 // pred_fallthru
    _
  %v21 = vld [vmem:[%s0] sm:$0xff]
  %v22 = vld [vmem:[%s0 + $0x8] sm:$0xff]
  %v23 = vld [vmem:[%s0 + $0x10] sm:$0xff]
  %v24 = vld [vmem:[%s0 + $0x18] sm:$0xff]
  %v25 = vld [vmem:[%s0 + $0x20] sm:$0xff]
  %v26 = vld [vmem:[%s0 + $0x28] sm:$0xff]
  %v27 = vld [vmem:[%s0 + $0x30] sm:$0xff]
  %v28 = vld [vmem:[%s0 + $0x38] sm:$0xff]
  %v29 = vld [vmem:[%s0 + $0x40] sm:$0xff]
  %v30 = vld [vmem:[%s0 + $0x48] sm:$0xff]
  %v31 = vld [vmem:[%s0 + $0x50] sm:$0xff]
  %v32 = vld [vmem:[%s0 + $0x58] sm:$0xff]
  %v33 = vld [vmem:[%s0 + $0x60] sm:$0xff]
  %v34 = vld [vmem:[%s0 + $0x68] sm:$0xff]
  %v35 = vld [vmem:[%s0 + $0x70] sm:$0xff]
  %v36 = vld [vmem:[%s0 + $0x78] sm:$0xff]
  %v37 = vpack.c.bf16 %v22, %v21
  %v38 = vpack.c.bf16 %v24, %v23
  %v39 = vpack.c.bf16 %v26, %v25
  %v40 = vpack.c.bf16 %v28, %v27
  %v41 = vpack.c.bf16 %v30, %v29
  %v42 = vpack.c.bf16 %v32, %v31
  %v43 = vpack.c.bf16 %v34, %v33
  %v44 = vpack.c.bf16 %v36, %v35
  %v45 = vld [vmem:[%s1] sm:$0xf]
  %v46 = vld [vmem:[%s1 + $0x4] sm:$0xf]
  %v47 = vld [vmem:[%s1 + $0x8] sm:$0xf]
  %v48 = vld [vmem:[%s1 + $0xc] sm:$0xf]
  %v49 = vld [vmem:[%s1 + $0x10] sm:$0xf]
  %v50 = vld [vmem:[%s1 + $0x14] sm:$0xf]
  %v51 = vld [vmem:[%s2] sm:$0x1]
  %v53 = vlaneseq
  %v54 = vshrl.u32 %v53, 7
  %v55 = vsub.s32 0, %v54
  %v56 = vrot.slane %v51, %v55
  %v64 = vunpack.c.l.b16 %v45
  %v65 = vunpack.c.l.b16 %v46
  %v66 = vunpack.c.l.b16 %v47
  %v67 = vunpack.c.l.b16 %v48
  %v68 = vunpack.c.l.b16 %v49
  %v69 = vunpack.c.l.b16 %v50
  %v70 = vpack.c.b16 %v65, %v64
  %v71 = vpack.c.b16 %v67, %v66
  %v72 = vpack.c.b16 %v69, %v68
  %vm76 = vcmask 392192
  %v78 = vsel %vm76, %v37, 0
  %v81 = vsel %vm76, %v38, 0
  %v84 = vsel %vm76, %v39, 0
  %v87 = vsel %vm76, %v40, 0
  %v90 = vsel %vm76, %v41, 0
  %v93 = vsel %vm76, %v42, 0
  %v96 = vsel %vm76, %v43, 0
  %v99 = vsel %vm76, %v44, 0
  %101 = vmatprep.subr.bf16.mxu0 0
  %102 = vmatpush1.bf16.msra.mxu0 0
  %103 = vmatprep.subr.bf16.mxu0 0
  %104 = vmatpush1.bf16.msra.mxu0 0
  %105 = vmatprep.subr.bf16.mxu0 0
  %106 = vmatpush1.bf16.msra.mxu0 0
  %107 = vmatprep.subr.bf16.mxu0 0
  %108 = vmatpush1.bf16.msra.mxu0 0
  %109 = vmatprep.subr.bf16.mxu0 0
  %110 = vmatpush1.bf16.msra.mxu0 0
  %111 = vmatprep.subr.bf16.mxu0 0
  %112 = vmatpush1.bf16.msra.mxu0 %v72
  %113 = vmatprep.subr.bf16.mxu0 0
  %114 = vmatpush1.bf16.msra.mxu0 %v71
  %115 = vmatprep.subr.bf16.mxu0 0
  %116 = vmatpush1.bf16.msra.mxu0 %v70
  %117 = vmatprep.subr.bf16.mxu0 0
  %118 = vmatpush2.bf16.msra.mxu0 0
  %119 = vmatprep.subr.bf16.mxu0 0
  %120 = vmatpush2.bf16.msra.mxu0 0
  %121 = vmatprep.subr.bf16.mxu0 0
  %122 = vmatpush2.bf16.msra.mxu0 0
  %123 = vmatprep.subr.bf16.mxu0 0
  %124 = vmatpush2.bf16.msra.mxu0 0
  %125 = vmatprep.subr.bf16.mxu0 0
  %126 = vmatpush2.bf16.msra.mxu0 0
  %127 = vmatprep.subr.bf16.mxu0 0
  %128 = vmatpush2.bf16.msra.mxu0 0
  %129 = vmatprep.subr.bf16.mxu0 0
  %130 = vmatpush2.bf16.msra.mxu0 0
  %131 = vmatprep.subr.bf16.mxu0 0
  %132 = vmatpush2.bf16.msra.mxu0 0
  %133 = vmatprep.mubr.bf16.mxu0 0
  %134 = vmatmul.mubr.bf16.gmra.mxu0 %v78
  %v135 = vpop.f32.mrf.mxu0
  %v136 = vadd.f32 %v56, %v135
  %v137 = vpop.f32.mrf.mxu0
  %v138 = vpop.f32.mrf.mxu0
  %v139 = vadd.f32 %v56, %v138
  %v140 = vpop.f32.mrf.mxu0
  %141 = vmatprep.mubr.bf16.mxu0 0
  %142 = vmatmul.mubr.bf16.gmra.mxu0 %v81
  %v143 = vpop.f32.mrf.mxu0
  %v144 = vadd.f32 %v56, %v143
  %v145 = vpop.f32.mrf.mxu0
  %v146 = vpop.f32.mrf.mxu0
  %v147 = vadd.f32 %v56, %v146
  %v148 = vpop.f32.mrf.mxu0
  %149 = vmatprep.mubr.bf16.mxu0 0
  %150 = vmatmul.mubr.bf16.gmra.mxu0 %v84
  %v151 = vpop.f32.mrf.mxu0
  %v152 = vadd.f32 %v56, %v151
  %v153 = vpop.f32.mrf.mxu0
  %v154 = vpop.f32.mrf.mxu0
  %v155 = vadd.f32 %v56, %v154
  %v156 = vpop.f32.mrf.mxu0
  %157 = vmatprep.mubr.bf16.mxu0 0
  %158 = vmatmul.mubr.bf16.gmra.mxu0 %v87
  %v159 = vpop.f32.mrf.mxu0
  %v160 = vadd.f32 %v56, %v159
  %v161 = vpop.f32.mrf.mxu0
  %v162 = vpop.f32.mrf.mxu0
  %v163 = vadd.f32 %v56, %v162
  %v164 = vpop.f32.mrf.mxu0
  %165 = vmatprep.mubr.bf16.mxu0 0
  %166 = vmatmul.mubr.bf16.gmra.mxu0 %v90
  %v167 = vpop.f32.mrf.mxu0
  %v168 = vadd.f32 %v56, %v167
  %v169 = vpop.f32.mrf.mxu0
  %v170 = vpop.f32.mrf.mxu0
  %v171 = vadd.f32 %v56, %v170
  %v172 = vpop.f32.mrf.mxu0
  %173 = vmatprep.mubr.bf16.mxu0 0
  %174 = vmatmul.mubr.bf16.gmra.mxu0 %v93
  %v175 = vpop.f32.mrf.mxu0
  %v176 = vadd.f32 %v56, %v175
  %v177 = vpop.f32.mrf.mxu0
  %v178 = vpop.f32.mrf.mxu0
  %v179 = vadd.f32 %v56, %v178
  %v180 = vpop.f32.mrf.mxu0
  %181 = vmatprep.mubr.bf16.mxu0 0
  %182 = vmatmul.mubr.bf16.gmra.mxu0 %v96
  %v183 = vpop.f32.mrf.mxu0
  %v184 = vadd.f32 %v56, %v183
  %v185 = vpop.f32.mrf.mxu0
  %v186 = vpop.f32.mrf.mxu0
  %v187 = vadd.f32 %v56, %v186
  %v188 = vpop.f32.mrf.mxu0
  %189 = vmatprep.mubr.bf16.mxu0 0
  %190 = vmatmul.mubr.bf16.gmra.mxu0 %v99
  %v191 = vpop.f32.mrf.mxu0
  %v192 = vadd.f32 %v56, %v191
  %v193 = vpop.f32.mrf.mxu0
  %v194 = vpop.f32.mrf.mxu0
  %v195 = vadd.f32 %v56, %v194
  %v196 = vpop.f32.mrf.mxu0
  %197 = vdwg.mxu0
  %vm198 = vcmask 261120
  %v199 = vsel %vm198, %v136, 0.0
  %200 = vadd.xlane.f32.xlu0 %v199
  %v201 = vpop.xlane.xlu0 %200
  %v202 = vsel %vm198, %v139, 0.0
  %203 = vadd.xlane.f32.xlu0 %v202
  %v204 = vpop.xlane.xlu0 %203
  %v205 = vsel %vm198, %v144, 0.0
  %206 = vadd.xlane.f32.xlu0 %v205
  %v207 = vpop.xlane.xlu0 %206
  %v208 = vsel %vm198, %v147, 0.0
  %209 = vadd.xlane.f32.xlu0 %v208
  %v210 = vpop.xlane.xlu0 %209
  %v211 = vsel %vm198, %v152, 0.0
  %212 = vadd.xlane.f32.xlu0 %v211
  %v213 = vpop.xlane.xlu0 %212
  %v214 = vsel %vm198, %v155, 0.0
  %215 = vadd.xlane.f32.xlu0 %v214
  %v216 = vpop.xlane.xlu0 %215
  %v217 = vsel %vm198, %v160, 0.0
  %218 = vadd.xlane.f32.xlu0 %v217
  %v219 = vpop.xlane.xlu0 %218
  %v220 = vsel %vm198, %v163, 0.0
  %221 = vadd.xlane.f32.xlu0 %v220
  %v222 = vpop.xlane.xlu0 %221
  %v223 = vsel %vm198, %v168, 0.0
  %224 = vadd.xlane.f32.xlu0 %v223
  %v225 = vpop.xlane.xlu0 %224
  %v226 = vsel %vm198, %v171, 0.0
  %227 = vadd.xlane.f32.xlu0 %v226
  %v228 = vpop.xlane.xlu0 %227
  %v229 = vsel %vm198, %v176, 0.0
  %230 = vadd.xlane.f32.xlu0 %v229
  %v231 = vpop.xlane.xlu0 %230
  %v232 = vsel %vm198, %v179, 0.0
  %233 = vadd.xlane.f32.xlu0 %v232
  %v234 = vpop.xlane.xlu0 %233
  %v235 = vsel %vm198, %v184, 0.0
  %236 = vadd.xlane.f32.xlu0 %v235
  %v237 = vpop.xlane.xlu0 %236
  %v238 = vsel %vm198, %v187, 0.0
  %239 = vadd.xlane.f32.xlu0 %v238
  %v240 = vpop.xlane.xlu0 %239
  %v241 = vsel %vm198, %v192, 0.0
  %242 = vadd.xlane.f32.xlu0 %v241
  %v243 = vpop.xlane.xlu0 %242
  %v244 = vsel %vm198, %v195, 0.0
  %245 = vadd.xlane.f32.xlu0 %v244
  %v246 = vpop.xlane.xlu0 %245
  %v247 = vrcp.pop 32.0
  %v248 = vmul.f32 %v201, %v247
  %v249 = vmul.f32 %v204, %v247
  %v250 = vmul.f32 %v207, %v247
  %v251 = vmul.f32 %v210, %v247
  %v252 = vmul.f32 %v213, %v247
  %v253 = vmul.f32 %v216, %v247
  %v254 = vmul.f32 %v219, %v247
  %v255 = vmul.f32 %v222, %v247
  %v256 = vmul.f32 %v225, %v247
  %v257 = vmul.f32 %v228, %v247
  %v258 = vmul.f32 %v231, %v247
  %v259 = vmul.f32 %v234, %v247
  %v260 = vmul.f32 %v237, %v247
  %v261 = vmul.f32 %v240, %v247
  %v262 = vmul.f32 %v243, %v247
  %v263 = vmul.f32 %v246, %v247
  %v264 = vsub.f32 %v136, %v248
  %v265 = vsub.f32 %v139, %v249
  %v266 = vsub.f32 %v144, %v250
  %v267 = vsub.f32 %v147, %v251
  %v268 = vsub.f32 %v152, %v252
  %v269 = vsub.f32 %v155, %v253
  %v270 = vsub.f32 %v160, %v254
  %v271 = vsub.f32 %v163, %v255
  %v272 = vsub.f32 %v168, %v256
  %v273 = vsub.f32 %v171, %v257
  %v274 = vsub.f32 %v176, %v258
  %v275 = vsub.f32 %v179, %v259
  %v276 = vsub.f32 %v184, %v260
  %v277 = vsub.f32 %v187, %v261
  %v278 = vsub.f32 %v192, %v262
  %v279 = vsub.f32 %v195, %v263
  %v280 = vmul.f32 %v264, %v264
  %v281 = vmul.f32 %v265, %v265
  %v282 = vmul.f32 %v266, %v266
  %v283 = vmul.f32 %v267, %v267
  %v284 = vmul.f32 %v268, %v268
  %v285 = vmul.f32 %v269, %v269
  %v286 = vmul.f32 %v270, %v270
  %v287 = vmul.f32 %v271, %v271
  %v288 = vmul.f32 %v272, %v272
  %v289 = vmul.f32 %v273, %v273
  %v290 = vmul.f32 %v274, %v274
  %v291 = vmul.f32 %v275, %v275
  %v292 = vmul.f32 %v276, %v276
  %v293 = vmul.f32 %v277, %v277
  %v294 = vmul.f32 %v278, %v278
  %v295 = vmul.f32 %v279, %v279
  %v296 = vsel %vm198, %v280, 0.0
  %297 = vadd.xlane.f32.xlu0 %v296
  %v298 = vpop.xlane.xlu0 %297
  %v299 = vsel %vm198, %v281, 0.0
  %300 = vadd.xlane.f32.xlu0 %v299
  %v301 = vpop.xlane.xlu0 %300
  %v302 = vsel %vm198, %v282, 0.0
  %303 = vadd.xlane.f32.xlu0 %v302
  %v304 = vpop.xlane.xlu0 %303
  %v305 = vsel %vm198, %v283, 0.0
  %306 = vadd.xlane.f32.xlu0 %v305
  %v307 = vpop.xlane.xlu0 %306
  %v308 = vsel %vm198, %v284, 0.0
  %309 = vadd.xlane.f32.xlu0 %v308
  %v310 = vpop.xlane.xlu0 %309
  %v311 = vsel %vm198, %v285, 0.0
  %312 = vadd.xlane.f32.xlu0 %v311
  %v313 = vpop.xlane.xlu0 %312
  %v314 = vsel %vm198, %v286, 0.0
  %315 = vadd.xlane.f32.xlu0 %v314
  %v316 = vpop.xlane.xlu0 %315
  %v317 = vsel %vm198, %v287, 0.0
  %318 = vadd.xlane.f32.xlu0 %v317
  %v319 = vpop.xlane.xlu0 %318
  %v320 = vsel %vm198, %v288, 0.0
  %321 = vadd.xlane.f32.xlu0 %v320
  %v322 = vpop.xlane.xlu0 %321
  %v323 = vsel %vm198, %v289, 0.0
  %324 = vadd.xlane.f32.xlu0 %v323
  %v325 = vpop.xlane.xlu0 %324
  %v326 = vsel %vm198, %v290, 0.0
  %327 = vadd.xlane.f32.xlu0 %v326
  %v328 = vpop.xlane.xlu0 %327
  %v329 = vsel %vm198, %v291, 0.0
  %330 = vadd.xlane.f32.xlu0 %v329
  %v331 = vpop.xlane.xlu0 %330
  %v332 = vsel %vm198, %v292, 0.0
  %333 = vadd.xlane.f32.xlu0 %v332
  %v334 = vpop.xlane.xlu0 %333
  %v335 = vsel %vm198, %v293, 0.0
  %336 = vadd.xlane.f32.xlu0 %v335
  %v337 = vpop.xlane.xlu0 %336
  %v338 = vsel %vm198, %v294, 0.0
  %339 = vadd.xlane.f32.xlu0 %v338
  %v340 = vpop.xlane.xlu0 %339
  %v341 = vsel %vm198, %v295, 0.0
  %342 = vadd.xlane.f32.xlu0 %v341
  %v343 = vpop.xlane.xlu0 %342
  %v344 = vmul.f32 %v298, %v247
  %v345 = vmul.f32 %v301, %v247
  %v346 = vmul.f32 %v304, %v247
  %v347 = vmul.f32 %v307, %v247
  %v348 = vmul.f32 %v310, %v247
  %v349 = vmul.f32 %v313, %v247
  %v350 = vmul.f32 %v316, %v247
  %v351 = vmul.f32 %v319, %v247
  %v352 = vmul.f32 %v322, %v247
  %v353 = vmul.f32 %v325, %v247
  %v354 = vmul.f32 %v328, %v247
  %v355 = vmul.f32 %v331, %v247
  %v356 = vmul.f32 %v334, %v247
  %v357 = vmul.f32 %v337, %v247
  %v358 = vmul.f32 %v340, %v247
  %v359 = vmul.f32 %v343, %v247
  %v360 = vadd.f32 %v344, 1e-05
  %v361 = vadd.f32 %v345, 1e-05
  %v362 = vadd.f32 %v346, 1e-05
  %v363 = vadd.f32 %v347, 1e-05
  %v364 = vadd.f32 %v348, 1e-05
  %v365 = vadd.f32 %v349, 1e-05
  %v366 = vadd.f32 %v350, 1e-05
  %v367 = vadd.f32 %v351, 1e-05
  %v368 = vadd.f32 %v352, 1e-05
  %v369 = vadd.f32 %v353, 1e-05
  %v370 = vadd.f32 %v354, 1e-05
  %v371 = vadd.f32 %v355, 1e-05
  %v372 = vadd.f32 %v356, 1e-05
  %v373 = vadd.f32 %v357, 1e-05
  %v374 = vadd.f32 %v358, 1e-05
  %v375 = vadd.f32 %v359, 1e-05
  %v376 = vrsqrt.pop %v360
  %v377 = vrsqrt.pop %v361
  %v378 = vrsqrt.pop %v362
  %v379 = vrsqrt.pop %v363
  %v380 = vrsqrt.pop %v364
  %v381 = vrsqrt.pop %v365
  %v382 = vrsqrt.pop %v366
  %v383 = vrsqrt.pop %v367
  %v384 = vrsqrt.pop %v368
  %v385 = vrsqrt.pop %v369
  %v386 = vrsqrt.pop %v370
  %v387 = vrsqrt.pop %v371
  %v388 = vrsqrt.pop %v372
  %v389 = vrsqrt.pop %v373
  %v390 = vrsqrt.pop %v374
  %v391 = vrsqrt.pop %v375
  %v392 = vmul.f32 %v264, %v376
  %v393 = vmul.f32 %v265, %v377
  %v394 = vmul.f32 %v266, %v378
  %v395 = vmul.f32 %v267, %v379
  %v396 = vmul.f32 %v268, %v380
  %v397 = vmul.f32 %v269, %v381
  %v398 = vmul.f32 %v270, %v382
  %v399 = vmul.f32 %v271, %v383
  %v400 = vmul.f32 %v272, %v384
  %v401 = vmul.f32 %v273, %v385
  %v402 = vmul.f32 %v274, %v386
  %v403 = vmul.f32 %v275, %v387
  %v404 = vmul.f32 %v276, %v388
  %v405 = vmul.f32 %v277, %v389
  %v406 = vmul.f32 %v278, %v390
  %v407 = vmul.f32 %v279, %v391
  %v408 = vld [vmem:[%s3] sm:$0x1]
  %v410 = vlaneseq
  %v411 = vshrl.u32 %v410, 7
  %v412 = vsub.s32 0, %v411
  %v413 = vrot.slane %v408, %v412
  %v415 = vmul.f32 %v392, %v413
  %v416 = vmul.f32 %v393, %v413
  %v417 = vmul.f32 %v394, %v413
  %v418 = vmul.f32 %v395, %v413
  %v419 = vmul.f32 %v396, %v413
  %v420 = vmul.f32 %v397, %v413
  %v421 = vmul.f32 %v398, %v413
  %v422 = vmul.f32 %v399, %v413
  %v423 = vmul.f32 %v400, %v413
  %v424 = vmul.f32 %v401, %v413
  %v425 = vmul.f32 %v402, %v413
  %v426 = vmul.f32 %v403, %v413
  %v427 = vmul.f32 %v404, %v413
  %v428 = vmul.f32 %v405, %v413
  %v429 = vmul.f32 %v406, %v413
  %v430 = vmul.f32 %v407, %v413
  %v431 = vld [vmem:[%s4] sm:$0x1]
  %v433 = vlaneseq
  %v434 = vshrl.u32 %v433, 7
  %v435 = vsub.s32 0, %v434
  %v436 = vrot.slane %v431, %v435
  %v438 = vadd.f32 %v415, %v436
  %v439 = vadd.f32 %v416, %v436
  %v440 = vadd.f32 %v417, %v436
  %v441 = vadd.f32 %v418, %v436
  %v442 = vadd.f32 %v419, %v436
  %v443 = vadd.f32 %v420, %v436
  %v444 = vadd.f32 %v421, %v436
  %v445 = vadd.f32 %v422, %v436
  %v446 = vadd.f32 %v423, %v436
  %v447 = vadd.f32 %v424, %v436
  %v448 = vadd.f32 %v425, %v436
  %v449 = vadd.f32 %v426, %v436
  %v450 = vadd.f32 %v427, %v436
  %v451 = vadd.f32 %v428, %v436
  %v452 = vadd.f32 %v429, %v436
  %v453 = vadd.f32 %v430, %v436
  %454 = vst.msk [vmem:[%s5] sm:$0xff] %vm198, %v438
  %455 = vst.msk [vmem:[%s5 + $0x8] sm:$0xff] %vm198, %v439
  %456 = vst.msk [vmem:[%s5 + $0x10] sm:$0xff] %vm198, %v440
  %457 = vst.msk [vmem:[%s5 + $0x18] sm:$0xff] %vm198, %v441
  %458 = vst.msk [vmem:[%s5 + $0x20] sm:$0xff] %vm198, %v442
  %459 = vst.msk [vmem:[%s5 + $0x28] sm:$0xff] %vm198, %v443
  %460 = vst.msk [vmem:[%s5 + $0x30] sm:$0xff] %vm198, %v444
  %461 = vst.msk [vmem:[%s5 + $0x38] sm:$0xff] %vm198, %v445
  %462 = vst.msk [vmem:[%s5 + $0x40] sm:$0xff] %vm198, %v446
  %463 = vst.msk [vmem:[%s5 + $0x48] sm:$0xff] %vm198, %v447
  %464 = vst.msk [vmem:[%s5 + $0x50] sm:$0xff] %vm198, %v448
  %465 = vst.msk [vmem:[%s5 + $0x58] sm:$0xff] %vm198, %v449
  %466 = vst.msk [vmem:[%s5 + $0x60] sm:$0xff] %vm198, %v450
  %467 = vst.msk [vmem:[%s5 + $0x68] sm:$0xff] %vm198, %v451
  %468 = vst.msk [vmem:[%s5 + $0x70] sm:$0xff] %vm198, %v452
  %469 = vst.msk [vmem:[%s5 + $0x78] sm:$0xff] %vm198, %v453
  // Predicated region
  $region22: #{swin_forward.19} parent=0 // pred_check
    _
  $region23: #{swin_forward.19} parent=0 // pred_check_branch
    %471 = sbr.rel (0) target = $region25
  $region24: #{swin_forward.19} parent=0 // pred_region
    _
  $region25: #{swin_forward.19} parent=0 // pred_fallthru
    _
  // Predicated region
  $region26: #{swin_forward.19} parent=0 // pred_check
    _
  $region27: #{swin_forward.19} parent=0 // pred_check_branch
    %473 = sbr.rel (0) target = $region29
  $region28: #{swin_forward.19} parent=0 // pred_region
    _
  $region29: #{swin_forward.19} parent=0 // pred_fallthru
    _

// kernel: swin_forward.20
$region0: #{swin_forward.20}
  #allocation0 [shape = 'u32[]', space=smem, size = 0x4, offset = 0x4, fixed_abs, tag = 'smem constant byte address 0x4 - core index']
  #allocation1 [shape = 'u32[144,128]{1,0:T(1,128)}', space=vmem, size = 0x12000, scoped, tag = 'internal scratch']
  %s0 = inlined_call_operand.vmem [shape: f32[128,32], index: 0, kind: input, shape index: {}]
  %s1 = inlined_call_operand.vmem [shape: f32[1,32], index: 1, kind: input, shape index: {}]
  %s2 = inlined_call_operand.vmem [shape: f32[1,32], index: 2, kind: input, shape index: {}]
  %s3 = inlined_call_operand.vmem [shape: bf16[32,96], index: 3, kind: input, shape index: {}]
  %s4 = inlined_call_operand.vmem [shape: f32[1,96], index: 4, kind: input, shape index: {}]
  %s5 = inlined_call_operand.vmem [shape: bf16[128,96], index: 5, kind: output, shape index: {}]
  %s6 = sld [smem:[#allocation0]]
  $region30: #{swin_forward.20} parent=0
    _
  %s8 = ssub.s32 1, %s6
  %s9 = scalar_select 0, %s8, %s6
  // Predicated region
  $region2: #{swin_forward.20} parent=0 // pred_check
    _
  $region3: #{swin_forward.20} parent=0 // pred_check_branch
    %11 = sbr.rel (0) target = $region5
  $region4: #{swin_forward.20} parent=0 // pred_region
    _
  $region5: #{swin_forward.20} parent=0 // pred_fallthru
    _
  // Predicated region
  $region6: #{swin_forward.20} parent=0 // pred_check
    _
  $region7: #{swin_forward.20} parent=0 // pred_check_branch
    %13 = sbr.rel (0) target = $region9
  $region8: #{swin_forward.20} parent=0 // pred_region
    _
  $region9: #{swin_forward.20} parent=0 // pred_fallthru
    _
  // Predicated region
  $region10: #{swin_forward.20} parent=0 // pred_check
    _
  $region11: #{swin_forward.20} parent=0 // pred_check_branch
    %15 = sbr.rel (0) target = $region13
  $region12: #{swin_forward.20} parent=0 // pred_region
    _
  $region13: #{swin_forward.20} parent=0 // pred_fallthru
    _
  // Predicated region
  $region14: #{swin_forward.20} parent=0 // pred_check
    _
  $region15: #{swin_forward.20} parent=0 // pred_check_branch
    %17 = sbr.rel (0) target = $region17
  $region16: #{swin_forward.20} parent=0 // pred_region
    _
  $region17: #{swin_forward.20} parent=0 // pred_fallthru
    _
  // Predicated region
  $region18: #{swin_forward.20} parent=0 // pred_check
    _
  $region19: #{swin_forward.20} parent=0 // pred_check_branch
    %19 = sbr.rel (0) target = $region21
  $region20: #{swin_forward.20} parent=0 // pred_region
    _
  $region21: #{swin_forward.20} parent=0 // pred_fallthru
    _
  %v21 = vld [vmem:[%s0] sm:$0xff]
  %v22 = vld [vmem:[%s0 + $0x8] sm:$0xff]
  %v23 = vld [vmem:[%s0 + $0x10] sm:$0xff]
  %v24 = vld [vmem:[%s0 + $0x18] sm:$0xff]
  %v25 = vld [vmem:[%s0 + $0x20] sm:$0xff]
  %v26 = vld [vmem:[%s0 + $0x28] sm:$0xff]
  %v27 = vld [vmem:[%s0 + $0x30] sm:$0xff]
  %v28 = vld [vmem:[%s0 + $0x38] sm:$0xff]
  %v29 = vld [vmem:[%s0 + $0x40] sm:$0xff]
  %v30 = vld [vmem:[%s0 + $0x48] sm:$0xff]
  %v31 = vld [vmem:[%s0 + $0x50] sm:$0xff]
  %v32 = vld [vmem:[%s0 + $0x58] sm:$0xff]
  %v33 = vld [vmem:[%s0 + $0x60] sm:$0xff]
  %v34 = vld [vmem:[%s0 + $0x68] sm:$0xff]
  %v35 = vld [vmem:[%s0 + $0x70] sm:$0xff]
  %v36 = vld [vmem:[%s0 + $0x78] sm:$0xff]
  %vm37 = vcmask 261120
  %v38 = vsel %vm37, %v21, 0.0
  %39 = vadd.xlane.f32.xlu0 %v38
  %v40 = vpop.xlane.xlu0 %39
  %v41 = vsel %vm37, %v22, 0.0
  %42 = vadd.xlane.f32.xlu0 %v41
  %v43 = vpop.xlane.xlu0 %42
  %v44 = vsel %vm37, %v23, 0.0
  %45 = vadd.xlane.f32.xlu0 %v44
  %v46 = vpop.xlane.xlu0 %45
  %v47 = vsel %vm37, %v24, 0.0
  %48 = vadd.xlane.f32.xlu0 %v47
  %v49 = vpop.xlane.xlu0 %48
  %v50 = vsel %vm37, %v25, 0.0
  %51 = vadd.xlane.f32.xlu0 %v50
  %v52 = vpop.xlane.xlu0 %51
  %v53 = vsel %vm37, %v26, 0.0
  %54 = vadd.xlane.f32.xlu0 %v53
  %v55 = vpop.xlane.xlu0 %54
  %v56 = vsel %vm37, %v27, 0.0
  %57 = vadd.xlane.f32.xlu0 %v56
  %v58 = vpop.xlane.xlu0 %57
  %v59 = vsel %vm37, %v28, 0.0
  %60 = vadd.xlane.f32.xlu0 %v59
  %v61 = vpop.xlane.xlu0 %60
  %v62 = vsel %vm37, %v29, 0.0
  %63 = vadd.xlane.f32.xlu0 %v62
  %v64 = vpop.xlane.xlu0 %63
  %v65 = vsel %vm37, %v30, 0.0
  %66 = vadd.xlane.f32.xlu0 %v65
  %v67 = vpop.xlane.xlu0 %66
  %v68 = vsel %vm37, %v31, 0.0
  %69 = vadd.xlane.f32.xlu0 %v68
  %v70 = vpop.xlane.xlu0 %69
  %v71 = vsel %vm37, %v32, 0.0
  %72 = vadd.xlane.f32.xlu0 %v71
  %v73 = vpop.xlane.xlu0 %72
  %v74 = vsel %vm37, %v33, 0.0
  %75 = vadd.xlane.f32.xlu0 %v74
  %v76 = vpop.xlane.xlu0 %75
  %v77 = vsel %vm37, %v34, 0.0
  %78 = vadd.xlane.f32.xlu0 %v77
  %v79 = vpop.xlane.xlu0 %78
  %v80 = vsel %vm37, %v35, 0.0
  %81 = vadd.xlane.f32.xlu0 %v80
  %v82 = vpop.xlane.xlu0 %81
  %v83 = vsel %vm37, %v36, 0.0
  %84 = vadd.xlane.f32.xlu0 %v83
  %v85 = vpop.xlane.xlu0 %84
  %v86 = vrcp.pop 32.0
  %v87 = vmul.f32 %v40, %v86
  %v88 = vmul.f32 %v43, %v86
  %v89 = vmul.f32 %v46, %v86
  %v90 = vmul.f32 %v49, %v86
  %v91 = vmul.f32 %v52, %v86
  %v92 = vmul.f32 %v55, %v86
  %v93 = vmul.f32 %v58, %v86
  %v94 = vmul.f32 %v61, %v86
  %v95 = vmul.f32 %v64, %v86
  %v96 = vmul.f32 %v67, %v86
  %v97 = vmul.f32 %v70, %v86
  %v98 = vmul.f32 %v73, %v86
  %v99 = vmul.f32 %v76, %v86
  %v100 = vmul.f32 %v79, %v86
  %v101 = vmul.f32 %v82, %v86
  %v102 = vmul.f32 %v85, %v86
  %v103 = vsub.f32 %v21, %v87
  %v104 = vsub.f32 %v22, %v88
  %v105 = vsub.f32 %v23, %v89
  %v106 = vsub.f32 %v24, %v90
  %v107 = vsub.f32 %v25, %v91
  %v108 = vsub.f32 %v26, %v92
  %v109 = vsub.f32 %v27, %v93
  %v110 = vsub.f32 %v28, %v94
  %v111 = vsub.f32 %v29, %v95
  %v112 = vsub.f32 %v30, %v96
  %v113 = vsub.f32 %v31, %v97
  %v114 = vsub.f32 %v32, %v98
  %v115 = vsub.f32 %v33, %v99
  %v116 = vsub.f32 %v34, %v100
  %v117 = vsub.f32 %v35, %v101
  %v118 = vsub.f32 %v36, %v102
  %v119 = vmul.f32 %v103, %v103
  %v120 = vmul.f32 %v104, %v104
  %v121 = vmul.f32 %v105, %v105
  %v122 = vmul.f32 %v106, %v106
  %v123 = vmul.f32 %v107, %v107
  %v124 = vmul.f32 %v108, %v108
  %v125 = vmul.f32 %v109, %v109
  %v126 = vmul.f32 %v110, %v110
  %v127 = vmul.f32 %v111, %v111
  %v128 = vmul.f32 %v112, %v112
  %v129 = vmul.f32 %v113, %v113
  %v130 = vmul.f32 %v114, %v114
  %v131 = vmul.f32 %v115, %v115
  %v132 = vmul.f32 %v116, %v116
  %v133 = vmul.f32 %v117, %v117
  %v134 = vmul.f32 %v118, %v118
  %v135 = vsel %vm37, %v119, 0.0
  %136 = vadd.xlane.f32.xlu0 %v135
  %v137 = vpop.xlane.xlu0 %136
  %v138 = vsel %vm37, %v120, 0.0
  %139 = vadd.xlane.f32.xlu0 %v138
  %v140 = vpop.xlane.xlu0 %139
  %v141 = vsel %vm37, %v121, 0.0
  %142 = vadd.xlane.f32.xlu0 %v141
  %v143 = vpop.xlane.xlu0 %142
  %v144 = vsel %vm37, %v122, 0.0
  %145 = vadd.xlane.f32.xlu0 %v144
  %v146 = vpop.xlane.xlu0 %145
  %v147 = vsel %vm37, %v123, 0.0
  %148 = vadd.xlane.f32.xlu0 %v147
  %v149 = vpop.xlane.xlu0 %148
  %v150 = vsel %vm37, %v124, 0.0
  %151 = vadd.xlane.f32.xlu0 %v150
  %v152 = vpop.xlane.xlu0 %151
  %v153 = vsel %vm37, %v125, 0.0
  %154 = vadd.xlane.f32.xlu0 %v153
  %v155 = vpop.xlane.xlu0 %154
  %v156 = vsel %vm37, %v126, 0.0
  %157 = vadd.xlane.f32.xlu0 %v156
  %v158 = vpop.xlane.xlu0 %157
  %v159 = vsel %vm37, %v127, 0.0
  %160 = vadd.xlane.f32.xlu0 %v159
  %v161 = vpop.xlane.xlu0 %160
  %v162 = vsel %vm37, %v128, 0.0
  %163 = vadd.xlane.f32.xlu0 %v162
  %v164 = vpop.xlane.xlu0 %163
  %v165 = vsel %vm37, %v129, 0.0
  %166 = vadd.xlane.f32.xlu0 %v165
  %v167 = vpop.xlane.xlu0 %166
  %v168 = vsel %vm37, %v130, 0.0
  %169 = vadd.xlane.f32.xlu0 %v168
  %v170 = vpop.xlane.xlu0 %169
  %v171 = vsel %vm37, %v131, 0.0
  %172 = vadd.xlane.f32.xlu0 %v171
  %v173 = vpop.xlane.xlu0 %172
  %v174 = vsel %vm37, %v132, 0.0
  %175 = vadd.xlane.f32.xlu0 %v174
  %v176 = vpop.xlane.xlu0 %175
  %v177 = vsel %vm37, %v133, 0.0
  %178 = vadd.xlane.f32.xlu0 %v177
  %v179 = vpop.xlane.xlu0 %178
  %v180 = vsel %vm37, %v134, 0.0
  %181 = vadd.xlane.f32.xlu0 %v180
  %v182 = vpop.xlane.xlu0 %181
  %v183 = vmul.f32 %v137, %v86
  %v184 = vmul.f32 %v140, %v86
  %v185 = vmul.f32 %v143, %v86
  %v186 = vmul.f32 %v146, %v86
  %v187 = vmul.f32 %v149, %v86
  %v188 = vmul.f32 %v152, %v86
  %v189 = vmul.f32 %v155, %v86
  %v190 = vmul.f32 %v158, %v86
  %v191 = vmul.f32 %v161, %v86
  %v192 = vmul.f32 %v164, %v86
  %v193 = vmul.f32 %v167, %v86
  %v194 = vmul.f32 %v170, %v86
  %v195 = vmul.f32 %v173, %v86
  %v196 = vmul.f32 %v176, %v86
  %v197 = vmul.f32 %v179, %v86
  %v198 = vmul.f32 %v182, %v86
  %v199 = vadd.f32 %v183, 1e-05
  %v200 = vadd.f32 %v184, 1e-05
  %v201 = vadd.f32 %v185, 1e-05
  %v202 = vadd.f32 %v186, 1e-05
  %v203 = vadd.f32 %v187, 1e-05
  %v204 = vadd.f32 %v188, 1e-05
  %v205 = vadd.f32 %v189, 1e-05
  %v206 = vadd.f32 %v190, 1e-05
  %v207 = vadd.f32 %v191, 1e-05
  %v208 = vadd.f32 %v192, 1e-05
  %v209 = vadd.f32 %v193, 1e-05
  %v210 = vadd.f32 %v194, 1e-05
  %v211 = vadd.f32 %v195, 1e-05
  %v212 = vadd.f32 %v196, 1e-05
  %v213 = vadd.f32 %v197, 1e-05
  %v214 = vadd.f32 %v198, 1e-05
  %v215 = vrsqrt.pop %v199
  %v216 = vrsqrt.pop %v200
  %v217 = vrsqrt.pop %v201
  %v218 = vrsqrt.pop %v202
  %v219 = vrsqrt.pop %v203
  %v220 = vrsqrt.pop %v204
  %v221 = vrsqrt.pop %v205
  %v222 = vrsqrt.pop %v206
  %v223 = vrsqrt.pop %v207
  %v224 = vrsqrt.pop %v208
  %v225 = vrsqrt.pop %v209
  %v226 = vrsqrt.pop %v210
  %v227 = vrsqrt.pop %v211
  %v228 = vrsqrt.pop %v212
  %v229 = vrsqrt.pop %v213
  %v230 = vrsqrt.pop %v214
  %v231 = vmul.f32 %v103, %v215
  %v232 = vmul.f32 %v104, %v216
  %v233 = vmul.f32 %v105, %v217
  %v234 = vmul.f32 %v106, %v218
  %v235 = vmul.f32 %v107, %v219
  %v236 = vmul.f32 %v108, %v220
  %v237 = vmul.f32 %v109, %v221
  %v238 = vmul.f32 %v110, %v222
  %v239 = vmul.f32 %v111, %v223
  %v240 = vmul.f32 %v112, %v224
  %v241 = vmul.f32 %v113, %v225
  %v242 = vmul.f32 %v114, %v226
  %v243 = vmul.f32 %v115, %v227
  %v244 = vmul.f32 %v116, %v228
  %v245 = vmul.f32 %v117, %v229
  %v246 = vmul.f32 %v118, %v230
  %v247 = vld [vmem:[%s1] sm:$0x1]
  %v249 = vlaneseq
  %v250 = vshrl.u32 %v249, 7
  %v251 = vsub.s32 0, %v250
  %v252 = vrot.slane %v247, %v251
  %v254 = vmul.f32 %v231, %v252
  %v255 = vmul.f32 %v232, %v252
  %v256 = vmul.f32 %v233, %v252
  %v257 = vmul.f32 %v234, %v252
  %v258 = vmul.f32 %v235, %v252
  %v259 = vmul.f32 %v236, %v252
  %v260 = vmul.f32 %v237, %v252
  %v261 = vmul.f32 %v238, %v252
  %v262 = vmul.f32 %v239, %v252
  %v263 = vmul.f32 %v240, %v252
  %v264 = vmul.f32 %v241, %v252
  %v265 = vmul.f32 %v242, %v252
  %v266 = vmul.f32 %v243, %v252
  %v267 = vmul.f32 %v244, %v252
  %v268 = vmul.f32 %v245, %v252
  %v269 = vmul.f32 %v246, %v252
  %v270 = vld [vmem:[%s2] sm:$0x1]
  %v272 = vlaneseq
  %v273 = vshrl.u32 %v272, 7
  %v274 = vsub.s32 0, %v273
  %v275 = vrot.slane %v270, %v274
  %v277 = vadd.f32 %v254, %v275
  %v278 = vadd.f32 %v255, %v275
  %v279 = vadd.f32 %v256, %v275
  %v280 = vadd.f32 %v257, %v275
  %v281 = vadd.f32 %v258, %v275
  %v282 = vadd.f32 %v259, %v275
  %v283 = vadd.f32 %v260, %v275
  %v284 = vadd.f32 %v261, %v275
  %v285 = vadd.f32 %v262, %v275
  %v286 = vadd.f32 %v263, %v275
  %v287 = vadd.f32 %v264, %v275
  %v288 = vadd.f32 %v265, %v275
  %v289 = vadd.f32 %v266, %v275
  %v290 = vadd.f32 %v267, %v275
  %v291 = vadd.f32 %v268, %v275
  %v292 = vadd.f32 %v269, %v275
  %v293 = vpack.c.bf16 %v278, %v277
  %v294 = vpack.c.bf16 %v280, %v279
  %v295 = vpack.c.bf16 %v282, %v281
  %v296 = vpack.c.bf16 %v284, %v283
  %v297 = vpack.c.bf16 %v286, %v285
  %v298 = vpack.c.bf16 %v288, %v287
  %v299 = vpack.c.bf16 %v290, %v289
  %v300 = vpack.c.bf16 %v292, %v291
  %v301 = vld [vmem:[%s3] sm:$0xf]
  %v302 = vld [vmem:[%s3 + $0x4] sm:$0xf]
  %v303 = vld [vmem:[%s3 + $0x8] sm:$0xf]
  %v304 = vld [vmem:[%s3 + $0xc] sm:$0xf]
  %v305 = vld [vmem:[%s4] sm:$0x1]
  %v307 = vlaneseq
  %v308 = vshrl.u32 %v307, 7
  %v309 = vsub.s32 0, %v308
  %v310 = vrot.slane %v305, %v309
  %v316 = vunpack.c.l.b16 %v301
  %v317 = vunpack.c.l.b16 %v302
  %v318 = vunpack.c.l.b16 %v303
  %v319 = vunpack.c.l.b16 %v304
  %v320 = vpack.c.b16 %v317, %v316
  %v321 = vpack.c.b16 %v319, %v318
  %v325 = vsel %vm37, %v293, 0
  %v328 = vsel %vm37, %v294, 0
  %v331 = vsel %vm37, %v295, 0
  %v334 = vsel %vm37, %v296, 0
  %v337 = vsel %vm37, %v297, 0
  %v340 = vsel %vm37, %v298, 0
  %v343 = vsel %vm37, %v299, 0
  %v346 = vsel %vm37, %v300, 0
  %348 = vmatprep.subr.bf16.mxu0 0
  %349 = vmatpush1.bf16.msra.mxu0 0
  %350 = vmatprep.subr.bf16.mxu0 0
  %351 = vmatpush1.bf16.msra.mxu0 0
  %352 = vmatprep.subr.bf16.mxu0 0
  %353 = vmatpush1.bf16.msra.mxu0 0
  %354 = vmatprep.subr.bf16.mxu0 0
  %355 = vmatpush1.bf16.msra.mxu0 0
  %356 = vmatprep.subr.bf16.mxu0 0
  %357 = vmatpush1.bf16.msra.mxu0 0
  %358 = vmatprep.subr.bf16.mxu0 0
  %359 = vmatpush1.bf16.msra.mxu0 0
  %360 = vmatprep.subr.bf16.mxu0 0
  %361 = vmatpush1.bf16.msra.mxu0 %v321
  %362 = vmatprep.subr.bf16.mxu0 0
  %363 = vmatpush1.bf16.msra.mxu0 %v320
  %364 = vmatprep.subr.bf16.mxu0 0
  %365 = vmatpush2.bf16.msra.mxu0 0
  %366 = vmatprep.subr.bf16.mxu0 0
  %367 = vmatpush2.bf16.msra.mxu0 0
  %368 = vmatprep.subr.bf16.mxu0 0
  %369 = vmatpush2.bf16.msra.mxu0 0
  %370 = vmatprep.subr.bf16.mxu0 0
  %371 = vmatpush2.bf16.msra.mxu0 0
  %372 = vmatprep.subr.bf16.mxu0 0
  %373 = vmatpush2.bf16.msra.mxu0 0
  %374 = vmatprep.subr.bf16.mxu0 0
  %375 = vmatpush2.bf16.msra.mxu0 0
  %376 = vmatprep.subr.bf16.mxu0 0
  %377 = vmatpush2.bf16.msra.mxu0 0
  %378 = vmatprep.subr.bf16.mxu0 0
  %379 = vmatpush2.bf16.msra.mxu0 0
  %380 = vmatprep.mubr.bf16.mxu0 0
  %381 = vmatmul.mubr.bf16.gmra.mxu0 %v325
  %v382 = vpop.f32.mrf.mxu0
  %v383 = vadd.f32 %v310, %v382
  %v384 = vpop.f32.mrf.mxu0
  %v385 = vpop.f32.mrf.mxu0
  %v386 = vadd.f32 %v310, %v385
  %v387 = vpop.f32.mrf.mxu0
  %388 = vmatprep.mubr.bf16.mxu0 0
  %389 = vmatmul.mubr.bf16.gmra.mxu0 %v328
  %v390 = vpop.f32.mrf.mxu0
  %v391 = vadd.f32 %v310, %v390
  %v392 = vpop.f32.mrf.mxu0
  %v393 = vpop.f32.mrf.mxu0
  %v394 = vadd.f32 %v310, %v393
  %v395 = vpop.f32.mrf.mxu0
  %396 = vmatprep.mubr.bf16.mxu0 0
  %397 = vmatmul.mubr.bf16.gmra.mxu0 %v331
  %v398 = vpop.f32.mrf.mxu0
  %v399 = vadd.f32 %v310, %v398
  %v400 = vpop.f32.mrf.mxu0
  %v401 = vpop.f32.mrf.mxu0
  %v402 = vadd.f32 %v310, %v401
  %v403 = vpop.f32.mrf.mxu0
  %404 = vmatprep.mubr.bf16.mxu0 0
  %405 = vmatmul.mubr.bf16.gmra.mxu0 %v334
  %v406 = vpop.f32.mrf.mxu0
  %v407 = vadd.f32 %v310, %v406
  %v408 = vpop.f32.mrf.mxu0
  %v409 = vpop.f32.mrf.mxu0
  %v410 = vadd.f32 %v310, %v409
  %v411 = vpop.f32.mrf.mxu0
  %412 = vmatprep.mubr.bf16.mxu0 0
  %413 = vmatmul.mubr.bf16.gmra.mxu0 %v337
  %v414 = vpop.f32.mrf.mxu0
  %v415 = vadd.f32 %v310, %v414
  %v416 = vpop.f32.mrf.mxu0
  %v417 = vpop.f32.mrf.mxu0
  %v418 = vadd.f32 %v310, %v417
  %v419 = vpop.f32.mrf.mxu0
  %420 = vmatprep.mubr.bf16.mxu0 0
  %421 = vmatmul.mubr.bf16.gmra.mxu0 %v340
  %v422 = vpop.f32.mrf.mxu0
  %v423 = vadd.f32 %v310, %v422
  %v424 = vpop.f32.mrf.mxu0
  %v425 = vpop.f32.mrf.mxu0
  %v426 = vadd.f32 %v310, %v425
  %v427 = vpop.f32.mrf.mxu0
  %428 = vmatprep.mubr.bf16.mxu0 0
  %429 = vmatmul.mubr.bf16.gmra.mxu0 %v343
  %v430 = vpop.f32.mrf.mxu0
  %v431 = vadd.f32 %v310, %v430
  %v432 = vpop.f32.mrf.mxu0
  %v433 = vpop.f32.mrf.mxu0
  %v434 = vadd.f32 %v310, %v433
  %v435 = vpop.f32.mrf.mxu0
  %436 = vmatprep.mubr.bf16.mxu0 0
  %437 = vmatmul.mubr.bf16.gmra.mxu0 %v346
  %v438 = vpop.f32.mrf.mxu0
  %v439 = vadd.f32 %v310, %v438
  %v440 = vpop.f32.mrf.mxu0
  %v441 = vpop.f32.mrf.mxu0
  %v442 = vadd.f32 %v310, %v441
  %v443 = vpop.f32.mrf.mxu0
  %444 = vdwg.mxu0
  %v445 = vpack.c.bf16 %v386, %v383
  %v446 = vpack.c.bf16 %v394, %v391
  %v447 = vpack.c.bf16 %v402, %v399
  %v448 = vpack.c.bf16 %v410, %v407
  %v449 = vpack.c.bf16 %v418, %v415
  %v450 = vpack.c.bf16 %v426, %v423
  %v451 = vpack.c.bf16 %v434, %v431
  %v452 = vpack.c.bf16 %v442, %v439
  %v461 = vunpack.c.l.b16 %v445
  %v462 = vunpack.c.h.b16 %v445
  %v463 = vunpack.c.l.b16 %v446
  %v464 = vunpack.c.h.b16 %v446
  %v465 = vunpack.c.l.b16 %v447
  %v466 = vunpack.c.h.b16 %v447
  %v467 = vunpack.c.l.b16 %v448
  %v468 = vunpack.c.h.b16 %v448
  %v469 = vunpack.c.l.b16 %v449
  %v470 = vunpack.c.h.b16 %v449
  %v471 = vunpack.c.l.b16 %v450
  %v472 = vunpack.c.h.b16 %v450
  %v473 = vunpack.c.l.b16 %v451
  %v474 = vunpack.c.h.b16 %v451
  %v475 = vunpack.c.l.b16 %v452
  %v476 = vunpack.c.h.b16 %v452
  %v477 = vpack.c.b16 %v461, %v461
  %v478 = vpack.c.b16 %v462, %v462
  %v479 = vpack.c.b16 %v463, %v463
  %v480 = vpack.c.b16 %v464, %v464
  %v481 = vpack.c.b16 %v465, %v465
  %v482 = vpack.c.b16 %v466, %v466
  %v483 = vpack.c.b16 %v467, %v467
  %v484 = vpack.c.b16 %v468, %v468
  %v485 = vpack.c.b16 %v469, %v469
  %v486 = vpack.c.b16 %v470, %v470
  %v487 = vpack.c.b16 %v471, %v471
  %v488 = vpack.c.b16 %v472, %v472
  %v489 = vpack.c.b16 %v473, %v473
  %v490 = vpack.c.b16 %v474, %v474
  %v491 = vpack.c.b16 %v475, %v475
  %v492 = vpack.c.b16 %v476, %v476
  %vm509 = vcmask 781312
  %510 = vst.msk [vmem:[%s5] sm:$0xf] %vm509, %v477
  %511 = vst.msk [vmem:[%s5 + $0x4] sm:$0xf] %vm509, %v478
  %512 = vst.msk [vmem:[%s5 + $0x8] sm:$0xf] %vm509, %v479
  %513 = vst.msk [vmem:[%s5 + $0xc] sm:$0xf] %vm509, %v480
  %514 = vst.msk [vmem:[%s5 + $0x10] sm:$0xf] %vm509, %v481
  %515 = vst.msk [vmem:[%s5 + $0x14] sm:$0xf] %vm509, %v482
  %516 = vst.msk [vmem:[%s5 + $0x18] sm:$0xf] %vm509, %v483
  %517 = vst.msk [vmem:[%s5 + $0x1c] sm:$0xf] %vm509, %v484
  %518 = vst.msk [vmem:[%s5 + $0x20] sm:$0xf] %vm509, %v485
  %519 = vst.msk [vmem:[%s5 + $0x24] sm:$0xf] %vm509, %v486
  %520 = vst.msk [vmem:[%s5 + $0x28] sm:$0xf] %vm509, %v487
  %521 = vst.msk [vmem:[%s5 + $0x2c] sm:$0xf] %vm509, %v488
  %522 = vst.msk [vmem:[%s5 + $0x30] sm:$0xf] %vm509, %v489
  %523 = vst.msk [vmem:[%s5 + $0x34] sm:$0xf] %vm509, %v490
  %524 = vst.msk [vmem:[%s5 + $0x38] sm:$0xf] %vm509, %v491
  %525 = vst.msk [vmem:[%s5 + $0x3c] sm:$0xf] %vm509, %v492
  // Predicated region
  $region22: #{swin_forward.20} parent=0 // pred_check
    _
  $region23: #{swin_forward.20} parent=0 // pred_check_branch
    %527 = sbr.rel (0) target = $region25
  $region24: #{swin_forward.20} parent=0 // pred_region
    _
  $region25: #{swin_forward.20} parent=0 // pred_fallthru
    _
  // Predicated region
  $region26: #{swin_forward.20} parent=0 // pred_check
    _
  $region27: #{swin_forward.20} parent=0 // pred_check_branch
    %529 = sbr.rel (0) target = $region29
  $region28: #{swin_forward.20} parent=0 // pred_region
    _
  $region29: #{swin_forward.20} parent=0 // pred_fallthru
    _

// kernel: swin_forward.21
$region0: #{swin_forward.21}
  #allocation0 [shape = 'u32[]', space=smem, size = 0x4, offset = 0x4, fixed_abs, tag = 'smem constant byte address 0x4 - core index']
  #allocation1 [shape = 'u32[144,128]{1,0:T(1,128)}', space=vmem, size = 0x12000, scoped, tag = 'internal scratch']
  %s0 = inlined_call_operand.vmem [shape: bf16[3,2,8,16,16], index: 0, kind: input, shape index: {}]
  %s1 = inlined_call_operand.vmem [shape: f32[2,16,16], index: 1, kind: input, shape index: {}]
  %s2 = inlined_call_operand.vmem [shape: bf16[2,8,16,16], index: 2, kind: output, shape index: {}]
  %s3 = sld [smem:[#allocation0]]
  $region82: #{swin_forward.21} parent=0
    _
  %s5 = ssub.s32 1, %s3
  %s6 = scalar_select 0, %s5, %s3
  $region1: #{swin_forward.21} parent=0
    #allocation2 [shape = 'u8[196608]{0}', space=vmem, size = 0x30000, scoped, tag = 'input window, operand 0']
    loop: start=0, step=1, limit=4
    $region2: #{swin_forward.21} parent=1 // loop_pre_header
      _
    $region3: #{swin_forward.21} parent=1 // loop_header
      %s8 = sphi 0, %s12
      %p9 = scmp.ge.s32.totalorder %s8, 4
      %s15 = sphi 0, %s27
      %s16 = sphi 0, %s23
      %s17 = sphi 0, %s15
      %s18 = sphi 0, %s16
      %s19 = sphi 0, %s17
      %s20 = sphi 0, %s18
      %s32 = sphi 0, %s34
      %s35 = sphi 0, %s32
      %s36 = sphi 0, %s35
      %s52 = sphi 0, %s36
      %s58 = sphi 0, %s60
      %s61 = sphi 0, %s58
      %s62 = sphi 0, %s61
      %s78 = sphi 0, %s62
      %s86 = sphi 0, %s88
      %s89 = sphi 0, %s86
      %s90 = sphi 0, %s89
      %s106 = sphi 0, %s90
    $region4: #{swin_forward.21} parent=1 // loop_header_branch
      %11 = sbr.rel (%p9) target = $region8
    $region5: #{swin_forward.21} parent=1 // loop_body
      %s13 = ssub.s32 %s8, 1
      %s14 = ssub.s32 %s8, 2
      %s21 = sadd.s32 1, %s16
      %p22 = scmp.ge.s32.totalorder %s21, 2
      %s23 = scalar_select %p22, 0, %s21
      %s24 = sadd.s32 1, %s15
      %s25 = scalar_select %p22, %s24, %s15
      %p26 = scmp.ge.s32.totalorder %s25, 1
      %s27 = scalar_select %p26, 0, %s25
      %s28 = ssub.s32 %s16, %s23
      %s29 = ssub.s32 %s15, %s27
      %s30 = sor.u32 %s28, %s29
      %p31 = scmp.eq.s32.totalorder %s30, 0
      %s33 = sadd.s32 %s32, 1
      %s34 = scalar_select %p31, %s32, %s33
      %p37 = pneg %p31
      %p38 = scmp.eq.s32.totalorder %s8, 1
      %p39 = por %p37, %p38
      %p40 = scmp.ne.s32.totalorder %s32, %s35
      %p41 = scmp.eq.s32.totalorder %s8, 0
      %p42 = por %p40, %p41
      %p43 = scmp.ne.s32.totalorder %s32, %s35
      %p44 = scmp.eq.s32.totalorder %s13, 1
      %p45 = por %p43, %p44
      %p46 = scmp.ne.s32.totalorder %s35, %s36
      %p47 = scmp.eq.s32.totalorder %s13, 0
      %p48 = por %p46, %p47
      %p49 = scmp.ne.s32.totalorder %s35, %s36
      %p50 = scmp.eq.s32.totalorder %s14, 1
      %p51 = por %p49, %p50
      %p53 = scmp.ne.s32.totalorder %s36, %s52
      %p54 = scmp.eq.s32.totalorder %s14, 0
      %p55 = por %p53, %p54
      %s56 = ssub.s32 %s16, %s23
      %p57 = scmp.eq.s32.totalorder %s56, 0
      %s59 = sadd.s32 %s58, 1
      %s60 = scalar_select %p57, %s58, %s59
      %p63 = pneg %p57
      %p64 = scmp.eq.s32.totalorder %s8, 1
      %p65 = por %p63, %p64
      %p66 = scmp.ne.s32.totalorder %s58, %s61
      %p67 = scmp.eq.s32.totalorder %s8, 0
      %p68 = por %p66, %p67
      %p69 = scmp.ne.s32.totalorder %s58, %s61
      %p70 = scmp.eq.s32.totalorder %s13, 1
      %p71 = por %p69, %p70
      %p72 = scmp.ne.s32.totalorder %s61, %s62
      %p73 = scmp.eq.s32.totalorder %s13, 0
      %p74 = por %p72, %p73
      %p75 = scmp.ne.s32.totalorder %s61, %s62
      %p76 = scmp.eq.s32.totalorder %s14, 1
      %p77 = por %p75, %p76
      %p79 = scmp.ne.s32.totalorder %s62, %s78
      %p80 = scmp.eq.s32.totalorder %s14, 0
      %p81 = por %p79, %p80
      %s82 = ssub.s32 %s16, %s23
      %s83 = ssub.s32 %s15, %s27
      %s84 = sor.u32 %s82, %s83
      %p85 = scmp.eq.s32.totalorder %s84, 0
      %s87 = sadd.s32 %s86, 1
      %s88 = scalar_select %p85, %s86, %s87
      %p91 = pneg %p85
      %p92 = scmp.eq.s32.totalorder %s8, 1
      %p93 = por %p91, %p92
      %p94 = scmp.ne.s32.totalorder %s86, %s89
      %p95 = scmp.eq.s32.totalorder %s8, 0
      %p96 = por %p94, %p95
      %p97 = scmp.ne.s32.totalorder %s86, %s89
      %p98 = scmp.eq.s32.totalorder %s13, 1
      %p99 = por %p97, %p98
      %p100 = scmp.ne.s32.totalorder %s89, %s90
      %p101 = scmp.eq.s32.totalorder %s13, 0
      %p102 = por %p100, %p101
      %p103 = scmp.ne.s32.totalorder %s89, %s90
      %p104 = scmp.eq.s32.totalorder %s14, 1
      %p105 = por %p103, %p104
      %p107 = scmp.ne.s32.totalorder %s90, %s106
      %p108 = scmp.eq.s32.totalorder %s14, 0
      %p109 = por %p107, %p108
      %p110 = scmp.le.s32.totalorder 1, %s8
      %p111 = scmp.lt.s32.totalorder %s8, 3
      %p112 = pnand %p110, %p111
      %p113 = pneg %p112
      // Predicated region
      $region9: #{swin_forward.21} parent=5 // pred_check
        _
      $region10: #{swin_forward.21} parent=5 // pred_check_branch
        %115 = sbr.rel (%p112) target = $region12
      $region11: #{swin_forward.21} parent=5 // pred_region
        %s116 = ssub.s32 %s8, 1
      $region12: #{swin_forward.21} parent=5 // pred_fallthru
        _
      %p117 = scmp.lt.s32.totalorder %s8, 2
      // Predicated region
      $region13: #{swin_forward.21} parent=5 // pred_check
        %p118 = pneg %p117
      $region14: #{swin_forward.21} parent=5 // pred_check_branch
        %120 = sbr.rel (%p118) target = $region16
      $region15: #{swin_forward.21} parent=5 // pred_region
        // Predicated region
        $region17: #{swin_forward.21} parent=15 // pred_check
          %p121 = pneg %p42
        $region18: #{swin_forward.21} parent=15 // pred_check_branch
          %123 = sbr.rel (%p121) target = $region20
        $region19: #{swin_forward.21} parent=15 // pred_region
          %s124 = sand.u32 %s32, 1
          %s125 = sand.u32 %s32, 1
          %s126 = smul.addr %s125, 192
          %s127 = scalar_lea.vmem [#allocation2], %s126
          %s128 = smul.u32 8, %s15
          %s129 = smul.addr %s128, 2
          %s130 = smul.addr %s16, 16
          %s131 = sadd.s32 %s129, %s130
          %s132 = smul.addr %s131, 4
          %s133 = scalar_lea.vmem %s0, %s132
          // Predicated region
          $region21: #{swin_forward.21} parent=19 // pred_check
            _
          $region22: #{swin_forward.21} parent=19 // pred_check_branch
            %135 = sbr.rel (0) target = $region24
          $region23: #{swin_forward.21} parent=19 // pred_region
            // Predicated region
            $region25: #{swin_forward.21} parent=23 // pred_check
              _
            $region26: #{swin_forward.21} parent=23 // pred_check_branch
              %137 = sbr.rel target = $region28
            $region27: #{swin_forward.21} parent=23 // pred_region
              // Predicated region
              $region40: #{swin_forward.21} parent=27 // pred_check
                _
              $region41: #{swin_forward.21} parent=27 // pred_check_branch
                %247 = sbr.rel (0) target = $region43
              $region42: #{swin_forward.21} parent=27 // pred_region
                loop: start=0, step=1, limit=1
                $region44: #{swin_forward.21} parent=42 // loop_pre_header
                  _
                $region45: #{swin_forward.21} parent=42 // loop_header
                  %s249 = sphi 0, %s253
                  %p250 = scmp.ge.s32.totalorder %s249, 1
                  %s254 = sphi %s133, %s133
                  %s255 = sphi %s127, %s127
                $region46: #{swin_forward.21} parent=42 // loop_header_branch
                  %252 = sbr.rel (%p250) target = $region50
                $region47: #{swin_forward.21} parent=42 // loop_body
                  _
                $region48: #{swin_forward.21} parent=42 // loop_footer
                  %s253 = sadd.s32 1, %s249
                $region49: #{swin_forward.21} parent=42 // loop_footer_branch
                  %248 = sbr.rel target = $region45
                $region50: #{swin_forward.21} parent=42 // loop_exit
                  _
                %s257 = ssub.s32 16, 1
                loop: start=0, step=1, limit=1
                $region51: #{swin_forward.21} parent=42 // loop_pre_header
                  _
                $region52: #{swin_forward.21} parent=42 // loop_header
                  %s259 = sphi 0, %s263
                  %p260 = scmp.ge.s32.totalorder %s259, 1
                  %s264 = sphi %s133, %s133
                  %s265 = sphi %s127, %s127
                $region53: #{swin_forward.21} parent=42 // loop_header_branch
                  %262 = sbr.rel (%p260) target = $region57
                $region54: #{swin_forward.21} parent=42 // loop_body
                  %v266 = vld [vmem:[%s264] sm:%s257]
                  %267 = vst [vmem:[%s265] sm:%s257] %v266
                  %v268 = vld [vmem:[%s264 + $0x4] sm:%s257]
                  %269 = vst [vmem:[%s265 + $0x4] sm:%s257] %v268
                  %v270 = vld [vmem:[%s264 + $0x8] sm:%s257]
                  %271 = vst [vmem:[%s265 + $0x8] sm:%s257] %v270
                  %v272 = vld [vmem:[%s264 + $0xc] sm:%s257]
                  %273 = vst [vmem:[%s265 + $0xc] sm:%s257] %v272
                  %v274 = vld [vmem:[%s264 + $0x10] sm:%s257]
                  %275 = vst [vmem:[%s265 + $0x10] sm:%s257] %v274
                  %v276 = vld [vmem:[%s264 + $0x14] sm:%s257]
                  %277 = vst [vmem:[%s265 + $0x14] sm:%s257] %v276
                  %v278 = vld [vmem:[%s264 + $0x18] sm:%s257]
                  %279 = vst [vmem:[%s265 + $0x18] sm:%s257] %v278
                  %v280 = vld [vmem:[%s264 + $0x1c] sm:%s257]
                  %281 = vst [vmem:[%s265 + $0x1c] sm:%s257] %v280
                  %v282 = vld [vmem:[%s264 + $0x20] sm:%s257]
                  %283 = vst [vmem:[%s265 + $0x20] sm:%s257] %v282
                  %v284 = vld [vmem:[%s264 + $0x24] sm:%s257]
                  %285 = vst [vmem:[%s265 + $0x24] sm:%s257] %v284
                  %v286 = vld [vmem:[%s264 + $0x28] sm:%s257]
                  %287 = vst [vmem:[%s265 + $0x28] sm:%s257] %v286
                  %v288 = vld [vmem:[%s264 + $0x2c] sm:%s257]
                  %289 = vst [vmem:[%s265 + $0x2c] sm:%s257] %v288
                  %v290 = vld [vmem:[%s264 + $0x30] sm:%s257]
                  %291 = vst [vmem:[%s265 + $0x30] sm:%s257] %v290
                  %v292 = vld [vmem:[%s264 + $0x34] sm:%s257]
                  %293 = vst [vmem:[%s265 + $0x34] sm:%s257] %v292
                  %v294 = vld [vmem:[%s264 + $0x38] sm:%s257]
                  %295 = vst [vmem:[%s265 + $0x38] sm:%s257] %v294
                  %v296 = vld [vmem:[%s264 + $0x3c] sm:%s257]
                  %297 = vst [vmem:[%s265 + $0x3c] sm:%s257] %v296
                  %v298 = vld [vmem:[%s264 + $0x80] sm:%s257]
                  %299 = vst [vmem:[%s265 + $0x40] sm:%s257] %v298
                  %v300 = vld [vmem:[%s264 + $0x84] sm:%s257]
                  %301 = vst [vmem:[%s265 + $0x44] sm:%s257] %v300
                  %v302 = vld [vmem:[%s264 + $0x88] sm:%s257]
                  %303 = vst [vmem:[%s265 + $0x48] sm:%s257] %v302
                  %v304 = vld [vmem:[%s264 + $0x8c] sm:%s257]
                  %305 = vst [vmem:[%s265 + $0x4c] sm:%s257] %v304
                  %v306 = vld [vmem:[%s264 + $0x90] sm:%s257]
                  %307 = vst [vmem:[%s265 + $0x50] sm:%s257] %v306
                  %v308 = vld [vmem:[%s264 + $0x94] sm:%s257]
                  %309 = vst [vmem:[%s265 + $0x54] sm:%s257] %v308
                  %v310 = vld [vmem:[%s264 + $0x98] sm:%s257]
                  %311 = vst [vmem:[%s265 + $0x58] sm:%s257] %v310
                  %v312 = vld [vmem:[%s264 + $0x9c] sm:%s257]
                  %313 = vst [vmem:[%s265 + $0x5c] sm:%s257] %v312
                  %v314 = vld [vmem:[%s264 + $0xa0] sm:%s257]
                  %315 = vst [vmem:[%s265 + $0x60] sm:%s257] %v314
                  %v316 = vld [vmem:[%s264 + $0xa4] sm:%s257]
                  %317 = vst [vmem:[%s265 + $0x64] sm:%s257] %v316
                  %v318 = vld [vmem:[%s264 + $0xa8] sm:%s257]
                  %319 = vst [vmem:[%s265 + $0x68] sm:%s257] %v318
                  %v320 = vld [vmem:[%s264 + $0xac] sm:%s257]
                  %321 = vst [vmem:[%s265 + $0x6c] sm:%s257] %v320
                  %v322 = vld [vmem:[%s264 + $0xb0] sm:%s257]
                  %323 = vst [vmem:[%s265 + $0x70] sm:%s257] %v322
                  %v324 = vld [vmem:[%s264 + $0xb4] sm:%s257]
                  %325 = vst [vmem:[%s265 + $0x74] sm:%s257] %v324
                  %v326 = vld [vmem:[%s264 + $0xb8] sm:%s257]
                  %327 = vst [vmem:[%s265 + $0x78] sm:%s257] %v326
                  %v328 = vld [vmem:[%s264 + $0xbc] sm:%s257]
                  %329 = vst [vmem:[%s265 + $0x7c] sm:%s257] %v328
                  %v330 = vld [vmem:[%s264 + $0x100] sm:%s257]
                  %331 = vst [vmem:[%s265 + $0x80] sm:%s257] %v330
                  %v332 = vld [vmem:[%s264 + $0x104] sm:%s257]
                  %333 = vst [vmem:[%s265 + $0x84] sm:%s257] %v332
                  %v334 = vld [vmem:[%s264 + $0x108] sm:%s257]
                  %335 = vst [vmem:[%s265 + $0x88] sm:%s257] %v334
                  %v336 = vld [vmem:[%s264 + $0x10c] sm:%s257]
                  %337 = vst [vmem:[%s265 + $0x8c] sm:%s257] %v336
                  %v338 = vld [vmem:[%s264 + $0x110] sm:%s257]
                  %339 = vst [vmem:[%s265 + $0x90] sm:%s257] %v338
                  %v340 = vld [vmem:[%s264 + $0x114] sm:%s257]
                  %341 = vst [vmem:[%s265 + $0x94] sm:%s257] %v340
                  %v342 = vld [vmem:[%s264 + $0x118] sm:%s257]
                  %343 = vst [vmem:[%s265 + $0x98] sm:%s257] %v342
                  %v344 = vld [vmem:[%s264 + $0x11c] sm:%s257]
                  %345 = vst [vmem:[%s265 + $0x9c] sm:%s257] %v344
                  %v346 = vld [vmem:[%s264 + $0x120] sm:%s257]
                  %347 = vst [vmem:[%s265 + $0xa0] sm:%s257] %v346
                  %v348 = vld [vmem:[%s264 + $0x124] sm:%s257]
                  %349 = vst [vmem:[%s265 + $0xa4] sm:%s257] %v348
                  %v350 = vld [vmem:[%s264 + $0x128] sm:%s257]
                  %351 = vst [vmem:[%s265 + $0xa8] sm:%s257] %v350
                  %v352 = vld [vmem:[%s264 + $0x12c] sm:%s257]
                  %353 = vst [vmem:[%s265 + $0xac] sm:%s257] %v352
                  %v354 = vld [vmem:[%s264 + $0x130] sm:%s257]
                  %355 = vst [vmem:[%s265 + $0xb0] sm:%s257] %v354
                  %v356 = vld [vmem:[%s264 + $0x134] sm:%s257]
                  %357 = vst [vmem:[%s265 + $0xb4] sm:%s257] %v356
                  %v358 = vld [vmem:[%s264 + $0x138] sm:%s257]
                  %359 = vst [vmem:[%s265 + $0xb8] sm:%s257] %v358
                  %v360 = vld [vmem:[%s264 + $0x13c] sm:%s257]
                  %361 = vst [vmem:[%s265 + $0xbc] sm:%s257] %v360
                $region55: #{swin_forward.21} parent=42 // loop_footer
                  %s263 = sadd.s32 1, %s259
                $region56: #{swin_forward.21} parent=42 // loop_footer_branch
                  %258 = sbr.rel target = $region52
                $region57: #{swin_forward.21} parent=42 // loop_exit
                  _
              $region43: #{swin_forward.21} parent=27 // pred_fallthru
                _
            $region28: #{swin_forward.21} parent=23 // pred_fallthru
              _
            // Predicated region
            $region29: #{swin_forward.21} parent=23 // pred_check
              _
            $region30: #{swin_forward.21} parent=23 // pred_check_branch
              %139 = sbr.rel (0) target = $region32
            $region31: #{swin_forward.21} parent=23 // pred_region
              %s141 = ssub.s32 16, 1
              loop: start=0, step=1, limit=1
              $region33: #{swin_forward.21} parent=31 // loop_pre_header
                _
              $region34: #{swin_forward.21} parent=31 // loop_header
                %s143 = sphi 0, %s147
                %p144 = scmp.ge.s32.totalorder %s143, 1
                %s148 = sphi %s133, %s133
                %s149 = sphi %s127, %s127
              $region35: #{swin_forward.21} parent=31 // loop_header_branch
                %146 = sbr.rel (%p144) target = $region39
              $region36: #{swin_forward.21} parent=31 // loop_body
                %v150 = vld [vmem:[%s148] sm:%s141]
                %151 = vst [vmem:[%s149] sm:%s141] %v150
                %v152 = vld [vmem:[%s148 + $0x4] sm:%s141]
                %153 = vst [vmem:[%s149 + $0x4] sm:%s141] %v152
                %v154 = vld [vmem:[%s148 + $0x8] sm:%s141]
                %155 = vst [vmem:[%s149 + $0x8] sm:%s141] %v154
                %v156 = vld [vmem:[%s148 + $0xc] sm:%s141]
                %157 = vst [vmem:[%s149 + $0xc] sm:%s141] %v156
                %v158 = vld [vmem:[%s148 + $0x10] sm:%s141]
                %159 = vst [vmem:[%s149 + $0x10] sm:%s141] %v158
                %v160 = vld [vmem:[%s148 + $0x14] sm:%s141]
                %161 = vst [vmem:[%s149 + $0x14] sm:%s141] %v160
                %v162 = vld [vmem:[%s148 + $0x18] sm:%s141]
                %163 = vst [vmem:[%s149 + $0x18] sm:%s141] %v162
                %v164 = vld [vmem:[%s148 + $0x1c] sm:%s141]
                %165 = vst [vmem:[%s149 + $0x1c] sm:%s141] %v164
                %v166 = vld [vmem:[%s148 + $0x20] sm:%s141]
                %167 = vst [vmem:[%s149 + $0x20] sm:%s141] %v166
                %v168 = vld [vmem:[%s148 + $0x24] sm:%s141]
                %169 = vst [vmem:[%s149 + $0x24] sm:%s141] %v168
                %v170 = vld [vmem:[%s148 + $0x28] sm:%s141]
                %171 = vst [vmem:[%s149 + $0x28] sm:%s141] %v170
                %v172 = vld [vmem:[%s148 + $0x2c] sm:%s141]
                %173 = vst [vmem:[%s149 + $0x2c] sm:%s141] %v172
                %v174 = vld [vmem:[%s148 + $0x30] sm:%s141]
                %175 = vst [vmem:[%s149 + $0x30] sm:%s141] %v174
                %v176 = vld [vmem:[%s148 + $0x34] sm:%s141]
                %177 = vst [vmem:[%s149 + $0x34] sm:%s141] %v176
                %v178 = vld [vmem:[%s148 + $0x38] sm:%s141]
                %179 = vst [vmem:[%s149 + $0x38] sm:%s141] %v178
                %v180 = vld [vmem:[%s148 + $0x3c] sm:%s141]
                %181 = vst [vmem:[%s149 + $0x3c] sm:%s141] %v180
                %v182 = vld [vmem:[%s148 + $0x80] sm:%s141]
                %183 = vst [vmem:[%s149 + $0x40] sm:%s141] %v182
                %v184 = vld [vmem:[%s148 + $0x84] sm:%s141]
                %185 = vst [vmem:[%s149 + $0x44] sm:%s141] %v184
                %v186 = vld [vmem:[%s148 + $0x88] sm:%s141]
                %187 = vst [vmem:[%s149 + $0x48] sm:%s141] %v186
                %v188 = vld [vmem:[%s148 + $0x8c] sm:%s141]
                %189 = vst [vmem:[%s149 + $0x4c] sm:%s141] %v188
                %v190 = vld [vmem:[%s148 + $0x90] sm:%s141]
                %191 = vst [vmem:[%s149 + $0x50] sm:%s141] %v190
                %v192 = vld [vmem:[%s148 + $0x94] sm:%s141]
                %193 = vst [vmem:[%s149 + $0x54] sm:%s141] %v192
                %v194 = vld [vmem:[%s148 + $0x98] sm:%s141]
                %195 = vst [vmem:[%s149 + $0x58] sm:%s141] %v194
                %v196 = vld [vmem:[%s148 + $0x9c] sm:%s141]
                %197 = vst [vmem:[%s149 + $0x5c] sm:%s141] %v196
                %v198 = vld [vmem:[%s148 + $0xa0] sm:%s141]
                %199 = vst [vmem:[%s149 + $0x60] sm:%s141] %v198
                %v200 = vld [vmem:[%s148 + $0xa4] sm:%s141]
                %201 = vst [vmem:[%s149 + $0x64] sm:%s141] %v200
                %v202 = vld [vmem:[%s148 + $0xa8] sm:%s141]
                %203 = vst [vmem:[%s149 + $0x68] sm:%s141] %v202
                %v204 = vld [vmem:[%s148 + $0xac] sm:%s141]
                %205 = vst [vmem:[%s149 + $0x6c] sm:%s141] %v204
                %v206 = vld [vmem:[%s148 + $0xb0] sm:%s141]
                %207 = vst [vmem:[%s149 + $0x70] sm:%s141] %v206
                %v208 = vld [vmem:[%s148 + $0xb4] sm:%s141]
                %209 = vst [vmem:[%s149 + $0x74] sm:%s141] %v208
                %v210 = vld [vmem:[%s148 + $0xb8] sm:%s141]
                %211 = vst [vmem:[%s149 + $0x78] sm:%s141] %v210
                %v212 = vld [vmem:[%s148 + $0xbc] sm:%s141]
                %213 = vst [vmem:[%s149 + $0x7c] sm:%s141] %v212
                %v214 = vld [vmem:[%s148 + $0x100] sm:%s141]
                %215 = vst [vmem:[%s149 + $0x80] sm:%s141] %v214
                %v216 = vld [vmem:[%s148 + $0x104] sm:%s141]
                %217 = vst [vmem:[%s149 + $0x84] sm:%s141] %v216
                %v218 = vld [vmem:[%s148 + $0x108] sm:%s141]
                %219 = vst [vmem:[%s149 + $0x88] sm:%s141] %v218
                %v220 = vld [vmem:[%s148 + $0x10c] sm:%s141]
                %221 = vst [vmem:[%s149 + $0x8c] sm:%s141] %v220
                %v222 = vld [vmem:[%s148 + $0x110] sm:%s141]
                %223 = vst [vmem:[%s149 + $0x90] sm:%s141] %v222
                %v224 = vld [vmem:[%s148 + $0x114] sm:%s141]
                %225 = vst [vmem:[%s149 + $0x94] sm:%s141] %v224
                %v226 = vld [vmem:[%s148 + $0x118] sm:%s141]
                %227 = vst [vmem:[%s149 + $0x98] sm:%s141] %v226
                %v228 = vld [vmem:[%s148 + $0x11c] sm:%s141]
                %229 = vst [vmem:[%s149 + $0x9c] sm:%s141] %v228
                %v230 = vld [vmem:[%s148 + $0x120] sm:%s141]
                %231 = vst [vmem:[%s149 + $0xa0] sm:%s141] %v230
                %v232 = vld [vmem:[%s148 + $0x124] sm:%s141]
                %233 = vst [vmem:[%s149 + $0xa4] sm:%s141] %v232
                %v234 = vld [vmem:[%s148 + $0x128] sm:%s141]
                %235 = vst [vmem:[%s149 + $0xa8] sm:%s141] %v234
                %v236 = vld [vmem:[%s148 + $0x12c] sm:%s141]
                %237 = vst [vmem:[%s149 + $0xac] sm:%s141] %v236
                %v238 = vld [vmem:[%s148 + $0x130] sm:%s141]
                %239 = vst [vmem:[%s149 + $0xb0] sm:%s141] %v238
                %v240 = vld [vmem:[%s148 + $0x134] sm:%s141]
                %241 = vst [vmem:[%s149 + $0xb4] sm:%s141] %v240
                %v242 = vld [vmem:[%s148 + $0x138] sm:%s141]
                %243 = vst [vmem:[%s149 + $0xb8] sm:%s141] %v242
                %v244 = vld [vmem:[%s148 + $0x13c] sm:%s141]
                %245 = vst [vmem:[%s149 + $0xbc] sm:%s141] %v244
              $region37: #{swin_forward.21} parent=31 // loop_footer
                %s147 = sadd.s32 1, %s143
              $region38: #{swin_forward.21} parent=31 // loop_footer_branch
                %142 = sbr.rel target = $region34
              $region39: #{swin_forward.21} parent=31 // loop_exit
                _
            $region32: #{swin_forward.21} parent=23 // pred_fallthru
              _
          $region24: #{swin_forward.21} parent=19 // pred_fallthru
            _
          %362 = vnop
        $region20: #{swin_forward.21} parent=15 // pred_fallthru
          _
        // Predicated region
        $region58: #{swin_forward.21} parent=15 // pred_check
          %p363 = pneg %p68
        $region59: #{swin_forward.21} parent=15 // pred_check_branch
          %365 = sbr.rel (%p363) target = $region61
        $region60: #{swin_forward.21} parent=15 // pred_region
          %p366 = scmp.lt.s32.totalorder %s16, 1
          %s367 = scalar_select %p366, %s16, 1
          %s368 = smul.addr %s367, 2
          %s369 = smul.addr %s368, 8
          %s370 = scalar_lea.vmem %s1, %s369
        $region61: #{swin_forward.21} parent=15 // pred_fallthru
          _
      $region16: #{swin_forward.21} parent=5 // pred_fallthru
        _
      %p371 = scmp.le.s32.totalorder 1, %s8
      %p372 = scmp.lt.s32.totalorder %s8, 3
      %p373 = pnand %p371, %p372
      %p374 = pneg %p373
      // Predicated region
      $region62: #{swin_forward.21} parent=5 // pred_check
        _
      $region63: #{swin_forward.21} parent=5 // pred_check_branch
        %376 = sbr.rel (%p373) target = $region65
      $region64: #{swin_forward.21} parent=5 // pred_region
        %s377 = ssub.s32 %s8, 1
        %s378 = sand.u32 %s35, 1
        %s379 = sand.u32 %s35, 1
        %s380 = smul.addr %s379, 192
        %s381 = scalar_lea.vmem [#allocation2], %s380
        // Predicated region
        $region66: #{swin_forward.21} parent=64 // pred_check
          %p382 = pneg %p48
        $region67: #{swin_forward.21} parent=64 // pred_check_branch
          %384 = sbr.rel (%p382) target = $region69
        $region68: #{swin_forward.21} parent=64 // pred_region
          _
        $region69: #{swin_forward.21} parent=64 // pred_fallthru
          _
        %s385 = sand.u32 %s35, 1
        %s386 = sand.u32 %s35, 1
        %s387 = smul.addr %s386, 192
        %s388 = scalar_lea.vmem [#allocation2], %s387
        %p389 = pneg %p48
        %p390 = pneg %p45
        %p391 = scmp.lt.s32.totalorder %s18, 1
        %s392 = scalar_select %p391, %s18, 1
        %s393 = smul.addr %s392, 2
        %s394 = smul.addr %s393, 8
        %s395 = scalar_lea.vmem %s1, %s394
        %p396 = pneg %p74
        %p397 = pneg %p71
        %p398 = pneg %p102
        %p399 = pneg %p99
        %s400 = smul.u32 8, %s17
        %p401 = scmp.lt.s32.totalorder %s18, 1
        %s402 = scalar_select %p401, %s18, 1
        %p403 = scmp.lt.s32.totalorder %s400, 7
        %s404 = scalar_select %p403, %s400, 7
        %s405 = smul.addr %s404, 2
        %s406 = smul.addr %s402, 16
        %s407 = sadd.s32 %s405, %s406
        %s408 = smul.addr %s407, 4
        %s409 = scalar_lea.vmem %s2, %s408
        %s410 = smul.u32 8, %s17
        %p411 = scmp.lt.s32.totalorder %s18, 1
        %s412 = scalar_select %p411, %s18, 1
        %s413 = smul.addr %s412, 2
        %s414 = smul.addr %s413, 8
        %s415 = scalar_lea.vmem %s1, %s414
        %s416 = smul.u32 8, %s17
        %p417 = scmp.lt.s32.totalorder %s18, 1
        %s418 = scalar_select %p417, %s18, 1
        %p419 = scmp.lt.s32.totalorder %s416, 7
        %s420 = scalar_select %p419, %s416, 7
        %s421 = smul.addr %s420, 2
        %s422 = smul.addr %s418, 16
        %s423 = sadd.s32 %s421, %s422
        %s424 = smul.addr %s423, 4
        %s425 = scalar_lea.vmem %s2, %s424
        %s426 = smul.u32 8, %s17
        %v428 = vld [vmem:[%s381] sm:$0xf]
        %v429 = vld [vmem:[%s381 + $0x4] sm:$0xf]
        %v430 = vld [vmem:[%s381 + $0x8] sm:$0xf]
        %v431 = vld [vmem:[%s381 + $0xc] sm:$0xf]
        %v432 = vld [vmem:[%s381 + $0x10] sm:$0xf]
        %v433 = vld [vmem:[%s381 + $0x14] sm:$0xf]
        %v434 = vld [vmem:[%s381 + $0x18] sm:$0xf]
        %v435 = vld [vmem:[%s381 + $0x1c] sm:$0xf]
        %v436 = vld [vmem:[%s381 + $0x20] sm:$0xf]
        %v437 = vld [vmem:[%s381 + $0x24] sm:$0xf]
        %v438 = vld [vmem:[%s381 + $0x28] sm:$0xf]
        %v439 = vld [vmem:[%s381 + $0x2c] sm:$0xf]
        %v440 = vld [vmem:[%s381 + $0x30] sm:$0xf]
        %v441 = vld [vmem:[%s381 + $0x34] sm:$0xf]
        %v442 = vld [vmem:[%s381 + $0x38] sm:$0xf]
        %v443 = vld [vmem:[%s381 + $0x3c] sm:$0xf]
        %s444 = scalar_lea.vmem %s381, 64 [#allocation2]
        %v445 = vld [vmem:[%s444] sm:$0xf]
        %v446 = vld [vmem:[%s444 + $0x4] sm:$0xf]
        %v447 = vld [vmem:[%s444 + $0x8] sm:$0xf]
        %v448 = vld [vmem:[%s444 + $0xc] sm:$0xf]
        %v449 = vld [vmem:[%s444 + $0x10] sm:$0xf]
        %v450 = vld [vmem:[%s444 + $0x14] sm:$0xf]
        %v451 = vld [vmem:[%s444 + $0x18] sm:$0xf]
        %v452 = vld [vmem:[%s444 + $0x1c] sm:$0xf]
        %v453 = vld [vmem:[%s444 + $0x20] sm:$0xf]
        %v454 = vld [vmem:[%s444 + $0x24] sm:$0xf]
        %v455 = vld [vmem:[%s444 + $0x28] sm:$0xf]
        %v456 = vld [vmem:[%s444 + $0x2c] sm:$0xf]
        %v457 = vld [vmem:[%s444 + $0x30] sm:$0xf]
        %v458 = vld [vmem:[%s444 + $0x34] sm:$0xf]
        %v459 = vld [vmem:[%s444 + $0x38] sm:$0xf]
        %v460 = vld [vmem:[%s444 + $0x3c] sm:$0xf]
        %s461 = scalar_lea.vmem %s381, 128 [#allocation2]
        %v462 = vld [vmem:[%s461] sm:$0xf]
        %v463 = vld [vmem:[%s461 + $0x4] sm:$0xf]
        %v464 = vld [vmem:[%s461 + $0x8] sm:$0xf]
        %v465 = vld [vmem:[%s461 + $0xc] sm:$0xf]
        %v466 = vld [vmem:[%s461 + $0x10] sm:$0xf]
        %v467 = vld [vmem:[%s461 + $0x14] sm:$0xf]
        %v468 = vld [vmem:[%s461 + $0x18] sm:$0xf]
        %v469 = vld [vmem:[%s461 + $0x1c] sm:$0xf]
        %v470 = vld [vmem:[%s461 + $0x20] sm:$0xf]
        %v471 = vld [vmem:[%s461 + $0x24] sm:$0xf]
        %v472 = vld [vmem:[%s461 + $0x28] sm:$0xf]
        %v473 = vld [vmem:[%s461 + $0x2c] sm:$0xf]
        %v474 = vld [vmem:[%s461 + $0x30] sm:$0xf]
        %v475 = vld [vmem:[%s461 + $0x34] sm:$0xf]
        %v476 = vld [vmem:[%s461 + $0x38] sm:$0xf]
        %v477 = vld [vmem:[%s461 + $0x3c] sm:$0xf]
        %v480 = vunpack.c.l.b16 %v428
        %v481 = vunpack.c.l.b16 %v429
        %v482 = vpack.c.b16 %v481, %v480
        %v485 = vunpack.c.l.b16 %v445
        %v486 = vunpack.c.l.b16 %v446
        %v487 = vpack.c.b16 %v486, %v485
        %vm488 = vcmask 130048
        %v490 = vsel %vm488, %v482, 0
        %v493 = vsel %vm488, %v487, 0
        %495 = vmatprep.subr.bf16.mxu0 0
        %496 = vmatpush1.bf16.xpose.msra.mxu0 0
        %497 = vmatprep.subr.bf16.mxu0 0
        %498 = vmatpush1.bf16.xpose.msra.mxu0 0
        %499 = vmatprep.subr.bf16.mxu0 0
        %500 = vmatpush1.bf16.xpose.msra.mxu0 0
        %501 = vmatprep.subr.bf16.mxu0 0
        %502 = vmatpush1.bf16.xpose.msra.mxu0 0
        %503 = vmatprep.subr.bf16.mxu0 0
        %504 = vmatpush1.bf16.xpose.msra.mxu0 0
        %505 = vmatprep.subr.bf16.mxu0 0
        %506 = vmatpush1.bf16.xpose.msra.mxu0 0
        %507 = vmatprep.subr.bf16.mxu0 0
        %508 = vmatpush1.bf16.xpose.msra.mxu0 0
        %509 = vmatprep.subr.bf16.mxu0 0
        %510 = vmatpush1.bf16.xpose.msra.mxu0 %v493
        %511 = vmatprep.subr.bf16.mxu0 0
        %512 = vmatpush2.bf16.xpose.msra.mxu0 0
        %513 = vmatprep.subr.bf16.mxu0 0
        %514 = vmatpush2.bf16.xpose.msra.mxu0 0
        %515 = vmatprep.subr.bf16.mxu0 0
        %516 = vmatpush2.bf16.xpose.msra.mxu0 0
        %517 = vmatprep.subr.bf16.mxu0 0
        %518 = vmatpush2.bf16.xpose.msra.mxu0 0
        %519 = vmatprep.subr.bf16.mxu0 0
        %520 = vmatpush2.bf16.xpose.msra.mxu0 0
        %521 = vmatprep.subr.bf16.mxu0 0
        %522 = vmatpush2.bf16.xpose.msra.mxu0 0
        %523 = vmatprep.subr.bf16.mxu0 0
        %524 = vmatpush2.bf16.xpose.msra.mxu0 0
        %525 = vmatprep.subr.bf16.mxu0 0
        %526 = vmatpush2.bf16.xpose.msra.mxu0 0
        %527 = vmatprep.mubr.bf16.mxu0 0
        %528 = vmatmul.mubr.bf16.gmra.mxu0 %v490
        %v529 = vpop.f32.mrf.mxu0
        %v530 = vadd.f32 0.0, %v529
        %v531 = vpop.f32.mrf.mxu0
        %v532 = vpop.f32.mrf.mxu0
        %v533 = vadd.f32 0.0, %v532
        %v534 = vpop.f32.mrf.mxu0
        %535 = vdwg.mxu0
        %v538 = vunpack.c.l.b16 %v430
        %v539 = vunpack.c.l.b16 %v431
        %v540 = vpack.c.b16 %v539, %v538
        %v543 = vunpack.c.l.b16 %v447
        %v544 = vunpack.c.l.b16 %v448
        %v545 = vpack.c.b16 %v544, %v543
        %v547 = vsel %vm488, %v540, 0
        %v550 = vsel %vm488, %v545, 0
        %552 = vmatprep.subr.bf16.mxu0 0
        %553 = vmatpush1.bf16.xpose.msra.mxu0 0
        %554 = vmatprep.subr.bf16.mxu0 0
        %555 = vmatpush1.bf16.xpose.msra.mxu0 0
        %556 = vmatprep.subr.bf16.mxu0 0
        %557 = vmatpush1.bf16.xpose.msra.mxu0 0
        %558 = vmatprep.subr.bf16.mxu0 0
        %559 = vmatpush1.bf16.xpose.msra.mxu0 0
        %560 = vmatprep.subr.bf16.mxu0 0
        %561 = vmatpush1.bf16.xpose.msra.mxu0 0
        %562 = vmatprep.subr.bf16.mxu0 0
        %563 = vmatpush1.bf16.xpose.msra.mxu0 0
        %564 = vmatprep.subr.bf16.mxu0 0
        %565 = vmatpush1.bf16.xpose.msra.mxu0 0
        %566 = vmatprep.subr.bf16.mxu0 0
        %567 = vmatpush1.bf16.xpose.msra.mxu0 %v550
        %568 = vmatprep.subr.bf16.mxu0 0
        %569 = vmatpush2.bf16.xpose.msra.mxu0 0
        %570 = vmatprep.subr.bf16.mxu0 0
        %571 = vmatpush2.bf16.xpose.msra.mxu0 0
        %572 = vmatprep.subr.bf16.mxu0 0
        %573 = vmatpush2.bf16.xpose.msra.mxu0 0
        %574 = vmatprep.subr.bf16.mxu0 0
        %575 = vmatpush2.bf16.xpose.msra.mxu0 0
        %576 = vmatprep.subr.bf16.mxu0 0
        %577 = vmatpush2.bf16.xpose.msra.mxu0 0
        %578 = vmatprep.subr.bf16.mxu0 0
        %579 = vmatpush2.bf16.xpose.msra.mxu0 0
        %580 = vmatprep.subr.bf16.mxu0 0
        %581 = vmatpush2.bf16.xpose.msra.mxu0 0
        %582 = vmatprep.subr.bf16.mxu0 0
        %583 = vmatpush2.bf16.xpose.msra.mxu0 0
        %584 = vmatprep.mubr.bf16.mxu0 0
        %585 = vmatmul.mubr.bf16.gmra.mxu0 %v547
        %v586 = vpop.f32.mrf.mxu0
        %v587 = vadd.f32 0.0, %v586
        %v588 = vpop.f32.mrf.mxu0
        %v589 = vpop.f32.mrf.mxu0
        %v590 = vadd.f32 0.0, %v589
        %v591 = vpop.f32.mrf.mxu0
        %592 = vdwg.mxu0
        %v595 = vunpack.c.l.b16 %v432
        %v596 = vunpack.c.l.b16 %v433
        %v597 = vpack.c.b16 %v596, %v595
        %v600 = vunpack.c.l.b16 %v449
        %v601 = vunpack.c.l.b16 %v450
        %v602 = vpack.c.b16 %v601, %v600
        %v604 = vsel %vm488, %v597, 0
        %v607 = vsel %vm488, %v602, 0
        %609 = vmatprep.subr.bf16.mxu0 0
        %610 = vmatpush1.bf16.xpose.msra.mxu0 0
        %611 = vmatprep.subr.bf16.mxu0 0
        %612 = vmatpush1.bf16.xpose.msra.mxu0 0
        %613 = vmatprep.subr.bf16.mxu0 0
        %614 = vmatpush1.bf16.xpose.msra.mxu0 0
        %615 = vmatprep.subr.bf16.mxu0 0
        %616 = vmatpush1.bf16.xpose.msra.mxu0 0
        %617 = vmatprep.subr.bf16.mxu0 0
        %618 = vmatpush1.bf16.xpose.msra.mxu0 0
        %619 = vmatprep.subr.bf16.mxu0 0
        %620 = vmatpush1.bf16.xpose.msra.mxu0 0
        %621 = vmatprep.subr.bf16.mxu0 0
        %622 = vmatpush1.bf16.xpose.msra.mxu0 0
        %623 = vmatprep.subr.bf16.mxu0 0
        %624 = vmatpush1.bf16.xpose.msra.mxu0 %v607
        %625 = vmatprep.subr.bf16.mxu0 0
        %626 = vmatpush2.bf16.xpose.msra.mxu0 0
        %627 = vmatprep.subr.bf16.mxu0 0
        %628 = vmatpush2.bf16.xpose.msra.mxu0 0
        %629 = vmatprep.subr.bf16.mxu0 0
        %630 = vmatpush2.bf16.xpose.msra.mxu0 0
        %631 = vmatprep.subr.bf16.mxu0 0
        %632 = vmatpush2.bf16.xpose.msra.mxu0 0
        %633 = vmatprep.subr.bf16.mxu0 0
        %634 = vmatpush2.bf16.xpose.msra.mxu0 0
        %635 = vmatprep.subr.bf16.mxu0 0
        %636 = vmatpush2.bf16.xpose.msra.mxu0 0
        %637 = vmatprep.subr.bf16.mxu0 0
        %638 = vmatpush2.bf16.xpose.msra.mxu0 0
        %639 = vmatprep.subr.bf16.mxu0 0
        %640 = vmatpush2.bf16.xpose.msra.mxu0 0
        %641 = vmatprep.mubr.bf16.mxu0 0
        %642 = vmatmul.mubr.bf16.gmra.mxu0 %v604
        %v643 = vpop.f32.mrf.mxu0
        %v644 = vadd.f32 0.0, %v643
        %v645 = vpop.f32.mrf.mxu0
        %v646 = vpop.f32.mrf.mxu0
        %v647 = vadd.f32 0.0, %v646
        %v648 = vpop.f32.mrf.mxu0
        %649 = vdwg.mxu0
        %v652 = vunpack.c.l.b16 %v434
        %v653 = vunpack.c.l.b16 %v435
        %v654 = vpack.c.b16 %v653, %v652
        %v657 = vunpack.c.l.b16 %v451
        %v658 = vunpack.c.l.b16 %v452
        %v659 = vpack.c.b16 %v658, %v657
        %v661 = vsel %vm488, %v654, 0
        %v664 = vsel %vm488, %v659, 0
        %666 = vmatprep.subr.bf16.mxu0 0
        %667 = vmatpush1.bf16.xpose.msra.mxu0 0
        %668 = vmatprep.subr.bf16.mxu0 0
        %669 = vmatpush1.bf16.xpose.msra.mxu0 0
        %670 = vmatprep.subr.bf16.mxu0 0
        %671 = vmatpush1.bf16.xpose.msra.mxu0 0
        %672 = vmatprep.subr.bf16.mxu0 0
        %673 = vmatpush1.bf16.xpose.msra.mxu0 0
        %674 = vmatprep.subr.bf16.mxu0 0
        %675 = vmatpush1.bf16.xpose.msra.mxu0 0
        %676 = vmatprep.subr.bf16.mxu0 0
        %677 = vmatpush1.bf16.xpose.msra.mxu0 0
        %678 = vmatprep.subr.bf16.mxu0 0
        %679 = vmatpush1.bf16.xpose.msra.mxu0 0
        %680 = vmatprep.subr.bf16.mxu0 0
        %681 = vmatpush1.bf16.xpose.msra.mxu0 %v664
        %682 = vmatprep.subr.bf16.mxu0 0
        %683 = vmatpush2.bf16.xpose.msra.mxu0 0
        %684 = vmatprep.subr.bf16.mxu0 0
        %685 = vmatpush2.bf16.xpose.msra.mxu0 0
        %686 = vmatprep.subr.bf16.mxu0 0
        %687 = vmatpush2.bf16.xpose.msra.mxu0 0
        %688 = vmatprep.subr.bf16.mxu0 0
        %689 = vmatpush2.bf16.xpose.msra.mxu0 0
        %690 = vmatprep.subr.bf16.mxu0 0
        %691 = vmatpush2.bf16.xpose.msra.mxu0 0
        %692 = vmatprep.subr.bf16.mxu0 0
        %693 = vmatpush2.bf16.xpose.msra.mxu0 0
        %694 = vmatprep.subr.bf16.mxu0 0
        %695 = vmatpush2.bf16.xpose.msra.mxu0 0
        %696 = vmatprep.subr.bf16.mxu0 0
        %697 = vmatpush2.bf16.xpose.msra.mxu0 0
        %698 = vmatprep.mubr.bf16.mxu0 0
        %699 = vmatmul.mubr.bf16.gmra.mxu0 %v661
        %v700 = vpop.f32.mrf.mxu0
        %v701 = vadd.f32 0.0, %v700
        %v702 = vpop.f32.mrf.mxu0
        %v703 = vpop.f32.mrf.mxu0
        %v704 = vadd.f32 0.0, %v703
        %v705 = vpop.f32.mrf.mxu0
        %706 = vdwg.mxu0
        %v709 = vunpack.c.l.b16 %v436
        %v710 = vunpack.c.l.b16 %v437
        %v711 = vpack.c.b16 %v710, %v709
        %v714 = vunpack.c.l.b16 %v453
        %v715 = vunpack.c.l.b16 %v454
        %v716 = vpack.c.b16 %v715, %v714
        %v718 = vsel %vm488, %v711, 0
        %v721 = vsel %vm488, %v716, 0
        %723 = vmatprep.subr.bf16.mxu0 0
        %724 = vmatpush1.bf16.xpose.msra.mxu0 0
        %725 = vmatprep.subr.bf16.mxu0 0
        %726 = vmatpush1.bf16.xpose.msra.mxu0 0
        %727 = vmatprep.subr.bf16.mxu0 0
        %728 = vmatpush1.bf16.xpose.msra.mxu0 0
        %729 = vmatprep.subr.bf16.mxu0 0
        %730 = vmatpush1.bf16.xpose.msra.mxu0 0
        %731 = vmatprep.subr.bf16.mxu0 0
        %732 = vmatpush1.bf16.xpose.msra.mxu0 0
        %733 = vmatprep.subr.bf16.mxu0 0
        %734 = vmatpush1.bf16.xpose.msra.mxu0 0
        %735 = vmatprep.subr.bf16.mxu0 0
        %736 = vmatpush1.bf16.xpose.msra.mxu0 0
        %737 = vmatprep.subr.bf16.mxu0 0
        %738 = vmatpush1.bf16.xpose.msra.mxu0 %v721
        %739 = vmatprep.subr.bf16.mxu0 0
        %740 = vmatpush2.bf16.xpose.msra.mxu0 0
        %741 = vmatprep.subr.bf16.mxu0 0
        %742 = vmatpush2.bf16.xpose.msra.mxu0 0
        %743 = vmatprep.subr.bf16.mxu0 0
        %744 = vmatpush2.bf16.xpose.msra.mxu0 0
        %745 = vmatprep.subr.bf16.mxu0 0
        %746 = vmatpush2.bf16.xpose.msra.mxu0 0
        %747 = vmatprep.subr.bf16.mxu0 0
        %748 = vmatpush2.bf16.xpose.msra.mxu0 0
        %749 = vmatprep.subr.bf16.mxu0 0
        %750 = vmatpush2.bf16.xpose.msra.mxu0 0
        %751 = vmatprep.subr.bf16.mxu0 0
        %752 = vmatpush2.bf16.xpose.msra.mxu0 0
        %753 = vmatprep.subr.bf16.mxu0 0
        %754 = vmatpush2.bf16.xpose.msra.mxu0 0
        %755 = vmatprep.mubr.bf16.mxu0 0
        %756 = vmatmul.mubr.bf16.gmra.mxu0 %v718
        %v757 = vpop.f32.mrf.mxu0
        %v758 = vadd.f32 0.0, %v757
        %v759 = vpop.f32.mrf.mxu0
        %v760 = vpop.f32.mrf.mxu0
        %v761 = vadd.f32 0.0, %v760
        %v762 = vpop.f32.mrf.mxu0
        %763 = vdwg.mxu0
        %v766 = vunpack.c.l.b16 %v438
        %v767 = vunpack.c.l.b16 %v439
        %v768 = vpack.c.b16 %v767, %v766
        %v771 = vunpack.c.l.b16 %v455
        %v772 = vunpack.c.l.b16 %v456
        %v773 = vpack.c.b16 %v772, %v771
        %v775 = vsel %vm488, %v768, 0
        %v778 = vsel %vm488, %v773, 0
        %780 = vmatprep.subr.bf16.mxu0 0
        %781 = vmatpush1.bf16.xpose.msra.mxu0 0
        %782 = vmatprep.subr.bf16.mxu0 0
        %783 = vmatpush1.bf16.xpose.msra.mxu0 0
        %784 = vmatprep.subr.bf16.mxu0 0
        %785 = vmatpush1.bf16.xpose.msra.mxu0 0
        %786 = vmatprep.subr.bf16.mxu0 0
        %787 = vmatpush1.bf16.xpose.msra.mxu0 0
        %788 = vmatprep.subr.bf16.mxu0 0
        %789 = vmatpush1.bf16.xpose.msra.mxu0 0
        %790 = vmatprep.subr.bf16.mxu0 0
        %791 = vmatpush1.bf16.xpose.msra.mxu0 0
        %792 = vmatprep.subr.bf16.mxu0 0
        %793 = vmatpush1.bf16.xpose.msra.mxu0 0
        %794 = vmatprep.subr.bf16.mxu0 0
        %795 = vmatpush1.bf16.xpose.msra.mxu0 %v778
        %796 = vmatprep.subr.bf16.mxu0 0
        %797 = vmatpush2.bf16.xpose.msra.mxu0 0
        %798 = vmatprep.subr.bf16.mxu0 0
        %799 = vmatpush2.bf16.xpose.msra.mxu0 0
        %800 = vmatprep.subr.bf16.mxu0 0
        %801 = vmatpush2.bf16.xpose.msra.mxu0 0
        %802 = vmatprep.subr.bf16.mxu0 0
        %803 = vmatpush2.bf16.xpose.msra.mxu0 0
        %804 = vmatprep.subr.bf16.mxu0 0
        %805 = vmatpush2.bf16.xpose.msra.mxu0 0
        %806 = vmatprep.subr.bf16.mxu0 0
        %807 = vmatpush2.bf16.xpose.msra.mxu0 0
        %808 = vmatprep.subr.bf16.mxu0 0
        %809 = vmatpush2.bf16.xpose.msra.mxu0 0
        %810 = vmatprep.subr.bf16.mxu0 0
        %811 = vmatpush2.bf16.xpose.msra.mxu0 0
        %812 = vmatprep.mubr.bf16.mxu0 0
        %813 = vmatmul.mubr.bf16.gmra.mxu0 %v775
        %v814 = vpop.f32.mrf.mxu0
        %v815 = vadd.f32 0.0, %v814
        %v816 = vpop.f32.mrf.mxu0
        %v817 = vpop.f32.mrf.mxu0
        %v818 = vadd.f32 0.0, %v817
        %v819 = vpop.f32.mrf.mxu0
        %820 = vdwg.mxu0
        %v823 = vunpack.c.l.b16 %v440
        %v824 = vunpack.c.l.b16 %v441
        %v825 = vpack.c.b16 %v824, %v823
        %v828 = vunpack.c.l.b16 %v457
        %v829 = vunpack.c.l.b16 %v458
        %v830 = vpack.c.b16 %v829, %v828
        %v832 = vsel %vm488, %v825, 0
        %v835 = vsel %vm488, %v830, 0
        %837 = vmatprep.subr.bf16.mxu0 0
        %838 = vmatpush1.bf16.xpose.msra.mxu0 0
        %839 = vmatprep.subr.bf16.mxu0 0
        %840 = vmatpush1.bf16.xpose.msra.mxu0 0
        %841 = vmatprep.subr.bf16.mxu0 0
        %842 = vmatpush1.bf16.xpose.msra.mxu0 0
        %843 = vmatprep.subr.bf16.mxu0 0
        %844 = vmatpush1.bf16.xpose.msra.mxu0 0
        %845 = vmatprep.subr.bf16.mxu0 0
        %846 = vmatpush1.bf16.xpose.msra.mxu0 0
        %847 = vmatprep.subr.bf16.mxu0 0
        %848 = vmatpush1.bf16.xpose.msra.mxu0 0
        %849 = vmatprep.subr.bf16.mxu0 0
        %850 = vmatpush1.bf16.xpose.msra.mxu0 0
        %851 = vmatprep.subr.bf16.mxu0 0
        %852 = vmatpush1.bf16.xpose.msra.mxu0 %v835
        %853 = vmatprep.subr.bf16.mxu0 0
        %854 = vmatpush2.bf16.xpose.msra.mxu0 0
        %855 = vmatprep.subr.bf16.mxu0 0
        %856 = vmatpush2.bf16.xpose.msra.mxu0 0
        %857 = vmatprep.subr.bf16.mxu0 0
        %858 = vmatpush2.bf16.xpose.msra.mxu0 0
        %859 = vmatprep.subr.bf16.mxu0 0
        %860 = vmatpush2.bf16.xpose.msra.mxu0 0
        %861 = vmatprep.subr.bf16.mxu0 0
        %862 = vmatpush2.bf16.xpose.msra.mxu0 0
        %863 = vmatprep.subr.bf16.mxu0 0
        %864 = vmatpush2.bf16.xpose.msra.mxu0 0
        %865 = vmatprep.subr.bf16.mxu0 0
        %866 = vmatpush2.bf16.xpose.msra.mxu0 0
        %867 = vmatprep.subr.bf16.mxu0 0
        %868 = vmatpush2.bf16.xpose.msra.mxu0 0
        %869 = vmatprep.mubr.bf16.mxu0 0
        %870 = vmatmul.mubr.bf16.gmra.mxu0 %v832
        %v871 = vpop.f32.mrf.mxu0
        %v872 = vadd.f32 0.0, %v871
        %v873 = vpop.f32.mrf.mxu0
        %v874 = vpop.f32.mrf.mxu0
        %v875 = vadd.f32 0.0, %v874
        %v876 = vpop.f32.mrf.mxu0
        %877 = vdwg.mxu0
        %v880 = vunpack.c.l.b16 %v442
        %v881 = vunpack.c.l.b16 %v443
        %v882 = vpack.c.b16 %v881, %v880
        %v885 = vunpack.c.l.b16 %v459
        %v886 = vunpack.c.l.b16 %v460
        %v887 = vpack.c.b16 %v886, %v885
        %v889 = vsel %vm488, %v882, 0
        %v892 = vsel %vm488, %v887, 0
        %894 = vmatprep.subr.bf16.mxu0 0
        %895 = vmatpush1.bf16.xpose.msra.mxu0 0
        %896 = vmatprep.subr.bf16.mxu0 0
        %897 = vmatpush1.bf16.xpose.msra.mxu0 0
        %898 = vmatprep.subr.bf16.mxu0 0
        %899 = vmatpush1.bf16.xpose.msra.mxu0 0
        %900 = vmatprep.subr.bf16.mxu0 0
        %901 = vmatpush1.bf16.xpose.msra.mxu0 0
        %902 = vmatprep.subr.bf16.mxu0 0
        %903 = vmatpush1.bf16.xpose.msra.mxu0 0
        %904 = vmatprep.subr.bf16.mxu0 0
        %905 = vmatpush1.bf16.xpose.msra.mxu0 0
        %906 = vmatprep.subr.bf16.mxu0 0
        %907 = vmatpush1.bf16.xpose.msra.mxu0 0
        %908 = vmatprep.subr.bf16.mxu0 0
        %909 = vmatpush1.bf16.xpose.msra.mxu0 %v892
        %910 = vmatprep.subr.bf16.mxu0 0
        %911 = vmatpush2.bf16.xpose.msra.mxu0 0
        %912 = vmatprep.subr.bf16.mxu0 0
        %913 = vmatpush2.bf16.xpose.msra.mxu0 0
        %914 = vmatprep.subr.bf16.mxu0 0
        %915 = vmatpush2.bf16.xpose.msra.mxu0 0
        %916 = vmatprep.subr.bf16.mxu0 0
        %917 = vmatpush2.bf16.xpose.msra.mxu0 0
        %918 = vmatprep.subr.bf16.mxu0 0
        %919 = vmatpush2.bf16.xpose.msra.mxu0 0
        %920 = vmatprep.subr.bf16.mxu0 0
        %921 = vmatpush2.bf16.xpose.msra.mxu0 0
        %922 = vmatprep.subr.bf16.mxu0 0
        %923 = vmatpush2.bf16.xpose.msra.mxu0 0
        %924 = vmatprep.subr.bf16.mxu0 0
        %925 = vmatpush2.bf16.xpose.msra.mxu0 0
        %926 = vmatprep.mubr.bf16.mxu0 0
        %927 = vmatmul.mubr.bf16.gmra.mxu0 %v889
        %v928 = vpop.f32.mrf.mxu0
        %v929 = vadd.f32 0.0, %v928
        %v930 = vpop.f32.mrf.mxu0
        %v931 = vpop.f32.mrf.mxu0
        %v932 = vadd.f32 0.0, %v931
        %v933 = vpop.f32.mrf.mxu0
        %934 = vdwg.mxu0
        %v935 = vmul.f32 %v530, 0.25
        %v936 = vmul.f32 %v533, 0.25
        %v937 = vmul.f32 %v587, 0.25
        %v938 = vmul.f32 %v590, 0.25
        %v939 = vmul.f32 %v644, 0.25
        %v940 = vmul.f32 %v647, 0.25
        %v941 = vmul.f32 %v701, 0.25
        %v942 = vmul.f32 %v704, 0.25
        %v943 = vmul.f32 %v758, 0.25
        %v944 = vmul.f32 %v761, 0.25
        %v945 = vmul.f32 %v815, 0.25
        %v946 = vmul.f32 %v818, 0.25
        %v947 = vmul.f32 %v872, 0.25
        %v948 = vmul.f32 %v875, 0.25
        %v949 = vmul.f32 %v929, 0.25
        %v950 = vmul.f32 %v932, 0.25
        %v951 = vld [vmem:[%s415] sm:$0xff]
        %v952 = vld [vmem:[%s415 + $0x8] sm:$0xff]
        %v953 = vadd.f32 %v935, %v951
        %v954 = vadd.f32 %v936, %v952
        %v955 = vadd.f32 %v937, %v951
        %v956 = vadd.f32 %v938, %v952
        %v957 = vadd.f32 %v939, %v951
        %v958 = vadd.f32 %v940, %v952
        %v959 = vadd.f32 %v941, %v951
        %v960 = vadd.f32 %v942, %v952
        %v961 = vadd.f32 %v943, %v951
        %v962 = vadd.f32 %v944, %v952
        %v963 = vadd.f32 %v945, %v951
        %v964 = vadd.f32 %v946, %v952
        %v965 = vadd.f32 %v947, %v951
        %v966 = vadd.f32 %v948, %v952
        %v967 = vadd.f32 %v949, %v951
        %v968 = vadd.f32 %v950, %v952
        %v969 = vsel %vm488, %v953, -inf
        %970 = vmax.xlane.f32.xlu0 %v969
        %v971 = vpop.xlane.xlu0 %970
        %v972 = vsel %vm488, %v954, -inf
        %973 = vmax.xlane.f32.xlu0 %v972
        %v974 = vpop.xlane.xlu0 %973
        %v975 = vsel %vm488, %v955, -inf
        %976 = vmax.xlane.f32.xlu0 %v975
        %v977 = vpop.xlane.xlu0 %976
        %v978 = vsel %vm488, %v956, -inf
        %979 = vmax.xlane.f32.xlu0 %v978
        %v980 = vpop.xlane.xlu0 %979
        %v981 = vsel %vm488, %v957, -inf
        %982 = vmax.xlane.f32.xlu0 %v981
        %v983 = vpop.xlane.xlu0 %982
        %v984 = vsel %vm488, %v958, -inf
        %985 = vmax.xlane.f32.xlu0 %v984
        %v986 = vpop.xlane.xlu0 %985
        %v987 = vsel %vm488, %v959, -inf
        %988 = vmax.xlane.f32.xlu0 %v987
        %v989 = vpop.xlane.xlu0 %988
        %v990 = vsel %vm488, %v960, -inf
        %991 = vmax.xlane.f32.xlu0 %v990
        %v992 = vpop.xlane.xlu0 %991
        %v993 = vsel %vm488, %v961, -inf
        %994 = vmax.xlane.f32.xlu0 %v993
        %v995 = vpop.xlane.xlu0 %994
        %v996 = vsel %vm488, %v962, -inf
        %997 = vmax.xlane.f32.xlu0 %v996
        %v998 = vpop.xlane.xlu0 %997
        %v999 = vsel %vm488, %v963, -inf
        %1000 = vmax.xlane.f32.xlu0 %v999
        %v1001 = vpop.xlane.xlu0 %1000
        %v1002 = vsel %vm488, %v964, -inf
        %1003 = vmax.xlane.f32.xlu0 %v1002
        %v1004 = vpop.xlane.xlu0 %1003
        %v1005 = vsel %vm488, %v965, -inf
        %1006 = vmax.xlane.f32.xlu0 %v1005
        %v1007 = vpop.xlane.xlu0 %1006
        %v1008 = vsel %vm488, %v966, -inf
        %1009 = vmax.xlane.f32.xlu0 %v1008
        %v1010 = vpop.xlane.xlu0 %1009
        %v1011 = vsel %vm488, %v967, -inf
        %1012 = vmax.xlane.f32.xlu0 %v1011
        %v1013 = vpop.xlane.xlu0 %1012
        %v1014 = vsel %vm488, %v968, -inf
        %1015 = vmax.xlane.f32.xlu0 %v1014
        %v1016 = vpop.xlane.xlu0 %1015
        %v1017 = vsub.f32 %v953, %v971
        %v1018 = vsub.f32 %v954, %v974
        %v1019 = vsub.f32 %v955, %v977
        %v1020 = vsub.f32 %v956, %v980
        %v1021 = vsub.f32 %v957, %v983
        %v1022 = vsub.f32 %v958, %v986
        %v1023 = vsub.f32 %v959, %v989
        %v1024 = vsub.f32 %v960, %v992
        %v1025 = vsub.f32 %v961, %v995
        %v1026 = vsub.f32 %v962, %v998
        %v1027 = vsub.f32 %v963, %v1001
        %v1028 = vsub.f32 %v964, %v1004
        %v1029 = vsub.f32 %v965, %v1007
        %v1030 = vsub.f32 %v966, %v1010
        %v1031 = vsub.f32 %v967, %v1013
        %v1032 = vsub.f32 %v968, %v1016
        %v1033 = vmul.f32 %v1017, 1.442695
        %v1034 = vpow.pop %v1033
        %v1035 = vmul.f32 %v1018, 1.442695
        %v1036 = vpow.pop %v1035
        %v1037 = vmul.f32 %v1019, 1.442695
        %v1038 = vpow.pop %v1037
        %v1039 = vmul.f32 %v1020, 1.442695
        %v1040 = vpow.pop %v1039
        %v1041 = vmul.f32 %v1021, 1.442695
        %v1042 = vpow.pop %v1041
        %v1043 = vmul.f32 %v1022, 1.442695
        %v1044 = vpow.pop %v1043
        %v1045 = vmul.f32 %v1023, 1.442695
        %v1046 = vpow.pop %v1045
        %v1047 = vmul.f32 %v1024, 1.442695
        %v1048 = vpow.pop %v1047
        %v1049 = vmul.f32 %v1025, 1.442695
        %v1050 = vpow.pop %v1049
        %v1051 = vmul.f32 %v1026, 1.442695
        %v1052 = vpow.pop %v1051
        %v1053 = vmul.f32 %v1027, 1.442695
        %v1054 = vpow.pop %v1053
        %v1055 = vmul.f32 %v1028, 1.442695
        %v1056 = vpow.pop %v1055
        %v1057 = vmul.f32 %v1029, 1.442695
        %v1058 = vpow.pop %v1057
        %v1059 = vmul.f32 %v1030, 1.442695
        %v1060 = vpow.pop %v1059
        %v1061 = vmul.f32 %v1031, 1.442695
        %v1062 = vpow.pop %v1061
        %v1063 = vmul.f32 %v1032, 1.442695
        %v1064 = vpow.pop %v1063
        %v1065 = vsel %vm488, %v1034, 0.0
        %1066 = vadd.xlane.f32.xlu0 %v1065
        %v1067 = vpop.xlane.xlu0 %1066
        %v1068 = vsel %vm488, %v1036, 0.0
        %1069 = vadd.xlane.f32.xlu0 %v1068
        %v1070 = vpop.xlane.xlu0 %1069
        %v1071 = vsel %vm488, %v1038, 0.0
        %1072 = vadd.xlane.f32.xlu0 %v1071
        %v1073 = vpop.xlane.xlu0 %1072
        %v1074 = vsel %vm488, %v1040, 0.0
        %1075 = vadd.xlane.f32.xlu0 %v1074
        %v1076 = vpop.xlane.xlu0 %1075
        %v1077 = vsel %vm488, %v1042, 0.0
        %1078 = vadd.xlane.f32.xlu0 %v1077
        %v1079 = vpop.xlane.xlu0 %1078
        %v1080 = vsel %vm488, %v1044, 0.0
        %1081 = vadd.xlane.f32.xlu0 %v1080
        %v1082 = vpop.xlane.xlu0 %1081
        %v1083 = vsel %vm488, %v1046, 0.0
        %1084 = vadd.xlane.f32.xlu0 %v1083
        %v1085 = vpop.xlane.xlu0 %1084
        %v1086 = vsel %vm488, %v1048, 0.0
        %1087 = vadd.xlane.f32.xlu0 %v1086
        %v1088 = vpop.xlane.xlu0 %1087
        %v1089 = vsel %vm488, %v1050, 0.0
        %1090 = vadd.xlane.f32.xlu0 %v1089
        %v1091 = vpop.xlane.xlu0 %1090
        %v1092 = vsel %vm488, %v1052, 0.0
        %1093 = vadd.xlane.f32.xlu0 %v1092
        %v1094 = vpop.xlane.xlu0 %1093
        %v1095 = vsel %vm488, %v1054, 0.0
        %1096 = vadd.xlane.f32.xlu0 %v1095
        %v1097 = vpop.xlane.xlu0 %1096
        %v1098 = vsel %vm488, %v1056, 0.0
        %1099 = vadd.xlane.f32.xlu0 %v1098
        %v1100 = vpop.xlane.xlu0 %1099
        %v1101 = vsel %vm488, %v1058, 0.0
        %1102 = vadd.xlane.f32.xlu0 %v1101
        %v1103 = vpop.xlane.xlu0 %1102
        %v1104 = vsel %vm488, %v1060, 0.0
        %1105 = vadd.xlane.f32.xlu0 %v1104
        %v1106 = vpop.xlane.xlu0 %1105
        %v1107 = vsel %vm488, %v1062, 0.0
        %1108 = vadd.xlane.f32.xlu0 %v1107
        %v1109 = vpop.xlane.xlu0 %1108
        %v1110 = vsel %vm488, %v1064, 0.0
        %1111 = vadd.xlane.f32.xlu0 %v1110
        %v1112 = vpop.xlane.xlu0 %1111
        %v1113 = vrcp.pop %v1067
        %v1114 = vrcp.pop %v1070
        %v1115 = vrcp.pop %v1073
        %v1116 = vrcp.pop %v1076
        %v1117 = vrcp.pop %v1079
        %v1118 = vrcp.pop %v1082
        %v1119 = vrcp.pop %v1085
        %v1120 = vrcp.pop %v1088
        %v1121 = vrcp.pop %v1091
        %v1122 = vrcp.pop %v1094
        %v1123 = vrcp.pop %v1097
        %v1124 = vrcp.pop %v1100
        %v1125 = vrcp.pop %v1103
        %v1126 = vrcp.pop %v1106
        %v1127 = vrcp.pop %v1109
        %v1128 = vrcp.pop %v1112
        %v1129 = vmul.f32 %v1034, %v1113
        %v1130 = vmul.f32 %v1036, %v1114
        %v1131 = vmul.f32 %v1038, %v1115
        %v1132 = vmul.f32 %v1040, %v1116
        %v1133 = vmul.f32 %v1042, %v1117
        %v1134 = vmul.f32 %v1044, %v1118
        %v1135 = vmul.f32 %v1046, %v1119
        %v1136 = vmul.f32 %v1048, %v1120
        %v1137 = vmul.f32 %v1050, %v1121
        %v1138 = vmul.f32 %v1052, %v1122
        %v1139 = vmul.f32 %v1054, %v1123
        %v1140 = vmul.f32 %v1056, %v1124
        %v1141 = vmul.f32 %v1058, %v1125
        %v1142 = vmul.f32 %v1060, %v1126
        %v1143 = vmul.f32 %v1062, %v1127
        %v1144 = vmul.f32 %v1064, %v1128
        %v1145 = vpack.c.bf16 %v1130, %v1129
        %v1146 = vpack.c.bf16 %v1132, %v1131
        %v1147 = vpack.c.bf16 %v1134, %v1133
        %v1148 = vpack.c.bf16 %v1136, %v1135
        %v1149 = vpack.c.bf16 %v1138, %v1137
        %v1150 = vpack.c.bf16 %v1140, %v1139
        %v1151 = vpack.c.bf16 %v1142, %v1141
        %v1152 = vpack.c.bf16 %v1144, %v1143
        %v1155 = vunpack.c.l.b16 %v462
        %v1156 = vunpack.c.l.b16 %v463
        %v1157 = vpack.c.b16 %v1156, %v1155
        %v1160 = vsel %vm488, %v1145, 0
        %1162 = vmatprep.subr.bf16.mxu0 0
        %1163 = vmatpush1.bf16.msra.mxu0 0
        %1164 = vmatprep.subr.bf16.mxu0 0
        %1165 = vmatpush1.bf16.msra.mxu0 0
        %1166 = vmatprep.subr.bf16.mxu0 0
        %1167 = vmatpush1.bf16.msra.mxu0 0
        %1168 = vmatprep.subr.bf16.mxu0 0
        %1169 = vmatpush1.bf16.msra.mxu0 0
        %1170 = vmatprep.subr.bf16.mxu0 0
        %1171 = vmatpush1.bf16.msra.mxu0 0
        %1172 = vmatprep.subr.bf16.mxu0 0
        %1173 = vmatpush1.bf16.msra.mxu0 0
        %1174 = vmatprep.subr.bf16.mxu0 0
        %1175 = vmatpush1.bf16.msra.mxu0 0
        %1176 = vmatprep.subr.bf16.mxu0 0
        %1177 = vmatpush1.bf16.msra.mxu0 %v1157
        %1178 = vmatprep.subr.bf16.mxu0 0
        %1179 = vmatpush2.bf16.msra.mxu0 0
        %1180 = vmatprep.subr.bf16.mxu0 0
        %1181 = vmatpush2.bf16.msra.mxu0 0
        %1182 = vmatprep.subr.bf16.mxu0 0
        %1183 = vmatpush2.bf16.msra.mxu0 0
        %1184 = vmatprep.subr.bf16.mxu0 0
        %1185 = vmatpush2.bf16.msra.mxu0 0
        %1186 = vmatprep.subr.bf16.mxu0 0
        %1187 = vmatpush2.bf16.msra.mxu0 0
        %1188 = vmatprep.subr.bf16.mxu0 0
        %1189 = vmatpush2.bf16.msra.mxu0 0
        %1190 = vmatprep.subr.bf16.mxu0 0
        %1191 = vmatpush2.bf16.msra.mxu0 0
        %1192 = vmatprep.subr.bf16.mxu0 0
        %1193 = vmatpush2.bf16.msra.mxu0 0
        %1194 = vmatprep.mubr.bf16.mxu0 0
        %1195 = vmatmul.mubr.bf16.gmra.mxu0 %v1160
        %v1196 = vpop.f32.mrf.mxu0
        %v1197 = vadd.f32 0.0, %v1196
        %v1198 = vpop.f32.mrf.mxu0
        %v1199 = vpop.f32.mrf.mxu0
        %v1200 = vadd.f32 0.0, %v1199
        %v1201 = vpop.f32.mrf.mxu0
        %1202 = vdwg.mxu0
        %v1205 = vunpack.c.l.b16 %v464
        %v1206 = vunpack.c.l.b16 %v465
        %v1207 = vpack.c.b16 %v1206, %v1205
        %v1210 = vsel %vm488, %v1146, 0
        %1212 = vmatprep.subr.bf16.mxu0 0
        %1213 = vmatpush1.bf16.msra.mxu0 0
        %1214 = vmatprep.subr.bf16.mxu0 0
        %1215 = vmatpush1.bf16.msra.mxu0 0
        %1216 = vmatprep.subr.bf16.mxu0 0
        %1217 = vmatpush1.bf16.msra.mxu0 0
        %1218 = vmatprep.subr.bf16.mxu0 0
        %1219 = vmatpush1.bf16.msra.mxu0 0
        %1220 = vmatprep.subr.bf16.mxu0 0
        %1221 = vmatpush1.bf16.msra.mxu0 0
        %1222 = vmatprep.subr.bf16.mxu0 0
        %1223 = vmatpush1.bf16.msra.mxu0 0
        %1224 = vmatprep.subr.bf16.mxu0 0
        %1225 = vmatpush1.bf16.msra.mxu0 0
        %1226 = vmatprep.subr.bf16.mxu0 0
        %1227 = vmatpush1.bf16.msra.mxu0 %v1207
        %1228 = vmatprep.subr.bf16.mxu0 0
        %1229 = vmatpush2.bf16.msra.mxu0 0
        %1230 = vmatprep.subr.bf16.mxu0 0
        %1231 = vmatpush2.bf16.msra.mxu0 0
        %1232 = vmatprep.subr.bf16.mxu0 0
        %1233 = vmatpush2.bf16.msra.mxu0 0
        %1234 = vmatprep.subr.bf16.mxu0 0
        %1235 = vmatpush2.bf16.msra.mxu0 0
        %1236 = vmatprep.subr.bf16.mxu0 0
        %1237 = vmatpush2.bf16.msra.mxu0 0
        %1238 = vmatprep.subr.bf16.mxu0 0
        %1239 = vmatpush2.bf16.msra.mxu0 0
        %1240 = vmatprep.subr.bf16.mxu0 0
        %1241 = vmatpush2.bf16.msra.mxu0 0
        %1242 = vmatprep.subr.bf16.mxu0 0
        %1243 = vmatpush2.bf16.msra.mxu0 0
        %1244 = vmatprep.mubr.bf16.mxu0 0
        %1245 = vmatmul.mubr.bf16.gmra.mxu0 %v1210
        %v1246 = vpop.f32.mrf.mxu0
        %v1247 = vadd.f32 0.0, %v1246
        %v1248 = vpop.f32.mrf.mxu0
        %v1249 = vpop.f32.mrf.mxu0
        %v1250 = vadd.f32 0.0, %v1249
        %v1251 = vpop.f32.mrf.mxu0
        %1252 = vdwg.mxu0
        %v1255 = vunpack.c.l.b16 %v466
        %v1256 = vunpack.c.l.b16 %v467
        %v1257 = vpack.c.b16 %v1256, %v1255
        %v1260 = vsel %vm488, %v1147, 0
        %1262 = vmatprep.subr.bf16.mxu0 0
        %1263 = vmatpush1.bf16.msra.mxu0 0
        %1264 = vmatprep.subr.bf16.mxu0 0
        %1265 = vmatpush1.bf16.msra.mxu0 0
        %1266 = vmatprep.subr.bf16.mxu0 0
        %1267 = vmatpush1.bf16.msra.mxu0 0
        %1268 = vmatprep.subr.bf16.mxu0 0
        %1269 = vmatpush1.bf16.msra.mxu0 0
        %1270 = vmatprep.subr.bf16.mxu0 0
        %1271 = vmatpush1.bf16.msra.mxu0 0
        %1272 = vmatprep.subr.bf16.mxu0 0
        %1273 = vmatpush1.bf16.msra.mxu0 0
        %1274 = vmatprep.subr.bf16.mxu0 0
        %1275 = vmatpush1.bf16.msra.mxu0 0
        %1276 = vmatprep.subr.bf16.mxu0 0
        %1277 = vmatpush1.bf16.msra.mxu0 %v1257
        %1278 = vmatprep.subr.bf16.mxu0 0
        %1279 = vmatpush2.bf16.msra.mxu0 0
        %1280 = vmatprep.subr.bf16.mxu0 0
        %1281 = vmatpush2.bf16.msra.mxu0 0
        %1282 = vmatprep.subr.bf16.mxu0 0
        %1283 = vmatpush2.bf16.msra.mxu0 0
        %1284 = vmatprep.subr.bf16.mxu0 0
        %1285 = vmatpush2.bf16.msra.mxu0 0
        %1286 = vmatprep.subr.bf16.mxu0 0
        %1287 = vmatpush2.bf16.msra.mxu0 0
        %1288 = vmatprep.subr.bf16.mxu0 0
        %1289 = vmatpush2.bf16.msra.mxu0 0
        %1290 = vmatprep.subr.bf16.mxu0 0
        %1291 = vmatpush2.bf16.msra.mxu0 0
        %1292 = vmatprep.subr.bf16.mxu0 0
        %1293 = vmatpush2.bf16.msra.mxu0 0
        %1294 = vmatprep.mubr.bf16.mxu0 0
        %1295 = vmatmul.mubr.bf16.gmra.mxu0 %v1260
        %v1296 = vpop.f32.mrf.mxu0
        %v1297 = vadd.f32 0.0, %v1296
        %v1298 = vpop.f32.mrf.mxu0
        %v1299 = vpop.f32.mrf.mxu0
        %v1300 = vadd.f32 0.0, %v1299
        %v1301 = vpop.f32.mrf.mxu0
        %1302 = vdwg.mxu0
        %v1305 = vunpack.c.l.b16 %v468
        %v1306 = vunpack.c.l.b16 %v469
        %v1307 = vpack.c.b16 %v1306, %v1305
        %v1310 = vsel %vm488, %v1148, 0
        %1312 = vmatprep.subr.bf16.mxu0 0
        %1313 = vmatpush1.bf16.msra.mxu0 0
        %1314 = vmatprep.subr.bf16.mxu0 0
        %1315 = vmatpush1.bf16.msra.mxu0 0
        %1316 = vmatprep.subr.bf16.mxu0 0
        %1317 = vmatpush1.bf16.msra.mxu0 0
        %1318 = vmatprep.subr.bf16.mxu0 0
        %1319 = vmatpush1.bf16.msra.mxu0 0
        %1320 = vmatprep.subr.bf16.mxu0 0
        %1321 = vmatpush1.bf16.msra.mxu0 0
        %1322 = vmatprep.subr.bf16.mxu0 0
        %1323 = vmatpush1.bf16.msra.mxu0 0
        %1324 = vmatprep.subr.bf16.mxu0 0
        %1325 = vmatpush1.bf16.msra.mxu0 0
        %1326 = vmatprep.subr.bf16.mxu0 0
        %1327 = vmatpush1.bf16.msra.mxu0 %v1307
        %1328 = vmatprep.subr.bf16.mxu0 0
        %1329 = vmatpush2.bf16.msra.mxu0 0
        %1330 = vmatprep.subr.bf16.mxu0 0
        %1331 = vmatpush2.bf16.msra.mxu0 0
        %1332 = vmatprep.subr.bf16.mxu0 0
        %1333 = vmatpush2.bf16.msra.mxu0 0
        %1334 = vmatprep.subr.bf16.mxu0 0
        %1335 = vmatpush2.bf16.msra.mxu0 0
        %1336 = vmatprep.subr.bf16.mxu0 0
        %1337 = vmatpush2.bf16.msra.mxu0 0
        %1338 = vmatprep.subr.bf16.mxu0 0
        %1339 = vmatpush2.bf16.msra.mxu0 0
        %1340 = vmatprep.subr.bf16.mxu0 0
        %1341 = vmatpush2.bf16.msra.mxu0 0
        %1342 = vmatprep.subr.bf16.mxu0 0
        %1343 = vmatpush2.bf16.msra.mxu0 0
        %1344 = vmatprep.mubr.bf16.mxu0 0
        %1345 = vmatmul.mubr.bf16.gmra.mxu0 %v1310
        %v1346 = vpop.f32.mrf.mxu0
        %v1347 = vadd.f32 0.0, %v1346
        %v1348 = vpop.f32.mrf.mxu0
        %v1349 = vpop.f32.mrf.mxu0
        %v1350 = vadd.f32 0.0, %v1349
        %v1351 = vpop.f32.mrf.mxu0
        %1352 = vdwg.mxu0
        %v1355 = vunpack.c.l.b16 %v470
        %v1356 = vunpack.c.l.b16 %v471
        %v1357 = vpack.c.b16 %v1356, %v1355
        %v1360 = vsel %vm488, %v1149, 0
        %1362 = vmatprep.subr.bf16.mxu0 0
        %1363 = vmatpush1.bf16.msra.mxu0 0
        %1364 = vmatprep.subr.bf16.mxu0 0
        %1365 = vmatpush1.bf16.msra.mxu0 0
        %1366 = vmatprep.subr.bf16.mxu0 0
        %1367 = vmatpush1.bf16.msra.mxu0 0
        %1368 = vmatprep.subr.bf16.mxu0 0
        %1369 = vmatpush1.bf16.msra.mxu0 0
        %1370 = vmatprep.subr.bf16.mxu0 0
        %1371 = vmatpush1.bf16.msra.mxu0 0
        %1372 = vmatprep.subr.bf16.mxu0 0
        %1373 = vmatpush1.bf16.msra.mxu0 0
        %1374 = vmatprep.subr.bf16.mxu0 0
        %1375 = vmatpush1.bf16.msra.mxu0 0
        %1376 = vmatprep.subr.bf16.mxu0 0
        %1377 = vmatpush1.bf16.msra.mxu0 %v1357
        %1378 = vmatprep.subr.bf16.mxu0 0
        %1379 = vmatpush2.bf16.msra.mxu0 0
        %1380 = vmatprep.subr.bf16.mxu0 0
        %1381 = vmatpush2.bf16.msra.mxu0 0
        %1382 = vmatprep.subr.bf16.mxu0 0
        %1383 = vmatpush2.bf16.msra.mxu0 0
        %1384 = vmatprep.subr.bf16.mxu0 0
        %1385 = vmatpush2.bf16.msra.mxu0 0
        %1386 = vmatprep.subr.bf16.mxu0 0
        %1387 = vmatpush2.bf16.msra.mxu0 0
        %1388 = vmatprep.subr.bf16.mxu0 0
        %1389 = vmatpush2.bf16.msra.mxu0 0
        %1390 = vmatprep.subr.bf16.mxu0 0
        %1391 = vmatpush2.bf16.msra.mxu0 0
        %1392 = vmatprep.subr.bf16.mxu0 0
        %1393 = vmatpush2.bf16.msra.mxu0 0
        %1394 = vmatprep.mubr.bf16.mxu0 0
        %1395 = vmatmul.mubr.bf16.gmra.mxu0 %v1360
        %v1396 = vpop.f32.mrf.mxu0
        %v1397 = vadd.f32 0.0, %v1396
        %v1398 = vpop.f32.mrf.mxu0
        %v1399 = vpop.f32.mrf.mxu0
        %v1400 = vadd.f32 0.0, %v1399
        %v1401 = vpop.f32.mrf.mxu0
        %1402 = vdwg.mxu0
        %v1405 = vunpack.c.l.b16 %v472
        %v1406 = vunpack.c.l.b16 %v473
        %v1407 = vpack.c.b16 %v1406, %v1405
        %v1410 = vsel %vm488, %v1150, 0
        %1412 = vmatprep.subr.bf16.mxu0 0
        %1413 = vmatpush1.bf16.msra.mxu0 0
        %1414 = vmatprep.subr.bf16.mxu0 0
        %1415 = vmatpush1.bf16.msra.mxu0 0
        %1416 = vmatprep.subr.bf16.mxu0 0
        %1417 = vmatpush1.bf16.msra.mxu0 0
        %1418 = vmatprep.subr.bf16.mxu0 0
        %1419 = vmatpush1.bf16.msra.mxu0 0
        %1420 = vmatprep.subr.bf16.mxu0 0
        %1421 = vmatpush1.bf16.msra.mxu0 0
        %1422 = vmatprep.subr.bf16.mxu0 0
        %1423 = vmatpush1.bf16.msra.mxu0 0
        %1424 = vmatprep.subr.bf16.mxu0 0
        %1425 = vmatpush1.bf16.msra.mxu0 0
        %1426 = vmatprep.subr.bf16.mxu0 0
        %1427 = vmatpush1.bf16.msra.mxu0 %v1407
        %1428 = vmatprep.subr.bf16.mxu0 0
        %1429 = vmatpush2.bf16.msra.mxu0 0
        %1430 = vmatprep.subr.bf16.mxu0 0
        %1431 = vmatpush2.bf16.msra.mxu0 0
        %1432 = vmatprep.subr.bf16.mxu0 0
        %1433 = vmatpush2.bf16.msra.mxu0 0
        %1434 = vmatprep.subr.bf16.mxu0 0
        %1435 = vmatpush2.bf16.msra.mxu0 0
        %1436 = vmatprep.subr.bf16.mxu0 0
        %1437 = vmatpush2.bf16.msra.mxu0 0
        %1438 = vmatprep.subr.bf16.mxu0 0
        %1439 = vmatpush2.bf16.msra.mxu0 0
        %1440 = vmatprep.subr.bf16.mxu0 0
        %1441 = vmatpush2.bf16.msra.mxu0 0
        %1442 = vmatprep.subr.bf16.mxu0 0
        %1443 = vmatpush2.bf16.msra.mxu0 0
        %1444 = vmatprep.mubr.bf16.mxu0 0
        %1445 = vmatmul.mubr.bf16.gmra.mxu0 %v1410
        %v1446 = vpop.f32.mrf.mxu0
        %v1447 = vadd.f32 0.0, %v1446
        %v1448 = vpop.f32.mrf.mxu0
        %v1449 = vpop.f32.mrf.mxu0
        %v1450 = vadd.f32 0.0, %v1449
        %v1451 = vpop.f32.mrf.mxu0
        %1452 = vdwg.mxu0
        %v1455 = vunpack.c.l.b16 %v474
        %v1456 = vunpack.c.l.b16 %v475
        %v1457 = vpack.c.b16 %v1456, %v1455
        %v1460 = vsel %vm488, %v1151, 0
        %1462 = vmatprep.subr.bf16.mxu0 0
        %1463 = vmatpush1.bf16.msra.mxu0 0
        %1464 = vmatprep.subr.bf16.mxu0 0
        %1465 = vmatpush1.bf16.msra.mxu0 0
        %1466 = vmatprep.subr.bf16.mxu0 0
        %1467 = vmatpush1.bf16.msra.mxu0 0
        %1468 = vmatprep.subr.bf16.mxu0 0
        %1469 = vmatpush1.bf16.msra.mxu0 0
        %1470 = vmatprep.subr.bf16.mxu0 0
        %1471 = vmatpush1.bf16.msra.mxu0 0
        %1472 = vmatprep.subr.bf16.mxu0 0
        %1473 = vmatpush1.bf16.msra.mxu0 0
        %1474 = vmatprep.subr.bf16.mxu0 0
        %1475 = vmatpush1.bf16.msra.mxu0 0
        %1476 = vmatprep.subr.bf16.mxu0 0
        %1477 = vmatpush1.bf16.msra.mxu0 %v1457
        %1478 = vmatprep.subr.bf16.mxu0 0
        %1479 = vmatpush2.bf16.msra.mxu0 0
        %1480 = vmatprep.subr.bf16.mxu0 0
        %1481 = vmatpush2.bf16.msra.mxu0 0
        %1482 = vmatprep.subr.bf16.mxu0 0
        %1483 = vmatpush2.bf16.msra.mxu0 0
        %1484 = vmatprep.subr.bf16.mxu0 0
        %1485 = vmatpush2.bf16.msra.mxu0 0
        %1486 = vmatprep.subr.bf16.mxu0 0
        %1487 = vmatpush2.bf16.msra.mxu0 0
        %1488 = vmatprep.subr.bf16.mxu0 0
        %1489 = vmatpush2.bf16.msra.mxu0 0
        %1490 = vmatprep.subr.bf16.mxu0 0
        %1491 = vmatpush2.bf16.msra.mxu0 0
        %1492 = vmatprep.subr.bf16.mxu0 0
        %1493 = vmatpush2.bf16.msra.mxu0 0
        %1494 = vmatprep.mubr.bf16.mxu0 0
        %1495 = vmatmul.mubr.bf16.gmra.mxu0 %v1460
        %v1496 = vpop.f32.mrf.mxu0
        %v1497 = vadd.f32 0.0, %v1496
        %v1498 = vpop.f32.mrf.mxu0
        %v1499 = vpop.f32.mrf.mxu0
        %v1500 = vadd.f32 0.0, %v1499
        %v1501 = vpop.f32.mrf.mxu0
        %1502 = vdwg.mxu0
        %v1505 = vunpack.c.l.b16 %v476
        %v1506 = vunpack.c.l.b16 %v477
        %v1507 = vpack.c.b16 %v1506, %v1505
        %v1510 = vsel %vm488, %v1152, 0
        %1512 = vmatprep.subr.bf16.mxu0 0
        %1513 = vmatpush1.bf16.msra.mxu0 0
        %1514 = vmatprep.subr.bf16.mxu0 0
        %1515 = vmatpush1.bf16.msra.mxu0 0
        %1516 = vmatprep.subr.bf16.mxu0 0
        %1517 = vmatpush1.bf16.msra.mxu0 0
        %1518 = vmatprep.subr.bf16.mxu0 0
        %1519 = vmatpush1.bf16.msra.mxu0 0
        %1520 = vmatprep.subr.bf16.mxu0 0
        %1521 = vmatpush1.bf16.msra.mxu0 0
        %1522 = vmatprep.subr.bf16.mxu0 0
        %1523 = vmatpush1.bf16.msra.mxu0 0
        %1524 = vmatprep.subr.bf16.mxu0 0
        %1525 = vmatpush1.bf16.msra.mxu0 0
        %1526 = vmatprep.subr.bf16.mxu0 0
        %1527 = vmatpush1.bf16.msra.mxu0 %v1507
        %1528 = vmatprep.subr.bf16.mxu0 0
        %1529 = vmatpush2.bf16.msra.mxu0 0
        %1530 = vmatprep.subr.bf16.mxu0 0
        %1531 = vmatpush2.bf16.msra.mxu0 0
        %1532 = vmatprep.subr.bf16.mxu0 0
        %1533 = vmatpush2.bf16.msra.mxu0 0
        %1534 = vmatprep.subr.bf16.mxu0 0
        %1535 = vmatpush2.bf16.msra.mxu0 0
        %1536 = vmatprep.subr.bf16.mxu0 0
        %1537 = vmatpush2.bf16.msra.mxu0 0
        %1538 = vmatprep.subr.bf16.mxu0 0
        %1539 = vmatpush2.bf16.msra.mxu0 0
        %1540 = vmatprep.subr.bf16.mxu0 0
        %1541 = vmatpush2.bf16.msra.mxu0 0
        %1542 = vmatprep.subr.bf16.mxu0 0
        %1543 = vmatpush2.bf16.msra.mxu0 0
        %1544 = vmatprep.mubr.bf16.mxu0 0
        %1545 = vmatmul.mubr.bf16.gmra.mxu0 %v1510
        %v1546 = vpop.f32.mrf.mxu0
        %v1547 = vadd.f32 0.0, %v1546
        %v1548 = vpop.f32.mrf.mxu0
        %v1549 = vpop.f32.mrf.mxu0
        %v1550 = vadd.f32 0.0, %v1549
        %v1551 = vpop.f32.mrf.mxu0
        %1552 = vdwg.mxu0
        %v1553 = vpack.c.bf16 %v1200, %v1197
        %v1554 = vpack.c.bf16 %v1250, %v1247
        %v1555 = vpack.c.bf16 %v1300, %v1297
        %v1556 = vpack.c.bf16 %v1350, %v1347
        %v1557 = vpack.c.bf16 %v1400, %v1397
        %v1558 = vpack.c.bf16 %v1450, %v1447
        %v1559 = vpack.c.bf16 %v1500, %v1497
        %v1560 = vpack.c.bf16 %v1550, %v1547
        %v1569 = vunpack.c.l.b16 %v1553
        %v1570 = vunpack.c.h.b16 %v1553
        %v1571 = vunpack.c.l.b16 %v1554
        %v1572 = vunpack.c.h.b16 %v1554
        %v1573 = vunpack.c.l.b16 %v1555
        %v1574 = vunpack.c.h.b16 %v1555
        %v1575 = vunpack.c.l.b16 %v1556
        %v1576 = vunpack.c.h.b16 %v1556
        %v1577 = vunpack.c.l.b16 %v1557
        %v1578 = vunpack.c.h.b16 %v1557
        %v1579 = vunpack.c.l.b16 %v1558
        %v1580 = vunpack.c.h.b16 %v1558
        %v1581 = vunpack.c.l.b16 %v1559
        %v1582 = vunpack.c.h.b16 %v1559
        %v1583 = vunpack.c.l.b16 %v1560
        %v1584 = vunpack.c.h.b16 %v1560
        %v1585 = vpack.c.b16 %v1569, %v1569
        %v1586 = vpack.c.b16 %v1570, %v1570
        %v1587 = vpack.c.b16 %v1571, %v1571
        %v1588 = vpack.c.b16 %v1572, %v1572
        %v1589 = vpack.c.b16 %v1573, %v1573
        %v1590 = vpack.c.b16 %v1574, %v1574
        %v1591 = vpack.c.b16 %v1575, %v1575
        %v1592 = vpack.c.b16 %v1576, %v1576
        %v1593 = vpack.c.b16 %v1577, %v1577
        %v1594 = vpack.c.b16 %v1578, %v1578
        %v1595 = vpack.c.b16 %v1579, %v1579
        %v1596 = vpack.c.b16 %v1580, %v1580
        %v1597 = vpack.c.b16 %v1581, %v1581
        %v1598 = vpack.c.b16 %v1582, %v1582
        %v1599 = vpack.c.b16 %v1583, %v1583
        %v1600 = vpack.c.b16 %v1584, %v1584
        %vm1617 = vcmask 125952
        %1618 = vst.msk [vmem:[%s425] sm:$0xf] %vm1617, %v1585
        %1619 = vst.msk [vmem:[%s425 + $0x4] sm:$0xf] %vm1617, %v1586
        %1620 = vst.msk [vmem:[%s425 + $0x8] sm:$0xf] %vm1617, %v1587
        %1621 = vst.msk [vmem:[%s425 + $0xc] sm:$0xf] %vm1617, %v1588
        %1622 = vst.msk [vmem:[%s425 + $0x10] sm:$0xf] %vm1617, %v1589
        %1623 = vst.msk [vmem:[%s425 + $0x14] sm:$0xf] %vm1617, %v1590
        %1624 = vst.msk [vmem:[%s425 + $0x18] sm:$0xf] %vm1617, %v1591
        %1625 = vst.msk [vmem:[%s425 + $0x1c] sm:$0xf] %vm1617, %v1592
        %1626 = vst.msk [vmem:[%s425 + $0x20] sm:$0xf] %vm1617, %v1593
        %1627 = vst.msk [vmem:[%s425 + $0x24] sm:$0xf] %vm1617, %v1594
        %1628 = vst.msk [vmem:[%s425 + $0x28] sm:$0xf] %vm1617, %v1595
        %1629 = vst.msk [vmem:[%s425 + $0x2c] sm:$0xf] %vm1617, %v1596
        %1630 = vst.msk [vmem:[%s425 + $0x30] sm:$0xf] %vm1617, %v1597
        %1631 = vst.msk [vmem:[%s425 + $0x34] sm:$0xf] %vm1617, %v1598
        %1632 = vst.msk [vmem:[%s425 + $0x38] sm:$0xf] %vm1617, %v1599
        %1633 = vst.msk [vmem:[%s425 + $0x3c] sm:$0xf] %vm1617, %v1600
        %s1634 = smul.u32 8, %s17
        %p1635 = scmp.lt.s32.totalorder %s18, 1
        %s1636 = scalar_select %p1635, %s18, 1
        %p1637 = scmp.lt.s32.totalorder %s1634, 7
        %s1638 = scalar_select %p1637, %s1634, 7
        %s1639 = smul.addr %s1638, 2
        %s1640 = smul.addr %s1636, 16
        %s1641 = sadd.s32 %s1639, %s1640
        %s1642 = smul.addr %s1641, 4
        %s1643 = scalar_lea.vmem %s2, %s1642
        // Predicated region
        $region70: #{swin_forward.21} parent=64 // pred_check
          %p1644 = pneg %p99
        $region71: #{swin_forward.21} parent=64 // pred_check_branch
          %1646 = sbr.rel (%p1644) target = $region73
        $region72: #{swin_forward.21} parent=64 // pred_region
          %s1647 = smul.u32 8, %s17
        $region73: #{swin_forward.21} parent=64 // pred_fallthru
          _
      $region65: #{swin_forward.21} parent=5 // pred_fallthru
        _
      %p1648 = scmp.le.s32.totalorder 2, %s8
      // Predicated region
      $region74: #{swin_forward.21} parent=5 // pred_check
        %p1649 = pneg %p1648
      $region75: #{swin_forward.21} parent=5 // pred_check_branch
        %1651 = sbr.rel (%p1649) target = $region77
      $region76: #{swin_forward.21} parent=5 // pred_region
        %s1652 = ssub.s32 %s8, 2
        // Predicated region
        $region78: #{swin_forward.21} parent=76 // pred_check
          %p1653 = pneg %p105
        $region79: #{swin_forward.21} parent=76 // pred_check_branch
          %1655 = sbr.rel (%p1653) target = $region81
        $region80: #{swin_forward.21} parent=76 // pred_region
          %s1656 = smul.u32 8, %s19
          %p1657 = scmp.lt.s32.totalorder %s20, 1
          %s1658 = scalar_select %p1657, %s20, 1
          %p1659 = scmp.lt.s32.totalorder %s1656, 7
          %s1660 = scalar_select %p1659, %s1656, 7
          %s1661 = smul.addr %s1660, 2
          %s1662 = smul.addr %s1658, 16
          %s1663 = sadd.s32 %s1661, %s1662
          %s1664 = smul.addr %s1663, 4
          %s1665 = scalar_lea.vmem %s2, %s1664
        $region81: #{swin_forward.21} parent=76 // pred_fallthru
          _
      $region77: #{swin_forward.21} parent=5 // pred_fallthru
        _
    $region6: #{swin_forward.21} parent=1 // loop_footer
      %s12 = sadd.s32 1, %s8
    $region7: #{swin_forward.21} parent=1 // loop_footer_branch
      %7 = sbr.rel target = $region3
    $region8: #{swin_forward.21} parent=1 // loop_exit
      _

// kernel: swin_forward.22
$region0: #{swin_forward.22}
  #allocation0 [shape = 'u32[]', space=smem, size = 0x4, offset = 0x4, fixed_abs, tag = 'smem constant byte address 0x4 - core index']
  #allocation1 [shape = 'u32[144,128]{1,0:T(1,128)}', space=vmem, size = 0x12000, scoped, tag = 'internal scratch']
  %s0 = inlined_call_operand.vmem [shape: bf16[128,32], index: 0, kind: input, shape index: {}]
  %s1 = inlined_call_operand.vmem [shape: f32[128,32], index: 1, kind: input, shape index: {}]
  %s2 = inlined_call_operand.vmem [shape: bf16[32,32], index: 2, kind: input, shape index: {}]
  %s3 = inlined_call_operand.vmem [shape: f32[1,32], index: 3, kind: input, shape index: {}]
  %s4 = inlined_call_operand.vmem [shape: f32[128,32], index: 4, kind: output, shape index: {}]
  %s5 = sld [smem:[#allocation0]]
  $region26: #{swin_forward.22} parent=0
    _
  %s7 = ssub.s32 1, %s5
  %s8 = scalar_select 0, %s7, %s5
  // Predicated region
  $region2: #{swin_forward.22} parent=0 // pred_check
    _
  $region3: #{swin_forward.22} parent=0 // pred_check_branch
    %10 = sbr.rel (0) target = $region5
  $region4: #{swin_forward.22} parent=0 // pred_region
    _
  $region5: #{swin_forward.22} parent=0 // pred_fallthru
    _
  // Predicated region
  $region6: #{swin_forward.22} parent=0 // pred_check
    _
  $region7: #{swin_forward.22} parent=0 // pred_check_branch
    %12 = sbr.rel (0) target = $region9
  $region8: #{swin_forward.22} parent=0 // pred_region
    _
  $region9: #{swin_forward.22} parent=0 // pred_fallthru
    _
  // Predicated region
  $region10: #{swin_forward.22} parent=0 // pred_check
    _
  $region11: #{swin_forward.22} parent=0 // pred_check_branch
    %14 = sbr.rel (0) target = $region13
  $region12: #{swin_forward.22} parent=0 // pred_region
    _
  $region13: #{swin_forward.22} parent=0 // pred_fallthru
    _
  // Predicated region
  $region14: #{swin_forward.22} parent=0 // pred_check
    _
  $region15: #{swin_forward.22} parent=0 // pred_check_branch
    %16 = sbr.rel (0) target = $region17
  $region16: #{swin_forward.22} parent=0 // pred_region
    _
  $region17: #{swin_forward.22} parent=0 // pred_fallthru
    _
  %v18 = vld [vmem:[%s0] sm:$0xf]
  %v19 = vld [vmem:[%s0 + $0x4] sm:$0xf]
  %v20 = vld [vmem:[%s0 + $0x8] sm:$0xf]
  %v21 = vld [vmem:[%s0 + $0xc] sm:$0xf]
  %v22 = vld [vmem:[%s0 + $0x10] sm:$0xf]
  %v23 = vld [vmem:[%s0 + $0x14] sm:$0xf]
  %v24 = vld [vmem:[%s0 + $0x18] sm:$0xf]
  %v25 = vld [vmem:[%s0 + $0x1c] sm:$0xf]
  %v26 = vld [vmem:[%s0 + $0x20] sm:$0xf]
  %v27 = vld [vmem:[%s0 + $0x24] sm:$0xf]
  %v28 = vld [vmem:[%s0 + $0x28] sm:$0xf]
  %v29 = vld [vmem:[%s0 + $0x2c] sm:$0xf]
  %v30 = vld [vmem:[%s0 + $0x30] sm:$0xf]
  %v31 = vld [vmem:[%s0 + $0x34] sm:$0xf]
  %v32 = vld [vmem:[%s0 + $0x38] sm:$0xf]
  %v33 = vld [vmem:[%s0 + $0x3c] sm:$0xf]
  %v34 = vld [vmem:[%s2] sm:$0xf]
  %v35 = vld [vmem:[%s2 + $0x4] sm:$0xf]
  %v36 = vld [vmem:[%s2 + $0x8] sm:$0xf]
  %v37 = vld [vmem:[%s2 + $0xc] sm:$0xf]
  %v38 = vld [vmem:[%s3] sm:$0x1]
  %v40 = vlaneseq
  %v41 = vshrl.u32 %v40, 7
  %v42 = vsub.s32 0, %v41
  %v43 = vrot.slane %v38, %v42
  %v61 = vunpack.c.l.b16 %v18
  %v62 = vunpack.c.l.b16 %v19
  %v63 = vunpack.c.l.b16 %v20
  %v64 = vunpack.c.l.b16 %v21
  %v65 = vunpack.c.l.b16 %v22
  %v66 = vunpack.c.l.b16 %v23
  %v67 = vunpack.c.l.b16 %v24
  %v68 = vunpack.c.l.b16 %v25
  %v69 = vunpack.c.l.b16 %v26
  %v70 = vunpack.c.l.b16 %v27
  %v71 = vunpack.c.l.b16 %v28
  %v72 = vunpack.c.l.b16 %v29
  %v73 = vunpack.c.l.b16 %v30
  %v74 = vunpack.c.l.b16 %v31
  %v75 = vunpack.c.l.b16 %v32
  %v76 = vunpack.c.l.b16 %v33
  %v77 = vpack.c.b16 %v62, %v61
  %v78 = vpack.c.b16 %v64, %v63
  %v79 = vpack.c.b16 %v66, %v65
  %v80 = vpack.c.b16 %v68, %v67
  %v81 = vpack.c.b16 %v70, %v69
  %v82 = vpack.c.b16 %v72, %v71
  %v83 = vpack.c.b16 %v74, %v73
  %v84 = vpack.c.b16 %v76, %v75
  %v89 = vunpack.c.l.b16 %v34
  %v90 = vunpack.c.l.b16 %v35
  %v91 = vunpack.c.l.b16 %v36
  %v92 = vunpack.c.l.b16 %v37
  %v93 = vpack.c.b16 %v90, %v89
  %v94 = vpack.c.b16 %v92, %v91
  %vm97 = vcmask 261120
  %v99 = vsel %vm97, %v77, 0
  %v102 = vsel %vm97, %v78, 0
  %v105 = vsel %vm97, %v79, 0
  %v108 = vsel %vm97, %v80, 0
  %v111 = vsel %vm97, %v81, 0
  %v114 = vsel %vm97, %v82, 0
  %v117 = vsel %vm97, %v83, 0
  %v120 = vsel %vm97, %v84, 0
  %122 = vmatprep.subr.bf16.mxu0 0
  %123 = vmatpush1.bf16.msra.mxu0 0
  %124 = vmatprep.subr.bf16.mxu0 0
  %125 = vmatpush1.bf16.msra.mxu0 0
  %126 = vmatprep.subr.bf16.mxu0 0
  %127 = vmatpush1.bf16.msra.mxu0 0
  %128 = vmatprep.subr.bf16.mxu0 0
  %129 = vmatpush1.bf16.msra.mxu0 0
  %130 = vmatprep.subr.bf16.mxu0 0
  %131 = vmatpush1.bf16.msra.mxu0 0
  %132 = vmatprep.subr.bf16.mxu0 0
  %133 = vmatpush1.bf16.msra.mxu0 0
  %134 = vmatprep.subr.bf16.mxu0 0
  %135 = vmatpush1.bf16.msra.mxu0 %v94
  %136 = vmatprep.subr.bf16.mxu0 0
  %137 = vmatpush1.bf16.msra.mxu0 %v93
  %138 = vmatprep.subr.bf16.mxu0 0
  %139 = vmatpush2.bf16.msra.mxu0 0
  %140 = vmatprep.subr.bf16.mxu0 0
  %141 = vmatpush2.bf16.msra.mxu0 0
  %142 = vmatprep.subr.bf16.mxu0 0
  %143 = vmatpush2.bf16.msra.mxu0 0
  %144 = vmatprep.subr.bf16.mxu0 0
  %145 = vmatpush2.bf16.msra.mxu0 0
  %146 = vmatprep.subr.bf16.mxu0 0
  %147 = vmatpush2.bf16.msra.mxu0 0
  %148 = vmatprep.subr.bf16.mxu0 0
  %149 = vmatpush2.bf16.msra.mxu0 0
  %150 = vmatprep.subr.bf16.mxu0 0
  %151 = vmatpush2.bf16.msra.mxu0 0
  %152 = vmatprep.subr.bf16.mxu0 0
  %153 = vmatpush2.bf16.msra.mxu0 0
  %154 = vmatprep.mubr.bf16.mxu0 0
  %155 = vmatmul.mubr.bf16.gmra.mxu0 %v99
  %v156 = vpop.f32.mrf.mxu0
  %v157 = vadd.f32 %v43, %v156
  %v158 = vpop.f32.mrf.mxu0
  %v159 = vpop.f32.mrf.mxu0
  %v160 = vadd.f32 %v43, %v159
  %v161 = vpop.f32.mrf.mxu0
  %162 = vmatprep.mubr.bf16.mxu0 0
  %163 = vmatmul.mubr.bf16.gmra.mxu0 %v102
  %v164 = vpop.f32.mrf.mxu0
  %v165 = vadd.f32 %v43, %v164
  %v166 = vpop.f32.mrf.mxu0
  %v167 = vpop.f32.mrf.mxu0
  %v168 = vadd.f32 %v43, %v167
  %v169 = vpop.f32.mrf.mxu0
  %170 = vmatprep.mubr.bf16.mxu0 0
  %171 = vmatmul.mubr.bf16.gmra.mxu0 %v105
  %v172 = vpop.f32.mrf.mxu0
  %v173 = vadd.f32 %v43, %v172
  %v174 = vpop.f32.mrf.mxu0
  %v175 = vpop.f32.mrf.mxu0
  %v176 = vadd.f32 %v43, %v175
  %v177 = vpop.f32.mrf.mxu0
  %178 = vmatprep.mubr.bf16.mxu0 0
  %179 = vmatmul.mubr.bf16.gmra.mxu0 %v108
  %v180 = vpop.f32.mrf.mxu0
  %v181 = vadd.f32 %v43, %v180
  %v182 = vpop.f32.mrf.mxu0
  %v183 = vpop.f32.mrf.mxu0
  %v184 = vadd.f32 %v43, %v183
  %v185 = vpop.f32.mrf.mxu0
  %186 = vmatprep.mubr.bf16.mxu0 0
  %187 = vmatmul.mubr.bf16.gmra.mxu0 %v111
  %v188 = vpop.f32.mrf.mxu0
  %v189 = vadd.f32 %v43, %v188
  %v190 = vpop.f32.mrf.mxu0
  %v191 = vpop.f32.mrf.mxu0
  %v192 = vadd.f32 %v43, %v191
  %v193 = vpop.f32.mrf.mxu0
  %194 = vmatprep.mubr.bf16.mxu0 0
  %195 = vmatmul.mubr.bf16.gmra.mxu0 %v114
  %v196 = vpop.f32.mrf.mxu0
  %v197 = vadd.f32 %v43, %v196
  %v198 = vpop.f32.mrf.mxu0
  %v199 = vpop.f32.mrf.mxu0
  %v200 = vadd.f32 %v43, %v199
  %v201 = vpop.f32.mrf.mxu0
  %202 = vmatprep.mubr.bf16.mxu0 0
  %203 = vmatmul.mubr.bf16.gmra.mxu0 %v117
  %v204 = vpop.f32.mrf.mxu0
  %v205 = vadd.f32 %v43, %v204
  %v206 = vpop.f32.mrf.mxu0
  %v207 = vpop.f32.mrf.mxu0
  %v208 = vadd.f32 %v43, %v207
  %v209 = vpop.f32.mrf.mxu0
  %210 = vmatprep.mubr.bf16.mxu0 0
  %211 = vmatmul.mubr.bf16.gmra.mxu0 %v120
  %v212 = vpop.f32.mrf.mxu0
  %v213 = vadd.f32 %v43, %v212
  %v214 = vpop.f32.mrf.mxu0
  %v215 = vpop.f32.mrf.mxu0
  %v216 = vadd.f32 %v43, %v215
  %v217 = vpop.f32.mrf.mxu0
  %218 = vdwg.mxu0
  %v219 = vld [vmem:[%s1] sm:$0xff]
  %v220 = vld [vmem:[%s1 + $0x8] sm:$0xff]
  %v221 = vld [vmem:[%s1 + $0x10] sm:$0xff]
  %v222 = vld [vmem:[%s1 + $0x18] sm:$0xff]
  %v223 = vld [vmem:[%s1 + $0x20] sm:$0xff]
  %v224 = vld [vmem:[%s1 + $0x28] sm:$0xff]
  %v225 = vld [vmem:[%s1 + $0x30] sm:$0xff]
  %v226 = vld [vmem:[%s1 + $0x38] sm:$0xff]
  %v227 = vld [vmem:[%s1 + $0x40] sm:$0xff]
  %v228 = vld [vmem:[%s1 + $0x48] sm:$0xff]
  %v229 = vld [vmem:[%s1 + $0x50] sm:$0xff]
  %v230 = vld [vmem:[%s1 + $0x58] sm:$0xff]
  %v231 = vld [vmem:[%s1 + $0x60] sm:$0xff]
  %v232 = vld [vmem:[%s1 + $0x68] sm:$0xff]
  %v233 = vld [vmem:[%s1 + $0x70] sm:$0xff]
  %v234 = vld [vmem:[%s1 + $0x78] sm:$0xff]
  %v235 = vadd.f32 %v219, %v157
  %v236 = vadd.f32 %v220, %v160
  %v237 = vadd.f32 %v221, %v165
  %v238 = vadd.f32 %v222, %v168
  %v239 = vadd.f32 %v223, %v173
  %v240 = vadd.f32 %v224, %v176
  %v241 = vadd.f32 %v225, %v181
  %v242 = vadd.f32 %v226, %v184
  %v243 = vadd.f32 %v227, %v189
  %v244 = vadd.f32 %v228, %v192
  %v245 = vadd.f32 %v229, %v197
  %v246 = vadd.f32 %v230, %v200
  %v247 = vadd.f32 %v231, %v205
  %v248 = vadd.f32 %v232, %v208
  %v249 = vadd.f32 %v233, %v213
  %v250 = vadd.f32 %v234, %v216
  %251 = vst.msk [vmem:[%s4] sm:$0xff] %vm97, %v235
  %252 = vst.msk [vmem:[%s4 + $0x8] sm:$0xff] %vm97, %v236
  %253 = vst.msk [vmem:[%s4 + $0x10] sm:$0xff] %vm97, %v237
  %254 = vst.msk [vmem:[%s4 + $0x18] sm:$0xff] %vm97, %v238
  %255 = vst.msk [vmem:[%s4 + $0x20] sm:$0xff] %vm97, %v239
  %256 = vst.msk [vmem:[%s4 + $0x28] sm:$0xff] %vm97, %v240
  %257 = vst.msk [vmem:[%s4 + $0x30] sm:$0xff] %vm97, %v241
  %258 = vst.msk [vmem:[%s4 + $0x38] sm:$0xff] %vm97, %v242
  %259 = vst.msk [vmem:[%s4 + $0x40] sm:$0xff] %vm97, %v243
  %260 = vst.msk [vmem:[%s4 + $0x48] sm:$0xff] %vm97, %v244
  %261 = vst.msk [vmem:[%s4 + $0x50] sm:$0xff] %vm97, %v245
  %262 = vst.msk [vmem:[%s4 + $0x58] sm:$0xff] %vm97, %v246
  %263 = vst.msk [vmem:[%s4 + $0x60] sm:$0xff] %vm97, %v247
  %264 = vst.msk [vmem:[%s4 + $0x68] sm:$0xff] %vm97, %v248
  %265 = vst.msk [vmem:[%s4 + $0x70] sm:$0xff] %vm97, %v249
  %266 = vst.msk [vmem:[%s4 + $0x78] sm:$0xff] %vm97, %v250
  // Predicated region
  $region18: #{swin_forward.22} parent=0 // pred_check
    _
  $region19: #{swin_forward.22} parent=0 // pred_check_branch
    %268 = sbr.rel (0) target = $region21
  $region20: #{swin_forward.22} parent=0 // pred_region
    _
  $region21: #{swin_forward.22} parent=0 // pred_fallthru
    _
  // Predicated region
  $region22: #{swin_forward.22} parent=0 // pred_check
    _
  $region23: #{swin_forward.22} parent=0 // pred_check_branch
    %270 = sbr.rel (0) target = $region25
  $region24: #{swin_forward.22} parent=0 // pred_region
    _
  $region25: #{swin_forward.22} parent=0 // pred_fallthru
    _

// kernel: swin_forward.23
$region0: #{swin_forward.23}
  #allocation0 [shape = 'u32[]', space=smem, size = 0x4, offset = 0x4, fixed_abs, tag = 'smem constant byte address 0x4 - core index']
  #allocation1 [shape = 'u32[144,128]{1,0:T(1,128)}', space=vmem, size = 0x12000, scoped, tag = 'internal scratch']
  #allocation2 [shape = 'f32[128,32]{1,0:T(8,128)}', space=vmem, size = 0x10000, scoped, tag = 'scratch operand']
  %s0 = inlined_call_operand.vmem [shape: f32[128,32], index: 0, kind: input, shape index: {}]
  %s1 = inlined_call_operand.vmem [shape: f32[1,32], index: 1, kind: input, shape index: {}]
  %s2 = inlined_call_operand.vmem [shape: f32[1,32], index: 2, kind: input, shape index: {}]
  %s3 = inlined_call_operand.vmem [shape: bf16[32,128], index: 3, kind: input, shape index: {}]
  %s4 = inlined_call_operand.vmem [shape: f32[1,128], index: 4, kind: input, shape index: {}]
  %s5 = inlined_call_operand.vmem [shape: bf16[128,32], index: 5, kind: input, shape index: {}]
  %s6 = inlined_call_operand.vmem [shape: f32[1,32], index: 6, kind: input, shape index: {}]
  %s7 = inlined_call_operand.vmem [shape: f32[128,32], index: 7, kind: output, shape index: {}]
  %s8 = sld [smem:[#allocation0]]
  $region46: #{swin_forward.23} parent=0
    _
  %s10 = ssub.s32 1, %s8
  %s11 = scalar_select 0, %s10, %s8
  // Predicated region
  $region2: #{swin_forward.23} parent=0 // pred_check
    _
  $region3: #{swin_forward.23} parent=0 // pred_check_branch
    %13 = sbr.rel (0) target = $region5
  $region4: #{swin_forward.23} parent=0 // pred_region
    _
  $region5: #{swin_forward.23} parent=0 // pred_fallthru
    _
  // Predicated region
  $region6: #{swin_forward.23} parent=0 // pred_check
    _
  $region7: #{swin_forward.23} parent=0 // pred_check_branch
    %15 = sbr.rel (0) target = $region9
  $region8: #{swin_forward.23} parent=0 // pred_region
    _
  $region9: #{swin_forward.23} parent=0 // pred_fallthru
    _
  // Predicated region
  $region10: #{swin_forward.23} parent=0 // pred_check
    _
  $region11: #{swin_forward.23} parent=0 // pred_check_branch
    %17 = sbr.rel (0) target = $region13
  $region12: #{swin_forward.23} parent=0 // pred_region
    _
  $region13: #{swin_forward.23} parent=0 // pred_fallthru
    _
  // Predicated region
  $region14: #{swin_forward.23} parent=0 // pred_check
    _
  $region15: #{swin_forward.23} parent=0 // pred_check_branch
    %19 = sbr.rel (0) target = $region17
  $region16: #{swin_forward.23} parent=0 // pred_region
    _
  $region17: #{swin_forward.23} parent=0 // pred_fallthru
    _
  // Predicated region
  $region18: #{swin_forward.23} parent=0 // pred_check
    _
  $region19: #{swin_forward.23} parent=0 // pred_check_branch
    %21 = sbr.rel (0) target = $region21
  $region20: #{swin_forward.23} parent=0 // pred_region
    _
  $region21: #{swin_forward.23} parent=0 // pred_fallthru
    _
  // Predicated region
  $region22: #{swin_forward.23} parent=0 // pred_check
    _
  $region23: #{swin_forward.23} parent=0 // pred_check_branch
    %23 = sbr.rel (0) target = $region25
  $region24: #{swin_forward.23} parent=0 // pred_region
    _
  $region25: #{swin_forward.23} parent=0 // pred_fallthru
    _
  // Predicated region
  $region26: #{swin_forward.23} parent=0 // pred_check
    _
  $region27: #{swin_forward.23} parent=0 // pred_check_branch
    %25 = sbr.rel (0) target = $region29
  $region28: #{swin_forward.23} parent=0 // pred_region
    _
  $region29: #{swin_forward.23} parent=0 // pred_fallthru
    _
  %v27 = vld [vmem:[%s0] sm:$0xff]
  %v28 = vld [vmem:[%s0 + $0x8] sm:$0xff]
  %v29 = vld [vmem:[%s0 + $0x10] sm:$0xff]
  %v30 = vld [vmem:[%s0 + $0x18] sm:$0xff]
  %v31 = vld [vmem:[%s0 + $0x20] sm:$0xff]
  %v32 = vld [vmem:[%s0 + $0x28] sm:$0xff]
  %v33 = vld [vmem:[%s0 + $0x30] sm:$0xff]
  %v34 = vld [vmem:[%s0 + $0x38] sm:$0xff]
  %v35 = vld [vmem:[%s0 + $0x40] sm:$0xff]
  %v36 = vld [vmem:[%s0 + $0x48] sm:$0xff]
  %v37 = vld [vmem:[%s0 + $0x50] sm:$0xff]
  %v38 = vld [vmem:[%s0 + $0x58] sm:$0xff]
  %v39 = vld [vmem:[%s0 + $0x60] sm:$0xff]
  %v40 = vld [vmem:[%s0 + $0x68] sm:$0xff]
  %v41 = vld [vmem:[%s0 + $0x70] sm:$0xff]
  %v42 = vld [vmem:[%s0 + $0x78] sm:$0xff]
  %vm43 = vcmask 261120
  %v44 = vsel %vm43, %v27, 0.0
  %45 = vadd.xlane.f32.xlu0 %v44
  %v46 = vpop.xlane.xlu0 %45
  %v47 = vsel %vm43, %v28, 0.0
  %48 = vadd.xlane.f32.xlu0 %v47
  %v49 = vpop.xlane.xlu0 %48
  %v50 = vsel %vm43, %v29, 0.0
  %51 = vadd.xlane.f32.xlu0 %v50
  %v52 = vpop.xlane.xlu0 %51
  %v53 = vsel %vm43, %v30, 0.0
  %54 = vadd.xlane.f32.xlu0 %v53
  %v55 = vpop.xlane.xlu0 %54
  %v56 = vsel %vm43, %v31, 0.0
  %57 = vadd.xlane.f32.xlu0 %v56
  %v58 = vpop.xlane.xlu0 %57
  %v59 = vsel %vm43, %v32, 0.0
  %60 = vadd.xlane.f32.xlu0 %v59
  %v61 = vpop.xlane.xlu0 %60
  %v62 = vsel %vm43, %v33, 0.0
  %63 = vadd.xlane.f32.xlu0 %v62
  %v64 = vpop.xlane.xlu0 %63
  %v65 = vsel %vm43, %v34, 0.0
  %66 = vadd.xlane.f32.xlu0 %v65
  %v67 = vpop.xlane.xlu0 %66
  %v68 = vsel %vm43, %v35, 0.0
  %69 = vadd.xlane.f32.xlu0 %v68
  %v70 = vpop.xlane.xlu0 %69
  %v71 = vsel %vm43, %v36, 0.0
  %72 = vadd.xlane.f32.xlu0 %v71
  %v73 = vpop.xlane.xlu0 %72
  %v74 = vsel %vm43, %v37, 0.0
  %75 = vadd.xlane.f32.xlu0 %v74
  %v76 = vpop.xlane.xlu0 %75
  %v77 = vsel %vm43, %v38, 0.0
  %78 = vadd.xlane.f32.xlu0 %v77
  %v79 = vpop.xlane.xlu0 %78
  %v80 = vsel %vm43, %v39, 0.0
  %81 = vadd.xlane.f32.xlu0 %v80
  %v82 = vpop.xlane.xlu0 %81
  %v83 = vsel %vm43, %v40, 0.0
  %84 = vadd.xlane.f32.xlu0 %v83
  %v85 = vpop.xlane.xlu0 %84
  %v86 = vsel %vm43, %v41, 0.0
  %87 = vadd.xlane.f32.xlu0 %v86
  %v88 = vpop.xlane.xlu0 %87
  %v89 = vsel %vm43, %v42, 0.0
  %90 = vadd.xlane.f32.xlu0 %v89
  %v91 = vpop.xlane.xlu0 %90
  %v92 = vrcp.pop 32.0
  %v93 = vmul.f32 %v46, %v92
  %v94 = vmul.f32 %v49, %v92
  %v95 = vmul.f32 %v52, %v92
  %v96 = vmul.f32 %v55, %v92
  %v97 = vmul.f32 %v58, %v92
  %v98 = vmul.f32 %v61, %v92
  %v99 = vmul.f32 %v64, %v92
  %v100 = vmul.f32 %v67, %v92
  %v101 = vmul.f32 %v70, %v92
  %v102 = vmul.f32 %v73, %v92
  %v103 = vmul.f32 %v76, %v92
  %v104 = vmul.f32 %v79, %v92
  %v105 = vmul.f32 %v82, %v92
  %v106 = vmul.f32 %v85, %v92
  %v107 = vmul.f32 %v88, %v92
  %v108 = vmul.f32 %v91, %v92
  %v109 = vsub.f32 %v27, %v93
  %v110 = vsub.f32 %v28, %v94
  %v111 = vsub.f32 %v29, %v95
  %v112 = vsub.f32 %v30, %v96
  %v113 = vsub.f32 %v31, %v97
  %v114 = vsub.f32 %v32, %v98
  %v115 = vsub.f32 %v33, %v99
  %v116 = vsub.f32 %v34, %v100
  %v117 = vsub.f32 %v35, %v101
  %v118 = vsub.f32 %v36, %v102
  %v119 = vsub.f32 %v37, %v103
  %v120 = vsub.f32 %v38, %v104
  %v121 = vsub.f32 %v39, %v105
  %v122 = vsub.f32 %v40, %v106
  %v123 = vsub.f32 %v41, %v107
  %v124 = vsub.f32 %v42, %v108
  %v125 = vmul.f32 %v109, %v109
  %v126 = vmul.f32 %v110, %v110
  %v127 = vmul.f32 %v111, %v111
  %v128 = vmul.f32 %v112, %v112
  %v129 = vmul.f32 %v113, %v113
  %v130 = vmul.f32 %v114, %v114
  %v131 = vmul.f32 %v115, %v115
  %v132 = vmul.f32 %v116, %v116
  %v133 = vmul.f32 %v117, %v117
  %v134 = vmul.f32 %v118, %v118
  %v135 = vmul.f32 %v119, %v119
  %v136 = vmul.f32 %v120, %v120
  %v137 = vmul.f32 %v121, %v121
  %v138 = vmul.f32 %v122, %v122
  %v139 = vmul.f32 %v123, %v123
  %v140 = vmul.f32 %v124, %v124
  %v141 = vsel %vm43, %v125, 0.0
  %142 = vadd.xlane.f32.xlu0 %v141
  %v143 = vpop.xlane.xlu0 %142
  %v144 = vsel %vm43, %v126, 0.0
  %145 = vadd.xlane.f32.xlu0 %v144
  %v146 = vpop.xlane.xlu0 %145
  %v147 = vsel %vm43, %v127, 0.0
  %148 = vadd.xlane.f32.xlu0 %v147
  %v149 = vpop.xlane.xlu0 %148
  %v150 = vsel %vm43, %v128, 0.0
  %151 = vadd.xlane.f32.xlu0 %v150
  %v152 = vpop.xlane.xlu0 %151
  %v153 = vsel %vm43, %v129, 0.0
  %154 = vadd.xlane.f32.xlu0 %v153
  %v155 = vpop.xlane.xlu0 %154
  %v156 = vsel %vm43, %v130, 0.0
  %157 = vadd.xlane.f32.xlu0 %v156
  %v158 = vpop.xlane.xlu0 %157
  %v159 = vsel %vm43, %v131, 0.0
  %160 = vadd.xlane.f32.xlu0 %v159
  %v161 = vpop.xlane.xlu0 %160
  %v162 = vsel %vm43, %v132, 0.0
  %163 = vadd.xlane.f32.xlu0 %v162
  %v164 = vpop.xlane.xlu0 %163
  %v165 = vsel %vm43, %v133, 0.0
  %166 = vadd.xlane.f32.xlu0 %v165
  %v167 = vpop.xlane.xlu0 %166
  %v168 = vsel %vm43, %v134, 0.0
  %169 = vadd.xlane.f32.xlu0 %v168
  %v170 = vpop.xlane.xlu0 %169
  %v171 = vsel %vm43, %v135, 0.0
  %172 = vadd.xlane.f32.xlu0 %v171
  %v173 = vpop.xlane.xlu0 %172
  %v174 = vsel %vm43, %v136, 0.0
  %175 = vadd.xlane.f32.xlu0 %v174
  %v176 = vpop.xlane.xlu0 %175
  %v177 = vsel %vm43, %v137, 0.0
  %178 = vadd.xlane.f32.xlu0 %v177
  %v179 = vpop.xlane.xlu0 %178
  %v180 = vsel %vm43, %v138, 0.0
  %181 = vadd.xlane.f32.xlu0 %v180
  %v182 = vpop.xlane.xlu0 %181
  %v183 = vsel %vm43, %v139, 0.0
  %184 = vadd.xlane.f32.xlu0 %v183
  %v185 = vpop.xlane.xlu0 %184
  %v186 = vsel %vm43, %v140, 0.0
  %187 = vadd.xlane.f32.xlu0 %v186
  %v188 = vpop.xlane.xlu0 %187
  %v189 = vmul.f32 %v143, %v92
  %v190 = vmul.f32 %v146, %v92
  %v191 = vmul.f32 %v149, %v92
  %v192 = vmul.f32 %v152, %v92
  %v193 = vmul.f32 %v155, %v92
  %v194 = vmul.f32 %v158, %v92
  %v195 = vmul.f32 %v161, %v92
  %v196 = vmul.f32 %v164, %v92
  %v197 = vmul.f32 %v167, %v92
  %v198 = vmul.f32 %v170, %v92
  %v199 = vmul.f32 %v173, %v92
  %v200 = vmul.f32 %v176, %v92
  %v201 = vmul.f32 %v179, %v92
  %v202 = vmul.f32 %v182, %v92
  %v203 = vmul.f32 %v185, %v92
  %v204 = vmul.f32 %v188, %v92
  %v205 = vadd.f32 %v189, 1e-05
  %v206 = vadd.f32 %v190, 1e-05
  %v207 = vadd.f32 %v191, 1e-05
  %v208 = vadd.f32 %v192, 1e-05
  %v209 = vadd.f32 %v193, 1e-05
  %v210 = vadd.f32 %v194, 1e-05
  %v211 = vadd.f32 %v195, 1e-05
  %v212 = vadd.f32 %v196, 1e-05
  %v213 = vadd.f32 %v197, 1e-05
  %v214 = vadd.f32 %v198, 1e-05
  %v215 = vadd.f32 %v199, 1e-05
  %v216 = vadd.f32 %v200, 1e-05
  %v217 = vadd.f32 %v201, 1e-05
  %v218 = vadd.f32 %v202, 1e-05
  %v219 = vadd.f32 %v203, 1e-05
  %v220 = vadd.f32 %v204, 1e-05
  %v221 = vrsqrt.pop %v205
  %v222 = vrsqrt.pop %v206
  %v223 = vrsqrt.pop %v207
  %v224 = vrsqrt.pop %v208
  %v225 = vrsqrt.pop %v209
  %v226 = vrsqrt.pop %v210
  %v227 = vrsqrt.pop %v211
  %v228 = vrsqrt.pop %v212
  %v229 = vrsqrt.pop %v213
  %v230 = vrsqrt.pop %v214
  %v231 = vrsqrt.pop %v215
  %v232 = vrsqrt.pop %v216
  %v233 = vrsqrt.pop %v217
  %v234 = vrsqrt.pop %v218
  %v235 = vrsqrt.pop %v219
  %v236 = vrsqrt.pop %v220
  %v237 = vmul.f32 %v109, %v221
  %v238 = vmul.f32 %v110, %v222
  %v239 = vmul.f32 %v111, %v223
  %v240 = vmul.f32 %v112, %v224
  %v241 = vmul.f32 %v113, %v225
  %v242 = vmul.f32 %v114, %v226
  %v243 = vmul.f32 %v115, %v227
  %v244 = vmul.f32 %v116, %v228
  %v245 = vmul.f32 %v117, %v229
  %v246 = vmul.f32 %v118, %v230
  %v247 = vmul.f32 %v119, %v231
  %v248 = vmul.f32 %v120, %v232
  %v249 = vmul.f32 %v121, %v233
  %v250 = vmul.f32 %v122, %v234
  %v251 = vmul.f32 %v123, %v235
  %v252 = vmul.f32 %v124, %v236
  %v253 = vld [vmem:[%s1] sm:$0x1]
  %v255 = vlaneseq
  %v256 = vshrl.u32 %v255, 7
  %v257 = vsub.s32 0, %v256
  %v258 = vrot.slane %v253, %v257
  %v260 = vmul.f32 %v237, %v258
  %v261 = vmul.f32 %v238, %v258
  %v262 = vmul.f32 %v239, %v258
  %v263 = vmul.f32 %v240, %v258
  %v264 = vmul.f32 %v241, %v258
  %v265 = vmul.f32 %v242, %v258
  %v266 = vmul.f32 %v243, %v258
  %v267 = vmul.f32 %v244, %v258
  %v268 = vmul.f32 %v245, %v258
  %v269 = vmul.f32 %v246, %v258
  %v270 = vmul.f32 %v247, %v258
  %v271 = vmul.f32 %v248, %v258
  %v272 = vmul.f32 %v249, %v258
  %v273 = vmul.f32 %v250, %v258
  %v274 = vmul.f32 %v251, %v258
  %v275 = vmul.f32 %v252, %v258
  %v276 = vld [vmem:[%s2] sm:$0x1]
  %v278 = vlaneseq
  %v279 = vshrl.u32 %v278, 7
  %v280 = vsub.s32 0, %v279
  %v281 = vrot.slane %v276, %v280
  %v283 = vadd.f32 %v260, %v281
  %v284 = vadd.f32 %v261, %v281
  %v285 = vadd.f32 %v262, %v281
  %v286 = vadd.f32 %v263, %v281
  %v287 = vadd.f32 %v264, %v281
  %v288 = vadd.f32 %v265, %v281
  %v289 = vadd.f32 %v266, %v281
  %v290 = vadd.f32 %v267, %v281
  %v291 = vadd.f32 %v268, %v281
  %v292 = vadd.f32 %v269, %v281
  %v293 = vadd.f32 %v270, %v281
  %v294 = vadd.f32 %v271, %v281
  %v295 = vadd.f32 %v272, %v281
  %v296 = vadd.f32 %v273, %v281
  %v297 = vadd.f32 %v274, %v281
  %v298 = vadd.f32 %v275, %v281
  %v299 = vpack.c.bf16 %v284, %v283
  %v300 = vpack.c.bf16 %v286, %v285
  %v301 = vpack.c.bf16 %v288, %v287
  %v302 = vpack.c.bf16 %v290, %v289
  %v303 = vpack.c.bf16 %v292, %v291
  %v304 = vpack.c.bf16 %v294, %v293
  %v305 = vpack.c.bf16 %v296, %v295
  %v306 = vpack.c.bf16 %v298, %v297
  %v307 = vld [vmem:[%s3] sm:$0xf]
  %v308 = vld [vmem:[%s3 + $0x4] sm:$0xf]
  %v309 = vld [vmem:[%s3 + $0x8] sm:$0xf]
  %v310 = vld [vmem:[%s3 + $0xc] sm:$0xf]
  %v311 = vld [vmem:[%s4] sm:$0x1]
  %v313 = vlaneseq
  %v314 = vshrl.u32 %v313, 7
  %v315 = vsub.s32 0, %v314
  %v316 = vrot.slane %v311, %v315
  %v322 = vunpack.c.l.b16 %v307
  %v323 = vunpack.c.l.b16 %v308
  %v324 = vunpack.c.l.b16 %v309
  %v325 = vunpack.c.l.b16 %v310
  %v326 = vpack.c.b16 %v323, %v322
  %v327 = vpack.c.b16 %v325, %v324
  %v331 = vsel %vm43, %v299, 0
  %v334 = vsel %vm43, %v300, 0
  %v337 = vsel %vm43, %v301, 0
  %v340 = vsel %vm43, %v302, 0
  %v343 = vsel %vm43, %v303, 0
  %v346 = vsel %vm43, %v304, 0
  %v349 = vsel %vm43, %v305, 0
  %v352 = vsel %vm43, %v306, 0
  %354 = vmatprep.subr.bf16.mxu0 0
  %355 = vmatpush1.bf16.msra.mxu0 0
  %356 = vmatprep.subr.bf16.mxu0 0
  %357 = vmatpush1.bf16.msra.mxu0 0
  %358 = vmatprep.subr.bf16.mxu0 0
  %359 = vmatpush1.bf16.msra.mxu0 0
  %360 = vmatprep.subr.bf16.mxu0 0
  %361 = vmatpush1.bf16.msra.mxu0 0
  %362 = vmatprep.subr.bf16.mxu0 0
  %363 = vmatpush1.bf16.msra.mxu0 0
  %364 = vmatprep.subr.bf16.mxu0 0
  %365 = vmatpush1.bf16.msra.mxu0 0
  %366 = vmatprep.subr.bf16.mxu0 0
  %367 = vmatpush1.bf16.msra.mxu0 %v327
  %368 = vmatprep.subr.bf16.mxu0 0
  %369 = vmatpush1.bf16.msra.mxu0 %v326
  %370 = vmatprep.subr.bf16.mxu0 0
  %371 = vmatpush2.bf16.msra.mxu0 0
  %372 = vmatprep.subr.bf16.mxu0 0
  %373 = vmatpush2.bf16.msra.mxu0 0
  %374 = vmatprep.subr.bf16.mxu0 0
  %375 = vmatpush2.bf16.msra.mxu0 0
  %376 = vmatprep.subr.bf16.mxu0 0
  %377 = vmatpush2.bf16.msra.mxu0 0
  %378 = vmatprep.subr.bf16.mxu0 0
  %379 = vmatpush2.bf16.msra.mxu0 0
  %380 = vmatprep.subr.bf16.mxu0 0
  %381 = vmatpush2.bf16.msra.mxu0 0
  %382 = vmatprep.subr.bf16.mxu0 0
  %383 = vmatpush2.bf16.msra.mxu0 0
  %384 = vmatprep.subr.bf16.mxu0 0
  %385 = vmatpush2.bf16.msra.mxu0 0
  %386 = vmatprep.mubr.bf16.mxu0 0
  %387 = vmatmul.mubr.bf16.gmra.mxu0 %v331
  %v388 = vpop.f32.mrf.mxu0
  %v389 = vadd.f32 %v316, %v388
  %v390 = vpop.f32.mrf.mxu0
  %v391 = vpop.f32.mrf.mxu0
  %v392 = vadd.f32 %v316, %v391
  %v393 = vpop.f32.mrf.mxu0
  %394 = vmatprep.mubr.bf16.mxu0 0
  %395 = vmatmul.mubr.bf16.gmra.mxu0 %v334
  %v396 = vpop.f32.mrf.mxu0
  %v397 = vadd.f32 %v316, %v396
  %v398 = vpop.f32.mrf.mxu0
  %v399 = vpop.f32.mrf.mxu0
  %v400 = vadd.f32 %v316, %v399
  %v401 = vpop.f32.mrf.mxu0
  %402 = vmatprep.mubr.bf16.mxu0 0
  %403 = vmatmul.mubr.bf16.gmra.mxu0 %v337
  %v404 = vpop.f32.mrf.mxu0
  %v405 = vadd.f32 %v316, %v404
  %v406 = vpop.f32.mrf.mxu0
  %v407 = vpop.f32.mrf.mxu0
  %v408 = vadd.f32 %v316, %v407
  %v409 = vpop.f32.mrf.mxu0
  %410 = vmatprep.mubr.bf16.mxu0 0
  %411 = vmatmul.mubr.bf16.gmra.mxu0 %v340
  %v412 = vpop.f32.mrf.mxu0
  %v413 = vadd.f32 %v316, %v412
  %v414 = vpop.f32.mrf.mxu0
  %v415 = vpop.f32.mrf.mxu0
  %v416 = vadd.f32 %v316, %v415
  %v417 = vpop.f32.mrf.mxu0
  %418 = vmatprep.mubr.bf16.mxu0 0
  %419 = vmatmul.mubr.bf16.gmra.mxu0 %v343
  %v420 = vpop.f32.mrf.mxu0
  %v421 = vadd.f32 %v316, %v420
  %v422 = vpop.f32.mrf.mxu0
  %v423 = vpop.f32.mrf.mxu0
  %v424 = vadd.f32 %v316, %v423
  %v425 = vpop.f32.mrf.mxu0
  %426 = vmatprep.mubr.bf16.mxu0 0
  %427 = vmatmul.mubr.bf16.gmra.mxu0 %v346
  %v428 = vpop.f32.mrf.mxu0
  %v429 = vadd.f32 %v316, %v428
  %v430 = vpop.f32.mrf.mxu0
  %v431 = vpop.f32.mrf.mxu0
  %v432 = vadd.f32 %v316, %v431
  %v433 = vpop.f32.mrf.mxu0
  %434 = vmatprep.mubr.bf16.mxu0 0
  %435 = vmatmul.mubr.bf16.gmra.mxu0 %v349
  %v436 = vpop.f32.mrf.mxu0
  %v437 = vadd.f32 %v316, %v436
  %v438 = vpop.f32.mrf.mxu0
  %v439 = vpop.f32.mrf.mxu0
  %v440 = vadd.f32 %v316, %v439
  %v441 = vpop.f32.mrf.mxu0
  %442 = vmatprep.mubr.bf16.mxu0 0
  %443 = vmatmul.mubr.bf16.gmra.mxu0 %v352
  %v444 = vpop.f32.mrf.mxu0
  %v445 = vadd.f32 %v316, %v444
  %v446 = vpop.f32.mrf.mxu0
  %v447 = vpop.f32.mrf.mxu0
  %v448 = vadd.f32 %v316, %v447
  %v449 = vpop.f32.mrf.mxu0
  %450 = vdwg.mxu0
  %v451 = vmul.f32 %v389, 0.5
  %v452 = vmul.f32 %v392, 0.5
  %v453 = vmul.f32 %v397, 0.5
  %v454 = vmul.f32 %v400, 0.5
  %v455 = vmul.f32 %v405, 0.5
  %v456 = vmul.f32 %v408, 0.5
  %v457 = vmul.f32 %v413, 0.5
  %v458 = vmul.f32 %v416, 0.5
  %v459 = vmul.f32 %v421, 0.5
  %v460 = vmul.f32 %v424, 0.5
  %v461 = vmul.f32 %v429, 0.5
  %v462 = vmul.f32 %v432, 0.5
  %v463 = vmul.f32 %v437, 0.5
  %v464 = vmul.f32 %v440, 0.5
  %v465 = vmul.f32 %v445, 0.5
  %v466 = vmul.f32 %v448, 0.5
  %v467 = vmul.f32 %v389, 0.70710677
  %v468 = vmul.f32 %v392, 0.70710677
  %v469 = vmul.f32 %v397, 0.70710677
  %v470 = vmul.f32 %v400, 0.70710677
  %v471 = vmul.f32 %v405, 0.70710677
  %v472 = vmul.f32 %v408, 0.70710677
  %v473 = vmul.f32 %v413, 0.70710677
  %v474 = vmul.f32 %v416, 0.70710677
  %v475 = vmul.f32 %v421, 0.70710677
  %v476 = vmul.f32 %v424, 0.70710677
  %v477 = vmul.f32 %v429, 0.70710677
  %v478 = vmul.f32 %v432, 0.70710677
  %v479 = vmul.f32 %v437, 0.70710677
  %v480 = vmul.f32 %v440, 0.70710677
  %v481 = vmul.f32 %v445, 0.70710677
  %v482 = vmul.f32 %v448, 0.70710677
  %v483 = verf.f32.pop %v467
  %v484 = verf.f32.pop %v468
  %v485 = verf.f32.pop %v469
  %v486 = verf.f32.pop %v470
  %v487 = verf.f32.pop %v471
  %v488 = verf.f32.pop %v472
  %v489 = verf.f32.pop %v473
  %v490 = verf.f32.pop %v474
  %v491 = verf.f32.pop %v475
  %v492 = verf.f32.pop %v476
  %v493 = verf.f32.pop %v477
  %v494 = verf.f32.pop %v478
  %v495 = verf.f32.pop %v479
  %v496 = verf.f32.pop %v480
  %v497 = verf.f32.pop %v481
  %v498 = verf.f32.pop %v482
  %v499 = vadd.f32 %v483, 1.0
  %v500 = vadd.f32 %v484, 1.0
  %v501 = vadd.f32 %v485, 1.0
  %v502 = vadd.f32 %v486, 1.0
  %v503 = vadd.f32 %v487, 1.0
  %v504 = vadd.f32 %v488, 1.0
  %v505 = vadd.f32 %v489, 1.0
  %v506 = vadd.f32 %v490, 1.0
  %v507 = vadd.f32 %v491, 1.0
  %v508 = vadd.f32 %v492, 1.0
  %v509 = vadd.f32 %v493, 1.0
  %v510 = vadd.f32 %v494, 1.0
  %v511 = vadd.f32 %v495, 1.0
  %v512 = vadd.f32 %v496, 1.0
  %v513 = vadd.f32 %v497, 1.0
  %v514 = vadd.f32 %v498, 1.0
  %v515 = vmul.f32 %v451, %v499
  %v516 = vmul.f32 %v452, %v500
  %v517 = vmul.f32 %v453, %v501
  %v518 = vmul.f32 %v454, %v502
  %v519 = vmul.f32 %v455, %v503
  %v520 = vmul.f32 %v456, %v504
  %v521 = vmul.f32 %v457, %v505
  %v522 = vmul.f32 %v458, %v506
  %v523 = vmul.f32 %v459, %v507
  %v524 = vmul.f32 %v460, %v508
  %v525 = vmul.f32 %v461, %v509
  %v526 = vmul.f32 %v462, %v510
  %v527 = vmul.f32 %v463, %v511
  %v528 = vmul.f32 %v464, %v512
  %v529 = vmul.f32 %v465, %v513
  %v530 = vmul.f32 %v466, %v514
  %v531 = vpack.c.bf16 %v516, %v515
  %v532 = vpack.c.bf16 %v518, %v517
  %v533 = vpack.c.bf16 %v520, %v519
  %v534 = vpack.c.bf16 %v522, %v521
  %v535 = vpack.c.bf16 %v524, %v523
  %v536 = vpack.c.bf16 %v526, %v525
  %v537 = vpack.c.bf16 %v528, %v527
  %v538 = vpack.c.bf16 %v530, %v529
  %v539 = vld [vmem:[%s5] sm:$0xf]
  %v540 = vld [vmem:[%s5 + $0x4] sm:$0xf]
  %v541 = vld [vmem:[%s5 + $0x8] sm:$0xf]
  %v542 = vld [vmem:[%s5 + $0xc] sm:$0xf]
  %v543 = vld [vmem:[%s5 + $0x10] sm:$0xf]
  %v544 = vld [vmem:[%s5 + $0x14] sm:$0xf]
  %v545 = vld [vmem:[%s5 + $0x18] sm:$0xf]
  %v546 = vld [vmem:[%s5 + $0x1c] sm:$0xf]
  %v547 = vld [vmem:[%s5 + $0x20] sm:$0xf]
  %v548 = vld [vmem:[%s5 + $0x24] sm:$0xf]
  %v549 = vld [vmem:[%s5 + $0x28] sm:$0xf]
  %v550 = vld [vmem:[%s5 + $0x2c] sm:$0xf]
  %v551 = vld [vmem:[%s5 + $0x30] sm:$0xf]
  %v552 = vld [vmem:[%s5 + $0x34] sm:$0xf]
  %v553 = vld [vmem:[%s5 + $0x38] sm:$0xf]
  %v554 = vld [vmem:[%s5 + $0x3c] sm:$0xf]
  %v571 = vunpack.c.l.b16 %v539
  %v572 = vunpack.c.l.b16 %v540
  %v573 = vunpack.c.l.b16 %v541
  %v574 = vunpack.c.l.b16 %v542
  %v575 = vunpack.c.l.b16 %v543
  %v576 = vunpack.c.l.b16 %v544
  %v577 = vunpack.c.l.b16 %v545
  %v578 = vunpack.c.l.b16 %v546
  %v579 = vunpack.c.l.b16 %v547
  %v580 = vunpack.c.l.b16 %v548
  %v581 = vunpack.c.l.b16 %v549
  %v582 = vunpack.c.l.b16 %v550
  %v583 = vunpack.c.l.b16 %v551
  %v584 = vunpack.c.l.b16 %v552
  %v585 = vunpack.c.l.b16 %v553
  %v586 = vunpack.c.l.b16 %v554
  %v587 = vpack.c.b16 %v572, %v571
  %v588 = vpack.c.b16 %v574, %v573
  %v589 = vpack.c.b16 %v576, %v575
  %v590 = vpack.c.b16 %v578, %v577
  %v591 = vpack.c.b16 %v580, %v579
  %v592 = vpack.c.b16 %v582, %v581
  %v593 = vpack.c.b16 %v584, %v583
  %v594 = vpack.c.b16 %v586, %v585
  %603 = vmatprep.subr.bf16.mxu0 0
  %604 = vmatpush1.bf16.msra.mxu0 %v594
  %605 = vmatprep.subr.bf16.mxu0 0
  %606 = vmatpush1.bf16.msra.mxu0 %v593
  %607 = vmatprep.subr.bf16.mxu0 0
  %608 = vmatpush1.bf16.msra.mxu0 %v592
  %609 = vmatprep.subr.bf16.mxu0 0
  %610 = vmatpush1.bf16.msra.mxu0 %v591
  %611 = vmatprep.subr.bf16.mxu0 0
  %612 = vmatpush1.bf16.msra.mxu0 %v590
  %613 = vmatprep.subr.bf16.mxu0 0
  %614 = vmatpush1.bf16.msra.mxu0 %v589
  %615 = vmatprep.subr.bf16.mxu0 0
  %616 = vmatpush1.bf16.msra.mxu0 %v588
  %617 = vmatprep.subr.bf16.mxu0 0
  %618 = vmatpush1.bf16.msra.mxu0 %v587
  %619 = vmatprep.subr.bf16.mxu0 0
  %620 = vmatpush2.bf16.msra.mxu0 0
  %621 = vmatprep.subr.bf16.mxu0 0
  %622 = vmatpush2.bf16.msra.mxu0 0
  %623 = vmatprep.subr.bf16.mxu0 0
  %624 = vmatpush2.bf16.msra.mxu0 0
  %625 = vmatprep.subr.bf16.mxu0 0
  %626 = vmatpush2.bf16.msra.mxu0 0
  %627 = vmatprep.subr.bf16.mxu0 0
  %628 = vmatpush2.bf16.msra.mxu0 0
  %629 = vmatprep.subr.bf16.mxu0 0
  %630 = vmatpush2.bf16.msra.mxu0 0
  %631 = vmatprep.subr.bf16.mxu0 0
  %632 = vmatpush2.bf16.msra.mxu0 0
  %633 = vmatprep.subr.bf16.mxu0 0
  %634 = vmatpush2.bf16.msra.mxu0 0
  %635 = vmatprep.mubr.bf16.mxu0 0
  %636 = vmatmul.mubr.bf16.gmra.mxu0 %v531
  %v637 = vpop.f32.mrf.mxu0
  %v638 = vadd.f32 0.0, %v637
  %v639 = vpop.f32.mrf.mxu0
  %v640 = vpop.f32.mrf.mxu0
  %v641 = vadd.f32 0.0, %v640
  %v642 = vpop.f32.mrf.mxu0
  %643 = vmatprep.mubr.bf16.mxu0 0
  %644 = vmatmul.mubr.bf16.gmra.mxu0 %v532
  %v645 = vpop.f32.mrf.mxu0
  %v646 = vadd.f32 0.0, %v645
  %v647 = vpop.f32.mrf.mxu0
  %v648 = vpop.f32.mrf.mxu0
  %v649 = vadd.f32 0.0, %v648
  %v650 = vpop.f32.mrf.mxu0
  %651 = vmatprep.mubr.bf16.mxu0 0
  %652 = vmatmul.mubr.bf16.gmra.mxu0 %v533
  %v653 = vpop.f32.mrf.mxu0
  %v654 = vadd.f32 0.0, %v653
  %v655 = vpop.f32.mrf.mxu0
  %v656 = vpop.f32.mrf.mxu0
  %v657 = vadd.f32 0.0, %v656
  %v658 = vpop.f32.mrf.mxu0
  %659 = vmatprep.mubr.bf16.mxu0 0
  %660 = vmatmul.mubr.bf16.gmra.mxu0 %v534
  %v661 = vpop.f32.mrf.mxu0
  %v662 = vadd.f32 0.0, %v661
  %v663 = vpop.f32.mrf.mxu0
  %v664 = vpop.f32.mrf.mxu0
  %v665 = vadd.f32 0.0, %v664
  %v666 = vpop.f32.mrf.mxu0
  %667 = vmatprep.mubr.bf16.mxu0 0
  %668 = vmatmul.mubr.bf16.gmra.mxu0 %v535
  %v669 = vpop.f32.mrf.mxu0
  %v670 = vadd.f32 0.0, %v669
  %v671 = vpop.f32.mrf.mxu0
  %v672 = vpop.f32.mrf.mxu0
  %v673 = vadd.f32 0.0, %v672
  %v674 = vpop.f32.mrf.mxu0
  %675 = vmatprep.mubr.bf16.mxu0 0
  %676 = vmatmul.mubr.bf16.gmra.mxu0 %v536
  %v677 = vpop.f32.mrf.mxu0
  %v678 = vadd.f32 0.0, %v677
  %v679 = vpop.f32.mrf.mxu0
  %v680 = vpop.f32.mrf.mxu0
  %v681 = vadd.f32 0.0, %v680
  %v682 = vpop.f32.mrf.mxu0
  %683 = vmatprep.mubr.bf16.mxu0 0
  %684 = vmatmul.mubr.bf16.gmra.mxu0 %v537
  %v685 = vpop.f32.mrf.mxu0
  %v686 = vadd.f32 0.0, %v685
  %v687 = vpop.f32.mrf.mxu0
  %v688 = vpop.f32.mrf.mxu0
  %v689 = vadd.f32 0.0, %v688
  %v690 = vpop.f32.mrf.mxu0
  %691 = vmatprep.mubr.bf16.mxu0 0
  %692 = vmatmul.mubr.bf16.gmra.mxu0 %v538
  %v693 = vpop.f32.mrf.mxu0
  %v694 = vadd.f32 0.0, %v693
  %v695 = vpop.f32.mrf.mxu0
  %v696 = vpop.f32.mrf.mxu0
  %v697 = vadd.f32 0.0, %v696
  %v698 = vpop.f32.mrf.mxu0
  %699 = vdwg.mxu0
  %p700 = scmp.eq.s32.totalorder 0, 0
  // Predicated region
  $region30: #{swin_forward.23} parent=0 // pred_check
    %p701 = pneg %p700
  $region31: #{swin_forward.23} parent=0 // pred_check_branch
    %703 = sbr.rel (%p701) target = $region33
  $region32: #{swin_forward.23} parent=0 // pred_region
    %v704 = vld [vmem:[%s6] sm:$0x1]
    %v706 = vlaneseq
    %v707 = vshrl.u32 %v706, 7
    %v708 = vsub.s32 0, %v707
    %v709 = vrot.slane %v704, %v708
    %v711 = vadd.f32 %v27, %v709
    %v712 = vadd.f32 %v28, %v709
    %v713 = vadd.f32 %v29, %v709
    %v714 = vadd.f32 %v30, %v709
    %v715 = vadd.f32 %v31, %v709
    %v716 = vadd.f32 %v32, %v709
    %v717 = vadd.f32 %v33, %v709
    %v718 = vadd.f32 %v34, %v709
    %v719 = vadd.f32 %v35, %v709
    %v720 = vadd.f32 %v36, %v709
    %v721 = vadd.f32 %v37, %v709
    %v722 = vadd.f32 %v38, %v709
    %v723 = vadd.f32 %v39, %v709
    %v724 = vadd.f32 %v40, %v709
    %v725 = vadd.f32 %v41, %v709
    %v726 = vadd.f32 %v42, %v709
    %727 = vst.msk [vmem:[#allocation2] sm:$0xff] %vm43, %v711
    %728 = vst.msk [vmem:[#allocation2 + $0x8] sm:$0xff] %vm43, %v712
    %729 = vst.msk [vmem:[#allocation2 + $0x10] sm:$0xff] %vm43, %v713
    %730 = vst.msk [vmem:[#allocation2 + $0x18] sm:$0xff] %vm43, %v714
    %731 = vst.msk [vmem:[#allocation2 + $0x20] sm:$0xff] %vm43, %v715
    %732 = vst.msk [vmem:[#allocation2 + $0x28] sm:$0xff] %vm43, %v716
    %733 = vst.msk [vmem:[#allocation2 + $0x30] sm:$0xff] %vm43, %v717
    %734 = vst.msk [vmem:[#allocation2 + $0x38] sm:$0xff] %vm43, %v718
    %735 = vst.msk [vmem:[#allocation2 + $0x40] sm:$0xff] %vm43, %v719
    %736 = vst.msk [vmem:[#allocation2 + $0x48] sm:$0xff] %vm43, %v720
    %737 = vst.msk [vmem:[#allocation2 + $0x50] sm:$0xff] %vm43, %v721
    %738 = vst.msk [vmem:[#allocation2 + $0x58] sm:$0xff] %vm43, %v722
    %739 = vst.msk [vmem:[#allocation2 + $0x60] sm:$0xff] %vm43, %v723
    %740 = vst.msk [vmem:[#allocation2 + $0x68] sm:$0xff] %vm43, %v724
    %741 = vst.msk [vmem:[#allocation2 + $0x70] sm:$0xff] %vm43, %v725
    %742 = vst.msk [vmem:[#allocation2 + $0x78] sm:$0xff] %vm43, %v726
  $region33: #{swin_forward.23} parent=0 // pred_fallthru
    _
  %v743 = vld [vmem:[#allocation2] sm:$0xff]
  %v744 = vld [vmem:[#allocation2 + $0x8] sm:$0xff]
  %v745 = vld [vmem:[#allocation2 + $0x10] sm:$0xff]
  %v746 = vld [vmem:[#allocation2 + $0x18] sm:$0xff]
  %v747 = vld [vmem:[#allocation2 + $0x20] sm:$0xff]
  %v748 = vld [vmem:[#allocation2 + $0x28] sm:$0xff]
  %v749 = vld [vmem:[#allocation2 + $0x30] sm:$0xff]
  %v750 = vld [vmem:[#allocation2 + $0x38] sm:$0xff]
  %v751 = vld [vmem:[#allocation2 + $0x40] sm:$0xff]
  %v752 = vld [vmem:[#allocation2 + $0x48] sm:$0xff]
  %v753 = vld [vmem:[#allocation2 + $0x50] sm:$0xff]
  %v754 = vld [vmem:[#allocation2 + $0x58] sm:$0xff]
  %v755 = vld [vmem:[#allocation2 + $0x60] sm:$0xff]
  %v756 = vld [vmem:[#allocation2 + $0x68] sm:$0xff]
  %v757 = vld [vmem:[#allocation2 + $0x70] sm:$0xff]
  %v758 = vld [vmem:[#allocation2 + $0x78] sm:$0xff]
  %v759 = vadd.f32 %v743, %v638
  %v760 = vadd.f32 %v744, %v641
  %v761 = vadd.f32 %v745, %v646
  %v762 = vadd.f32 %v746, %v649
  %v763 = vadd.f32 %v747, %v654
  %v764 = vadd.f32 %v748, %v657
  %v765 = vadd.f32 %v749, %v662
  %v766 = vadd.f32 %v750, %v665
  %v767 = vadd.f32 %v751, %v670
  %v768 = vadd.f32 %v752, %v673
  %v769 = vadd.f32 %v753, %v678
  %v770 = vadd.f32 %v754, %v681
  %v771 = vadd.f32 %v755, %v686
  %v772 = vadd.f32 %v756, %v689
  %v773 = vadd.f32 %v757, %v694
  %v774 = vadd.f32 %v758, %v697
  %775 = vst.msk [vmem:[#allocation2] sm:$0xff] %vm43, %v759
  %776 = vst.msk [vmem:[#allocation2 + $0x8] sm:$0xff] %vm43, %v760
  %777 = vst.msk [vmem:[#allocation2 + $0x10] sm:$0xff] %vm43, %v761
  %778 = vst.msk [vmem:[#allocation2 + $0x18] sm:$0xff] %vm43, %v762
  %779 = vst.msk [vmem:[#allocation2 + $0x20] sm:$0xff] %vm43, %v763
  %780 = vst.msk [vmem:[#allocation2 + $0x28] sm:$0xff] %vm43, %v764
  %781 = vst.msk [vmem:[#allocation2 + $0x30] sm:$0xff] %vm43, %v765
  %782 = vst.msk [vmem:[#allocation2 + $0x38] sm:$0xff] %vm43, %v766
  %783 = vst.msk [vmem:[#allocation2 + $0x40] sm:$0xff] %vm43, %v767
  %784 = vst.msk [vmem:[#allocation2 + $0x48] sm:$0xff] %vm43, %v768
  %785 = vst.msk [vmem:[#allocation2 + $0x50] sm:$0xff] %vm43, %v769
  %786 = vst.msk [vmem:[#allocation2 + $0x58] sm:$0xff] %vm43, %v770
  %787 = vst.msk [vmem:[#allocation2 + $0x60] sm:$0xff] %vm43, %v771
  %788 = vst.msk [vmem:[#allocation2 + $0x68] sm:$0xff] %vm43, %v772
  %789 = vst.msk [vmem:[#allocation2 + $0x70] sm:$0xff] %vm43, %v773
  %790 = vst.msk [vmem:[#allocation2 + $0x78] sm:$0xff] %vm43, %v774
  // Predicated region
  $region34: #{swin_forward.23} parent=0 // pred_check
    %p791 = pneg %p700
  $region35: #{swin_forward.23} parent=0 // pred_check_branch
    %793 = sbr.rel (%p791) target = $region37
  $region36: #{swin_forward.23} parent=0 // pred_region
    %v794 = vld [vmem:[#allocation2] sm:$0xff]
    %v795 = vld [vmem:[#allocation2 + $0x8] sm:$0xff]
    %v796 = vld [vmem:[#allocation2 + $0x10] sm:$0xff]
    %v797 = vld [vmem:[#allocation2 + $0x18] sm:$0xff]
    %v798 = vld [vmem:[#allocation2 + $0x20] sm:$0xff]
    %v799 = vld [vmem:[#allocation2 + $0x28] sm:$0xff]
    %v800 = vld [vmem:[#allocation2 + $0x30] sm:$0xff]
    %v801 = vld [vmem:[#allocation2 + $0x38] sm:$0xff]
    %v802 = vld [vmem:[#allocation2 + $0x40] sm:$0xff]
    %v803 = vld [vmem:[#allocation2 + $0x48] sm:$0xff]
    %v804 = vld [vmem:[#allocation2 + $0x50] sm:$0xff]
    %v805 = vld [vmem:[#allocation2 + $0x58] sm:$0xff]
    %v806 = vld [vmem:[#allocation2 + $0x60] sm:$0xff]
    %v807 = vld [vmem:[#allocation2 + $0x68] sm:$0xff]
    %v808 = vld [vmem:[#allocation2 + $0x70] sm:$0xff]
    %v809 = vld [vmem:[#allocation2 + $0x78] sm:$0xff]
    %810 = vst.msk [vmem:[%s7] sm:$0xff] %vm43, %v794
    %811 = vst.msk [vmem:[%s7 + $0x8] sm:$0xff] %vm43, %v795
    %812 = vst.msk [vmem:[%s7 + $0x10] sm:$0xff] %vm43, %v796
    %813 = vst.msk [vmem:[%s7 + $0x18] sm:$0xff] %vm43, %v797
    %814 = vst.msk [vmem:[%s7 + $0x20] sm:$0xff] %vm43, %v798
    %815 = vst.msk [vmem:[%s7 + $0x28] sm:$0xff] %vm43, %v799
    %816 = vst.msk [vmem:[%s7 + $0x30] sm:$0xff] %vm43, %v800
    %817 = vst.msk [vmem:[%s7 + $0x38] sm:$0xff] %vm43, %v801
    %818 = vst.msk [vmem:[%s7 + $0x40] sm:$0xff] %vm43, %v802
    %819 = vst.msk [vmem:[%s7 + $0x48] sm:$0xff] %vm43, %v803
    %820 = vst.msk [vmem:[%s7 + $0x50] sm:$0xff] %vm43, %v804
    %821 = vst.msk [vmem:[%s7 + $0x58] sm:$0xff] %vm43, %v805
    %822 = vst.msk [vmem:[%s7 + $0x60] sm:$0xff] %vm43, %v806
    %823 = vst.msk [vmem:[%s7 + $0x68] sm:$0xff] %vm43, %v807
    %824 = vst.msk [vmem:[%s7 + $0x70] sm:$0xff] %vm43, %v808
    %825 = vst.msk [vmem:[%s7 + $0x78] sm:$0xff] %vm43, %v809
  $region37: #{swin_forward.23} parent=0 // pred_fallthru
    _
  // Predicated region
  $region38: #{swin_forward.23} parent=0 // pred_check
    _
  $region39: #{swin_forward.23} parent=0 // pred_check_branch
    %827 = sbr.rel (0) target = $region41
  $region40: #{swin_forward.23} parent=0 // pred_region
    _
  $region41: #{swin_forward.23} parent=0 // pred_fallthru
    _
  // Predicated region
  $region42: #{swin_forward.23} parent=0 // pred_check
    _
  $region43: #{swin_forward.23} parent=0 // pred_check_branch
    %829 = sbr.rel (0) target = $region45
  $region44: #{swin_forward.23} parent=0 // pred_region
    _
  $region45: #{swin_forward.23} parent=0 // pred_fallthru
    _

// kernel: swin_forward.28
$region0: #{swin_forward.28}
  #allocation0 [shape = 'u32[]', space=smem, size = 0x4, offset = 0x4, fixed_abs, tag = 'smem constant byte address 0x4 - core index']
  #allocation1 [shape = 'u32[144,128]{1,0:T(1,128)}', space=vmem, size = 0x12000, scoped, tag = 'internal scratch']
  %s0 = inlined_call_operand.vmem [shape: f32[32,128], index: 0, kind: input, shape index: {}]
  %s1 = inlined_call_operand.vmem [shape: f32[1,128], index: 1, kind: input, shape index: {}]
  %s2 = inlined_call_operand.vmem [shape: f32[1,128], index: 2, kind: input, shape index: {}]
  %s3 = inlined_call_operand.vmem [shape: bf16[128,64], index: 3, kind: input, shape index: {}]
  %s4 = inlined_call_operand.vmem [shape: f32[1,64], index: 4, kind: input, shape index: {}]
  %s5 = inlined_call_operand.vmem [shape: f32[32,64], index: 5, kind: output, shape index: {}]
  %s6 = sld [smem:[#allocation0]]
  $region30: #{swin_forward.28} parent=0
    _
  %s8 = ssub.s32 1, %s6
  %s9 = scalar_select 0, %s8, %s6
  // Predicated region
  $region2: #{swin_forward.28} parent=0 // pred_check
    _
  $region3: #{swin_forward.28} parent=0 // pred_check_branch
    %11 = sbr.rel (0) target = $region5
  $region4: #{swin_forward.28} parent=0 // pred_region
    _
  $region5: #{swin_forward.28} parent=0 // pred_fallthru
    _
  // Predicated region
  $region6: #{swin_forward.28} parent=0 // pred_check
    _
  $region7: #{swin_forward.28} parent=0 // pred_check_branch
    %13 = sbr.rel (0) target = $region9
  $region8: #{swin_forward.28} parent=0 // pred_region
    _
  $region9: #{swin_forward.28} parent=0 // pred_fallthru
    _
  // Predicated region
  $region10: #{swin_forward.28} parent=0 // pred_check
    _
  $region11: #{swin_forward.28} parent=0 // pred_check_branch
    %15 = sbr.rel (0) target = $region13
  $region12: #{swin_forward.28} parent=0 // pred_region
    _
  $region13: #{swin_forward.28} parent=0 // pred_fallthru
    _
  // Predicated region
  $region14: #{swin_forward.28} parent=0 // pred_check
    _
  $region15: #{swin_forward.28} parent=0 // pred_check_branch
    %17 = sbr.rel (0) target = $region17
  $region16: #{swin_forward.28} parent=0 // pred_region
    _
  $region17: #{swin_forward.28} parent=0 // pred_fallthru
    _
  // Predicated region
  $region18: #{swin_forward.28} parent=0 // pred_check
    _
  $region19: #{swin_forward.28} parent=0 // pred_check_branch
    %19 = sbr.rel (0) target = $region21
  $region20: #{swin_forward.28} parent=0 // pred_region
    _
  $region21: #{swin_forward.28} parent=0 // pred_fallthru
    _
  %v21 = vld [vmem:[%s0] sm:$0xff]
  %v22 = vld [vmem:[%s0 + $0x8] sm:$0xff]
  %v23 = vld [vmem:[%s0 + $0x10] sm:$0xff]
  %v24 = vld [vmem:[%s0 + $0x18] sm:$0xff]
  %25 = vadd.xlane.f32.xlu0 %v21
  %v26 = vpop.xlane.xlu0 %25
  %27 = vadd.xlane.f32.xlu0 %v22
  %v28 = vpop.xlane.xlu0 %27
  %29 = vadd.xlane.f32.xlu0 %v23
  %v30 = vpop.xlane.xlu0 %29
  %31 = vadd.xlane.f32.xlu0 %v24
  %v32 = vpop.xlane.xlu0 %31
  %v33 = vrcp.pop 128.0
  %v34 = vmul.f32 %v26, %v33
  %v35 = vmul.f32 %v28, %v33
  %v36 = vmul.f32 %v30, %v33
  %v37 = vmul.f32 %v32, %v33
  %v38 = vsub.f32 %v21, %v34
  %v39 = vsub.f32 %v22, %v35
  %v40 = vsub.f32 %v23, %v36
  %v41 = vsub.f32 %v24, %v37
  %v42 = vmul.f32 %v38, %v38
  %v43 = vmul.f32 %v39, %v39
  %v44 = vmul.f32 %v40, %v40
  %v45 = vmul.f32 %v41, %v41
  %46 = vadd.xlane.f32.xlu0 %v42
  %v47 = vpop.xlane.xlu0 %46
  %48 = vadd.xlane.f32.xlu0 %v43
  %v49 = vpop.xlane.xlu0 %48
  %50 = vadd.xlane.f32.xlu0 %v44
  %v51 = vpop.xlane.xlu0 %50
  %52 = vadd.xlane.f32.xlu0 %v45
  %v53 = vpop.xlane.xlu0 %52
  %v54 = vmul.f32 %v47, %v33
  %v55 = vmul.f32 %v49, %v33
  %v56 = vmul.f32 %v51, %v33
  %v57 = vmul.f32 %v53, %v33
  %v58 = vadd.f32 %v54, 1e-05
  %v59 = vadd.f32 %v55, 1e-05
  %v60 = vadd.f32 %v56, 1e-05
  %v61 = vadd.f32 %v57, 1e-05
  %v62 = vrsqrt.pop %v58
  %v63 = vrsqrt.pop %v59
  %v64 = vrsqrt.pop %v60
  %v65 = vrsqrt.pop %v61
  %v66 = vmul.f32 %v38, %v62
  %v67 = vmul.f32 %v39, %v63
  %v68 = vmul.f32 %v40, %v64
  %v69 = vmul.f32 %v41, %v65
  %v70 = vld [vmem:[%s1] sm:$0x1]
  %v72 = vlaneseq
  %v73 = vshrl.u32 %v72, 7
  %v74 = vsub.s32 0, %v73
  %v75 = vrot.slane %v70, %v74
  %v77 = vmul.f32 %v66, %v75
  %v78 = vmul.f32 %v67, %v75
  %v79 = vmul.f32 %v68, %v75
  %v80 = vmul.f32 %v69, %v75
  %v81 = vld [vmem:[%s2] sm:$0x1]
  %v83 = vlaneseq
  %v84 = vshrl.u32 %v83, 7
  %v85 = vsub.s32 0, %v84
  %v86 = vrot.slane %v81, %v85
  %v88 = vadd.f32 %v77, %v86
  %v89 = vadd.f32 %v78, %v86
  %v90 = vadd.f32 %v79, %v86
  %v91 = vadd.f32 %v80, %v86
  %v92 = vpack.c.bf16 %v89, %v88
  %v93 = vpack.c.bf16 %v91, %v90
  %v94 = vld [vmem:[%s3] sm:$0xf]
  %v95 = vld [vmem:[%s3 + $0x4] sm:$0xf]
  %v96 = vld [vmem:[%s3 + $0x8] sm:$0xf]
  %v97 = vld [vmem:[%s3 + $0xc] sm:$0xf]
  %v98 = vld [vmem:[%s3 + $0x10] sm:$0xf]
  %v99 = vld [vmem:[%s3 + $0x14] sm:$0xf]
  %v100 = vld [vmem:[%s3 + $0x18] sm:$0xf]
  %v101 = vld [vmem:[%s3 + $0x1c] sm:$0xf]
  %v102 = vld [vmem:[%s3 + $0x20] sm:$0xf]
  %v103 = vld [vmem:[%s3 + $0x24] sm:$0xf]
  %v104 = vld [vmem:[%s3 + $0x28] sm:$0xf]
  %v105 = vld [vmem:[%s3 + $0x2c] sm:$0xf]
  %v106 = vld [vmem:[%s3 + $0x30] sm:$0xf]
  %v107 = vld [vmem:[%s3 + $0x34] sm:$0xf]
  %v108 = vld [vmem:[%s3 + $0x38] sm:$0xf]
  %v109 = vld [vmem:[%s3 + $0x3c] sm:$0xf]
  %v110 = vld [vmem:[%s4] sm:$0x1]
  %v112 = vlaneseq
  %v113 = vshrl.u32 %v112, 7
  %v114 = vsub.s32 0, %v113
  %v115 = vrot.slane %v110, %v114
  %v133 = vunpack.c.l.b16 %v94
  %v134 = vunpack.c.l.b16 %v95
  %v135 = vunpack.c.l.b16 %v96
  %v136 = vunpack.c.l.b16 %v97
  %v137 = vunpack.c.l.b16 %v98
  %v138 = vunpack.c.l.b16 %v99
  %v139 = vunpack.c.l.b16 %v100
  %v140 = vunpack.c.l.b16 %v101
  %v141 = vunpack.c.l.b16 %v102
  %v142 = vunpack.c.l.b16 %v103
  %v143 = vunpack.c.l.b16 %v104
  %v144 = vunpack.c.l.b16 %v105
  %v145 = vunpack.c.l.b16 %v106
  %v146 = vunpack.c.l.b16 %v107
  %v147 = vunpack.c.l.b16 %v108
  %v148 = vunpack.c.l.b16 %v109
  %v149 = vpack.c.b16 %v134, %v133
  %v150 = vpack.c.b16 %v136, %v135
  %v151 = vpack.c.b16 %v138, %v137
  %v152 = vpack.c.b16 %v140, %v139
  %v153 = vpack.c.b16 %v142, %v141
  %v154 = vpack.c.b16 %v144, %v143
  %v155 = vpack.c.b16 %v146, %v145
  %v156 = vpack.c.b16 %v148, %v147
  %165 = vmatprep.subr.bf16.mxu0 0
  %166 = vmatpush1.bf16.msra.mxu0 %v156
  %167 = vmatprep.subr.bf16.mxu0 0
  %168 = vmatpush1.bf16.msra.mxu0 %v155
  %169 = vmatprep.subr.bf16.mxu0 0
  %170 = vmatpush1.bf16.msra.mxu0 %v154
  %171 = vmatprep.subr.bf16.mxu0 0
  %172 = vmatpush1.bf16.msra.mxu0 %v153
  %173 = vmatprep.subr.bf16.mxu0 0
  %174 = vmatpush1.bf16.msra.mxu0 %v152
  %175 = vmatprep.subr.bf16.mxu0 0
  %176 = vmatpush1.bf16.msra.mxu0 %v151
  %177 = vmatprep.subr.bf16.mxu0 0
  %178 = vmatpush1.bf16.msra.mxu0 %v150
  %179 = vmatprep.subr.bf16.mxu0 0
  %180 = vmatpush1.bf16.msra.mxu0 %v149
  %181 = vmatprep.subr.bf16.mxu0 0
  %182 = vmatpush2.bf16.msra.mxu0 0
  %183 = vmatprep.subr.bf16.mxu0 0
  %184 = vmatpush2.bf16.msra.mxu0 0
  %185 = vmatprep.subr.bf16.mxu0 0
  %186 = vmatpush2.bf16.msra.mxu0 0
  %187 = vmatprep.subr.bf16.mxu0 0
  %188 = vmatpush2.bf16.msra.mxu0 0
  %189 = vmatprep.subr.bf16.mxu0 0
  %190 = vmatpush2.bf16.msra.mxu0 0
  %191 = vmatprep.subr.bf16.mxu0 0
  %192 = vmatpush2.bf16.msra.mxu0 0
  %193 = vmatprep.subr.bf16.mxu0 0
  %194 = vmatpush2.bf16.msra.mxu0 0
  %195 = vmatprep.subr.bf16.mxu0 0
  %196 = vmatpush2.bf16.msra.mxu0 0
  %197 = vmatprep.mubr.bf16.mxu0 0
  %198 = vmatmul.mubr.bf16.gmra.mxu0 %v92
  %v199 = vpop.f32.mrf.mxu0
  %v200 = vadd.f32 %v115, %v199
  %v201 = vpop.f32.mrf.mxu0
  %v202 = vpop.f32.mrf.mxu0
  %v203 = vadd.f32 %v115, %v202
  %v204 = vpop.f32.mrf.mxu0
  %205 = vmatprep.mubr.bf16.mxu0 0
  %206 = vmatmul.mubr.bf16.gmra.mxu0 %v93
  %v207 = vpop.f32.mrf.mxu0
  %v208 = vadd.f32 %v115, %v207
  %v209 = vpop.f32.mrf.mxu0
  %v210 = vpop.f32.mrf.mxu0
  %v211 = vadd.f32 %v115, %v210
  %v212 = vpop.f32.mrf.mxu0
  %213 = vdwg.mxu0
  %vm214 = vcmask 523264
  %215 = vst.msk [vmem:[%s5] sm:$0xff] %vm214, %v200
  %216 = vst.msk [vmem:[%s5 + $0x8] sm:$0xff] %vm214, %v203
  %217 = vst.msk [vmem:[%s5 + $0x10] sm:$0xff] %vm214, %v208
  %218 = vst.msk [vmem:[%s5 + $0x18] sm:$0xff] %vm214, %v211
  // Predicated region
  $region22: #{swin_forward.28} parent=0 // pred_check
    _
  $region23: #{swin_forward.28} parent=0 // pred_check_branch
    %220 = sbr.rel (0) target = $region25
  $region24: #{swin_forward.28} parent=0 // pred_region
    _
  $region25: #{swin_forward.28} parent=0 // pred_fallthru
    _
  // Predicated region
  $region26: #{swin_forward.28} parent=0 // pred_check
    _
  $region27: #{swin_forward.28} parent=0 // pred_check_branch
    %222 = sbr.rel (0) target = $region29
  $region28: #{swin_forward.28} parent=0 // pred_region
    _
  $region29: #{swin_forward.28} parent=0 // pred_fallthru
    _

// kernel: swin_forward.29
$region0: #{swin_forward.29}
  #allocation0 [shape = 'u32[]', space=smem, size = 0x4, offset = 0x4, fixed_abs, tag = 'smem constant byte address 0x4 - core index']
  #allocation1 [shape = 'u32[144,128]{1,0:T(1,128)}', space=vmem, size = 0x12000, scoped, tag = 'internal scratch']
  %s0 = inlined_call_operand.vmem [shape: f32[32,64], index: 0, kind: input, shape index: {}]
  %s1 = inlined_call_operand.vmem [shape: f32[1,64], index: 1, kind: input, shape index: {}]
  %s2 = inlined_call_operand.vmem [shape: f32[1,64], index: 2, kind: input, shape index: {}]
  %s3 = inlined_call_operand.vmem [shape: bf16[64,192], index: 3, kind: input, shape index: {}]
  %s4 = inlined_call_operand.vmem [shape: f32[1,192], index: 4, kind: input, shape index: {}]
  %s5 = inlined_call_operand.vmem [shape: bf16[32,192], index: 5, kind: output, shape index: {}]
  %s6 = sld [smem:[#allocation0]]
  $region30: #{swin_forward.29} parent=0
    _
  %s8 = ssub.s32 1, %s6
  %s9 = scalar_select 0, %s8, %s6
  // Predicated region
  $region2: #{swin_forward.29} parent=0 // pred_check
    _
  $region3: #{swin_forward.29} parent=0 // pred_check_branch
    %11 = sbr.rel (0) target = $region5
  $region4: #{swin_forward.29} parent=0 // pred_region
    _
  $region5: #{swin_forward.29} parent=0 // pred_fallthru
    _
  // Predicated region
  $region6: #{swin_forward.29} parent=0 // pred_check
    _
  $region7: #{swin_forward.29} parent=0 // pred_check_branch
    %13 = sbr.rel (0) target = $region9
  $region8: #{swin_forward.29} parent=0 // pred_region
    _
  $region9: #{swin_forward.29} parent=0 // pred_fallthru
    _
  // Predicated region
  $region10: #{swin_forward.29} parent=0 // pred_check
    _
  $region11: #{swin_forward.29} parent=0 // pred_check_branch
    %15 = sbr.rel (0) target = $region13
  $region12: #{swin_forward.29} parent=0 // pred_region
    _
  $region13: #{swin_forward.29} parent=0 // pred_fallthru
    _
  // Predicated region
  $region14: #{swin_forward.29} parent=0 // pred_check
    _
  $region15: #{swin_forward.29} parent=0 // pred_check_branch
    %17 = sbr.rel (0) target = $region17
  $region16: #{swin_forward.29} parent=0 // pred_region
    _
  $region17: #{swin_forward.29} parent=0 // pred_fallthru
    _
  // Predicated region
  $region18: #{swin_forward.29} parent=0 // pred_check
    _
  $region19: #{swin_forward.29} parent=0 // pred_check_branch
    %19 = sbr.rel (0) target = $region21
  $region20: #{swin_forward.29} parent=0 // pred_region
    _
  $region21: #{swin_forward.29} parent=0 // pred_fallthru
    _
  %v21 = vld [vmem:[%s0] sm:$0xff]
  %v22 = vld [vmem:[%s0 + $0x8] sm:$0xff]
  %v23 = vld [vmem:[%s0 + $0x10] sm:$0xff]
  %v24 = vld [vmem:[%s0 + $0x18] sm:$0xff]
  %vm25 = vcmask 523264
  %v26 = vsel %vm25, %v21, 0.0
  %27 = vadd.xlane.f32.xlu0 %v26
  %v28 = vpop.xlane.xlu0 %27
  %v29 = vsel %vm25, %v22, 0.0
  %30 = vadd.xlane.f32.xlu0 %v29
  %v31 = vpop.xlane.xlu0 %30
  %v32 = vsel %vm25, %v23, 0.0
  %33 = vadd.xlane.f32.xlu0 %v32
  %v34 = vpop.xlane.xlu0 %33
  %v35 = vsel %vm25, %v24, 0.0
  %36 = vadd.xlane.f32.xlu0 %v35
  %v37 = vpop.xlane.xlu0 %36
  %v38 = vrcp.pop 64.0
  %v39 = vmul.f32 %v28, %v38
  %v40 = vmul.f32 %v31, %v38
  %v41 = vmul.f32 %v34, %v38
  %v42 = vmul.f32 %v37, %v38
  %v43 = vsub.f32 %v21, %v39
  %v44 = vsub.f32 %v22, %v40
  %v45 = vsub.f32 %v23, %v41
  %v46 = vsub.f32 %v24, %v42
  %v47 = vmul.f32 %v43, %v43
  %v48 = vmul.f32 %v44, %v44
  %v49 = vmul.f32 %v45, %v45
  %v50 = vmul.f32 %v46, %v46
  %v51 = vsel %vm25, %v47, 0.0
  %52 = vadd.xlane.f32.xlu0 %v51
  %v53 = vpop.xlane.xlu0 %52
  %v54 = vsel %vm25, %v48, 0.0
  %55 = vadd.xlane.f32.xlu0 %v54
  %v56 = vpop.xlane.xlu0 %55
  %v57 = vsel %vm25, %v49, 0.0
  %58 = vadd.xlane.f32.xlu0 %v57
  %v59 = vpop.xlane.xlu0 %58
  %v60 = vsel %vm25, %v50, 0.0
  %61 = vadd.xlane.f32.xlu0 %v60
  %v62 = vpop.xlane.xlu0 %61
  %v63 = vmul.f32 %v53, %v38
  %v64 = vmul.f32 %v56, %v38
  %v65 = vmul.f32 %v59, %v38
  %v66 = vmul.f32 %v62, %v38
  %v67 = vadd.f32 %v63, 1e-05
  %v68 = vadd.f32 %v64, 1e-05
  %v69 = vadd.f32 %v65, 1e-05
  %v70 = vadd.f32 %v66, 1e-05
  %v71 = vrsqrt.pop %v67
  %v72 = vrsqrt.pop %v68
  %v73 = vrsqrt.pop %v69
  %v74 = vrsqrt.pop %v70
  %v75 = vmul.f32 %v43, %v71
  %v76 = vmul.f32 %v44, %v72
  %v77 = vmul.f32 %v45, %v73
  %v78 = vmul.f32 %v46, %v74
  %v79 = vld [vmem:[%s1] sm:$0x1]
  %v81 = vlaneseq
  %v82 = vshrl.u32 %v81, 7
  %v83 = vsub.s32 0, %v82
  %v84 = vrot.slane %v79, %v83
  %v86 = vmul.f32 %v75, %v84
  %v87 = vmul.f32 %v76, %v84
  %v88 = vmul.f32 %v77, %v84
  %v89 = vmul.f32 %v78, %v84
  %v90 = vld [vmem:[%s2] sm:$0x1]
  %v92 = vlaneseq
  %v93 = vshrl.u32 %v92, 7
  %v94 = vsub.s32 0, %v93
  %v95 = vrot.slane %v90, %v94
  %v97 = vadd.f32 %v86, %v95
  %v98 = vadd.f32 %v87, %v95
  %v99 = vadd.f32 %v88, %v95
  %v100 = vadd.f32 %v89, %v95
  %v101 = vpack.c.bf16 %v98, %v97
  %v102 = vpack.c.bf16 %v100, %v99
  %v103 = vld [vmem:[%s3] sm:$0xff]
  %v104 = vld [vmem:[%s3 + $0x8] sm:$0xff]
  %v105 = vld [vmem:[%s3 + $0x10] sm:$0xff]
  %v106 = vld [vmem:[%s3 + $0x18] sm:$0xff]
  %v107 = vld [vmem:[%s3 + $0x20] sm:$0xff]
  %v108 = vld [vmem:[%s3 + $0x28] sm:$0xff]
  %v109 = vld [vmem:[%s3 + $0x30] sm:$0xff]
  %v110 = vld [vmem:[%s3 + $0x38] sm:$0xff]
  %v111 = vld [vmem:[%s4] sm:$0x3]
  %v113 = vlaneseq
  %v114 = vshrl.u32 %v113, 7
  %v115 = vsub.s32 0, %v114
  %v116 = vrot.slane %v111, %v115
  %v117 = vlaneseq
  %v118 = vshrl.u32 %v117, 7
  %v119 = vsub.s32 1, %v118
  %v120 = vrot.slane %v111, %v119
  %v131 = vunpack.c.l.b16 %v103
  %v132 = vunpack.c.h.b16 %v103
  %v133 = vunpack.c.l.b16 %v104
  %v134 = vunpack.c.h.b16 %v104
  %v135 = vunpack.c.l.b16 %v105
  %v136 = vunpack.c.h.b16 %v105
  %v137 = vunpack.c.l.b16 %v106
  %v138 = vunpack.c.h.b16 %v106
  %v139 = vunpack.c.l.b16 %v107
  %v140 = vunpack.c.h.b16 %v107
  %v141 = vunpack.c.l.b16 %v108
  %v142 = vunpack.c.h.b16 %v108
  %v143 = vunpack.c.l.b16 %v109
  %v144 = vunpack.c.h.b16 %v109
  %v145 = vunpack.c.l.b16 %v110
  %v146 = vunpack.c.h.b16 %v110
  %v147 = vpack.c.b16 %v133, %v131
  %v148 = vpack.c.b16 %v134, %v132
  %v149 = vpack.c.b16 %v137, %v135
  %v150 = vpack.c.b16 %v138, %v136
  %v151 = vpack.c.b16 %v141, %v139
  %v152 = vpack.c.b16 %v142, %v140
  %v153 = vpack.c.b16 %v145, %v143
  %v154 = vpack.c.b16 %v146, %v144
  %v164 = vsel %vm25, %v101, 0
  %v167 = vsel %vm25, %v102, 0
  %169 = vmatprep.subr.bf16.mxu0 0
  %170 = vmatpush1.bf16.msra.mxu0 0
  %171 = vmatprep.subr.bf16.mxu0 0
  %172 = vmatpush1.bf16.msra.mxu0 0
  %173 = vmatprep.subr.bf16.mxu0 0
  %174 = vmatpush1.bf16.msra.mxu0 0
  %175 = vmatprep.subr.bf16.mxu0 0
  %176 = vmatpush1.bf16.msra.mxu0 0
  %177 = vmatprep.subr.bf16.mxu0 %v154
  %178 = vmatpush1.bf16.msra.mxu0 %v153
  %179 = vmatprep.subr.bf16.mxu0 %v152
  %180 = vmatpush1.bf16.msra.mxu0 %v151
  %181 = vmatprep.subr.bf16.mxu0 %v150
  %182 = vmatpush1.bf16.msra.mxu0 %v149
  %183 = vmatprep.subr.bf16.mxu0 %v148
  %184 = vmatpush1.bf16.msra.mxu0 %v147
  %185 = vmatprep.subr.bf16.mxu0 0
  %186 = vmatpush2.bf16.msra.mxu0 0
  %187 = vmatprep.subr.bf16.mxu0 0
  %188 = vmatpush2.bf16.msra.mxu0 0
  %189 = vmatprep.subr.bf16.mxu0 0
  %190 = vmatpush2.bf16.msra.mxu0 0
  %191 = vmatprep.subr.bf16.mxu0 0
  %192 = vmatpush2.bf16.msra.mxu0 0
  %193 = vmatprep.subr.bf16.mxu0 0
  %194 = vmatpush2.bf16.msra.mxu0 0
  %195 = vmatprep.subr.bf16.mxu0 0
  %196 = vmatpush2.bf16.msra.mxu0 0
  %197 = vmatprep.subr.bf16.mxu0 0
  %198 = vmatpush2.bf16.msra.mxu0 0
  %199 = vmatprep.subr.bf16.mxu0 0
  %200 = vmatpush2.bf16.msra.mxu0 0
  %201 = vmatprep.mubr.bf16.mxu0 0
  %202 = vmatmul.mubr.bf16.gmra.mxu0 %v164
  %v203 = vpop.f32.mrf.mxu0
  %v204 = vadd.f32 %v116, %v203
  %v205 = vpop.f32.mrf.mxu0
  %v206 = vadd.f32 %v120, %v205
  %v207 = vpop.f32.mrf.mxu0
  %v208 = vadd.f32 %v116, %v207
  %v209 = vpop.f32.mrf.mxu0
  %v210 = vadd.f32 %v120, %v209
  %211 = vmatprep.mubr.bf16.mxu0 0
  %212 = vmatmul.mubr.bf16.gmra.mxu0 %v167
  %v213 = vpop.f32.mrf.mxu0
  %v214 = vadd.f32 %v116, %v213
  %v215 = vpop.f32.mrf.mxu0
  %v216 = vadd.f32 %v120, %v215
  %v217 = vpop.f32.mrf.mxu0
  %v218 = vadd.f32 %v116, %v217
  %v219 = vpop.f32.mrf.mxu0
  %v220 = vadd.f32 %v120, %v219
  %221 = vdwg.mxu0
  %v222 = vpack.c.bf16 %v208, %v204
  %v223 = vpack.c.bf16 %v210, %v206
  %v224 = vpack.c.bf16 %v218, %v214
  %v225 = vpack.c.bf16 %v220, %v216
  %v230 = vunpack.c.l.b16 %v222
  %v231 = vunpack.c.l.b16 %v223
  %v232 = vunpack.c.h.b16 %v222
  %v233 = vunpack.c.h.b16 %v223
  %v234 = vunpack.c.l.b16 %v224
  %v235 = vunpack.c.l.b16 %v225
  %v236 = vunpack.c.h.b16 %v224
  %v237 = vunpack.c.h.b16 %v225
  %v238 = vpack.c.b16 %v231, %v230
  %v239 = vpack.c.b16 %v233, %v232
  %v240 = vpack.c.b16 %v235, %v234
  %v241 = vpack.c.b16 %v237, %v236
  %vm246 = vcmask 1043456
  %vm247 = vcmask 523268
  %vm248 = vmor %vm247, %vm246
  %249 = vst.msk [vmem:[%s5] sm:$0xff] %vm248, %v238
  %250 = vst.msk [vmem:[%s5 + $0x8] sm:$0xff] %vm248, %v239
  %251 = vst.msk [vmem:[%s5 + $0x10] sm:$0xff] %vm248, %v240
  %252 = vst.msk [vmem:[%s5 + $0x18] sm:$0xff] %vm248, %v241
  // Predicated region
  $region22: #{swin_forward.29} parent=0 // pred_check
    _
  $region23: #{swin_forward.29} parent=0 // pred_check_branch
    %254 = sbr.rel (0) target = $region25
  $region24: #{swin_forward.29} parent=0 // pred_region
    _
  $region25: #{swin_forward.29} parent=0 // pred_fallthru
    _
  // Predicated region
  $region26: #{swin_forward.29} parent=0 // pred_check
    _
  $region27: #{swin_forward.29} parent=0 // pred_check_branch
    %256 = sbr.rel (0) target = $region29
  $region28: #{swin_forward.29} parent=0 // pred_region
    _
  $region29: #{swin_forward.29} parent=0 // pred_fallthru
    _

// kernel: swin_forward.25
$region0: #{swin_forward.25}
  #allocation0 [shape = 'u32[]', space=smem, size = 0x4, offset = 0x4, fixed_abs, tag = 'smem constant byte address 0x4 - core index']
  #allocation1 [shape = 'u32[144,128]{1,0:T(1,128)}', space=vmem, size = 0x12000, scoped, tag = 'internal scratch']
  %s0 = inlined_call_operand.vmem [shape: bf16[3,2,8,16,16], index: 0, kind: input, shape index: {}]
  %s1 = inlined_call_operand.vmem [shape: f32[2,16,16], index: 1, kind: input, shape index: {}]
  %s2 = inlined_call_operand.vmem [shape: f32[8,16,16], index: 2, kind: input, shape index: {}]
  %s3 = inlined_call_operand.vmem [shape: bf16[2,8,16,16], index: 3, kind: output, shape index: {}]
  %s4 = sld [smem:[#allocation0]]
  $region86: #{swin_forward.25} parent=0
    _
  %s6 = ssub.s32 1, %s4
  %s7 = scalar_select 0, %s6, %s4
  $region1: #{swin_forward.25} parent=0
    #allocation2 [shape = 'u8[196608]{0}', space=vmem, size = 0x30000, scoped, tag = 'input window, operand 0']
    loop: start=0, step=1, limit=4
    $region2: #{swin_forward.25} parent=1 // loop_pre_header
      _
    $region3: #{swin_forward.25} parent=1 // loop_header
      %s9 = sphi 0, %s13
      %p10 = scmp.ge.s32.totalorder %s9, 4
      %s16 = sphi 0, %s28
      %s17 = sphi 0, %s24
      %s18 = sphi 0, %s16
      %s19 = sphi 0, %s17
      %s20 = sphi 0, %s18
      %s21 = sphi 0, %s19
      %s33 = sphi 0, %s35
      %s36 = sphi 0, %s33
      %s37 = sphi 0, %s36
      %s53 = sphi 0, %s37
      %s59 = sphi 0, %s61
      %s62 = sphi 0, %s59
      %s63 = sphi 0, %s62
      %s79 = sphi 0, %s63
      %s83 = sphi 0, %s83
      %s85 = sphi 0, %s83
      %s86 = sphi 0, %s85
      %s100 = sphi 0, %s86
      %s108 = sphi 0, %s110
      %s111 = sphi 0, %s108
      %s112 = sphi 0, %s111
      %s128 = sphi 0, %s112
    $region4: #{swin_forward.25} parent=1 // loop_header_branch
      %12 = sbr.rel (%p10) target = $region8
    $region5: #{swin_forward.25} parent=1 // loop_body
      %s14 = ssub.s32 %s9, 1
      %s15 = ssub.s32 %s9, 2
      %s22 = sadd.s32 1, %s17
      %p23 = scmp.ge.s32.totalorder %s22, 2
      %s24 = scalar_select %p23, 0, %s22
      %s25 = sadd.s32 1, %s16
      %s26 = scalar_select %p23, %s25, %s16
      %p27 = scmp.ge.s32.totalorder %s26, 1
      %s28 = scalar_select %p27, 0, %s26
      %s29 = ssub.s32 %s17, %s24
      %s30 = ssub.s32 %s16, %s28
      %s31 = sor.u32 %s29, %s30
      %p32 = scmp.eq.s32.totalorder %s31, 0
      %s34 = sadd.s32 %s33, 1
      %s35 = scalar_select %p32, %s33, %s34
      %p38 = pneg %p32
      %p39 = scmp.eq.s32.totalorder %s9, 1
      %p40 = por %p38, %p39
      %p41 = scmp.ne.s32.totalorder %s33, %s36
      %p42 = scmp.eq.s32.totalorder %s9, 0
      %p43 = por %p41, %p42
      %p44 = scmp.ne.s32.totalorder %s33, %s36
      %p45 = scmp.eq.s32.totalorder %s14, 1
      %p46 = por %p44, %p45
      %p47 = scmp.ne.s32.totalorder %s36, %s37
      %p48 = scmp.eq.s32.totalorder %s14, 0
      %p49 = por %p47, %p48
      %p50 = scmp.ne.s32.totalorder %s36, %s37
      %p51 = scmp.eq.s32.totalorder %s15, 1
      %p52 = por %p50, %p51
      %p54 = scmp.ne.s32.totalorder %s37, %s53
      %p55 = scmp.eq.s32.totalorder %s15, 0
      %p56 = por %p54, %p55
      %s57 = ssub.s32 %s17, %s24
      %p58 = scmp.eq.s32.totalorder %s57, 0
      %s60 = sadd.s32 %s59, 1
      %s61 = scalar_select %p58, %s59, %s60
      %p64 = pneg %p58
      %p65 = scmp.eq.s32.totalorder %s9, 1
      %p66 = por %p64, %p65
      %p67 = scmp.ne.s32.totalorder %s59, %s62
      %p68 = scmp.eq.s32.totalorder %s9, 0
      %p69 = por %p67, %p68
      %p70 = scmp.ne.s32.totalorder %s59, %s62
      %p71 = scmp.eq.s32.totalorder %s14, 1
      %p72 = por %p70, %p71
      %p73 = scmp.ne.s32.totalorder %s62, %s63
      %p74 = scmp.eq.s32.totalorder %s14, 0
      %p75 = por %p73, %p74
      %p76 = scmp.ne.s32.totalorder %s62, %s63
      %p77 = scmp.eq.s32.totalorder %s15, 1
      %p78 = por %p76, %p77
      %p80 = scmp.ne.s32.totalorder %s63, %s79
      %p81 = scmp.eq.s32.totalorder %s15, 0
      %p82 = por %p80, %p81
      %s84 = sadd.s32 %s83, 1
      %p87 = scmp.eq.s32.totalorder %s9, 1
      %p88 = scmp.ne.s32.totalorder %s83, %s85
      %p89 = scmp.eq.s32.totalorder %s9, 0
      %p90 = por %p88, %p89
      %p91 = scmp.ne.s32.totalorder %s83, %s85
      %p92 = scmp.eq.s32.totalorder %s14, 1
      %p93 = por %p91, %p92
      %p94 = scmp.ne.s32.totalorder %s85, %s86
      %p95 = scmp.eq.s32.totalorder %s14, 0
      %p96 = por %p94, %p95
      %p97 = scmp.ne.s32.totalorder %s85, %s86
      %p98 = scmp.eq.s32.totalorder %s15, 1
      %p99 = por %p97, %p98
      %p101 = scmp.ne.s32.totalorder %s86, %s100
      %p102 = scmp.eq.s32.totalorder %s15, 0
      %p103 = por %p101, %p102
      %s104 = ssub.s32 %s17, %s24
      %s105 = ssub.s32 %s16, %s28
      %s106 = sor.u32 %s104, %s105
      %p107 = scmp.eq.s32.totalorder %s106, 0
      %s109 = sadd.s32 %s108, 1
      %s110 = scalar_select %p107, %s108, %s109
      %p113 = pneg %p107
      %p114 = scmp.eq.s32.totalorder %s9, 1
      %p115 = por %p113, %p114
      %p116 = scmp.ne.s32.totalorder %s108, %s111
      %p117 = scmp.eq.s32.totalorder %s9, 0
      %p118 = por %p116, %p117
      %p119 = scmp.ne.s32.totalorder %s108, %s111
      %p120 = scmp.eq.s32.totalorder %s14, 1
      %p121 = por %p119, %p120
      %p122 = scmp.ne.s32.totalorder %s111, %s112
      %p123 = scmp.eq.s32.totalorder %s14, 0
      %p124 = por %p122, %p123
      %p125 = scmp.ne.s32.totalorder %s111, %s112
      %p126 = scmp.eq.s32.totalorder %s15, 1
      %p127 = por %p125, %p126
      %p129 = scmp.ne.s32.totalorder %s112, %s128
      %p130 = scmp.eq.s32.totalorder %s15, 0
      %p131 = por %p129, %p130
      %p132 = scmp.le.s32.totalorder 1, %s9
      %p133 = scmp.lt.s32.totalorder %s9, 3
      %p134 = pnand %p132, %p133
      %p135 = pneg %p134
      // Predicated region
      $region9: #{swin_forward.25} parent=5 // pred_check
        _
      $region10: #{swin_forward.25} parent=5 // pred_check_branch
        %137 = sbr.rel (%p134) target = $region12
      $region11: #{swin_forward.25} parent=5 // pred_region
        %s138 = ssub.s32 %s9, 1
        // Predicated region
        $region13: #{swin_forward.25} parent=11 // pred_check
          %p139 = pneg %p96
        $region14: #{swin_forward.25} parent=11 // pred_check_branch
          %141 = sbr.rel (%p139) target = $region16
        $region15: #{swin_forward.25} parent=11 // pred_region
          _
        $region16: #{swin_forward.25} parent=11 // pred_fallthru
          _
      $region12: #{swin_forward.25} parent=5 // pred_fallthru
        _
      %p142 = scmp.lt.s32.totalorder %s9, 2
      // Predicated region
      $region17: #{swin_forward.25} parent=5 // pred_check
        %p143 = pneg %p142
      $region18: #{swin_forward.25} parent=5 // pred_check_branch
        %145 = sbr.rel (%p143) target = $region20
      $region19: #{swin_forward.25} parent=5 // pred_region
        // Predicated region
        $region21: #{swin_forward.25} parent=19 // pred_check
          %p146 = pneg %p43
        $region22: #{swin_forward.25} parent=19 // pred_check_branch
          %148 = sbr.rel (%p146) target = $region24
        $region23: #{swin_forward.25} parent=19 // pred_region
          %s149 = sand.u32 %s33, 1
          %s150 = sand.u32 %s33, 1
          %s151 = smul.addr %s150, 192
          %s152 = scalar_lea.vmem [#allocation2], %s151
          %s153 = smul.u32 8, %s16
          %s154 = smul.addr %s153, 2
          %s155 = smul.addr %s17, 16
          %s156 = sadd.s32 %s154, %s155
          %s157 = smul.addr %s156, 4
          %s158 = scalar_lea.vmem %s0, %s157
          // Predicated region
          $region25: #{swin_forward.25} parent=23 // pred_check
            _
          $region26: #{swin_forward.25} parent=23 // pred_check_branch
            %160 = sbr.rel (0) target = $region28
          $region27: #{swin_forward.25} parent=23 // pred_region
            // Predicated region
            $region29: #{swin_forward.25} parent=27 // pred_check
              _
            $region30: #{swin_forward.25} parent=27 // pred_check_branch
              %162 = sbr.rel target = $region32
            $region31: #{swin_forward.25} parent=27 // pred_region
              // Predicated region
              $region44: #{swin_forward.25} parent=31 // pred_check
                _
              $region45: #{swin_forward.25} parent=31 // pred_check_branch
                %272 = sbr.rel (0) target = $region47
              $region46: #{swin_forward.25} parent=31 // pred_region
                loop: start=0, step=1, limit=1
                $region48: #{swin_forward.25} parent=46 // loop_pre_header
                  _
                $region49: #{swin_forward.25} parent=46 // loop_header
                  %s274 = sphi 0, %s278
                  %p275 = scmp.ge.s32.totalorder %s274, 1
                  %s279 = sphi %s158, %s158
                  %s280 = sphi %s152, %s152
                $region50: #{swin_forward.25} parent=46 // loop_header_branch
                  %277 = sbr.rel (%p275) target = $region54
                $region51: #{swin_forward.25} parent=46 // loop_body
                  _
                $region52: #{swin_forward.25} parent=46 // loop_footer
                  %s278 = sadd.s32 1, %s274
                $region53: #{swin_forward.25} parent=46 // loop_footer_branch
                  %273 = sbr.rel target = $region49
                $region54: #{swin_forward.25} parent=46 // loop_exit
                  _
                %s282 = ssub.s32 16, 1
                loop: start=0, step=1, limit=1
                $region55: #{swin_forward.25} parent=46 // loop_pre_header
                  _
                $region56: #{swin_forward.25} parent=46 // loop_header
                  %s284 = sphi 0, %s288
                  %p285 = scmp.ge.s32.totalorder %s284, 1
                  %s289 = sphi %s158, %s158
                  %s290 = sphi %s152, %s152
                $region57: #{swin_forward.25} parent=46 // loop_header_branch
                  %287 = sbr.rel (%p285) target = $region61
                $region58: #{swin_forward.25} parent=46 // loop_body
                  %v291 = vld [vmem:[%s289] sm:%s282]
                  %292 = vst [vmem:[%s290] sm:%s282] %v291
                  %v293 = vld [vmem:[%s289 + $0x4] sm:%s282]
                  %294 = vst [vmem:[%s290 + $0x4] sm:%s282] %v293
                  %v295 = vld [vmem:[%s289 + $0x8] sm:%s282]
                  %296 = vst [vmem:[%s290 + $0x8] sm:%s282] %v295
                  %v297 = vld [vmem:[%s289 + $0xc] sm:%s282]
                  %298 = vst [vmem:[%s290 + $0xc] sm:%s282] %v297
                  %v299 = vld [vmem:[%s289 + $0x10] sm:%s282]
                  %300 = vst [vmem:[%s290 + $0x10] sm:%s282] %v299
                  %v301 = vld [vmem:[%s289 + $0x14] sm:%s282]
                  %302 = vst [vmem:[%s290 + $0x14] sm:%s282] %v301
                  %v303 = vld [vmem:[%s289 + $0x18] sm:%s282]
                  %304 = vst [vmem:[%s290 + $0x18] sm:%s282] %v303
                  %v305 = vld [vmem:[%s289 + $0x1c] sm:%s282]
                  %306 = vst [vmem:[%s290 + $0x1c] sm:%s282] %v305
                  %v307 = vld [vmem:[%s289 + $0x20] sm:%s282]
                  %308 = vst [vmem:[%s290 + $0x20] sm:%s282] %v307
                  %v309 = vld [vmem:[%s289 + $0x24] sm:%s282]
                  %310 = vst [vmem:[%s290 + $0x24] sm:%s282] %v309
                  %v311 = vld [vmem:[%s289 + $0x28] sm:%s282]
                  %312 = vst [vmem:[%s290 + $0x28] sm:%s282] %v311
                  %v313 = vld [vmem:[%s289 + $0x2c] sm:%s282]
                  %314 = vst [vmem:[%s290 + $0x2c] sm:%s282] %v313
                  %v315 = vld [vmem:[%s289 + $0x30] sm:%s282]
                  %316 = vst [vmem:[%s290 + $0x30] sm:%s282] %v315
                  %v317 = vld [vmem:[%s289 + $0x34] sm:%s282]
                  %318 = vst [vmem:[%s290 + $0x34] sm:%s282] %v317
                  %v319 = vld [vmem:[%s289 + $0x38] sm:%s282]
                  %320 = vst [vmem:[%s290 + $0x38] sm:%s282] %v319
                  %v321 = vld [vmem:[%s289 + $0x3c] sm:%s282]
                  %322 = vst [vmem:[%s290 + $0x3c] sm:%s282] %v321
                  %v323 = vld [vmem:[%s289 + $0x80] sm:%s282]
                  %324 = vst [vmem:[%s290 + $0x40] sm:%s282] %v323
                  %v325 = vld [vmem:[%s289 + $0x84] sm:%s282]
                  %326 = vst [vmem:[%s290 + $0x44] sm:%s282] %v325
                  %v327 = vld [vmem:[%s289 + $0x88] sm:%s282]
                  %328 = vst [vmem:[%s290 + $0x48] sm:%s282] %v327
                  %v329 = vld [vmem:[%s289 + $0x8c] sm:%s282]
                  %330 = vst [vmem:[%s290 + $0x4c] sm:%s282] %v329
                  %v331 = vld [vmem:[%s289 + $0x90] sm:%s282]
                  %332 = vst [vmem:[%s290 + $0x50] sm:%s282] %v331
                  %v333 = vld [vmem:[%s289 + $0x94] sm:%s282]
                  %334 = vst [vmem:[%s290 + $0x54] sm:%s282] %v333
                  %v335 = vld [vmem:[%s289 + $0x98] sm:%s282]
                  %336 = vst [vmem:[%s290 + $0x58] sm:%s282] %v335
                  %v337 = vld [vmem:[%s289 + $0x9c] sm:%s282]
                  %338 = vst [vmem:[%s290 + $0x5c] sm:%s282] %v337
                  %v339 = vld [vmem:[%s289 + $0xa0] sm:%s282]
                  %340 = vst [vmem:[%s290 + $0x60] sm:%s282] %v339
                  %v341 = vld [vmem:[%s289 + $0xa4] sm:%s282]
                  %342 = vst [vmem:[%s290 + $0x64] sm:%s282] %v341
                  %v343 = vld [vmem:[%s289 + $0xa8] sm:%s282]
                  %344 = vst [vmem:[%s290 + $0x68] sm:%s282] %v343
                  %v345 = vld [vmem:[%s289 + $0xac] sm:%s282]
                  %346 = vst [vmem:[%s290 + $0x6c] sm:%s282] %v345
                  %v347 = vld [vmem:[%s289 + $0xb0] sm:%s282]
                  %348 = vst [vmem:[%s290 + $0x70] sm:%s282] %v347
                  %v349 = vld [vmem:[%s289 + $0xb4] sm:%s282]
                  %350 = vst [vmem:[%s290 + $0x74] sm:%s282] %v349
                  %v351 = vld [vmem:[%s289 + $0xb8] sm:%s282]
                  %352 = vst [vmem:[%s290 + $0x78] sm:%s282] %v351
                  %v353 = vld [vmem:[%s289 + $0xbc] sm:%s282]
                  %354 = vst [vmem:[%s290 + $0x7c] sm:%s282] %v353
                  %v355 = vld [vmem:[%s289 + $0x100] sm:%s282]
                  %356 = vst [vmem:[%s290 + $0x80] sm:%s282] %v355
                  %v357 = vld [vmem:[%s289 + $0x104] sm:%s282]
                  %358 = vst [vmem:[%s290 + $0x84] sm:%s282] %v357
                  %v359 = vld [vmem:[%s289 + $0x108] sm:%s282]
                  %360 = vst [vmem:[%s290 + $0x88] sm:%s282] %v359
                  %v361 = vld [vmem:[%s289 + $0x10c] sm:%s282]
                  %362 = vst [vmem:[%s290 + $0x8c] sm:%s282] %v361
                  %v363 = vld [vmem:[%s289 + $0x110] sm:%s282]
                  %364 = vst [vmem:[%s290 + $0x90] sm:%s282] %v363
                  %v365 = vld [vmem:[%s289 + $0x114] sm:%s282]
                  %366 = vst [vmem:[%s290 + $0x94] sm:%s282] %v365
                  %v367 = vld [vmem:[%s289 + $0x118] sm:%s282]
                  %368 = vst [vmem:[%s290 + $0x98] sm:%s282] %v367
                  %v369 = vld [vmem:[%s289 + $0x11c] sm:%s282]
                  %370 = vst [vmem:[%s290 + $0x9c] sm:%s282] %v369
                  %v371 = vld [vmem:[%s289 + $0x120] sm:%s282]
                  %372 = vst [vmem:[%s290 + $0xa0] sm:%s282] %v371
                  %v373 = vld [vmem:[%s289 + $0x124] sm:%s282]
                  %374 = vst [vmem:[%s290 + $0xa4] sm:%s282] %v373
                  %v375 = vld [vmem:[%s289 + $0x128] sm:%s282]
                  %376 = vst [vmem:[%s290 + $0xa8] sm:%s282] %v375
                  %v377 = vld [vmem:[%s289 + $0x12c] sm:%s282]
                  %378 = vst [vmem:[%s290 + $0xac] sm:%s282] %v377
                  %v379 = vld [vmem:[%s289 + $0x130] sm:%s282]
                  %380 = vst [vmem:[%s290 + $0xb0] sm:%s282] %v379
                  %v381 = vld [vmem:[%s289 + $0x134] sm:%s282]
                  %382 = vst [vmem:[%s290 + $0xb4] sm:%s282] %v381
                  %v383 = vld [vmem:[%s289 + $0x138] sm:%s282]
                  %384 = vst [vmem:[%s290 + $0xb8] sm:%s282] %v383
                  %v385 = vld [vmem:[%s289 + $0x13c] sm:%s282]
                  %386 = vst [vmem:[%s290 + $0xbc] sm:%s282] %v385
                $region59: #{swin_forward.25} parent=46 // loop_footer
                  %s288 = sadd.s32 1, %s284
                $region60: #{swin_forward.25} parent=46 // loop_footer_branch
                  %283 = sbr.rel target = $region56
                $region61: #{swin_forward.25} parent=46 // loop_exit
                  _
              $region47: #{swin_forward.25} parent=31 // pred_fallthru
                _
            $region32: #{swin_forward.25} parent=27 // pred_fallthru
              _
            // Predicated region
            $region33: #{swin_forward.25} parent=27 // pred_check
              _
            $region34: #{swin_forward.25} parent=27 // pred_check_branch
              %164 = sbr.rel (0) target = $region36
            $region35: #{swin_forward.25} parent=27 // pred_region
              %s166 = ssub.s32 16, 1
              loop: start=0, step=1, limit=1
              $region37: #{swin_forward.25} parent=35 // loop_pre_header
                _
              $region38: #{swin_forward.25} parent=35 // loop_header
                %s168 = sphi 0, %s172
                %p169 = scmp.ge.s32.totalorder %s168, 1
                %s173 = sphi %s158, %s158
                %s174 = sphi %s152, %s152
              $region39: #{swin_forward.25} parent=35 // loop_header_branch
                %171 = sbr.rel (%p169) target = $region43
              $region40: #{swin_forward.25} parent=35 // loop_body
                %v175 = vld [vmem:[%s173] sm:%s166]
                %176 = vst [vmem:[%s174] sm:%s166] %v175
                %v177 = vld [vmem:[%s173 + $0x4] sm:%s166]
                %178 = vst [vmem:[%s174 + $0x4] sm:%s166] %v177
                %v179 = vld [vmem:[%s173 + $0x8] sm:%s166]
                %180 = vst [vmem:[%s174 + $0x8] sm:%s166] %v179
                %v181 = vld [vmem:[%s173 + $0xc] sm:%s166]
                %182 = vst [vmem:[%s174 + $0xc] sm:%s166] %v181
                %v183 = vld [vmem:[%s173 + $0x10] sm:%s166]
                %184 = vst [vmem:[%s174 + $0x10] sm:%s166] %v183
                %v185 = vld [vmem:[%s173 + $0x14] sm:%s166]
                %186 = vst [vmem:[%s174 + $0x14] sm:%s166] %v185
                %v187 = vld [vmem:[%s173 + $0x18] sm:%s166]
                %188 = vst [vmem:[%s174 + $0x18] sm:%s166] %v187
                %v189 = vld [vmem:[%s173 + $0x1c] sm:%s166]
                %190 = vst [vmem:[%s174 + $0x1c] sm:%s166] %v189
                %v191 = vld [vmem:[%s173 + $0x20] sm:%s166]
                %192 = vst [vmem:[%s174 + $0x20] sm:%s166] %v191
                %v193 = vld [vmem:[%s173 + $0x24] sm:%s166]
                %194 = vst [vmem:[%s174 + $0x24] sm:%s166] %v193
                %v195 = vld [vmem:[%s173 + $0x28] sm:%s166]
                %196 = vst [vmem:[%s174 + $0x28] sm:%s166] %v195
                %v197 = vld [vmem:[%s173 + $0x2c] sm:%s166]
                %198 = vst [vmem:[%s174 + $0x2c] sm:%s166] %v197
                %v199 = vld [vmem:[%s173 + $0x30] sm:%s166]
                %200 = vst [vmem:[%s174 + $0x30] sm:%s166] %v199
                %v201 = vld [vmem:[%s173 + $0x34] sm:%s166]
                %202 = vst [vmem:[%s174 + $0x34] sm:%s166] %v201
                %v203 = vld [vmem:[%s173 + $0x38] sm:%s166]
                %204 = vst [vmem:[%s174 + $0x38] sm:%s166] %v203
                %v205 = vld [vmem:[%s173 + $0x3c] sm:%s166]
                %206 = vst [vmem:[%s174 + $0x3c] sm:%s166] %v205
                %v207 = vld [vmem:[%s173 + $0x80] sm:%s166]
                %208 = vst [vmem:[%s174 + $0x40] sm:%s166] %v207
                %v209 = vld [vmem:[%s173 + $0x84] sm:%s166]
                %210 = vst [vmem:[%s174 + $0x44] sm:%s166] %v209
                %v211 = vld [vmem:[%s173 + $0x88] sm:%s166]
                %212 = vst [vmem:[%s174 + $0x48] sm:%s166] %v211
                %v213 = vld [vmem:[%s173 + $0x8c] sm:%s166]
                %214 = vst [vmem:[%s174 + $0x4c] sm:%s166] %v213
                %v215 = vld [vmem:[%s173 + $0x90] sm:%s166]
                %216 = vst [vmem:[%s174 + $0x50] sm:%s166] %v215
                %v217 = vld [vmem:[%s173 + $0x94] sm:%s166]
                %218 = vst [vmem:[%s174 + $0x54] sm:%s166] %v217
                %v219 = vld [vmem:[%s173 + $0x98] sm:%s166]
                %220 = vst [vmem:[%s174 + $0x58] sm:%s166] %v219
                %v221 = vld [vmem:[%s173 + $0x9c] sm:%s166]
                %222 = vst [vmem:[%s174 + $0x5c] sm:%s166] %v221
                %v223 = vld [vmem:[%s173 + $0xa0] sm:%s166]
                %224 = vst [vmem:[%s174 + $0x60] sm:%s166] %v223
                %v225 = vld [vmem:[%s173 + $0xa4] sm:%s166]
                %226 = vst [vmem:[%s174 + $0x64] sm:%s166] %v225
                %v227 = vld [vmem:[%s173 + $0xa8] sm:%s166]
                %228 = vst [vmem:[%s174 + $0x68] sm:%s166] %v227
                %v229 = vld [vmem:[%s173 + $0xac] sm:%s166]
                %230 = vst [vmem:[%s174 + $0x6c] sm:%s166] %v229
                %v231 = vld [vmem:[%s173 + $0xb0] sm:%s166]
                %232 = vst [vmem:[%s174 + $0x70] sm:%s166] %v231
                %v233 = vld [vmem:[%s173 + $0xb4] sm:%s166]
                %234 = vst [vmem:[%s174 + $0x74] sm:%s166] %v233
                %v235 = vld [vmem:[%s173 + $0xb8] sm:%s166]
                %236 = vst [vmem:[%s174 + $0x78] sm:%s166] %v235
                %v237 = vld [vmem:[%s173 + $0xbc] sm:%s166]
                %238 = vst [vmem:[%s174 + $0x7c] sm:%s166] %v237
                %v239 = vld [vmem:[%s173 + $0x100] sm:%s166]
                %240 = vst [vmem:[%s174 + $0x80] sm:%s166] %v239
                %v241 = vld [vmem:[%s173 + $0x104] sm:%s166]
                %242 = vst [vmem:[%s174 + $0x84] sm:%s166] %v241
                %v243 = vld [vmem:[%s173 + $0x108] sm:%s166]
                %244 = vst [vmem:[%s174 + $0x88] sm:%s166] %v243
                %v245 = vld [vmem:[%s173 + $0x10c] sm:%s166]
                %246 = vst [vmem:[%s174 + $0x8c] sm:%s166] %v245
                %v247 = vld [vmem:[%s173 + $0x110] sm:%s166]
                %248 = vst [vmem:[%s174 + $0x90] sm:%s166] %v247
                %v249 = vld [vmem:[%s173 + $0x114] sm:%s166]
                %250 = vst [vmem:[%s174 + $0x94] sm:%s166] %v249
                %v251 = vld [vmem:[%s173 + $0x118] sm:%s166]
                %252 = vst [vmem:[%s174 + $0x98] sm:%s166] %v251
                %v253 = vld [vmem:[%s173 + $0x11c] sm:%s166]
                %254 = vst [vmem:[%s174 + $0x9c] sm:%s166] %v253
                %v255 = vld [vmem:[%s173 + $0x120] sm:%s166]
                %256 = vst [vmem:[%s174 + $0xa0] sm:%s166] %v255
                %v257 = vld [vmem:[%s173 + $0x124] sm:%s166]
                %258 = vst [vmem:[%s174 + $0xa4] sm:%s166] %v257
                %v259 = vld [vmem:[%s173 + $0x128] sm:%s166]
                %260 = vst [vmem:[%s174 + $0xa8] sm:%s166] %v259
                %v261 = vld [vmem:[%s173 + $0x12c] sm:%s166]
                %262 = vst [vmem:[%s174 + $0xac] sm:%s166] %v261
                %v263 = vld [vmem:[%s173 + $0x130] sm:%s166]
                %264 = vst [vmem:[%s174 + $0xb0] sm:%s166] %v263
                %v265 = vld [vmem:[%s173 + $0x134] sm:%s166]
                %266 = vst [vmem:[%s174 + $0xb4] sm:%s166] %v265
                %v267 = vld [vmem:[%s173 + $0x138] sm:%s166]
                %268 = vst [vmem:[%s174 + $0xb8] sm:%s166] %v267
                %v269 = vld [vmem:[%s173 + $0x13c] sm:%s166]
                %270 = vst [vmem:[%s174 + $0xbc] sm:%s166] %v269
              $region41: #{swin_forward.25} parent=35 // loop_footer
                %s172 = sadd.s32 1, %s168
              $region42: #{swin_forward.25} parent=35 // loop_footer_branch
                %167 = sbr.rel target = $region38
              $region43: #{swin_forward.25} parent=35 // loop_exit
                _
            $region36: #{swin_forward.25} parent=27 // pred_fallthru
              _
          $region28: #{swin_forward.25} parent=23 // pred_fallthru
            _
          %387 = vnop
        $region24: #{swin_forward.25} parent=19 // pred_fallthru
          _
        // Predicated region
        $region62: #{swin_forward.25} parent=19 // pred_check
          %p388 = pneg %p69
        $region63: #{swin_forward.25} parent=19 // pred_check_branch
          %390 = sbr.rel (%p388) target = $region65
        $region64: #{swin_forward.25} parent=19 // pred_region
          %p391 = scmp.lt.s32.totalorder %s17, 1
          %s392 = scalar_select %p391, %s17, 1
          %s393 = smul.addr %s392, 2
          %s394 = smul.addr %s393, 8
          %s395 = scalar_lea.vmem %s1, %s394
        $region65: #{swin_forward.25} parent=19 // pred_fallthru
          _
      $region20: #{swin_forward.25} parent=5 // pred_fallthru
        _
      %p396 = scmp.le.s32.totalorder 1, %s9
      %p397 = scmp.lt.s32.totalorder %s9, 3
      %p398 = pnand %p396, %p397
      %p399 = pneg %p398
      // Predicated region
      $region66: #{swin_forward.25} parent=5 // pred_check
        _
      $region67: #{swin_forward.25} parent=5 // pred_check_branch
        %401 = sbr.rel (%p398) target = $region69
      $region68: #{swin_forward.25} parent=5 // pred_region
        %s402 = ssub.s32 %s9, 1
        %s403 = sand.u32 %s36, 1
        %s404 = sand.u32 %s36, 1
        %s405 = smul.addr %s404, 192
        %s406 = scalar_lea.vmem [#allocation2], %s405
        // Predicated region
        $region70: #{swin_forward.25} parent=68 // pred_check
          %p407 = pneg %p49
        $region71: #{swin_forward.25} parent=68 // pred_check_branch
          %409 = sbr.rel (%p407) target = $region73
        $region72: #{swin_forward.25} parent=68 // pred_region
          _
        $region73: #{swin_forward.25} parent=68 // pred_fallthru
          _
        %s410 = sand.u32 %s36, 1
        %s411 = sand.u32 %s36, 1
        %s412 = smul.addr %s411, 192
        %s413 = scalar_lea.vmem [#allocation2], %s412
        %p414 = pneg %p49
        %p415 = pneg %p46
        %p416 = scmp.lt.s32.totalorder %s19, 1
        %s417 = scalar_select %p416, %s19, 1
        %s418 = smul.addr %s417, 2
        %s419 = smul.addr %s418, 8
        %s420 = scalar_lea.vmem %s1, %s419
        %p421 = pneg %p75
        %p422 = pneg %p72
        %p423 = pneg %p96
        %p424 = pneg %p93
        %p425 = pneg %p124
        %p426 = pneg %p121
        %s427 = smul.u32 8, %s18
        %p428 = scmp.lt.s32.totalorder %s19, 1
        %s429 = scalar_select %p428, %s19, 1
        %p430 = scmp.lt.s32.totalorder %s427, 7
        %s431 = scalar_select %p430, %s427, 7
        %s432 = smul.addr %s431, 2
        %s433 = smul.addr %s429, 16
        %s434 = sadd.s32 %s432, %s433
        %s435 = smul.addr %s434, 4
        %s436 = scalar_lea.vmem %s3, %s435
        %s437 = smul.u32 8, %s18
        %p438 = scmp.lt.s32.totalorder %s19, 1
        %s439 = scalar_select %p438, %s19, 1
        %s440 = smul.addr %s439, 2
        %s441 = smul.addr %s440, 8
        %s442 = scalar_lea.vmem %s1, %s441
        %s443 = smul.u32 8, %s18
        %p444 = scmp.lt.s32.totalorder %s19, 1
        %s445 = scalar_select %p444, %s19, 1
        %p446 = scmp.lt.s32.totalorder %s443, 7
        %s447 = scalar_select %p446, %s443, 7
        %s448 = smul.addr %s447, 2
        %s449 = smul.addr %s445, 16
        %s450 = sadd.s32 %s448, %s449
        %s451 = smul.addr %s450, 4
        %s452 = scalar_lea.vmem %s3, %s451
        %s453 = smul.u32 8, %s18
        %v455 = vld [vmem:[%s406] sm:$0xf]
        %v456 = vld [vmem:[%s406 + $0x4] sm:$0xf]
        %v457 = vld [vmem:[%s406 + $0x8] sm:$0xf]
        %v458 = vld [vmem:[%s406 + $0xc] sm:$0xf]
        %v459 = vld [vmem:[%s406 + $0x10] sm:$0xf]
        %v460 = vld [vmem:[%s406 + $0x14] sm:$0xf]
        %v461 = vld [vmem:[%s406 + $0x18] sm:$0xf]
        %v462 = vld [vmem:[%s406 + $0x1c] sm:$0xf]
        %v463 = vld [vmem:[%s406 + $0x20] sm:$0xf]
        %v464 = vld [vmem:[%s406 + $0x24] sm:$0xf]
        %v465 = vld [vmem:[%s406 + $0x28] sm:$0xf]
        %v466 = vld [vmem:[%s406 + $0x2c] sm:$0xf]
        %v467 = vld [vmem:[%s406 + $0x30] sm:$0xf]
        %v468 = vld [vmem:[%s406 + $0x34] sm:$0xf]
        %v469 = vld [vmem:[%s406 + $0x38] sm:$0xf]
        %v470 = vld [vmem:[%s406 + $0x3c] sm:$0xf]
        %s471 = scalar_lea.vmem %s406, 64 [#allocation2]
        %v472 = vld [vmem:[%s471] sm:$0xf]
        %v473 = vld [vmem:[%s471 + $0x4] sm:$0xf]
        %v474 = vld [vmem:[%s471 + $0x8] sm:$0xf]
        %v475 = vld [vmem:[%s471 + $0xc] sm:$0xf]
        %v476 = vld [vmem:[%s471 + $0x10] sm:$0xf]
        %v477 = vld [vmem:[%s471 + $0x14] sm:$0xf]
        %v478 = vld [vmem:[%s471 + $0x18] sm:$0xf]
        %v479 = vld [vmem:[%s471 + $0x1c] sm:$0xf]
        %v480 = vld [vmem:[%s471 + $0x20] sm:$0xf]
        %v481 = vld [vmem:[%s471 + $0x24] sm:$0xf]
        %v482 = vld [vmem:[%s471 + $0x28] sm:$0xf]
        %v483 = vld [vmem:[%s471 + $0x2c] sm:$0xf]
        %v484 = vld [vmem:[%s471 + $0x30] sm:$0xf]
        %v485 = vld [vmem:[%s471 + $0x34] sm:$0xf]
        %v486 = vld [vmem:[%s471 + $0x38] sm:$0xf]
        %v487 = vld [vmem:[%s471 + $0x3c] sm:$0xf]
        %s488 = scalar_lea.vmem %s406, 128 [#allocation2]
        %v489 = vld [vmem:[%s488] sm:$0xf]
        %v490 = vld [vmem:[%s488 + $0x4] sm:$0xf]
        %v491 = vld [vmem:[%s488 + $0x8] sm:$0xf]
        %v492 = vld [vmem:[%s488 + $0xc] sm:$0xf]
        %v493 = vld [vmem:[%s488 + $0x10] sm:$0xf]
        %v494 = vld [vmem:[%s488 + $0x14] sm:$0xf]
        %v495 = vld [vmem:[%s488 + $0x18] sm:$0xf]
        %v496 = vld [vmem:[%s488 + $0x1c] sm:$0xf]
        %v497 = vld [vmem:[%s488 + $0x20] sm:$0xf]
        %v498 = vld [vmem:[%s488 + $0x24] sm:$0xf]
        %v499 = vld [vmem:[%s488 + $0x28] sm:$0xf]
        %v500 = vld [vmem:[%s488 + $0x2c] sm:$0xf]
        %v501 = vld [vmem:[%s488 + $0x30] sm:$0xf]
        %v502 = vld [vmem:[%s488 + $0x34] sm:$0xf]
        %v503 = vld [vmem:[%s488 + $0x38] sm:$0xf]
        %v504 = vld [vmem:[%s488 + $0x3c] sm:$0xf]
        %v507 = vunpack.c.l.b16 %v455
        %v508 = vunpack.c.l.b16 %v456
        %v509 = vpack.c.b16 %v508, %v507
        %v512 = vunpack.c.l.b16 %v472
        %v513 = vunpack.c.l.b16 %v473
        %v514 = vpack.c.b16 %v513, %v512
        %vm515 = vcmask 130048
        %v517 = vsel %vm515, %v509, 0
        %v520 = vsel %vm515, %v514, 0
        %522 = vmatprep.subr.bf16.mxu0 0
        %523 = vmatpush1.bf16.xpose.msra.mxu0 0
        %524 = vmatprep.subr.bf16.mxu0 0
        %525 = vmatpush1.bf16.xpose.msra.mxu0 0
        %526 = vmatprep.subr.bf16.mxu0 0
        %527 = vmatpush1.bf16.xpose.msra.mxu0 0
        %528 = vmatprep.subr.bf16.mxu0 0
        %529 = vmatpush1.bf16.xpose.msra.mxu0 0
        %530 = vmatprep.subr.bf16.mxu0 0
        %531 = vmatpush1.bf16.xpose.msra.mxu0 0
        %532 = vmatprep.subr.bf16.mxu0 0
        %533 = vmatpush1.bf16.xpose.msra.mxu0 0
        %534 = vmatprep.subr.bf16.mxu0 0
        %535 = vmatpush1.bf16.xpose.msra.mxu0 0
        %536 = vmatprep.subr.bf16.mxu0 0
        %537 = vmatpush1.bf16.xpose.msra.mxu0 %v520
        %538 = vmatprep.subr.bf16.mxu0 0
        %539 = vmatpush2.bf16.xpose.msra.mxu0 0
        %540 = vmatprep.subr.bf16.mxu0 0
        %541 = vmatpush2.bf16.xpose.msra.mxu0 0
        %542 = vmatprep.subr.bf16.mxu0 0
        %543 = vmatpush2.bf16.xpose.msra.mxu0 0
        %544 = vmatprep.subr.bf16.mxu0 0
        %545 = vmatpush2.bf16.xpose.msra.mxu0 0
        %546 = vmatprep.subr.bf16.mxu0 0
        %547 = vmatpush2.bf16.xpose.msra.mxu0 0
        %548 = vmatprep.subr.bf16.mxu0 0
        %549 = vmatpush2.bf16.xpose.msra.mxu0 0
        %550 = vmatprep.subr.bf16.mxu0 0
        %551 = vmatpush2.bf16.xpose.msra.mxu0 0
        %552 = vmatprep.subr.bf16.mxu0 0
        %553 = vmatpush2.bf16.xpose.msra.mxu0 0
        %554 = vmatprep.mubr.bf16.mxu0 0
        %555 = vmatmul.mubr.bf16.gmra.mxu0 %v517
        %v556 = vpop.f32.mrf.mxu0
        %v557 = vadd.f32 0.0, %v556
        %v558 = vpop.f32.mrf.mxu0
        %v559 = vpop.f32.mrf.mxu0
        %v560 = vadd.f32 0.0, %v559
        %v561 = vpop.f32.mrf.mxu0
        %562 = vdwg.mxu0
        %v565 = vunpack.c.l.b16 %v457
        %v566 = vunpack.c.l.b16 %v458
        %v567 = vpack.c.b16 %v566, %v565
        %v570 = vunpack.c.l.b16 %v474
        %v571 = vunpack.c.l.b16 %v475
        %v572 = vpack.c.b16 %v571, %v570
        %v574 = vsel %vm515, %v567, 0
        %v577 = vsel %vm515, %v572, 0
        %579 = vmatprep.subr.bf16.mxu0 0
        %580 = vmatpush1.bf16.xpose.msra.mxu0 0
        %581 = vmatprep.subr.bf16.mxu0 0
        %582 = vmatpush1.bf16.xpose.msra.mxu0 0
        %583 = vmatprep.subr.bf16.mxu0 0
        %584 = vmatpush1.bf16.xpose.msra.mxu0 0
        %585 = vmatprep.subr.bf16.mxu0 0
        %586 = vmatpush1.bf16.xpose.msra.mxu0 0
        %587 = vmatprep.subr.bf16.mxu0 0
        %588 = vmatpush1.bf16.xpose.msra.mxu0 0
        %589 = vmatprep.subr.bf16.mxu0 0
        %590 = vmatpush1.bf16.xpose.msra.mxu0 0
        %591 = vmatprep.subr.bf16.mxu0 0
        %592 = vmatpush1.bf16.xpose.msra.mxu0 0
        %593 = vmatprep.subr.bf16.mxu0 0
        %594 = vmatpush1.bf16.xpose.msra.mxu0 %v577
        %595 = vmatprep.subr.bf16.mxu0 0
        %596 = vmatpush2.bf16.xpose.msra.mxu0 0
        %597 = vmatprep.subr.bf16.mxu0 0
        %598 = vmatpush2.bf16.xpose.msra.mxu0 0
        %599 = vmatprep.subr.bf16.mxu0 0
        %600 = vmatpush2.bf16.xpose.msra.mxu0 0
        %601 = vmatprep.subr.bf16.mxu0 0
        %602 = vmatpush2.bf16.xpose.msra.mxu0 0
        %603 = vmatprep.subr.bf16.mxu0 0
        %604 = vmatpush2.bf16.xpose.msra.mxu0 0
        %605 = vmatprep.subr.bf16.mxu0 0
        %606 = vmatpush2.bf16.xpose.msra.mxu0 0
        %607 = vmatprep.subr.bf16.mxu0 0
        %608 = vmatpush2.bf16.xpose.msra.mxu0 0
        %609 = vmatprep.subr.bf16.mxu0 0
        %610 = vmatpush2.bf16.xpose.msra.mxu0 0
        %611 = vmatprep.mubr.bf16.mxu0 0
        %612 = vmatmul.mubr.bf16.gmra.mxu0 %v574
        %v613 = vpop.f32.mrf.mxu0
        %v614 = vadd.f32 0.0, %v613
        %v615 = vpop.f32.mrf.mxu0
        %v616 = vpop.f32.mrf.mxu0
        %v617 = vadd.f32 0.0, %v616
        %v618 = vpop.f32.mrf.mxu0
        %619 = vdwg.mxu0
        %v622 = vunpack.c.l.b16 %v459
        %v623 = vunpack.c.l.b16 %v460
        %v624 = vpack.c.b16 %v623, %v622
        %v627 = vunpack.c.l.b16 %v476
        %v628 = vunpack.c.l.b16 %v477
        %v629 = vpack.c.b16 %v628, %v627
        %v631 = vsel %vm515, %v624, 0
        %v634 = vsel %vm515, %v629, 0
        %636 = vmatprep.subr.bf16.mxu0 0
        %637 = vmatpush1.bf16.xpose.msra.mxu0 0
        %638 = vmatprep.subr.bf16.mxu0 0
        %639 = vmatpush1.bf16.xpose.msra.mxu0 0
        %640 = vmatprep.subr.bf16.mxu0 0
        %641 = vmatpush1.bf16.xpose.msra.mxu0 0
        %642 = vmatprep.subr.bf16.mxu0 0
        %643 = vmatpush1.bf16.xpose.msra.mxu0 0
        %644 = vmatprep.subr.bf16.mxu0 0
        %645 = vmatpush1.bf16.xpose.msra.mxu0 0
        %646 = vmatprep.subr.bf16.mxu0 0
        %647 = vmatpush1.bf16.xpose.msra.mxu0 0
        %648 = vmatprep.subr.bf16.mxu0 0
        %649 = vmatpush1.bf16.xpose.msra.mxu0 0
        %650 = vmatprep.subr.bf16.mxu0 0
        %651 = vmatpush1.bf16.xpose.msra.mxu0 %v634
        %652 = vmatprep.subr.bf16.mxu0 0
        %653 = vmatpush2.bf16.xpose.msra.mxu0 0
        %654 = vmatprep.subr.bf16.mxu0 0
        %655 = vmatpush2.bf16.xpose.msra.mxu0 0
        %656 = vmatprep.subr.bf16.mxu0 0
        %657 = vmatpush2.bf16.xpose.msra.mxu0 0
        %658 = vmatprep.subr.bf16.mxu0 0
        %659 = vmatpush2.bf16.xpose.msra.mxu0 0
        %660 = vmatprep.subr.bf16.mxu0 0
        %661 = vmatpush2.bf16.xpose.msra.mxu0 0
        %662 = vmatprep.subr.bf16.mxu0 0
        %663 = vmatpush2.bf16.xpose.msra.mxu0 0
        %664 = vmatprep.subr.bf16.mxu0 0
        %665 = vmatpush2.bf16.xpose.msra.mxu0 0
        %666 = vmatprep.subr.bf16.mxu0 0
        %667 = vmatpush2.bf16.xpose.msra.mxu0 0
        %668 = vmatprep.mubr.bf16.mxu0 0
        %669 = vmatmul.mubr.bf16.gmra.mxu0 %v631
        %v670 = vpop.f32.mrf.mxu0
        %v671 = vadd.f32 0.0, %v670
        %v672 = vpop.f32.mrf.mxu0
        %v673 = vpop.f32.mrf.mxu0
        %v674 = vadd.f32 0.0, %v673
        %v675 = vpop.f32.mrf.mxu0
        %676 = vdwg.mxu0
        %v679 = vunpack.c.l.b16 %v461
        %v680 = vunpack.c.l.b16 %v462
        %v681 = vpack.c.b16 %v680, %v679
        %v684 = vunpack.c.l.b16 %v478
        %v685 = vunpack.c.l.b16 %v479
        %v686 = vpack.c.b16 %v685, %v684
        %v688 = vsel %vm515, %v681, 0
        %v691 = vsel %vm515, %v686, 0
        %693 = vmatprep.subr.bf16.mxu0 0
        %694 = vmatpush1.bf16.xpose.msra.mxu0 0
        %695 = vmatprep.subr.bf16.mxu0 0
        %696 = vmatpush1.bf16.xpose.msra.mxu0 0
        %697 = vmatprep.subr.bf16.mxu0 0
        %698 = vmatpush1.bf16.xpose.msra.mxu0 0
        %699 = vmatprep.subr.bf16.mxu0 0
        %700 = vmatpush1.bf16.xpose.msra.mxu0 0
        %701 = vmatprep.subr.bf16.mxu0 0
        %702 = vmatpush1.bf16.xpose.msra.mxu0 0
        %703 = vmatprep.subr.bf16.mxu0 0
        %704 = vmatpush1.bf16.xpose.msra.mxu0 0
        %705 = vmatprep.subr.bf16.mxu0 0
        %706 = vmatpush1.bf16.xpose.msra.mxu0 0
        %707 = vmatprep.subr.bf16.mxu0 0
        %708 = vmatpush1.bf16.xpose.msra.mxu0 %v691
        %709 = vmatprep.subr.bf16.mxu0 0
        %710 = vmatpush2.bf16.xpose.msra.mxu0 0
        %711 = vmatprep.subr.bf16.mxu0 0
        %712 = vmatpush2.bf16.xpose.msra.mxu0 0
        %713 = vmatprep.subr.bf16.mxu0 0
        %714 = vmatpush2.bf16.xpose.msra.mxu0 0
        %715 = vmatprep.subr.bf16.mxu0 0
        %716 = vmatpush2.bf16.xpose.msra.mxu0 0
        %717 = vmatprep.subr.bf16.mxu0 0
        %718 = vmatpush2.bf16.xpose.msra.mxu0 0
        %719 = vmatprep.subr.bf16.mxu0 0
        %720 = vmatpush2.bf16.xpose.msra.mxu0 0
        %721 = vmatprep.subr.bf16.mxu0 0
        %722 = vmatpush2.bf16.xpose.msra.mxu0 0
        %723 = vmatprep.subr.bf16.mxu0 0
        %724 = vmatpush2.bf16.xpose.msra.mxu0 0
        %725 = vmatprep.mubr.bf16.mxu0 0
        %726 = vmatmul.mubr.bf16.gmra.mxu0 %v688
        %v727 = vpop.f32.mrf.mxu0
        %v728 = vadd.f32 0.0, %v727
        %v729 = vpop.f32.mrf.mxu0
        %v730 = vpop.f32.mrf.mxu0
        %v731 = vadd.f32 0.0, %v730
        %v732 = vpop.f32.mrf.mxu0
        %733 = vdwg.mxu0
        %v736 = vunpack.c.l.b16 %v463
        %v737 = vunpack.c.l.b16 %v464
        %v738 = vpack.c.b16 %v737, %v736
        %v741 = vunpack.c.l.b16 %v480
        %v742 = vunpack.c.l.b16 %v481
        %v743 = vpack.c.b16 %v742, %v741
        %v745 = vsel %vm515, %v738, 0
        %v748 = vsel %vm515, %v743, 0
        %750 = vmatprep.subr.bf16.mxu0 0
        %751 = vmatpush1.bf16.xpose.msra.mxu0 0
        %752 = vmatprep.subr.bf16.mxu0 0
        %753 = vmatpush1.bf16.xpose.msra.mxu0 0
        %754 = vmatprep.subr.bf16.mxu0 0
        %755 = vmatpush1.bf16.xpose.msra.mxu0 0
        %756 = vmatprep.subr.bf16.mxu0 0
        %757 = vmatpush1.bf16.xpose.msra.mxu0 0
        %758 = vmatprep.subr.bf16.mxu0 0
        %759 = vmatpush1.bf16.xpose.msra.mxu0 0
        %760 = vmatprep.subr.bf16.mxu0 0
        %761 = vmatpush1.bf16.xpose.msra.mxu0 0
        %762 = vmatprep.subr.bf16.mxu0 0
        %763 = vmatpush1.bf16.xpose.msra.mxu0 0
        %764 = vmatprep.subr.bf16.mxu0 0
        %765 = vmatpush1.bf16.xpose.msra.mxu0 %v748
        %766 = vmatprep.subr.bf16.mxu0 0
        %767 = vmatpush2.bf16.xpose.msra.mxu0 0
        %768 = vmatprep.subr.bf16.mxu0 0
        %769 = vmatpush2.bf16.xpose.msra.mxu0 0
        %770 = vmatprep.subr.bf16.mxu0 0
        %771 = vmatpush2.bf16.xpose.msra.mxu0 0
        %772 = vmatprep.subr.bf16.mxu0 0
        %773 = vmatpush2.bf16.xpose.msra.mxu0 0
        %774 = vmatprep.subr.bf16.mxu0 0
        %775 = vmatpush2.bf16.xpose.msra.mxu0 0
        %776 = vmatprep.subr.bf16.mxu0 0
        %777 = vmatpush2.bf16.xpose.msra.mxu0 0
        %778 = vmatprep.subr.bf16.mxu0 0
        %779 = vmatpush2.bf16.xpose.msra.mxu0 0
        %780 = vmatprep.subr.bf16.mxu0 0
        %781 = vmatpush2.bf16.xpose.msra.mxu0 0
        %782 = vmatprep.mubr.bf16.mxu0 0
        %783 = vmatmul.mubr.bf16.gmra.mxu0 %v745
        %v784 = vpop.f32.mrf.mxu0
        %v785 = vadd.f32 0.0, %v784
        %v786 = vpop.f32.mrf.mxu0
        %v787 = vpop.f32.mrf.mxu0
        %v788 = vadd.f32 0.0, %v787
        %v789 = vpop.f32.mrf.mxu0
        %790 = vdwg.mxu0
        %v793 = vunpack.c.l.b16 %v465
        %v794 = vunpack.c.l.b16 %v466
        %v795 = vpack.c.b16 %v794, %v793
        %v798 = vunpack.c.l.b16 %v482
        %v799 = vunpack.c.l.b16 %v483
        %v800 = vpack.c.b16 %v799, %v798
        %v802 = vsel %vm515, %v795, 0
        %v805 = vsel %vm515, %v800, 0
        %807 = vmatprep.subr.bf16.mxu0 0
        %808 = vmatpush1.bf16.xpose.msra.mxu0 0
        %809 = vmatprep.subr.bf16.mxu0 0
        %810 = vmatpush1.bf16.xpose.msra.mxu0 0
        %811 = vmatprep.subr.bf16.mxu0 0
        %812 = vmatpush1.bf16.xpose.msra.mxu0 0
        %813 = vmatprep.subr.bf16.mxu0 0
        %814 = vmatpush1.bf16.xpose.msra.mxu0 0
        %815 = vmatprep.subr.bf16.mxu0 0
        %816 = vmatpush1.bf16.xpose.msra.mxu0 0
        %817 = vmatprep.subr.bf16.mxu0 0
        %818 = vmatpush1.bf16.xpose.msra.mxu0 0
        %819 = vmatprep.subr.bf16.mxu0 0
        %820 = vmatpush1.bf16.xpose.msra.mxu0 0
        %821 = vmatprep.subr.bf16.mxu0 0
        %822 = vmatpush1.bf16.xpose.msra.mxu0 %v805
        %823 = vmatprep.subr.bf16.mxu0 0
        %824 = vmatpush2.bf16.xpose.msra.mxu0 0
        %825 = vmatprep.subr.bf16.mxu0 0
        %826 = vmatpush2.bf16.xpose.msra.mxu0 0
        %827 = vmatprep.subr.bf16.mxu0 0
        %828 = vmatpush2.bf16.xpose.msra.mxu0 0
        %829 = vmatprep.subr.bf16.mxu0 0
        %830 = vmatpush2.bf16.xpose.msra.mxu0 0
        %831 = vmatprep.subr.bf16.mxu0 0
        %832 = vmatpush2.bf16.xpose.msra.mxu0 0
        %833 = vmatprep.subr.bf16.mxu0 0
        %834 = vmatpush2.bf16.xpose.msra.mxu0 0
        %835 = vmatprep.subr.bf16.mxu0 0
        %836 = vmatpush2.bf16.xpose.msra.mxu0 0
        %837 = vmatprep.subr.bf16.mxu0 0
        %838 = vmatpush2.bf16.xpose.msra.mxu0 0
        %839 = vmatprep.mubr.bf16.mxu0 0
        %840 = vmatmul.mubr.bf16.gmra.mxu0 %v802
        %v841 = vpop.f32.mrf.mxu0
        %v842 = vadd.f32 0.0, %v841
        %v843 = vpop.f32.mrf.mxu0
        %v844 = vpop.f32.mrf.mxu0
        %v845 = vadd.f32 0.0, %v844
        %v846 = vpop.f32.mrf.mxu0
        %847 = vdwg.mxu0
        %v850 = vunpack.c.l.b16 %v467
        %v851 = vunpack.c.l.b16 %v468
        %v852 = vpack.c.b16 %v851, %v850
        %v855 = vunpack.c.l.b16 %v484
        %v856 = vunpack.c.l.b16 %v485
        %v857 = vpack.c.b16 %v856, %v855
        %v859 = vsel %vm515, %v852, 0
        %v862 = vsel %vm515, %v857, 0
        %864 = vmatprep.subr.bf16.mxu0 0
        %865 = vmatpush1.bf16.xpose.msra.mxu0 0
        %866 = vmatprep.subr.bf16.mxu0 0
        %867 = vmatpush1.bf16.xpose.msra.mxu0 0
        %868 = vmatprep.subr.bf16.mxu0 0
        %869 = vmatpush1.bf16.xpose.msra.mxu0 0
        %870 = vmatprep.subr.bf16.mxu0 0
        %871 = vmatpush1.bf16.xpose.msra.mxu0 0
        %872 = vmatprep.subr.bf16.mxu0 0
        %873 = vmatpush1.bf16.xpose.msra.mxu0 0
        %874 = vmatprep.subr.bf16.mxu0 0
        %875 = vmatpush1.bf16.xpose.msra.mxu0 0
        %876 = vmatprep.subr.bf16.mxu0 0
        %877 = vmatpush1.bf16.xpose.msra.mxu0 0
        %878 = vmatprep.subr.bf16.mxu0 0
        %879 = vmatpush1.bf16.xpose.msra.mxu0 %v862
        %880 = vmatprep.subr.bf16.mxu0 0
        %881 = vmatpush2.bf16.xpose.msra.mxu0 0
        %882 = vmatprep.subr.bf16.mxu0 0
        %883 = vmatpush2.bf16.xpose.msra.mxu0 0
        %884 = vmatprep.subr.bf16.mxu0 0
        %885 = vmatpush2.bf16.xpose.msra.mxu0 0
        %886 = vmatprep.subr.bf16.mxu0 0
        %887 = vmatpush2.bf16.xpose.msra.mxu0 0
        %888 = vmatprep.subr.bf16.mxu0 0
        %889 = vmatpush2.bf16.xpose.msra.mxu0 0
        %890 = vmatprep.subr.bf16.mxu0 0
        %891 = vmatpush2.bf16.xpose.msra.mxu0 0
        %892 = vmatprep.subr.bf16.mxu0 0
        %893 = vmatpush2.bf16.xpose.msra.mxu0 0
        %894 = vmatprep.subr.bf16.mxu0 0
        %895 = vmatpush2.bf16.xpose.msra.mxu0 0
        %896 = vmatprep.mubr.bf16.mxu0 0
        %897 = vmatmul.mubr.bf16.gmra.mxu0 %v859
        %v898 = vpop.f32.mrf.mxu0
        %v899 = vadd.f32 0.0, %v898
        %v900 = vpop.f32.mrf.mxu0
        %v901 = vpop.f32.mrf.mxu0
        %v902 = vadd.f32 0.0, %v901
        %v903 = vpop.f32.mrf.mxu0
        %904 = vdwg.mxu0
        %v907 = vunpack.c.l.b16 %v469
        %v908 = vunpack.c.l.b16 %v470
        %v909 = vpack.c.b16 %v908, %v907
        %v912 = vunpack.c.l.b16 %v486
        %v913 = vunpack.c.l.b16 %v487
        %v914 = vpack.c.b16 %v913, %v912
        %v916 = vsel %vm515, %v909, 0
        %v919 = vsel %vm515, %v914, 0
        %921 = vmatprep.subr.bf16.mxu0 0
        %922 = vmatpush1.bf16.xpose.msra.mxu0 0
        %923 = vmatprep.subr.bf16.mxu0 0
        %924 = vmatpush1.bf16.xpose.msra.mxu0 0
        %925 = vmatprep.subr.bf16.mxu0 0
        %926 = vmatpush1.bf16.xpose.msra.mxu0 0
        %927 = vmatprep.subr.bf16.mxu0 0
        %928 = vmatpush1.bf16.xpose.msra.mxu0 0
        %929 = vmatprep.subr.bf16.mxu0 0
        %930 = vmatpush1.bf16.xpose.msra.mxu0 0
        %931 = vmatprep.subr.bf16.mxu0 0
        %932 = vmatpush1.bf16.xpose.msra.mxu0 0
        %933 = vmatprep.subr.bf16.mxu0 0
        %934 = vmatpush1.bf16.xpose.msra.mxu0 0
        %935 = vmatprep.subr.bf16.mxu0 0
        %936 = vmatpush1.bf16.xpose.msra.mxu0 %v919
        %937 = vmatprep.subr.bf16.mxu0 0
        %938 = vmatpush2.bf16.xpose.msra.mxu0 0
        %939 = vmatprep.subr.bf16.mxu0 0
        %940 = vmatpush2.bf16.xpose.msra.mxu0 0
        %941 = vmatprep.subr.bf16.mxu0 0
        %942 = vmatpush2.bf16.xpose.msra.mxu0 0
        %943 = vmatprep.subr.bf16.mxu0 0
        %944 = vmatpush2.bf16.xpose.msra.mxu0 0
        %945 = vmatprep.subr.bf16.mxu0 0
        %946 = vmatpush2.bf16.xpose.msra.mxu0 0
        %947 = vmatprep.subr.bf16.mxu0 0
        %948 = vmatpush2.bf16.xpose.msra.mxu0 0
        %949 = vmatprep.subr.bf16.mxu0 0
        %950 = vmatpush2.bf16.xpose.msra.mxu0 0
        %951 = vmatprep.subr.bf16.mxu0 0
        %952 = vmatpush2.bf16.xpose.msra.mxu0 0
        %953 = vmatprep.mubr.bf16.mxu0 0
        %954 = vmatmul.mubr.bf16.gmra.mxu0 %v916
        %v955 = vpop.f32.mrf.mxu0
        %v956 = vadd.f32 0.0, %v955
        %v957 = vpop.f32.mrf.mxu0
        %v958 = vpop.f32.mrf.mxu0
        %v959 = vadd.f32 0.0, %v958
        %v960 = vpop.f32.mrf.mxu0
        %961 = vdwg.mxu0
        %v962 = vmul.f32 %v557, 0.25
        %v963 = vmul.f32 %v560, 0.25
        %v964 = vmul.f32 %v614, 0.25
        %v965 = vmul.f32 %v617, 0.25
        %v966 = vmul.f32 %v671, 0.25
        %v967 = vmul.f32 %v674, 0.25
        %v968 = vmul.f32 %v728, 0.25
        %v969 = vmul.f32 %v731, 0.25
        %v970 = vmul.f32 %v785, 0.25
        %v971 = vmul.f32 %v788, 0.25
        %v972 = vmul.f32 %v842, 0.25
        %v973 = vmul.f32 %v845, 0.25
        %v974 = vmul.f32 %v899, 0.25
        %v975 = vmul.f32 %v902, 0.25
        %v976 = vmul.f32 %v956, 0.25
        %v977 = vmul.f32 %v959, 0.25
        %v978 = vld [vmem:[%s442] sm:$0xff]
        %v979 = vld [vmem:[%s442 + $0x8] sm:$0xff]
        %v980 = vadd.f32 %v962, %v978
        %v981 = vadd.f32 %v963, %v979
        %v982 = vadd.f32 %v964, %v978
        %v983 = vadd.f32 %v965, %v979
        %v984 = vadd.f32 %v966, %v978
        %v985 = vadd.f32 %v967, %v979
        %v986 = vadd.f32 %v968, %v978
        %v987 = vadd.f32 %v969, %v979
        %v988 = vadd.f32 %v970, %v978
        %v989 = vadd.f32 %v971, %v979
        %v990 = vadd.f32 %v972, %v978
        %v991 = vadd.f32 %v973, %v979
        %v992 = vadd.f32 %v974, %v978
        %v993 = vadd.f32 %v975, %v979
        %v994 = vadd.f32 %v976, %v978
        %v995 = vadd.f32 %v977, %v979
        %v996 = vld [vmem:[%s2] sm:$0xff]
        %v997 = vld [vmem:[%s2 + $0x8] sm:$0xff]
        %v998 = vld [vmem:[%s2 + $0x10] sm:$0xff]
        %v999 = vld [vmem:[%s2 + $0x18] sm:$0xff]
        %v1000 = vld [vmem:[%s2 + $0x20] sm:$0xff]
        %v1001 = vld [vmem:[%s2 + $0x28] sm:$0xff]
        %v1002 = vld [vmem:[%s2 + $0x30] sm:$0xff]
        %v1003 = vld [vmem:[%s2 + $0x38] sm:$0xff]
        %v1004 = vld [vmem:[%s2 + $0x40] sm:$0xff]
        %v1005 = vld [vmem:[%s2 + $0x48] sm:$0xff]
        %v1006 = vld [vmem:[%s2 + $0x50] sm:$0xff]
        %v1007 = vld [vmem:[%s2 + $0x58] sm:$0xff]
        %v1008 = vld [vmem:[%s2 + $0x60] sm:$0xff]
        %v1009 = vld [vmem:[%s2 + $0x68] sm:$0xff]
        %v1010 = vld [vmem:[%s2 + $0x70] sm:$0xff]
        %v1011 = vld [vmem:[%s2 + $0x78] sm:$0xff]
        %v1012 = vadd.f32 %v980, %v996
        %v1013 = vadd.f32 %v981, %v997
        %v1014 = vadd.f32 %v982, %v998
        %v1015 = vadd.f32 %v983, %v999
        %v1016 = vadd.f32 %v984, %v1000
        %v1017 = vadd.f32 %v985, %v1001
        %v1018 = vadd.f32 %v986, %v1002
        %v1019 = vadd.f32 %v987, %v1003
        %v1020 = vadd.f32 %v988, %v1004
        %v1021 = vadd.f32 %v989, %v1005
        %v1022 = vadd.f32 %v990, %v1006
        %v1023 = vadd.f32 %v991, %v1007
        %v1024 = vadd.f32 %v992, %v1008
        %v1025 = vadd.f32 %v993, %v1009
        %v1026 = vadd.f32 %v994, %v1010
        %v1027 = vadd.f32 %v995, %v1011
        %v1028 = vsel %vm515, %v1012, -inf
        %1029 = vmax.xlane.f32.xlu0 %v1028
        %v1030 = vpop.xlane.xlu0 %1029
        %v1031 = vsel %vm515, %v1013, -inf
        %1032 = vmax.xlane.f32.xlu0 %v1031
        %v1033 = vpop.xlane.xlu0 %1032
        %v1034 = vsel %vm515, %v1014, -inf
        %1035 = vmax.xlane.f32.xlu0 %v1034
        %v1036 = vpop.xlane.xlu0 %1035
        %v1037 = vsel %vm515, %v1015, -inf
        %1038 = vmax.xlane.f32.xlu0 %v1037
        %v1039 = vpop.xlane.xlu0 %1038
        %v1040 = vsel %vm515, %v1016, -inf
        %1041 = vmax.xlane.f32.xlu0 %v1040
        %v1042 = vpop.xlane.xlu0 %1041
        %v1043 = vsel %vm515, %v1017, -inf
        %1044 = vmax.xlane.f32.xlu0 %v1043
        %v1045 = vpop.xlane.xlu0 %1044
        %v1046 = vsel %vm515, %v1018, -inf
        %1047 = vmax.xlane.f32.xlu0 %v1046
        %v1048 = vpop.xlane.xlu0 %1047
        %v1049 = vsel %vm515, %v1019, -inf
        %1050 = vmax.xlane.f32.xlu0 %v1049
        %v1051 = vpop.xlane.xlu0 %1050
        %v1052 = vsel %vm515, %v1020, -inf
        %1053 = vmax.xlane.f32.xlu0 %v1052
        %v1054 = vpop.xlane.xlu0 %1053
        %v1055 = vsel %vm515, %v1021, -inf
        %1056 = vmax.xlane.f32.xlu0 %v1055
        %v1057 = vpop.xlane.xlu0 %1056
        %v1058 = vsel %vm515, %v1022, -inf
        %1059 = vmax.xlane.f32.xlu0 %v1058
        %v1060 = vpop.xlane.xlu0 %1059
        %v1061 = vsel %vm515, %v1023, -inf
        %1062 = vmax.xlane.f32.xlu0 %v1061
        %v1063 = vpop.xlane.xlu0 %1062
        %v1064 = vsel %vm515, %v1024, -inf
        %1065 = vmax.xlane.f32.xlu0 %v1064
        %v1066 = vpop.xlane.xlu0 %1065
        %v1067 = vsel %vm515, %v1025, -inf
        %1068 = vmax.xlane.f32.xlu0 %v1067
        %v1069 = vpop.xlane.xlu0 %1068
        %v1070 = vsel %vm515, %v1026, -inf
        %1071 = vmax.xlane.f32.xlu0 %v1070
        %v1072 = vpop.xlane.xlu0 %1071
        %v1073 = vsel %vm515, %v1027, -inf
        %1074 = vmax.xlane.f32.xlu0 %v1073
        %v1075 = vpop.xlane.xlu0 %1074
        %v1076 = vsub.f32 %v1012, %v1030
        %v1077 = vsub.f32 %v1013, %v1033
        %v1078 = vsub.f32 %v1014, %v1036
        %v1079 = vsub.f32 %v1015, %v1039
        %v1080 = vsub.f32 %v1016, %v1042
        %v1081 = vsub.f32 %v1017, %v1045
        %v1082 = vsub.f32 %v1018, %v1048
        %v1083 = vsub.f32 %v1019, %v1051
        %v1084 = vsub.f32 %v1020, %v1054
        %v1085 = vsub.f32 %v1021, %v1057
        %v1086 = vsub.f32 %v1022, %v1060
        %v1087 = vsub.f32 %v1023, %v1063
        %v1088 = vsub.f32 %v1024, %v1066
        %v1089 = vsub.f32 %v1025, %v1069
        %v1090 = vsub.f32 %v1026, %v1072
        %v1091 = vsub.f32 %v1027, %v1075
        %v1092 = vmul.f32 %v1076, 1.442695
        %v1093 = vpow.pop %v1092
        %v1094 = vmul.f32 %v1077, 1.442695
        %v1095 = vpow.pop %v1094
        %v1096 = vmul.f32 %v1078, 1.442695
        %v1097 = vpow.pop %v1096
        %v1098 = vmul.f32 %v1079, 1.442695
        %v1099 = vpow.pop %v1098
        %v1100 = vmul.f32 %v1080, 1.442695
        %v1101 = vpow.pop %v1100
        %v1102 = vmul.f32 %v1081, 1.442695
        %v1103 = vpow.pop %v1102
        %v1104 = vmul.f32 %v1082, 1.442695
        %v1105 = vpow.pop %v1104
        %v1106 = vmul.f32 %v1083, 1.442695
        %v1107 = vpow.pop %v1106
        %v1108 = vmul.f32 %v1084, 1.442695
        %v1109 = vpow.pop %v1108
        %v1110 = vmul.f32 %v1085, 1.442695
        %v1111 = vpow.pop %v1110
        %v1112 = vmul.f32 %v1086, 1.442695
        %v1113 = vpow.pop %v1112
        %v1114 = vmul.f32 %v1087, 1.442695
        %v1115 = vpow.pop %v1114
        %v1116 = vmul.f32 %v1088, 1.442695
        %v1117 = vpow.pop %v1116
        %v1118 = vmul.f32 %v1089, 1.442695
        %v1119 = vpow.pop %v1118
        %v1120 = vmul.f32 %v1090, 1.442695
        %v1121 = vpow.pop %v1120
        %v1122 = vmul.f32 %v1091, 1.442695
        %v1123 = vpow.pop %v1122
        %v1124 = vsel %vm515, %v1093, 0.0
        %1125 = vadd.xlane.f32.xlu0 %v1124
        %v1126 = vpop.xlane.xlu0 %1125
        %v1127 = vsel %vm515, %v1095, 0.0
        %1128 = vadd.xlane.f32.xlu0 %v1127
        %v1129 = vpop.xlane.xlu0 %1128
        %v1130 = vsel %vm515, %v1097, 0.0
        %1131 = vadd.xlane.f32.xlu0 %v1130
        %v1132 = vpop.xlane.xlu0 %1131
        %v1133 = vsel %vm515, %v1099, 0.0
        %1134 = vadd.xlane.f32.xlu0 %v1133
        %v1135 = vpop.xlane.xlu0 %1134
        %v1136 = vsel %vm515, %v1101, 0.0
        %1137 = vadd.xlane.f32.xlu0 %v1136
        %v1138 = vpop.xlane.xlu0 %1137
        %v1139 = vsel %vm515, %v1103, 0.0
        %1140 = vadd.xlane.f32.xlu0 %v1139
        %v1141 = vpop.xlane.xlu0 %1140
        %v1142 = vsel %vm515, %v1105, 0.0
        %1143 = vadd.xlane.f32.xlu0 %v1142
        %v1144 = vpop.xlane.xlu0 %1143
        %v1145 = vsel %vm515, %v1107, 0.0
        %1146 = vadd.xlane.f32.xlu0 %v1145
        %v1147 = vpop.xlane.xlu0 %1146
        %v1148 = vsel %vm515, %v1109, 0.0
        %1149 = vadd.xlane.f32.xlu0 %v1148
        %v1150 = vpop.xlane.xlu0 %1149
        %v1151 = vsel %vm515, %v1111, 0.0
        %1152 = vadd.xlane.f32.xlu0 %v1151
        %v1153 = vpop.xlane.xlu0 %1152
        %v1154 = vsel %vm515, %v1113, 0.0
        %1155 = vadd.xlane.f32.xlu0 %v1154
        %v1156 = vpop.xlane.xlu0 %1155
        %v1157 = vsel %vm515, %v1115, 0.0
        %1158 = vadd.xlane.f32.xlu0 %v1157
        %v1159 = vpop.xlane.xlu0 %1158
        %v1160 = vsel %vm515, %v1117, 0.0
        %1161 = vadd.xlane.f32.xlu0 %v1160
        %v1162 = vpop.xlane.xlu0 %1161
        %v1163 = vsel %vm515, %v1119, 0.0
        %1164 = vadd.xlane.f32.xlu0 %v1163
        %v1165 = vpop.xlane.xlu0 %1164
        %v1166 = vsel %vm515, %v1121, 0.0
        %1167 = vadd.xlane.f32.xlu0 %v1166
        %v1168 = vpop.xlane.xlu0 %1167
        %v1169 = vsel %vm515, %v1123, 0.0
        %1170 = vadd.xlane.f32.xlu0 %v1169
        %v1171 = vpop.xlane.xlu0 %1170
        %v1172 = vrcp.pop %v1126
        %v1173 = vrcp.pop %v1129
        %v1174 = vrcp.pop %v1132
        %v1175 = vrcp.pop %v1135
        %v1176 = vrcp.pop %v1138
        %v1177 = vrcp.pop %v1141
        %v1178 = vrcp.pop %v1144
        %v1179 = vrcp.pop %v1147
        %v1180 = vrcp.pop %v1150
        %v1181 = vrcp.pop %v1153
        %v1182 = vrcp.pop %v1156
        %v1183 = vrcp.pop %v1159
        %v1184 = vrcp.pop %v1162
        %v1185 = vrcp.pop %v1165
        %v1186 = vrcp.pop %v1168
        %v1187 = vrcp.pop %v1171
        %v1188 = vmul.f32 %v1093, %v1172
        %v1189 = vmul.f32 %v1095, %v1173
        %v1190 = vmul.f32 %v1097, %v1174
        %v1191 = vmul.f32 %v1099, %v1175
        %v1192 = vmul.f32 %v1101, %v1176
        %v1193 = vmul.f32 %v1103, %v1177
        %v1194 = vmul.f32 %v1105, %v1178
        %v1195 = vmul.f32 %v1107, %v1179
        %v1196 = vmul.f32 %v1109, %v1180
        %v1197 = vmul.f32 %v1111, %v1181
        %v1198 = vmul.f32 %v1113, %v1182
        %v1199 = vmul.f32 %v1115, %v1183
        %v1200 = vmul.f32 %v1117, %v1184
        %v1201 = vmul.f32 %v1119, %v1185
        %v1202 = vmul.f32 %v1121, %v1186
        %v1203 = vmul.f32 %v1123, %v1187
        %v1204 = vpack.c.bf16 %v1189, %v1188
        %v1205 = vpack.c.bf16 %v1191, %v1190
        %v1206 = vpack.c.bf16 %v1193, %v1192
        %v1207 = vpack.c.bf16 %v1195, %v1194
        %v1208 = vpack.c.bf16 %v1197, %v1196
        %v1209 = vpack.c.bf16 %v1199, %v1198
        %v1210 = vpack.c.bf16 %v1201, %v1200
        %v1211 = vpack.c.bf16 %v1203, %v1202
        %v1214 = vunpack.c.l.b16 %v489
        %v1215 = vunpack.c.l.b16 %v490
        %v1216 = vpack.c.b16 %v1215, %v1214
        %v1219 = vsel %vm515, %v1204, 0
        %1221 = vmatprep.subr.bf16.mxu0 0
        %1222 = vmatpush1.bf16.msra.mxu0 0
        %1223 = vmatprep.subr.bf16.mxu0 0
        %1224 = vmatpush1.bf16.msra.mxu0 0
        %1225 = vmatprep.subr.bf16.mxu0 0
        %1226 = vmatpush1.bf16.msra.mxu0 0
        %1227 = vmatprep.subr.bf16.mxu0 0
        %1228 = vmatpush1.bf16.msra.mxu0 0
        %1229 = vmatprep.subr.bf16.mxu0 0
        %1230 = vmatpush1.bf16.msra.mxu0 0
        %1231 = vmatprep.subr.bf16.mxu0 0
        %1232 = vmatpush1.bf16.msra.mxu0 0
        %1233 = vmatprep.subr.bf16.mxu0 0
        %1234 = vmatpush1.bf16.msra.mxu0 0
        %1235 = vmatprep.subr.bf16.mxu0 0
        %1236 = vmatpush1.bf16.msra.mxu0 %v1216
        %1237 = vmatprep.subr.bf16.mxu0 0
        %1238 = vmatpush2.bf16.msra.mxu0 0
        %1239 = vmatprep.subr.bf16.mxu0 0
        %1240 = vmatpush2.bf16.msra.mxu0 0
        %1241 = vmatprep.subr.bf16.mxu0 0
        %1242 = vmatpush2.bf16.msra.mxu0 0
        %1243 = vmatprep.subr.bf16.mxu0 0
        %1244 = vmatpush2.bf16.msra.mxu0 0
        %1245 = vmatprep.subr.bf16.mxu0 0
        %1246 = vmatpush2.bf16.msra.mxu0 0
        %1247 = vmatprep.subr.bf16.mxu0 0
        %1248 = vmatpush2.bf16.msra.mxu0 0
        %1249 = vmatprep.subr.bf16.mxu0 0
        %1250 = vmatpush2.bf16.msra.mxu0 0
        %1251 = vmatprep.subr.bf16.mxu0 0
        %1252 = vmatpush2.bf16.msra.mxu0 0
        %1253 = vmatprep.mubr.bf16.mxu0 0
        %1254 = vmatmul.mubr.bf16.gmra.mxu0 %v1219
        %v1255 = vpop.f32.mrf.mxu0
        %v1256 = vadd.f32 0.0, %v1255
        %v1257 = vpop.f32.mrf.mxu0
        %v1258 = vpop.f32.mrf.mxu0
        %v1259 = vadd.f32 0.0, %v1258
        %v1260 = vpop.f32.mrf.mxu0
        %1261 = vdwg.mxu0
        %v1264 = vunpack.c.l.b16 %v491
        %v1265 = vunpack.c.l.b16 %v492
        %v1266 = vpack.c.b16 %v1265, %v1264
        %v1269 = vsel %vm515, %v1205, 0
        %1271 = vmatprep.subr.bf16.mxu0 0
        %1272 = vmatpush1.bf16.msra.mxu0 0
        %1273 = vmatprep.subr.bf16.mxu0 0
        %1274 = vmatpush1.bf16.msra.mxu0 0
        %1275 = vmatprep.subr.bf16.mxu0 0
        %1276 = vmatpush1.bf16.msra.mxu0 0
        %1277 = vmatprep.subr.bf16.mxu0 0
        %1278 = vmatpush1.bf16.msra.mxu0 0
        %1279 = vmatprep.subr.bf16.mxu0 0
        %1280 = vmatpush1.bf16.msra.mxu0 0
        %1281 = vmatprep.subr.bf16.mxu0 0
        %1282 = vmatpush1.bf16.msra.mxu0 0
        %1283 = vmatprep.subr.bf16.mxu0 0
        %1284 = vmatpush1.bf16.msra.mxu0 0
        %1285 = vmatprep.subr.bf16.mxu0 0
        %1286 = vmatpush1.bf16.msra.mxu0 %v1266
        %1287 = vmatprep.subr.bf16.mxu0 0
        %1288 = vmatpush2.bf16.msra.mxu0 0
        %1289 = vmatprep.subr.bf16.mxu0 0
        %1290 = vmatpush2.bf16.msra.mxu0 0
        %1291 = vmatprep.subr.bf16.mxu0 0
        %1292 = vmatpush2.bf16.msra.mxu0 0
        %1293 = vmatprep.subr.bf16.mxu0 0
        %1294 = vmatpush2.bf16.msra.mxu0 0
        %1295 = vmatprep.subr.bf16.mxu0 0
        %1296 = vmatpush2.bf16.msra.mxu0 0
        %1297 = vmatprep.subr.bf16.mxu0 0
        %1298 = vmatpush2.bf16.msra.mxu0 0
        %1299 = vmatprep.subr.bf16.mxu0 0
        %1300 = vmatpush2.bf16.msra.mxu0 0
        %1301 = vmatprep.subr.bf16.mxu0 0
        %1302 = vmatpush2.bf16.msra.mxu0 0
        %1303 = vmatprep.mubr.bf16.mxu0 0
        %1304 = vmatmul.mubr.bf16.gmra.mxu0 %v1269
        %v1305 = vpop.f32.mrf.mxu0
        %v1306 = vadd.f32 0.0, %v1305
        %v1307 = vpop.f32.mrf.mxu0
        %v1308 = vpop.f32.mrf.mxu0
        %v1309 = vadd.f32 0.0, %v1308
        %v1310 = vpop.f32.mrf.mxu0
        %1311 = vdwg.mxu0
        %v1314 = vunpack.c.l.b16 %v493
        %v1315 = vunpack.c.l.b16 %v494
        %v1316 = vpack.c.b16 %v1315, %v1314
        %v1319 = vsel %vm515, %v1206, 0
        %1321 = vmatprep.subr.bf16.mxu0 0
        %1322 = vmatpush1.bf16.msra.mxu0 0
        %1323 = vmatprep.subr.bf16.mxu0 0
        %1324 = vmatpush1.bf16.msra.mxu0 0
        %1325 = vmatprep.subr.bf16.mxu0 0
        %1326 = vmatpush1.bf16.msra.mxu0 0
        %1327 = vmatprep.subr.bf16.mxu0 0
        %1328 = vmatpush1.bf16.msra.mxu0 0
        %1329 = vmatprep.subr.bf16.mxu0 0
        %1330 = vmatpush1.bf16.msra.mxu0 0
        %1331 = vmatprep.subr.bf16.mxu0 0
        %1332 = vmatpush1.bf16.msra.mxu0 0
        %1333 = vmatprep.subr.bf16.mxu0 0
        %1334 = vmatpush1.bf16.msra.mxu0 0
        %1335 = vmatprep.subr.bf16.mxu0 0
        %1336 = vmatpush1.bf16.msra.mxu0 %v1316
        %1337 = vmatprep.subr.bf16.mxu0 0
        %1338 = vmatpush2.bf16.msra.mxu0 0
        %1339 = vmatprep.subr.bf16.mxu0 0
        %1340 = vmatpush2.bf16.msra.mxu0 0
        %1341 = vmatprep.subr.bf16.mxu0 0
        %1342 = vmatpush2.bf16.msra.mxu0 0
        %1343 = vmatprep.subr.bf16.mxu0 0
        %1344 = vmatpush2.bf16.msra.mxu0 0
        %1345 = vmatprep.subr.bf16.mxu0 0
        %1346 = vmatpush2.bf16.msra.mxu0 0
        %1347 = vmatprep.subr.bf16.mxu0 0
        %1348 = vmatpush2.bf16.msra.mxu0 0
        %1349 = vmatprep.subr.bf16.mxu0 0
        %1350 = vmatpush2.bf16.msra.mxu0 0
        %1351 = vmatprep.subr.bf16.mxu0 0
        %1352 = vmatpush2.bf16.msra.mxu0 0
        %1353 = vmatprep.mubr.bf16.mxu0 0
        %1354 = vmatmul.mubr.bf16.gmra.mxu0 %v1319
        %v1355 = vpop.f32.mrf.mxu0
        %v1356 = vadd.f32 0.0, %v1355
        %v1357 = vpop.f32.mrf.mxu0
        %v1358 = vpop.f32.mrf.mxu0
        %v1359 = vadd.f32 0.0, %v1358
        %v1360 = vpop.f32.mrf.mxu0
        %1361 = vdwg.mxu0
        %v1364 = vunpack.c.l.b16 %v495
        %v1365 = vunpack.c.l.b16 %v496
        %v1366 = vpack.c.b16 %v1365, %v1364
        %v1369 = vsel %vm515, %v1207, 0
        %1371 = vmatprep.subr.bf16.mxu0 0
        %1372 = vmatpush1.bf16.msra.mxu0 0
        %1373 = vmatprep.subr.bf16.mxu0 0
        %1374 = vmatpush1.bf16.msra.mxu0 0
        %1375 = vmatprep.subr.bf16.mxu0 0
        %1376 = vmatpush1.bf16.msra.mxu0 0
        %1377 = vmatprep.subr.bf16.mxu0 0
        %1378 = vmatpush1.bf16.msra.mxu0 0
        %1379 = vmatprep.subr.bf16.mxu0 0
        %1380 = vmatpush1.bf16.msra.mxu0 0
        %1381 = vmatprep.subr.bf16.mxu0 0
        %1382 = vmatpush1.bf16.msra.mxu0 0
        %1383 = vmatprep.subr.bf16.mxu0 0
        %1384 = vmatpush1.bf16.msra.mxu0 0
        %1385 = vmatprep.subr.bf16.mxu0 0
        %1386 = vmatpush1.bf16.msra.mxu0 %v1366
        %1387 = vmatprep.subr.bf16.mxu0 0
        %1388 = vmatpush2.bf16.msra.mxu0 0
        %1389 = vmatprep.subr.bf16.mxu0 0
        %1390 = vmatpush2.bf16.msra.mxu0 0
        %1391 = vmatprep.subr.bf16.mxu0 0
        %1392 = vmatpush2.bf16.msra.mxu0 0
        %1393 = vmatprep.subr.bf16.mxu0 0
        %1394 = vmatpush2.bf16.msra.mxu0 0
        %1395 = vmatprep.subr.bf16.mxu0 0
        %1396 = vmatpush2.bf16.msra.mxu0 0
        %1397 = vmatprep.subr.bf16.mxu0 0
        %1398 = vmatpush2.bf16.msra.mxu0 0
        %1399 = vmatprep.subr.bf16.mxu0 0
        %1400 = vmatpush2.bf16.msra.mxu0 0
        %1401 = vmatprep.subr.bf16.mxu0 0
        %1402 = vmatpush2.bf16.msra.mxu0 0
        %1403 = vmatprep.mubr.bf16.mxu0 0
        %1404 = vmatmul.mubr.bf16.gmra.mxu0 %v1369
        %v1405 = vpop.f32.mrf.mxu0
        %v1406 = vadd.f32 0.0, %v1405
        %v1407 = vpop.f32.mrf.mxu0
        %v1408 = vpop.f32.mrf.mxu0
        %v1409 = vadd.f32 0.0, %v1408
        %v1410 = vpop.f32.mrf.mxu0
        %1411 = vdwg.mxu0
        %v1414 = vunpack.c.l.b16 %v497
        %v1415 = vunpack.c.l.b16 %v498
        %v1416 = vpack.c.b16 %v1415, %v1414
        %v1419 = vsel %vm515, %v1208, 0
        %1421 = vmatprep.subr.bf16.mxu0 0
        %1422 = vmatpush1.bf16.msra.mxu0 0
        %1423 = vmatprep.subr.bf16.mxu0 0
        %1424 = vmatpush1.bf16.msra.mxu0 0
        %1425 = vmatprep.subr.bf16.mxu0 0
        %1426 = vmatpush1.bf16.msra.mxu0 0
        %1427 = vmatprep.subr.bf16.mxu0 0
        %1428 = vmatpush1.bf16.msra.mxu0 0
        %1429 = vmatprep.subr.bf16.mxu0 0
        %1430 = vmatpush1.bf16.msra.mxu0 0
        %1431 = vmatprep.subr.bf16.mxu0 0
        %1432 = vmatpush1.bf16.msra.mxu0 0
        %1433 = vmatprep.subr.bf16.mxu0 0
        %1434 = vmatpush1.bf16.msra.mxu0 0
        %1435 = vmatprep.subr.bf16.mxu0 0
        %1436 = vmatpush1.bf16.msra.mxu0 %v1416
        %1437 = vmatprep.subr.bf16.mxu0 0
        %1438 = vmatpush2.bf16.msra.mxu0 0
        %1439 = vmatprep.subr.bf16.mxu0 0
        %1440 = vmatpush2.bf16.msra.mxu0 0
        %1441 = vmatprep.subr.bf16.mxu0 0
        %1442 = vmatpush2.bf16.msra.mxu0 0
        %1443 = vmatprep.subr.bf16.mxu0 0
        %1444 = vmatpush2.bf16.msra.mxu0 0
        %1445 = vmatprep.subr.bf16.mxu0 0
        %1446 = vmatpush2.bf16.msra.mxu0 0
        %1447 = vmatprep.subr.bf16.mxu0 0
        %1448 = vmatpush2.bf16.msra.mxu0 0
        %1449 = vmatprep.subr.bf16.mxu0 0
        %1450 = vmatpush2.bf16.msra.mxu0 0
        %1451 = vmatprep.subr.bf16.mxu0 0
        %1452 = vmatpush2.bf16.msra.mxu0 0
        %1453 = vmatprep.mubr.bf16.mxu0 0
        %1454 = vmatmul.mubr.bf16.gmra.mxu0 %v1419
        %v1455 = vpop.f32.mrf.mxu0
        %v1456 = vadd.f32 0.0, %v1455
        %v1457 = vpop.f32.mrf.mxu0
        %v1458 = vpop.f32.mrf.mxu0
        %v1459 = vadd.f32 0.0, %v1458
        %v1460 = vpop.f32.mrf.mxu0
        %1461 = vdwg.mxu0
        %v1464 = vunpack.c.l.b16 %v499
        %v1465 = vunpack.c.l.b16 %v500
        %v1466 = vpack.c.b16 %v1465, %v1464
        %v1469 = vsel %vm515, %v1209, 0
        %1471 = vmatprep.subr.bf16.mxu0 0
        %1472 = vmatpush1.bf16.msra.mxu0 0
        %1473 = vmatprep.subr.bf16.mxu0 0
        %1474 = vmatpush1.bf16.msra.mxu0 0
        %1475 = vmatprep.subr.bf16.mxu0 0
        %1476 = vmatpush1.bf16.msra.mxu0 0
        %1477 = vmatprep.subr.bf16.mxu0 0
        %1478 = vmatpush1.bf16.msra.mxu0 0
        %1479 = vmatprep.subr.bf16.mxu0 0
        %1480 = vmatpush1.bf16.msra.mxu0 0
        %1481 = vmatprep.subr.bf16.mxu0 0
        %1482 = vmatpush1.bf16.msra.mxu0 0
        %1483 = vmatprep.subr.bf16.mxu0 0
        %1484 = vmatpush1.bf16.msra.mxu0 0
        %1485 = vmatprep.subr.bf16.mxu0 0
        %1486 = vmatpush1.bf16.msra.mxu0 %v1466
        %1487 = vmatprep.subr.bf16.mxu0 0
        %1488 = vmatpush2.bf16.msra.mxu0 0
        %1489 = vmatprep.subr.bf16.mxu0 0
        %1490 = vmatpush2.bf16.msra.mxu0 0
        %1491 = vmatprep.subr.bf16.mxu0 0
        %1492 = vmatpush2.bf16.msra.mxu0 0
        %1493 = vmatprep.subr.bf16.mxu0 0
        %1494 = vmatpush2.bf16.msra.mxu0 0
        %1495 = vmatprep.subr.bf16.mxu0 0
        %1496 = vmatpush2.bf16.msra.mxu0 0
        %1497 = vmatprep.subr.bf16.mxu0 0
        %1498 = vmatpush2.bf16.msra.mxu0 0
        %1499 = vmatprep.subr.bf16.mxu0 0
        %1500 = vmatpush2.bf16.msra.mxu0 0
        %1501 = vmatprep.subr.bf16.mxu0 0
        %1502 = vmatpush2.bf16.msra.mxu0 0
        %1503 = vmatprep.mubr.bf16.mxu0 0
        %1504 = vmatmul.mubr.bf16.gmra.mxu0 %v1469
        %v1505 = vpop.f32.mrf.mxu0
        %v1506 = vadd.f32 0.0, %v1505
        %v1507 = vpop.f32.mrf.mxu0
        %v1508 = vpop.f32.mrf.mxu0
        %v1509 = vadd.f32 0.0, %v1508
        %v1510 = vpop.f32.mrf.mxu0
        %1511 = vdwg.mxu0
        %v1514 = vunpack.c.l.b16 %v501
        %v1515 = vunpack.c.l.b16 %v502
        %v1516 = vpack.c.b16 %v1515, %v1514
        %v1519 = vsel %vm515, %v1210, 0
        %1521 = vmatprep.subr.bf16.mxu0 0
        %1522 = vmatpush1.bf16.msra.mxu0 0
        %1523 = vmatprep.subr.bf16.mxu0 0
        %1524 = vmatpush1.bf16.msra.mxu0 0
        %1525 = vmatprep.subr.bf16.mxu0 0
        %1526 = vmatpush1.bf16.msra.mxu0 0
        %1527 = vmatprep.subr.bf16.mxu0 0
        %1528 = vmatpush1.bf16.msra.mxu0 0
        %1529 = vmatprep.subr.bf16.mxu0 0
        %1530 = vmatpush1.bf16.msra.mxu0 0
        %1531 = vmatprep.subr.bf16.mxu0 0
        %1532 = vmatpush1.bf16.msra.mxu0 0
        %1533 = vmatprep.subr.bf16.mxu0 0
        %1534 = vmatpush1.bf16.msra.mxu0 0
        %1535 = vmatprep.subr.bf16.mxu0 0
        %1536 = vmatpush1.bf16.msra.mxu0 %v1516
        %1537 = vmatprep.subr.bf16.mxu0 0
        %1538 = vmatpush2.bf16.msra.mxu0 0
        %1539 = vmatprep.subr.bf16.mxu0 0
        %1540 = vmatpush2.bf16.msra.mxu0 0
        %1541 = vmatprep.subr.bf16.mxu0 0
        %1542 = vmatpush2.bf16.msra.mxu0 0
        %1543 = vmatprep.subr.bf16.mxu0 0
        %1544 = vmatpush2.bf16.msra.mxu0 0
        %1545 = vmatprep.subr.bf16.mxu0 0
        %1546 = vmatpush2.bf16.msra.mxu0 0
        %1547 = vmatprep.subr.bf16.mxu0 0
        %1548 = vmatpush2.bf16.msra.mxu0 0
        %1549 = vmatprep.subr.bf16.mxu0 0
        %1550 = vmatpush2.bf16.msra.mxu0 0
        %1551 = vmatprep.subr.bf16.mxu0 0
        %1552 = vmatpush2.bf16.msra.mxu0 0
        %1553 = vmatprep.mubr.bf16.mxu0 0
        %1554 = vmatmul.mubr.bf16.gmra.mxu0 %v1519
        %v1555 = vpop.f32.mrf.mxu0
        %v1556 = vadd.f32 0.0, %v1555
        %v1557 = vpop.f32.mrf.mxu0
        %v1558 = vpop.f32.mrf.mxu0
        %v1559 = vadd.f32 0.0, %v1558
        %v1560 = vpop.f32.mrf.mxu0
        %1561 = vdwg.mxu0
        %v1564 = vunpack.c.l.b16 %v503
        %v1565 = vunpack.c.l.b16 %v504
        %v1566 = vpack.c.b16 %v1565, %v1564
        %v1569 = vsel %vm515, %v1211, 0
        %1571 = vmatprep.subr.bf16.mxu0 0
        %1572 = vmatpush1.bf16.msra.mxu0 0
        %1573 = vmatprep.subr.bf16.mxu0 0
        %1574 = vmatpush1.bf16.msra.mxu0 0
        %1575 = vmatprep.subr.bf16.mxu0 0
        %1576 = vmatpush1.bf16.msra.mxu0 0
        %1577 = vmatprep.subr.bf16.mxu0 0
        %1578 = vmatpush1.bf16.msra.mxu0 0
        %1579 = vmatprep.subr.bf16.mxu0 0
        %1580 = vmatpush1.bf16.msra.mxu0 0
        %1581 = vmatprep.subr.bf16.mxu0 0
        %1582 = vmatpush1.bf16.msra.mxu0 0
        %1583 = vmatprep.subr.bf16.mxu0 0
        %1584 = vmatpush1.bf16.msra.mxu0 0
        %1585 = vmatprep.subr.bf16.mxu0 0
        %1586 = vmatpush1.bf16.msra.mxu0 %v1566
        %1587 = vmatprep.subr.bf16.mxu0 0
        %1588 = vmatpush2.bf16.msra.mxu0 0
        %1589 = vmatprep.subr.bf16.mxu0 0
        %1590 = vmatpush2.bf16.msra.mxu0 0
        %1591 = vmatprep.subr.bf16.mxu0 0
        %1592 = vmatpush2.bf16.msra.mxu0 0
        %1593 = vmatprep.subr.bf16.mxu0 0
        %1594 = vmatpush2.bf16.msra.mxu0 0
        %1595 = vmatprep.subr.bf16.mxu0 0
        %1596 = vmatpush2.bf16.msra.mxu0 0
        %1597 = vmatprep.subr.bf16.mxu0 0
        %1598 = vmatpush2.bf16.msra.mxu0 0
        %1599 = vmatprep.subr.bf16.mxu0 0
        %1600 = vmatpush2.bf16.msra.mxu0 0
        %1601 = vmatprep.subr.bf16.mxu0 0
        %1602 = vmatpush2.bf16.msra.mxu0 0
        %1603 = vmatprep.mubr.bf16.mxu0 0
        %1604 = vmatmul.mubr.bf16.gmra.mxu0 %v1569
        %v1605 = vpop.f32.mrf.mxu0
        %v1606 = vadd.f32 0.0, %v1605
        %v1607 = vpop.f32.mrf.mxu0
        %v1608 = vpop.f32.mrf.mxu0
        %v1609 = vadd.f32 0.0, %v1608
        %v1610 = vpop.f32.mrf.mxu0
        %1611 = vdwg.mxu0
        %v1612 = vpack.c.bf16 %v1259, %v1256
        %v1613 = vpack.c.bf16 %v1309, %v1306
        %v1614 = vpack.c.bf16 %v1359, %v1356
        %v1615 = vpack.c.bf16 %v1409, %v1406
        %v1616 = vpack.c.bf16 %v1459, %v1456
        %v1617 = vpack.c.bf16 %v1509, %v1506
        %v1618 = vpack.c.bf16 %v1559, %v1556
        %v1619 = vpack.c.bf16 %v1609, %v1606
        %v1628 = vunpack.c.l.b16 %v1612
        %v1629 = vunpack.c.h.b16 %v1612
        %v1630 = vunpack.c.l.b16 %v1613
        %v1631 = vunpack.c.h.b16 %v1613
        %v1632 = vunpack.c.l.b16 %v1614
        %v1633 = vunpack.c.h.b16 %v1614
        %v1634 = vunpack.c.l.b16 %v1615
        %v1635 = vunpack.c.h.b16 %v1615
        %v1636 = vunpack.c.l.b16 %v1616
        %v1637 = vunpack.c.h.b16 %v1616
        %v1638 = vunpack.c.l.b16 %v1617
        %v1639 = vunpack.c.h.b16 %v1617
        %v1640 = vunpack.c.l.b16 %v1618
        %v1641 = vunpack.c.h.b16 %v1618
        %v1642 = vunpack.c.l.b16 %v1619
        %v1643 = vunpack.c.h.b16 %v1619
        %v1644 = vpack.c.b16 %v1628, %v1628
        %v1645 = vpack.c.b16 %v1629, %v1629
        %v1646 = vpack.c.b16 %v1630, %v1630
        %v1647 = vpack.c.b16 %v1631, %v1631
        %v1648 = vpack.c.b16 %v1632, %v1632
        %v1649 = vpack.c.b16 %v1633, %v1633
        %v1650 = vpack.c.b16 %v1634, %v1634
        %v1651 = vpack.c.b16 %v1635, %v1635
        %v1652 = vpack.c.b16 %v1636, %v1636
        %v1653 = vpack.c.b16 %v1637, %v1637
        %v1654 = vpack.c.b16 %v1638, %v1638
        %v1655 = vpack.c.b16 %v1639, %v1639
        %v1656 = vpack.c.b16 %v1640, %v1640
        %v1657 = vpack.c.b16 %v1641, %v1641
        %v1658 = vpack.c.b16 %v1642, %v1642
        %v1659 = vpack.c.b16 %v1643, %v1643
        %vm1676 = vcmask 125952
        %1677 = vst.msk [vmem:[%s452] sm:$0xf] %vm1676, %v1644
        %1678 = vst.msk [vmem:[%s452 + $0x4] sm:$0xf] %vm1676, %v1645
        %1679 = vst.msk [vmem:[%s452 + $0x8] sm:$0xf] %vm1676, %v1646
        %1680 = vst.msk [vmem:[%s452 + $0xc] sm:$0xf] %vm1676, %v1647
        %1681 = vst.msk [vmem:[%s452 + $0x10] sm:$0xf] %vm1676, %v1648
        %1682 = vst.msk [vmem:[%s452 + $0x14] sm:$0xf] %vm1676, %v1649
        %1683 = vst.msk [vmem:[%s452 + $0x18] sm:$0xf] %vm1676, %v1650
        %1684 = vst.msk [vmem:[%s452 + $0x1c] sm:$0xf] %vm1676, %v1651
        %1685 = vst.msk [vmem:[%s452 + $0x20] sm:$0xf] %vm1676, %v1652
        %1686 = vst.msk [vmem:[%s452 + $0x24] sm:$0xf] %vm1676, %v1653
        %1687 = vst.msk [vmem:[%s452 + $0x28] sm:$0xf] %vm1676, %v1654
        %1688 = vst.msk [vmem:[%s452 + $0x2c] sm:$0xf] %vm1676, %v1655
        %1689 = vst.msk [vmem:[%s452 + $0x30] sm:$0xf] %vm1676, %v1656
        %1690 = vst.msk [vmem:[%s452 + $0x34] sm:$0xf] %vm1676, %v1657
        %1691 = vst.msk [vmem:[%s452 + $0x38] sm:$0xf] %vm1676, %v1658
        %1692 = vst.msk [vmem:[%s452 + $0x3c] sm:$0xf] %vm1676, %v1659
        %s1693 = smul.u32 8, %s18
        %p1694 = scmp.lt.s32.totalorder %s19, 1
        %s1695 = scalar_select %p1694, %s19, 1
        %p1696 = scmp.lt.s32.totalorder %s1693, 7
        %s1697 = scalar_select %p1696, %s1693, 7
        %s1698 = smul.addr %s1697, 2
        %s1699 = smul.addr %s1695, 16
        %s1700 = sadd.s32 %s1698, %s1699
        %s1701 = smul.addr %s1700, 4
        %s1702 = scalar_lea.vmem %s3, %s1701
        // Predicated region
        $region74: #{swin_forward.25} parent=68 // pred_check
          %p1703 = pneg %p121
        $region75: #{swin_forward.25} parent=68 // pred_check_branch
          %1705 = sbr.rel (%p1703) target = $region77
        $region76: #{swin_forward.25} parent=68 // pred_region
          %s1706 = smul.u32 8, %s18
        $region77: #{swin_forward.25} parent=68 // pred_fallthru
          _
      $region69: #{swin_forward.25} parent=5 // pred_fallthru
        _
      %p1707 = scmp.le.s32.totalorder 2, %s9
      // Predicated region
      $region78: #{swin_forward.25} parent=5 // pred_check
        %p1708 = pneg %p1707
      $region79: #{swin_forward.25} parent=5 // pred_check_branch
        %1710 = sbr.rel (%p1708) target = $region81
      $region80: #{swin_forward.25} parent=5 // pred_region
        %s1711 = ssub.s32 %s9, 2
        // Predicated region
        $region82: #{swin_forward.25} parent=80 // pred_check
          %p1712 = pneg %p127
        $region83: #{swin_forward.25} parent=80 // pred_check_branch
          %1714 = sbr.rel (%p1712) target = $region85
        $region84: #{swin_forward.25} parent=80 // pred_region
          %s1715 = smul.u32 8, %s20
          %p1716 = scmp.lt.s32.totalorder %s21, 1
          %s1717 = scalar_select %p1716, %s21, 1
          %p1718 = scmp.lt.s32.totalorder %s1715, 7
          %s1719 = scalar_select %p1718, %s1715, 7
          %s1720 = smul.addr %s1719, 2
          %s1721 = smul.addr %s1717, 16
          %s1722 = sadd.s32 %s1720, %s1721
          %s1723 = smul.addr %s1722, 4
          %s1724 = scalar_lea.vmem %s3, %s1723
        $region85: #{swin_forward.25} parent=80 // pred_fallthru
          _
      $region81: #{swin_forward.25} parent=5 // pred_fallthru
        _
    $region6: #{swin_forward.25} parent=1 // loop_footer
      %s13 = sadd.s32 1, %s9
    $region7: #{swin_forward.25} parent=1 // loop_footer_branch
      %8 = sbr.rel target = $region3
    $region8: #{swin_forward.25} parent=1 // loop_exit
      _

// kernel: swin_forward.30
$region0: #{swin_forward.30}
  #allocation0 [shape = 'u32[]', space=smem, size = 0x4, offset = 0x4, fixed_abs, tag = 'smem constant byte address 0x4 - core index']
  #allocation1 [shape = 'u32[144,128]{1,0:T(1,128)}', space=vmem, size = 0x12000, scoped, tag = 'internal scratch']
  %s0 = inlined_call_operand.vmem [shape: bf16[3,4,2,16,16], index: 0, kind: input, shape index: {}]
  %s1 = inlined_call_operand.vmem [shape: f32[4,16,16], index: 1, kind: input, shape index: {}]
  %s2 = inlined_call_operand.vmem [shape: bf16[4,2,16,16], index: 2, kind: output, shape index: {}]
  %s3 = sld [smem:[#allocation0]]
  $region82: #{swin_forward.30} parent=0
    _
  %s5 = ssub.s32 1, %s3
  %s6 = scalar_select 0, %s5, %s3
  $region1: #{swin_forward.30} parent=0
    #allocation2 [shape = 'u8[49152]{0}', space=vmem, size = 0xc000, scoped, tag = 'input window, operand 0']
    loop: start=0, step=1, limit=6
    $region2: #{swin_forward.30} parent=1 // loop_pre_header
      _
    $region3: #{swin_forward.30} parent=1 // loop_header
      %s8 = sphi 0, %s12
      %p9 = scmp.ge.s32.totalorder %s8, 6
      %s15 = sphi 0, %s27
      %s16 = sphi 0, %s23
      %s17 = sphi 0, %s15
      %s18 = sphi 0, %s16
      %s19 = sphi 0, %s17
      %s20 = sphi 0, %s18
      %s32 = sphi 0, %s34
      %s35 = sphi 0, %s32
      %s36 = sphi 0, %s35
      %s52 = sphi 0, %s36
      %s58 = sphi 0, %s60
      %s61 = sphi 0, %s58
      %s62 = sphi 0, %s61
      %s78 = sphi 0, %s62
      %s86 = sphi 0, %s88
      %s89 = sphi 0, %s86
      %s90 = sphi 0, %s89
      %s106 = sphi 0, %s90
    $region4: #{swin_forward.30} parent=1 // loop_header_branch
      %11 = sbr.rel (%p9) target = $region8
    $region5: #{swin_forward.30} parent=1 // loop_body
      %s13 = ssub.s32 %s8, 1
      %s14 = ssub.s32 %s8, 2
      %s21 = sadd.s32 1, %s16
      %p22 = scmp.ge.s32.totalorder %s21, 4
      %s23 = scalar_select %p22, 0, %s21
      %s24 = sadd.s32 1, %s15
      %s25 = scalar_select %p22, %s24, %s15
      %p26 = scmp.ge.s32.totalorder %s25, 1
      %s27 = scalar_select %p26, 0, %s25
      %s28 = ssub.s32 %s16, %s23
      %s29 = ssub.s32 %s15, %s27
      %s30 = sor.u32 %s28, %s29
      %p31 = scmp.eq.s32.totalorder %s30, 0
      %s33 = sadd.s32 %s32, 1
      %s34 = scalar_select %p31, %s32, %s33
      %p37 = pneg %p31
      %p38 = scmp.eq.s32.totalorder %s8, 3
      %p39 = por %p37, %p38
      %p40 = scmp.ne.s32.totalorder %s32, %s35
      %p41 = scmp.eq.s32.totalorder %s8, 0
      %p42 = por %p40, %p41
      %p43 = scmp.ne.s32.totalorder %s32, %s35
      %p44 = scmp.eq.s32.totalorder %s13, 3
      %p45 = por %p43, %p44
      %p46 = scmp.ne.s32.totalorder %s35, %s36
      %p47 = scmp.eq.s32.totalorder %s13, 0
      %p48 = por %p46, %p47
      %p49 = scmp.ne.s32.totalorder %s35, %s36
      %p50 = scmp.eq.s32.totalorder %s14, 3
      %p51 = por %p49, %p50
      %p53 = scmp.ne.s32.totalorder %s36, %s52
      %p54 = scmp.eq.s32.totalorder %s14, 0
      %p55 = por %p53, %p54
      %s56 = ssub.s32 %s16, %s23
      %p57 = scmp.eq.s32.totalorder %s56, 0
      %s59 = sadd.s32 %s58, 1
      %s60 = scalar_select %p57, %s58, %s59
      %p63 = pneg %p57
      %p64 = scmp.eq.s32.totalorder %s8, 3
      %p65 = por %p63, %p64
      %p66 = scmp.ne.s32.totalorder %s58, %s61
      %p67 = scmp.eq.s32.totalorder %s8, 0
      %p68 = por %p66, %p67
      %p69 = scmp.ne.s32.totalorder %s58, %s61
      %p70 = scmp.eq.s32.totalorder %s13, 3
      %p71 = por %p69, %p70
      %p72 = scmp.ne.s32.totalorder %s61, %s62
      %p73 = scmp.eq.s32.totalorder %s13, 0
      %p74 = por %p72, %p73
      %p75 = scmp.ne.s32.totalorder %s61, %s62
      %p76 = scmp.eq.s32.totalorder %s14, 3
      %p77 = por %p75, %p76
      %p79 = scmp.ne.s32.totalorder %s62, %s78
      %p80 = scmp.eq.s32.totalorder %s14, 0
      %p81 = por %p79, %p80
      %s82 = ssub.s32 %s16, %s23
      %s83 = ssub.s32 %s15, %s27
      %s84 = sor.u32 %s82, %s83
      %p85 = scmp.eq.s32.totalorder %s84, 0
      %s87 = sadd.s32 %s86, 1
      %s88 = scalar_select %p85, %s86, %s87
      %p91 = pneg %p85
      %p92 = scmp.eq.s32.totalorder %s8, 3
      %p93 = por %p91, %p92
      %p94 = scmp.ne.s32.totalorder %s86, %s89
      %p95 = scmp.eq.s32.totalorder %s8, 0
      %p96 = por %p94, %p95
      %p97 = scmp.ne.s32.totalorder %s86, %s89
      %p98 = scmp.eq.s32.totalorder %s13, 3
      %p99 = por %p97, %p98
      %p100 = scmp.ne.s32.totalorder %s89, %s90
      %p101 = scmp.eq.s32.totalorder %s13, 0
      %p102 = por %p100, %p101
      %p103 = scmp.ne.s32.totalorder %s89, %s90
      %p104 = scmp.eq.s32.totalorder %s14, 3
      %p105 = por %p103, %p104
      %p107 = scmp.ne.s32.totalorder %s90, %s106
      %p108 = scmp.eq.s32.totalorder %s14, 0
      %p109 = por %p107, %p108
      %p110 = scmp.le.s32.totalorder 1, %s8
      %p111 = scmp.lt.s32.totalorder %s8, 5
      %p112 = pnand %p110, %p111
      %p113 = pneg %p112
      // Predicated region
      $region9: #{swin_forward.30} parent=5 // pred_check
        _
      $region10: #{swin_forward.30} parent=5 // pred_check_branch
        %115 = sbr.rel (%p112) target = $region12
      $region11: #{swin_forward.30} parent=5 // pred_region
        %s116 = ssub.s32 %s8, 1
      $region12: #{swin_forward.30} parent=5 // pred_fallthru
        _
      %p117 = scmp.lt.s32.totalorder %s8, 4
      // Predicated region
      $region13: #{swin_forward.30} parent=5 // pred_check
        %p118 = pneg %p117
      $region14: #{swin_forward.30} parent=5 // pred_check_branch
        %120 = sbr.rel (%p118) target = $region16
      $region15: #{swin_forward.30} parent=5 // pred_region
        // Predicated region
        $region17: #{swin_forward.30} parent=15 // pred_check
          %p121 = pneg %p42
        $region18: #{swin_forward.30} parent=15 // pred_check_branch
          %123 = sbr.rel (%p121) target = $region20
        $region19: #{swin_forward.30} parent=15 // pred_region
          %s124 = sand.u32 %s32, 1
          %s125 = sand.u32 %s32, 1
          %s126 = smul.addr %s125, 48
          %s127 = scalar_lea.vmem [#allocation2], %s126
          %s128 = smul.u32 2, %s15
          %s129 = smul.addr %s128, 2
          %s130 = smul.addr %s16, 4
          %s131 = sadd.s32 %s129, %s130
          %s132 = smul.addr %s131, 4
          %s133 = scalar_lea.vmem %s0, %s132
          // Predicated region
          $region21: #{swin_forward.30} parent=19 // pred_check
            _
          $region22: #{swin_forward.30} parent=19 // pred_check_branch
            %135 = sbr.rel (0) target = $region24
          $region23: #{swin_forward.30} parent=19 // pred_region
            // Predicated region
            $region25: #{swin_forward.30} parent=23 // pred_check
              _
            $region26: #{swin_forward.30} parent=23 // pred_check_branch
              %137 = sbr.rel target = $region28
            $region27: #{swin_forward.30} parent=23 // pred_region
              // Predicated region
              $region40: #{swin_forward.30} parent=27 // pred_check
                _
              $region41: #{swin_forward.30} parent=27 // pred_check_branch
                %175 = sbr.rel (0) target = $region43
              $region42: #{swin_forward.30} parent=27 // pred_region
                loop: start=0, step=1, limit=1
                $region44: #{swin_forward.30} parent=42 // loop_pre_header
                  _
                $region45: #{swin_forward.30} parent=42 // loop_header
                  %s177 = sphi 0, %s181
                  %p178 = scmp.ge.s32.totalorder %s177, 1
                  %s182 = sphi %s133, %s133
                  %s183 = sphi %s127, %s127
                $region46: #{swin_forward.30} parent=42 // loop_header_branch
                  %180 = sbr.rel (%p178) target = $region50
                $region47: #{swin_forward.30} parent=42 // loop_body
                  _
                $region48: #{swin_forward.30} parent=42 // loop_footer
                  %s181 = sadd.s32 1, %s177
                $region49: #{swin_forward.30} parent=42 // loop_footer_branch
                  %176 = sbr.rel target = $region45
                $region50: #{swin_forward.30} parent=42 // loop_exit
                  _
                %s185 = ssub.s32 16, 1
                loop: start=0, step=1, limit=1
                $region51: #{swin_forward.30} parent=42 // loop_pre_header
                  _
                $region52: #{swin_forward.30} parent=42 // loop_header
                  %s187 = sphi 0, %s191
                  %p188 = scmp.ge.s32.totalorder %s187, 1
                  %s192 = sphi %s133, %s133
                  %s193 = sphi %s127, %s127
                $region53: #{swin_forward.30} parent=42 // loop_header_branch
                  %190 = sbr.rel (%p188) target = $region57
                $region54: #{swin_forward.30} parent=42 // loop_body
                  %v194 = vld [vmem:[%s192] sm:%s185]
                  %195 = vst [vmem:[%s193] sm:%s185] %v194
                  %v196 = vld [vmem:[%s192 + $0x4] sm:%s185]
                  %197 = vst [vmem:[%s193 + $0x4] sm:%s185] %v196
                  %v198 = vld [vmem:[%s192 + $0x8] sm:%s185]
                  %199 = vst [vmem:[%s193 + $0x8] sm:%s185] %v198
                  %v200 = vld [vmem:[%s192 + $0xc] sm:%s185]
                  %201 = vst [vmem:[%s193 + $0xc] sm:%s185] %v200
                  %v202 = vld [vmem:[%s192 + $0x40] sm:%s185]
                  %203 = vst [vmem:[%s193 + $0x10] sm:%s185] %v202
                  %v204 = vld [vmem:[%s192 + $0x44] sm:%s185]
                  %205 = vst [vmem:[%s193 + $0x14] sm:%s185] %v204
                  %v206 = vld [vmem:[%s192 + $0x48] sm:%s185]
                  %207 = vst [vmem:[%s193 + $0x18] sm:%s185] %v206
                  %v208 = vld [vmem:[%s192 + $0x4c] sm:%s185]
                  %209 = vst [vmem:[%s193 + $0x1c] sm:%s185] %v208
                  %v210 = vld [vmem:[%s192 + $0x80] sm:%s185]
                  %211 = vst [vmem:[%s193 + $0x20] sm:%s185] %v210
                  %v212 = vld [vmem:[%s192 + $0x84] sm:%s185]
                  %213 = vst [vmem:[%s193 + $0x24] sm:%s185] %v212
                  %v214 = vld [vmem:[%s192 + $0x88] sm:%s185]
                  %215 = vst [vmem:[%s193 + $0x28] sm:%s185] %v214
                  %v216 = vld [vmem:[%s192 + $0x8c] sm:%s185]
                  %217 = vst [vmem:[%s193 + $0x2c] sm:%s185] %v216
                $region55: #{swin_forward.30} parent=42 // loop_footer
                  %s191 = sadd.s32 1, %s187
                $region56: #{swin_forward.30} parent=42 // loop_footer_branch
                  %186 = sbr.rel target = $region52
                $region57: #{swin_forward.30} parent=42 // loop_exit
                  _
              $region43: #{swin_forward.30} parent=27 // pred_fallthru
                _
            $region28: #{swin_forward.30} parent=23 // pred_fallthru
              _
            // Predicated region
            $region29: #{swin_forward.30} parent=23 // pred_check
              _
            $region30: #{swin_forward.30} parent=23 // pred_check_branch
              %139 = sbr.rel (0) target = $region32
            $region31: #{swin_forward.30} parent=23 // pred_region
              %s141 = ssub.s32 16, 1
              loop: start=0, step=1, limit=1
              $region33: #{swin_forward.30} parent=31 // loop_pre_header
                _
              $region34: #{swin_forward.30} parent=31 // loop_header
                %s143 = sphi 0, %s147
                %p144 = scmp.ge.s32.totalorder %s143, 1
                %s148 = sphi %s133, %s133
                %s149 = sphi %s127, %s127
              $region35: #{swin_forward.30} parent=31 // loop_header_branch
                %146 = sbr.rel (%p144) target = $region39
              $region36: #{swin_forward.30} parent=31 // loop_body
                %v150 = vld [vmem:[%s148] sm:%s141]
                %151 = vst [vmem:[%s149] sm:%s141] %v150
                %v152 = vld [vmem:[%s148 + $0x4] sm:%s141]
                %153 = vst [vmem:[%s149 + $0x4] sm:%s141] %v152
                %v154 = vld [vmem:[%s148 + $0x8] sm:%s141]
                %155 = vst [vmem:[%s149 + $0x8] sm:%s141] %v154
                %v156 = vld [vmem:[%s148 + $0xc] sm:%s141]
                %157 = vst [vmem:[%s149 + $0xc] sm:%s141] %v156
                %v158 = vld [vmem:[%s148 + $0x40] sm:%s141]
                %159 = vst [vmem:[%s149 + $0x10] sm:%s141] %v158
                %v160 = vld [vmem:[%s148 + $0x44] sm:%s141]
                %161 = vst [vmem:[%s149 + $0x14] sm:%s141] %v160
                %v162 = vld [vmem:[%s148 + $0x48] sm:%s141]
                %163 = vst [vmem:[%s149 + $0x18] sm:%s141] %v162
                %v164 = vld [vmem:[%s148 + $0x4c] sm:%s141]
                %165 = vst [vmem:[%s149 + $0x1c] sm:%s141] %v164
                %v166 = vld [vmem:[%s148 + $0x80] sm:%s141]
                %167 = vst [vmem:[%s149 + $0x20] sm:%s141] %v166
                %v168 = vld [vmem:[%s148 + $0x84] sm:%s141]
                %169 = vst [vmem:[%s149 + $0x24] sm:%s141] %v168
                %v170 = vld [vmem:[%s148 + $0x88] sm:%s141]
                %171 = vst [vmem:[%s149 + $0x28] sm:%s141] %v170
                %v172 = vld [vmem:[%s148 + $0x8c] sm:%s141]
                %173 = vst [vmem:[%s149 + $0x2c] sm:%s141] %v172
              $region37: #{swin_forward.30} parent=31 // loop_footer
                %s147 = sadd.s32 1, %s143
              $region38: #{swin_forward.30} parent=31 // loop_footer_branch
                %142 = sbr.rel target = $region34
              $region39: #{swin_forward.30} parent=31 // loop_exit
                _
            $region32: #{swin_forward.30} parent=23 // pred_fallthru
              _
          $region24: #{swin_forward.30} parent=19 // pred_fallthru
            _
          %218 = vnop
        $region20: #{swin_forward.30} parent=15 // pred_fallthru
          _
        // Predicated region
        $region58: #{swin_forward.30} parent=15 // pred_check
          %p219 = pneg %p68
        $region59: #{swin_forward.30} parent=15 // pred_check_branch
          %221 = sbr.rel (%p219) target = $region61
        $region60: #{swin_forward.30} parent=15 // pred_region
          %p222 = scmp.lt.s32.totalorder %s16, 3
          %s223 = scalar_select %p222, %s16, 3
          %s224 = smul.addr %s223, 2
          %s225 = smul.addr %s224, 8
          %s226 = scalar_lea.vmem %s1, %s225
        $region61: #{swin_forward.30} parent=15 // pred_fallthru
          _
      $region16: #{swin_forward.30} parent=5 // pred_fallthru
        _
      %p227 = scmp.le.s32.totalorder 1, %s8
      %p228 = scmp.lt.s32.totalorder %s8, 5
      %p229 = pnand %p227, %p228
      %p230 = pneg %p229
      // Predicated region
      $region62: #{swin_forward.30} parent=5 // pred_check
        _
      $region63: #{swin_forward.30} parent=5 // pred_check_branch
        %232 = sbr.rel (%p229) target = $region65
      $region64: #{swin_forward.30} parent=5 // pred_region
        %s233 = ssub.s32 %s8, 1
        %s234 = sand.u32 %s35, 1
        %s235 = sand.u32 %s35, 1
        %s236 = smul.addr %s235, 48
        %s237 = scalar_lea.vmem [#allocation2], %s236
        // Predicated region
        $region66: #{swin_forward.30} parent=64 // pred_check
          %p238 = pneg %p48
        $region67: #{swin_forward.30} parent=64 // pred_check_branch
          %240 = sbr.rel (%p238) target = $region69
        $region68: #{swin_forward.30} parent=64 // pred_region
          _
        $region69: #{swin_forward.30} parent=64 // pred_fallthru
          _
        %s241 = sand.u32 %s35, 1
        %s242 = sand.u32 %s35, 1
        %s243 = smul.addr %s242, 48
        %s244 = scalar_lea.vmem [#allocation2], %s243
        %p245 = pneg %p48
        %p246 = pneg %p45
        %p247 = scmp.lt.s32.totalorder %s18, 3
        %s248 = scalar_select %p247, %s18, 3
        %s249 = smul.addr %s248, 2
        %s250 = smul.addr %s249, 8
        %s251 = scalar_lea.vmem %s1, %s250
        %p252 = pneg %p74
        %p253 = pneg %p71
        %p254 = pneg %p102
        %p255 = pneg %p99
        %s256 = smul.u32 2, %s17
        %p257 = scmp.lt.s32.totalorder %s18, 3
        %s258 = scalar_select %p257, %s18, 3
        %p259 = scmp.lt.s32.totalorder %s256, 1
        %s260 = scalar_select %p259, %s256, 1
        %s261 = smul.addr %s260, 2
        %s262 = smul.addr %s258, 4
        %s263 = sadd.s32 %s261, %s262
        %s264 = smul.addr %s263, 4
        %s265 = scalar_lea.vmem %s2, %s264
        %s266 = smul.u32 2, %s17
        %p267 = scmp.lt.s32.totalorder %s18, 3
        %s268 = scalar_select %p267, %s18, 3
        %s269 = smul.addr %s268, 2
        %s270 = smul.addr %s269, 8
        %s271 = scalar_lea.vmem %s1, %s270
        %s272 = smul.u32 2, %s17
        %p273 = scmp.lt.s32.totalorder %s18, 3
        %s274 = scalar_select %p273, %s18, 3
        %p275 = scmp.lt.s32.totalorder %s272, 1
        %s276 = scalar_select %p275, %s272, 1
        %s277 = smul.addr %s276, 2
        %s278 = smul.addr %s274, 4
        %s279 = sadd.s32 %s277, %s278
        %s280 = smul.addr %s279, 4
        %s281 = scalar_lea.vmem %s2, %s280
        %s282 = smul.u32 2, %s17
        %v284 = vld [vmem:[%s237] sm:$0xf]
        %v285 = vld [vmem:[%s237 + $0x4] sm:$0xf]
        %v286 = vld [vmem:[%s237 + $0x8] sm:$0xf]
        %v287 = vld [vmem:[%s237 + $0xc] sm:$0xf]
        %s288 = scalar_lea.vmem %s237, 16 [#allocation2]
        %v289 = vld [vmem:[%s288] sm:$0xf]
        %v290 = vld [vmem:[%s288 + $0x4] sm:$0xf]
        %v291 = vld [vmem:[%s288 + $0x8] sm:$0xf]
        %v292 = vld [vmem:[%s288 + $0xc] sm:$0xf]
        %s293 = scalar_lea.vmem %s237, 32 [#allocation2]
        %v294 = vld [vmem:[%s293] sm:$0xf]
        %v295 = vld [vmem:[%s293 + $0x4] sm:$0xf]
        %v296 = vld [vmem:[%s293 + $0x8] sm:$0xf]
        %v297 = vld [vmem:[%s293 + $0xc] sm:$0xf]
        %v300 = vunpack.c.l.b16 %v284
        %v301 = vunpack.c.l.b16 %v285
        %v302 = vpack.c.b16 %v301, %v300
        %v305 = vunpack.c.l.b16 %v289
        %v306 = vunpack.c.l.b16 %v290
        %v307 = vpack.c.b16 %v306, %v305
        %vm308 = vcmask 130048
        %v310 = vsel %vm308, %v302, 0
        %v313 = vsel %vm308, %v307, 0
        %315 = vmatprep.subr.bf16.mxu0 0
        %316 = vmatpush1.bf16.xpose.msra.mxu0 0
        %317 = vmatprep.subr.bf16.mxu0 0
        %318 = vmatpush1.bf16.xpose.msra.mxu0 0
        %319 = vmatprep.subr.bf16.mxu0 0
        %320 = vmatpush1.bf16.xpose.msra.mxu0 0
        %321 = vmatprep.subr.bf16.mxu0 0
        %322 = vmatpush1.bf16.xpose.msra.mxu0 0
        %323 = vmatprep.subr.bf16.mxu0 0
        %324 = vmatpush1.bf16.xpose.msra.mxu0 0
        %325 = vmatprep.subr.bf16.mxu0 0
        %326 = vmatpush1.bf16.xpose.msra.mxu0 0
        %327 = vmatprep.subr.bf16.mxu0 0
        %328 = vmatpush1.bf16.xpose.msra.mxu0 0
        %329 = vmatprep.subr.bf16.mxu0 0
        %330 = vmatpush1.bf16.xpose.msra.mxu0 %v313
        %331 = vmatprep.subr.bf16.mxu0 0
        %332 = vmatpush2.bf16.xpose.msra.mxu0 0
        %333 = vmatprep.subr.bf16.mxu0 0
        %334 = vmatpush2.bf16.xpose.msra.mxu0 0
        %335 = vmatprep.subr.bf16.mxu0 0
        %336 = vmatpush2.bf16.xpose.msra.mxu0 0
        %337 = vmatprep.subr.bf16.mxu0 0
        %338 = vmatpush2.bf16.xpose.msra.mxu0 0
        %339 = vmatprep.subr.bf16.mxu0 0
        %340 = vmatpush2.bf16.xpose.msra.mxu0 0
        %341 = vmatprep.subr.bf16.mxu0 0
        %342 = vmatpush2.bf16.xpose.msra.mxu0 0
        %343 = vmatprep.subr.bf16.mxu0 0
        %344 = vmatpush2.bf16.xpose.msra.mxu0 0
        %345 = vmatprep.subr.bf16.mxu0 0
        %346 = vmatpush2.bf16.xpose.msra.mxu0 0
        %347 = vmatprep.mubr.bf16.mxu0 0
        %348 = vmatmul.mubr.bf16.gmra.mxu0 %v310
        %v349 = vpop.f32.mrf.mxu0
        %v350 = vadd.f32 0.0, %v349
        %v351 = vpop.f32.mrf.mxu0
        %v352 = vpop.f32.mrf.mxu0
        %v353 = vadd.f32 0.0, %v352
        %v354 = vpop.f32.mrf.mxu0
        %355 = vdwg.mxu0
        %v358 = vunpack.c.l.b16 %v286
        %v359 = vunpack.c.l.b16 %v287
        %v360 = vpack.c.b16 %v359, %v358
        %v363 = vunpack.c.l.b16 %v291
        %v364 = vunpack.c.l.b16 %v292
        %v365 = vpack.c.b16 %v364, %v363
        %v367 = vsel %vm308, %v360, 0
        %v370 = vsel %vm308, %v365, 0
        %372 = vmatprep.subr.bf16.mxu0 0
        %373 = vmatpush1.bf16.xpose.msra.mxu0 0
        %374 = vmatprep.subr.bf16.mxu0 0
        %375 = vmatpush1.bf16.xpose.msra.mxu0 0
        %376 = vmatprep.subr.bf16.mxu0 0
        %377 = vmatpush1.bf16.xpose.msra.mxu0 0
        %378 = vmatprep.subr.bf16.mxu0 0
        %379 = vmatpush1.bf16.xpose.msra.mxu0 0
        %380 = vmatprep.subr.bf16.mxu0 0
        %381 = vmatpush1.bf16.xpose.msra.mxu0 0
        %382 = vmatprep.subr.bf16.mxu0 0
        %383 = vmatpush1.bf16.xpose.msra.mxu0 0
        %384 = vmatprep.subr.bf16.mxu0 0
        %385 = vmatpush1.bf16.xpose.msra.mxu0 0
        %386 = vmatprep.subr.bf16.mxu0 0
        %387 = vmatpush1.bf16.xpose.msra.mxu0 %v370
        %388 = vmatprep.subr.bf16.mxu0 0
        %389 = vmatpush2.bf16.xpose.msra.mxu0 0
        %390 = vmatprep.subr.bf16.mxu0 0
        %391 = vmatpush2.bf16.xpose.msra.mxu0 0
        %392 = vmatprep.subr.bf16.mxu0 0
        %393 = vmatpush2.bf16.xpose.msra.mxu0 0
        %394 = vmatprep.subr.bf16.mxu0 0
        %395 = vmatpush2.bf16.xpose.msra.mxu0 0
        %396 = vmatprep.subr.bf16.mxu0 0
        %397 = vmatpush2.bf16.xpose.msra.mxu0 0
        %398 = vmatprep.subr.bf16.mxu0 0
        %399 = vmatpush2.bf16.xpose.msra.mxu0 0
        %400 = vmatprep.subr.bf16.mxu0 0
        %401 = vmatpush2.bf16.xpose.msra.mxu0 0
        %402 = vmatprep.subr.bf16.mxu0 0
        %403 = vmatpush2.bf16.xpose.msra.mxu0 0
        %404 = vmatprep.mubr.bf16.mxu0 0
        %405 = vmatmul.mubr.bf16.gmra.mxu0 %v367
        %v406 = vpop.f32.mrf.mxu0
        %v407 = vadd.f32 0.0, %v406
        %v408 = vpop.f32.mrf.mxu0
        %v409 = vpop.f32.mrf.mxu0
        %v410 = vadd.f32 0.0, %v409
        %v411 = vpop.f32.mrf.mxu0
        %412 = vdwg.mxu0
        %v413 = vmul.f32 %v350, 0.25
        %v414 = vmul.f32 %v353, 0.25
        %v415 = vmul.f32 %v407, 0.25
        %v416 = vmul.f32 %v410, 0.25
        %v417 = vld [vmem:[%s271] sm:$0xff]
        %v418 = vld [vmem:[%s271 + $0x8] sm:$0xff]
        %v419 = vadd.f32 %v413, %v417
        %v420 = vadd.f32 %v414, %v418
        %v421 = vadd.f32 %v415, %v417
        %v422 = vadd.f32 %v416, %v418
        %v423 = vsel %vm308, %v419, -inf
        %424 = vmax.xlane.f32.xlu0 %v423
        %v425 = vpop.xlane.xlu0 %424
        %v426 = vsel %vm308, %v420, -inf
        %427 = vmax.xlane.f32.xlu0 %v426
        %v428 = vpop.xlane.xlu0 %427
        %v429 = vsel %vm308, %v421, -inf
        %430 = vmax.xlane.f32.xlu0 %v429
        %v431 = vpop.xlane.xlu0 %430
        %v432 = vsel %vm308, %v422, -inf
        %433 = vmax.xlane.f32.xlu0 %v432
        %v434 = vpop.xlane.xlu0 %433
        %v435 = vsub.f32 %v419, %v425
        %v436 = vsub.f32 %v420, %v428
        %v437 = vsub.f32 %v421, %v431
        %v438 = vsub.f32 %v422, %v434
        %v439 = vmul.f32 %v435, 1.442695
        %v440 = vpow.pop %v439
        %v441 = vmul.f32 %v436, 1.442695
        %v442 = vpow.pop %v441
        %v443 = vmul.f32 %v437, 1.442695
        %v444 = vpow.pop %v443
        %v445 = vmul.f32 %v438, 1.442695
        %v446 = vpow.pop %v445
        %v447 = vsel %vm308, %v440, 0.0
        %448 = vadd.xlane.f32.xlu0 %v447
        %v449 = vpop.xlane.xlu0 %448
        %v450 = vsel %vm308, %v442, 0.0
        %451 = vadd.xlane.f32.xlu0 %v450
        %v452 = vpop.xlane.xlu0 %451
        %v453 = vsel %vm308, %v444, 0.0
        %454 = vadd.xlane.f32.xlu0 %v453
        %v455 = vpop.xlane.xlu0 %454
        %v456 = vsel %vm308, %v446, 0.0
        %457 = vadd.xlane.f32.xlu0 %v456
        %v458 = vpop.xlane.xlu0 %457
        %v459 = vrcp.pop %v449
        %v460 = vrcp.pop %v452
        %v461 = vrcp.pop %v455
        %v462 = vrcp.pop %v458
        %v463 = vmul.f32 %v440, %v459
        %v464 = vmul.f32 %v442, %v460
        %v465 = vmul.f32 %v444, %v461
        %v466 = vmul.f32 %v446, %v462
        %v467 = vpack.c.bf16 %v464, %v463
        %v468 = vpack.c.bf16 %v466, %v465
        %v471 = vunpack.c.l.b16 %v294
        %v472 = vunpack.c.l.b16 %v295
        %v473 = vpack.c.b16 %v472, %v471
        %v476 = vsel %vm308, %v467, 0
        %478 = vmatprep.subr.bf16.mxu0 0
        %479 = vmatpush1.bf16.msra.mxu0 0
        %480 = vmatprep.subr.bf16.mxu0 0
        %481 = vmatpush1.bf16.msra.mxu0 0
        %482 = vmatprep.subr.bf16.mxu0 0
        %483 = vmatpush1.bf16.msra.mxu0 0
        %484 = vmatprep.subr.bf16.mxu0 0
        %485 = vmatpush1.bf16.msra.mxu0 0
        %486 = vmatprep.subr.bf16.mxu0 0
        %487 = vmatpush1.bf16.msra.mxu0 0
        %488 = vmatprep.subr.bf16.mxu0 0
        %489 = vmatpush1.bf16.msra.mxu0 0
        %490 = vmatprep.subr.bf16.mxu0 0
        %491 = vmatpush1.bf16.msra.mxu0 0
        %492 = vmatprep.subr.bf16.mxu0 0
        %493 = vmatpush1.bf16.msra.mxu0 %v473
        %494 = vmatprep.subr.bf16.mxu0 0
        %495 = vmatpush2.bf16.msra.mxu0 0
        %496 = vmatprep.subr.bf16.mxu0 0
        %497 = vmatpush2.bf16.msra.mxu0 0
        %498 = vmatprep.subr.bf16.mxu0 0
        %499 = vmatpush2.bf16.msra.mxu0 0
        %500 = vmatprep.subr.bf16.mxu0 0
        %501 = vmatpush2.bf16.msra.mxu0 0
        %502 = vmatprep.subr.bf16.mxu0 0
        %503 = vmatpush2.bf16.msra.mxu0 0
        %504 = vmatprep.subr.bf16.mxu0 0
        %505 = vmatpush2.bf16.msra.mxu0 0
        %506 = vmatprep.subr.bf16.mxu0 0
        %507 = vmatpush2.bf16.msra.mxu0 0
        %508 = vmatprep.subr.bf16.mxu0 0
        %509 = vmatpush2.bf16.msra.mxu0 0
        %510 = vmatprep.mubr.bf16.mxu0 0
        %511 = vmatmul.mubr.bf16.gmra.mxu0 %v476
        %v512 = vpop.f32.mrf.mxu0
        %v513 = vadd.f32 0.0, %v512
        %v514 = vpop.f32.mrf.mxu0
        %v515 = vpop.f32.mrf.mxu0
        %v516 = vadd.f32 0.0, %v515
        %v517 = vpop.f32.mrf.mxu0
        %518 = vdwg.mxu0
        %v521 = vunpack.c.l.b16 %v296
        %v522 = vunpack.c.l.b16 %v297
        %v523 = vpack.c.b16 %v522, %v521
        %v526 = vsel %vm308, %v468, 0
        %528 = vmatprep.subr.bf16.mxu0 0
        %529 = vmatpush1.bf16.msra.mxu0 0
        %530 = vmatprep.subr.bf16.mxu0 0
        %531 = vmatpush1.bf16.msra.mxu0 0
        %532 = vmatprep.subr.bf16.mxu0 0
        %533 = vmatpush1.bf16.msra.mxu0 0
        %534 = vmatprep.subr.bf16.mxu0 0
        %535 = vmatpush1.bf16.msra.mxu0 0
        %536 = vmatprep.subr.bf16.mxu0 0
        %537 = vmatpush1.bf16.msra.mxu0 0
        %538 = vmatprep.subr.bf16.mxu0 0
        %539 = vmatpush1.bf16.msra.mxu0 0
        %540 = vmatprep.subr.bf16.mxu0 0
        %541 = vmatpush1.bf16.msra.mxu0 0
        %542 = vmatprep.subr.bf16.mxu0 0
        %543 = vmatpush1.bf16.msra.mxu0 %v523
        %544 = vmatprep.subr.bf16.mxu0 0
        %545 = vmatpush2.bf16.msra.mxu0 0
        %546 = vmatprep.subr.bf16.mxu0 0
        %547 = vmatpush2.bf16.msra.mxu0 0
        %548 = vmatprep.subr.bf16.mxu0 0
        %549 = vmatpush2.bf16.msra.mxu0 0
        %550 = vmatprep.subr.bf16.mxu0 0
        %551 = vmatpush2.bf16.msra.mxu0 0
        %552 = vmatprep.subr.bf16.mxu0 0
        %553 = vmatpush2.bf16.msra.mxu0 0
        %554 = vmatprep.subr.bf16.mxu0 0
        %555 = vmatpush2.bf16.msra.mxu0 0
        %556 = vmatprep.subr.bf16.mxu0 0
        %557 = vmatpush2.bf16.msra.mxu0 0
        %558 = vmatprep.subr.bf16.mxu0 0
        %559 = vmatpush2.bf16.msra.mxu0 0
        %560 = vmatprep.mubr.bf16.mxu0 0
        %561 = vmatmul.mubr.bf16.gmra.mxu0 %v526
        %v562 = vpop.f32.mrf.mxu0
        %v563 = vadd.f32 0.0, %v562
        %v564 = vpop.f32.mrf.mxu0
        %v565 = vpop.f32.mrf.mxu0
        %v566 = vadd.f32 0.0, %v565
        %v567 = vpop.f32.mrf.mxu0
        %568 = vdwg.mxu0
        %v569 = vpack.c.bf16 %v516, %v513
        %v570 = vpack.c.bf16 %v566, %v563
        %v573 = vunpack.c.l.b16 %v569
        %v574 = vunpack.c.h.b16 %v569
        %v575 = vunpack.c.l.b16 %v570
        %v576 = vunpack.c.h.b16 %v570
        %v577 = vpack.c.b16 %v573, %v573
        %v578 = vpack.c.b16 %v574, %v574
        %v579 = vpack.c.b16 %v575, %v575
        %v580 = vpack.c.b16 %v576, %v576
        %vm585 = vcmask 125952
        %586 = vst.msk [vmem:[%s281] sm:$0xf] %vm585, %v577
        %587 = vst.msk [vmem:[%s281 + $0x4] sm:$0xf] %vm585, %v578
        %588 = vst.msk [vmem:[%s281 + $0x8] sm:$0xf] %vm585, %v579
        %589 = vst.msk [vmem:[%s281 + $0xc] sm:$0xf] %vm585, %v580
        %s590 = smul.u32 2, %s17
        %p591 = scmp.lt.s32.totalorder %s18, 3
        %s592 = scalar_select %p591, %s18, 3
        %p593 = scmp.lt.s32.totalorder %s590, 1
        %s594 = scalar_select %p593, %s590, 1
        %s595 = smul.addr %s594, 2
        %s596 = smul.addr %s592, 4
        %s597 = sadd.s32 %s595, %s596
        %s598 = smul.addr %s597, 4
        %s599 = scalar_lea.vmem %s2, %s598
        // Predicated region
        $region70: #{swin_forward.30} parent=64 // pred_check
          %p600 = pneg %p99
        $region71: #{swin_forward.30} parent=64 // pred_check_branch
          %602 = sbr.rel (%p600) target = $region73
        $region72: #{swin_forward.30} parent=64 // pred_region
          %s603 = smul.u32 2, %s17
        $region73: #{swin_forward.30} parent=64 // pred_fallthru
          _
      $region65: #{swin_forward.30} parent=5 // pred_fallthru
        _
      %p604 = scmp.le.s32.totalorder 2, %s8
      // Predicated region
      $region74: #{swin_forward.30} parent=5 // pred_check
        %p605 = pneg %p604
      $region75: #{swin_forward.30} parent=5 // pred_check_branch
        %607 = sbr.rel (%p605) target = $region77
      $region76: #{swin_forward.30} parent=5 // pred_region
        %s608 = ssub.s32 %s8, 2
        // Predicated region
        $region78: #{swin_forward.30} parent=76 // pred_check
          %p609 = pneg %p105
        $region79: #{swin_forward.30} parent=76 // pred_check_branch
          %611 = sbr.rel (%p609) target = $region81
        $region80: #{swin_forward.30} parent=76 // pred_region
          %s612 = smul.u32 2, %s19
          %p613 = scmp.lt.s32.totalorder %s20, 3
          %s614 = scalar_select %p613, %s20, 3
          %p615 = scmp.lt.s32.totalorder %s612, 1
          %s616 = scalar_select %p615, %s612, 1
          %s617 = smul.addr %s616, 2
          %s618 = smul.addr %s614, 4
          %s619 = sadd.s32 %s617, %s618
          %s620 = smul.addr %s619, 4
          %s621 = scalar_lea.vmem %s2, %s620
        $region81: #{swin_forward.30} parent=76 // pred_fallthru
          _
      $region77: #{swin_forward.30} parent=5 // pred_fallthru
        _
    $region6: #{swin_forward.30} parent=1 // loop_footer
      %s12 = sadd.s32 1, %s8
    $region7: #{swin_forward.30} parent=1 // loop_footer_branch
      %7 = sbr.rel target = $region3
    $region8: #{swin_forward.30} parent=1 // loop_exit
      _

// kernel: swin_forward.31
$region0: #{swin_forward.31}
  #allocation0 [shape = 'u32[]', space=smem, size = 0x4, offset = 0x4, fixed_abs, tag = 'smem constant byte address 0x4 - core index']
  #allocation1 [shape = 'u32[144,128]{1,0:T(1,128)}', space=vmem, size = 0x12000, scoped, tag = 'internal scratch']
  %s0 = inlined_call_operand.vmem [shape: bf16[32,64], index: 0, kind: input, shape index: {}]
  %s1 = inlined_call_operand.vmem [shape: f32[32,64], index: 1, kind: input, shape index: {}]
  %s2 = inlined_call_operand.vmem [shape: bf16[64,64], index: 2, kind: input, shape index: {}]
  %s3 = inlined_call_operand.vmem [shape: f32[1,64], index: 3, kind: input, shape index: {}]
  %s4 = inlined_call_operand.vmem [shape: f32[32,64], index: 4, kind: output, shape index: {}]
  %s5 = sld [smem:[#allocation0]]
  $region26: #{swin_forward.31} parent=0
    _
  %s7 = ssub.s32 1, %s5
  %s8 = scalar_select 0, %s7, %s5
  // Predicated region
  $region2: #{swin_forward.31} parent=0 // pred_check
    _
  $region3: #{swin_forward.31} parent=0 // pred_check_branch
    %10 = sbr.rel (0) target = $region5
  $region4: #{swin_forward.31} parent=0 // pred_region
    _
  $region5: #{swin_forward.31} parent=0 // pred_fallthru
    _
  // Predicated region
  $region6: #{swin_forward.31} parent=0 // pred_check
    _
  $region7: #{swin_forward.31} parent=0 // pred_check_branch
    %12 = sbr.rel (0) target = $region9
  $region8: #{swin_forward.31} parent=0 // pred_region
    _
  $region9: #{swin_forward.31} parent=0 // pred_fallthru
    _
  // Predicated region
  $region10: #{swin_forward.31} parent=0 // pred_check
    _
  $region11: #{swin_forward.31} parent=0 // pred_check_branch
    %14 = sbr.rel (0) target = $region13
  $region12: #{swin_forward.31} parent=0 // pred_region
    _
  $region13: #{swin_forward.31} parent=0 // pred_fallthru
    _
  // Predicated region
  $region14: #{swin_forward.31} parent=0 // pred_check
    _
  $region15: #{swin_forward.31} parent=0 // pred_check_branch
    %16 = sbr.rel (0) target = $region17
  $region16: #{swin_forward.31} parent=0 // pred_region
    _
  $region17: #{swin_forward.31} parent=0 // pred_fallthru
    _
  %v18 = vld [vmem:[%s0] sm:$0xf]
  %v19 = vld [vmem:[%s0 + $0x4] sm:$0xf]
  %v20 = vld [vmem:[%s0 + $0x8] sm:$0xf]
  %v21 = vld [vmem:[%s0 + $0xc] sm:$0xf]
  %v22 = vld [vmem:[%s2] sm:$0xf]
  %v23 = vld [vmem:[%s2 + $0x4] sm:$0xf]
  %v24 = vld [vmem:[%s2 + $0x8] sm:$0xf]
  %v25 = vld [vmem:[%s2 + $0xc] sm:$0xf]
  %v26 = vld [vmem:[%s2 + $0x10] sm:$0xf]
  %v27 = vld [vmem:[%s2 + $0x14] sm:$0xf]
  %v28 = vld [vmem:[%s2 + $0x18] sm:$0xf]
  %v29 = vld [vmem:[%s2 + $0x1c] sm:$0xf]
  %v30 = vld [vmem:[%s3] sm:$0x1]
  %v32 = vlaneseq
  %v33 = vshrl.u32 %v32, 7
  %v34 = vsub.s32 0, %v33
  %v35 = vrot.slane %v30, %v34
  %v41 = vunpack.c.l.b16 %v18
  %v42 = vunpack.c.l.b16 %v19
  %v43 = vunpack.c.l.b16 %v20
  %v44 = vunpack.c.l.b16 %v21
  %v45 = vpack.c.b16 %v42, %v41
  %v46 = vpack.c.b16 %v44, %v43
  %v55 = vunpack.c.l.b16 %v22
  %v56 = vunpack.c.l.b16 %v23
  %v57 = vunpack.c.l.b16 %v24
  %v58 = vunpack.c.l.b16 %v25
  %v59 = vunpack.c.l.b16 %v26
  %v60 = vunpack.c.l.b16 %v27
  %v61 = vunpack.c.l.b16 %v28
  %v62 = vunpack.c.l.b16 %v29
  %v63 = vpack.c.b16 %v56, %v55
  %v64 = vpack.c.b16 %v58, %v57
  %v65 = vpack.c.b16 %v60, %v59
  %v66 = vpack.c.b16 %v62, %v61
  %vm71 = vcmask 523264
  %v73 = vsel %vm71, %v45, 0
  %v76 = vsel %vm71, %v46, 0
  %78 = vmatprep.subr.bf16.mxu0 0
  %79 = vmatpush1.bf16.msra.mxu0 0
  %80 = vmatprep.subr.bf16.mxu0 0
  %81 = vmatpush1.bf16.msra.mxu0 0
  %82 = vmatprep.subr.bf16.mxu0 0
  %83 = vmatpush1.bf16.msra.mxu0 0
  %84 = vmatprep.subr.bf16.mxu0 0
  %85 = vmatpush1.bf16.msra.mxu0 0
  %86 = vmatprep.subr.bf16.mxu0 0
  %87 = vmatpush1.bf16.msra.mxu0 %v66
  %88 = vmatprep.subr.bf16.mxu0 0
  %89 = vmatpush1.bf16.msra.mxu0 %v65
  %90 = vmatprep.subr.bf16.mxu0 0
  %91 = vmatpush1.bf16.msra.mxu0 %v64
  %92 = vmatprep.subr.bf16.mxu0 0
  %93 = vmatpush1.bf16.msra.mxu0 %v63
  %94 = vmatprep.subr.bf16.mxu0 0
  %95 = vmatpush2.bf16.msra.mxu0 0
  %96 = vmatprep.subr.bf16.mxu0 0
  %97 = vmatpush2.bf16.msra.mxu0 0
  %98 = vmatprep.subr.bf16.mxu0 0
  %99 = vmatpush2.bf16.msra.mxu0 0
  %100 = vmatprep.subr.bf16.mxu0 0
  %101 = vmatpush2.bf16.msra.mxu0 0
  %102 = vmatprep.subr.bf16.mxu0 0
  %103 = vmatpush2.bf16.msra.mxu0 0
  %104 = vmatprep.subr.bf16.mxu0 0
  %105 = vmatpush2.bf16.msra.mxu0 0
  %106 = vmatprep.subr.bf16.mxu0 0
  %107 = vmatpush2.bf16.msra.mxu0 0
  %108 = vmatprep.subr.bf16.mxu0 0
  %109 = vmatpush2.bf16.msra.mxu0 0
  %110 = vmatprep.mubr.bf16.mxu0 0
  %111 = vmatmul.mubr.bf16.gmra.mxu0 %v73
  %v112 = vpop.f32.mrf.mxu0
  %v113 = vadd.f32 %v35, %v112
  %v114 = vpop.f32.mrf.mxu0
  %v115 = vpop.f32.mrf.mxu0
  %v116 = vadd.f32 %v35, %v115
  %v117 = vpop.f32.mrf.mxu0
  %118 = vmatprep.mubr.bf16.mxu0 0
  %119 = vmatmul.mubr.bf16.gmra.mxu0 %v76
  %v120 = vpop.f32.mrf.mxu0
  %v121 = vadd.f32 %v35, %v120
  %v122 = vpop.f32.mrf.mxu0
  %v123 = vpop.f32.mrf.mxu0
  %v124 = vadd.f32 %v35, %v123
  %v125 = vpop.f32.mrf.mxu0
  %126 = vdwg.mxu0
  %v127 = vld [vmem:[%s1] sm:$0xff]
  %v128 = vld [vmem:[%s1 + $0x8] sm:$0xff]
  %v129 = vld [vmem:[%s1 + $0x10] sm:$0xff]
  %v130 = vld [vmem:[%s1 + $0x18] sm:$0xff]
  %v131 = vadd.f32 %v127, %v113
  %v132 = vadd.f32 %v128, %v116
  %v133 = vadd.f32 %v129, %v121
  %v134 = vadd.f32 %v130, %v124
  %135 = vst.msk [vmem:[%s4] sm:$0xff] %vm71, %v131
  %136 = vst.msk [vmem:[%s4 + $0x8] sm:$0xff] %vm71, %v132
  %137 = vst.msk [vmem:[%s4 + $0x10] sm:$0xff] %vm71, %v133
  %138 = vst.msk [vmem:[%s4 + $0x18] sm:$0xff] %vm71, %v134
  // Predicated region
  $region18: #{swin_forward.31} parent=0 // pred_check
    _
  $region19: #{swin_forward.31} parent=0 // pred_check_branch
    %140 = sbr.rel (0) target = $region21
  $region20: #{swin_forward.31} parent=0 // pred_region
    _
  $region21: #{swin_forward.31} parent=0 // pred_fallthru
    _
  // Predicated region
  $region22: #{swin_forward.31} parent=0 // pred_check
    _
  $region23: #{swin_forward.31} parent=0 // pred_check_branch
    %142 = sbr.rel (0) target = $region25
  $region24: #{swin_forward.31} parent=0 // pred_region
    _
  $region25: #{swin_forward.31} parent=0 // pred_fallthru
    _

// kernel: swin_forward.32
$region0: #{swin_forward.32}
  #allocation0 [shape = 'u32[]', space=smem, size = 0x4, offset = 0x4, fixed_abs, tag = 'smem constant byte address 0x4 - core index']
  #allocation1 [shape = 'u32[144,128]{1,0:T(1,128)}', space=vmem, size = 0x12000, scoped, tag = 'internal scratch']
  #allocation2 [shape = 'f32[32,64]{1,0:T(8,128)}', space=vmem, size = 0x4000, scoped, tag = 'scratch operand']
  %s0 = inlined_call_operand.vmem [shape: f32[32,64], index: 0, kind: input, shape index: {}]
  %s1 = inlined_call_operand.vmem [shape: f32[1,64], index: 1, kind: input, shape index: {}]
  %s2 = inlined_call_operand.vmem [shape: f32[1,64], index: 2, kind: input, shape index: {}]
  %s3 = inlined_call_operand.vmem [shape: bf16[64,256], index: 3, kind: input, shape index: {}]
  %s4 = inlined_call_operand.vmem [shape: f32[1,256], index: 4, kind: input, shape index: {}]
  %s5 = inlined_call_operand.vmem [shape: bf16[256,64], index: 5, kind: input, shape index: {}]
  %s6 = inlined_call_operand.vmem [shape: f32[1,64], index: 6, kind: input, shape index: {}]
  %s7 = inlined_call_operand.vmem [shape: f32[32,64], index: 7, kind: output, shape index: {}]
  %s8 = sld [smem:[#allocation0]]
  $region46: #{swin_forward.32} parent=0
    _
  %s10 = ssub.s32 1, %s8
  %s11 = scalar_select 0, %s10, %s8
  // Predicated region
  $region2: #{swin_forward.32} parent=0 // pred_check
    _
  $region3: #{swin_forward.32} parent=0 // pred_check_branch
    %13 = sbr.rel (0) target = $region5
  $region4: #{swin_forward.32} parent=0 // pred_region
    _
  $region5: #{swin_forward.32} parent=0 // pred_fallthru
    _
  // Predicated region
  $region6: #{swin_forward.32} parent=0 // pred_check
    _
  $region7: #{swin_forward.32} parent=0 // pred_check_branch
    %15 = sbr.rel (0) target = $region9
  $region8: #{swin_forward.32} parent=0 // pred_region
    _
  $region9: #{swin_forward.32} parent=0 // pred_fallthru
    _
  // Predicated region
  $region10: #{swin_forward.32} parent=0 // pred_check
    _
  $region11: #{swin_forward.32} parent=0 // pred_check_branch
    %17 = sbr.rel (0) target = $region13
  $region12: #{swin_forward.32} parent=0 // pred_region
    _
  $region13: #{swin_forward.32} parent=0 // pred_fallthru
    _
  // Predicated region
  $region14: #{swin_forward.32} parent=0 // pred_check
    _
  $region15: #{swin_forward.32} parent=0 // pred_check_branch
    %19 = sbr.rel (0) target = $region17
  $region16: #{swin_forward.32} parent=0 // pred_region
    _
  $region17: #{swin_forward.32} parent=0 // pred_fallthru
    _
  // Predicated region
  $region18: #{swin_forward.32} parent=0 // pred_check
    _
  $region19: #{swin_forward.32} parent=0 // pred_check_branch
    %21 = sbr.rel (0) target = $region21
  $region20: #{swin_forward.32} parent=0 // pred_region
    _
  $region21: #{swin_forward.32} parent=0 // pred_fallthru
    _
  // Predicated region
  $region22: #{swin_forward.32} parent=0 // pred_check
    _
  $region23: #{swin_forward.32} parent=0 // pred_check_branch
    %23 = sbr.rel (0) target = $region25
  $region24: #{swin_forward.32} parent=0 // pred_region
    _
  $region25: #{swin_forward.32} parent=0 // pred_fallthru
    _
  // Predicated region
  $region26: #{swin_forward.32} parent=0 // pred_check
    _
  $region27: #{swin_forward.32} parent=0 // pred_check_branch
    %25 = sbr.rel (0) target = $region29
  $region28: #{swin_forward.32} parent=0 // pred_region
    _
  $region29: #{swin_forward.32} parent=0 // pred_fallthru
    _
  %v27 = vld [vmem:[%s0] sm:$0xff]
  %v28 = vld [vmem:[%s0 + $0x8] sm:$0xff]
  %v29 = vld [vmem:[%s0 + $0x10] sm:$0xff]
  %v30 = vld [vmem:[%s0 + $0x18] sm:$0xff]
  %vm31 = vcmask 523264
  %v32 = vsel %vm31, %v27, 0.0
  %33 = vadd.xlane.f32.xlu0 %v32
  %v34 = vpop.xlane.xlu0 %33
  %v35 = vsel %vm31, %v28, 0.0
  %36 = vadd.xlane.f32.xlu0 %v35
  %v37 = vpop.xlane.xlu0 %36
  %v38 = vsel %vm31, %v29, 0.0
  %39 = vadd.xlane.f32.xlu0 %v38
  %v40 = vpop.xlane.xlu0 %39
  %v41 = vsel %vm31, %v30, 0.0
  %42 = vadd.xlane.f32.xlu0 %v41
  %v43 = vpop.xlane.xlu0 %42
  %v44 = vrcp.pop 64.0
  %v45 = vmul.f32 %v34, %v44
  %v46 = vmul.f32 %v37, %v44
  %v47 = vmul.f32 %v40, %v44
  %v48 = vmul.f32 %v43, %v44
  %v49 = vsub.f32 %v27, %v45
  %v50 = vsub.f32 %v28, %v46
  %v51 = vsub.f32 %v29, %v47
  %v52 = vsub.f32 %v30, %v48
  %v53 = vmul.f32 %v49, %v49
  %v54 = vmul.f32 %v50, %v50
  %v55 = vmul.f32 %v51, %v51
  %v56 = vmul.f32 %v52, %v52
  %v57 = vsel %vm31, %v53, 0.0
  %58 = vadd.xlane.f32.xlu0 %v57
  %v59 = vpop.xlane.xlu0 %58
  %v60 = vsel %vm31, %v54, 0.0
  %61 = vadd.xlane.f32.xlu0 %v60
  %v62 = vpop.xlane.xlu0 %61
  %v63 = vsel %vm31, %v55, 0.0
  %64 = vadd.xlane.f32.xlu0 %v63
  %v65 = vpop.xlane.xlu0 %64
  %v66 = vsel %vm31, %v56, 0.0
  %67 = vadd.xlane.f32.xlu0 %v66
  %v68 = vpop.xlane.xlu0 %67
  %v69 = vmul.f32 %v59, %v44
  %v70 = vmul.f32 %v62, %v44
  %v71 = vmul.f32 %v65, %v44
  %v72 = vmul.f32 %v68, %v44
  %v73 = vadd.f32 %v69, 1e-05
  %v74 = vadd.f32 %v70, 1e-05
  %v75 = vadd.f32 %v71, 1e-05
  %v76 = vadd.f32 %v72, 1e-05
  %v77 = vrsqrt.pop %v73
  %v78 = vrsqrt.pop %v74
  %v79 = vrsqrt.pop %v75
  %v80 = vrsqrt.pop %v76
  %v81 = vmul.f32 %v49, %v77
  %v82 = vmul.f32 %v50, %v78
  %v83 = vmul.f32 %v51, %v79
  %v84 = vmul.f32 %v52, %v80
  %v85 = vld [vmem:[%s1] sm:$0x1]
  %v87 = vlaneseq
  %v88 = vshrl.u32 %v87, 7
  %v89 = vsub.s32 0, %v88
  %v90 = vrot.slane %v85, %v89
  %v92 = vmul.f32 %v81, %v90
  %v93 = vmul.f32 %v82, %v90
  %v94 = vmul.f32 %v83, %v90
  %v95 = vmul.f32 %v84, %v90
  %v96 = vld [vmem:[%s2] sm:$0x1]
  %v98 = vlaneseq
  %v99 = vshrl.u32 %v98, 7
  %v100 = vsub.s32 0, %v99
  %v101 = vrot.slane %v96, %v100
  %v103 = vadd.f32 %v92, %v101
  %v104 = vadd.f32 %v93, %v101
  %v105 = vadd.f32 %v94, %v101
  %v106 = vadd.f32 %v95, %v101
  %v107 = vpack.c.bf16 %v104, %v103
  %v108 = vpack.c.bf16 %v106, %v105
  %v109 = vld [vmem:[%s3] sm:$0xff]
  %v110 = vld [vmem:[%s3 + $0x8] sm:$0xff]
  %v111 = vld [vmem:[%s3 + $0x10] sm:$0xff]
  %v112 = vld [vmem:[%s3 + $0x18] sm:$0xff]
  %v113 = vld [vmem:[%s3 + $0x20] sm:$0xff]
  %v114 = vld [vmem:[%s3 + $0x28] sm:$0xff]
  %v115 = vld [vmem:[%s3 + $0x30] sm:$0xff]
  %v116 = vld [vmem:[%s3 + $0x38] sm:$0xff]
  %v117 = vld [vmem:[%s4] sm:$0x3]
  %v119 = vlaneseq
  %v120 = vshrl.u32 %v119, 7
  %v121 = vsub.s32 0, %v120
  %v122 = vrot.slane %v117, %v121
  %v123 = vlaneseq
  %v124 = vshrl.u32 %v123, 7
  %v125 = vsub.s32 1, %v124
  %v126 = vrot.slane %v117, %v125
  %v137 = vunpack.c.l.b16 %v109
  %v138 = vunpack.c.h.b16 %v109
  %v139 = vunpack.c.l.b16 %v110
  %v140 = vunpack.c.h.b16 %v110
  %v141 = vunpack.c.l.b16 %v111
  %v142 = vunpack.c.h.b16 %v111
  %v143 = vunpack.c.l.b16 %v112
  %v144 = vunpack.c.h.b16 %v112
  %v145 = vunpack.c.l.b16 %v113
  %v146 = vunpack.c.h.b16 %v113
  %v147 = vunpack.c.l.b16 %v114
  %v148 = vunpack.c.h.b16 %v114
  %v149 = vunpack.c.l.b16 %v115
  %v150 = vunpack.c.h.b16 %v115
  %v151 = vunpack.c.l.b16 %v116
  %v152 = vunpack.c.h.b16 %v116
  %v153 = vpack.c.b16 %v139, %v137
  %v154 = vpack.c.b16 %v140, %v138
  %v155 = vpack.c.b16 %v143, %v141
  %v156 = vpack.c.b16 %v144, %v142
  %v157 = vpack.c.b16 %v147, %v145
  %v158 = vpack.c.b16 %v148, %v146
  %v159 = vpack.c.b16 %v151, %v149
  %v160 = vpack.c.b16 %v152, %v150
  %v170 = vsel %vm31, %v107, 0
  %v173 = vsel %vm31, %v108, 0
  %175 = vmatprep.subr.bf16.mxu0 0
  %176 = vmatpush1.bf16.msra.mxu0 0
  %177 = vmatprep.subr.bf16.mxu0 0
  %178 = vmatpush1.bf16.msra.mxu0 0
  %179 = vmatprep.subr.bf16.mxu0 0
  %180 = vmatpush1.bf16.msra.mxu0 0
  %181 = vmatprep.subr.bf16.mxu0 0
  %182 = vmatpush1.bf16.msra.mxu0 0
  %183 = vmatprep.subr.bf16.mxu0 %v160
  %184 = vmatpush1.bf16.msra.mxu0 %v159
  %185 = vmatprep.subr.bf16.mxu0 %v158
  %186 = vmatpush1.bf16.msra.mxu0 %v157
  %187 = vmatprep.subr.bf16.mxu0 %v156
  %188 = vmatpush1.bf16.msra.mxu0 %v155
  %189 = vmatprep.subr.bf16.mxu0 %v154
  %190 = vmatpush1.bf16.msra.mxu0 %v153
  %191 = vmatprep.subr.bf16.mxu0 0
  %192 = vmatpush2.bf16.msra.mxu0 0
  %193 = vmatprep.subr.bf16.mxu0 0
  %194 = vmatpush2.bf16.msra.mxu0 0
  %195 = vmatprep.subr.bf16.mxu0 0
  %196 = vmatpush2.bf16.msra.mxu0 0
  %197 = vmatprep.subr.bf16.mxu0 0
  %198 = vmatpush2.bf16.msra.mxu0 0
  %199 = vmatprep.subr.bf16.mxu0 0
  %200 = vmatpush2.bf16.msra.mxu0 0
  %201 = vmatprep.subr.bf16.mxu0 0
  %202 = vmatpush2.bf16.msra.mxu0 0
  %203 = vmatprep.subr.bf16.mxu0 0
  %204 = vmatpush2.bf16.msra.mxu0 0
  %205 = vmatprep.subr.bf16.mxu0 0
  %206 = vmatpush2.bf16.msra.mxu0 0
  %207 = vmatprep.mubr.bf16.mxu0 0
  %208 = vmatmul.mubr.bf16.gmra.mxu0 %v170
  %v209 = vpop.f32.mrf.mxu0
  %v210 = vadd.f32 %v122, %v209
  %v211 = vpop.f32.mrf.mxu0
  %v212 = vadd.f32 %v126, %v211
  %v213 = vpop.f32.mrf.mxu0
  %v214 = vadd.f32 %v122, %v213
  %v215 = vpop.f32.mrf.mxu0
  %v216 = vadd.f32 %v126, %v215
  %217 = vmatprep.mubr.bf16.mxu0 0
  %218 = vmatmul.mubr.bf16.gmra.mxu0 %v173
  %v219 = vpop.f32.mrf.mxu0
  %v220 = vadd.f32 %v122, %v219
  %v221 = vpop.f32.mrf.mxu0
  %v222 = vadd.f32 %v126, %v221
  %v223 = vpop.f32.mrf.mxu0
  %v224 = vadd.f32 %v122, %v223
  %v225 = vpop.f32.mrf.mxu0
  %v226 = vadd.f32 %v126, %v225
  %227 = vdwg.mxu0
  %v228 = vmul.f32 %v210, 0.5
  %v229 = vmul.f32 %v212, 0.5
  %v230 = vmul.f32 %v214, 0.5
  %v231 = vmul.f32 %v216, 0.5
  %v232 = vmul.f32 %v220, 0.5
  %v233 = vmul.f32 %v222, 0.5
  %v234 = vmul.f32 %v224, 0.5
  %v235 = vmul.f32 %v226, 0.5
  %v236 = vmul.f32 %v210, 0.70710677
  %v237 = vmul.f32 %v212, 0.70710677
  %v238 = vmul.f32 %v214, 0.70710677
  %v239 = vmul.f32 %v216, 0.70710677
  %v240 = vmul.f32 %v220, 0.70710677
  %v241 = vmul.f32 %v222, 0.70710677
  %v242 = vmul.f32 %v224, 0.70710677
  %v243 = vmul.f32 %v226, 0.70710677
  %v244 = verf.f32.pop %v236
  %v245 = verf.f32.pop %v237
  %v246 = verf.f32.pop %v238
  %v247 = verf.f32.pop %v239
  %v248 = verf.f32.pop %v240
  %v249 = verf.f32.pop %v241
  %v250 = verf.f32.pop %v242
  %v251 = verf.f32.pop %v243
  %v252 = vadd.f32 %v244, 1.0
  %v253 = vadd.f32 %v245, 1.0
  %v254 = vadd.f32 %v246, 1.0
  %v255 = vadd.f32 %v247, 1.0
  %v256 = vadd.f32 %v248, 1.0
  %v257 = vadd.f32 %v249, 1.0
  %v258 = vadd.f32 %v250, 1.0
  %v259 = vadd.f32 %v251, 1.0
  %v260 = vmul.f32 %v228, %v252
  %v261 = vmul.f32 %v229, %v253
  %v262 = vmul.f32 %v230, %v254
  %v263 = vmul.f32 %v231, %v255
  %v264 = vmul.f32 %v232, %v256
  %v265 = vmul.f32 %v233, %v257
  %v266 = vmul.f32 %v234, %v258
  %v267 = vmul.f32 %v235, %v259
  %v268 = vpack.c.bf16 %v262, %v260
  %v269 = vpack.c.bf16 %v263, %v261
  %v270 = vpack.c.bf16 %v266, %v264
  %v271 = vpack.c.bf16 %v267, %v265
  %v272 = vld [vmem:[%s5] sm:$0xf]
  %v273 = vld [vmem:[%s5 + $0x4] sm:$0xf]
  %v274 = vld [vmem:[%s5 + $0x8] sm:$0xf]
  %v275 = vld [vmem:[%s5 + $0xc] sm:$0xf]
  %v276 = vld [vmem:[%s5 + $0x10] sm:$0xf]
  %v277 = vld [vmem:[%s5 + $0x14] sm:$0xf]
  %v278 = vld [vmem:[%s5 + $0x18] sm:$0xf]
  %v279 = vld [vmem:[%s5 + $0x1c] sm:$0xf]
  %v280 = vld [vmem:[%s5 + $0x20] sm:$0xf]
  %v281 = vld [vmem:[%s5 + $0x24] sm:$0xf]
  %v282 = vld [vmem:[%s5 + $0x28] sm:$0xf]
  %v283 = vld [vmem:[%s5 + $0x2c] sm:$0xf]
  %v284 = vld [vmem:[%s5 + $0x30] sm:$0xf]
  %v285 = vld [vmem:[%s5 + $0x34] sm:$0xf]
  %v286 = vld [vmem:[%s5 + $0x38] sm:$0xf]
  %v287 = vld [vmem:[%s5 + $0x3c] sm:$0xf]
  %v288 = vld [vmem:[%s5 + $0x40] sm:$0xf]
  %v289 = vld [vmem:[%s5 + $0x44] sm:$0xf]
  %v290 = vld [vmem:[%s5 + $0x48] sm:$0xf]
  %v291 = vld [vmem:[%s5 + $0x4c] sm:$0xf]
  %v292 = vld [vmem:[%s5 + $0x50] sm:$0xf]
  %v293 = vld [vmem:[%s5 + $0x54] sm:$0xf]
  %v294 = vld [vmem:[%s5 + $0x58] sm:$0xf]
  %v295 = vld [vmem:[%s5 + $0x5c] sm:$0xf]
  %v296 = vld [vmem:[%s5 + $0x60] sm:$0xf]
  %v297 = vld [vmem:[%s5 + $0x64] sm:$0xf]
  %v298 = vld [vmem:[%s5 + $0x68] sm:$0xf]
  %v299 = vld [vmem:[%s5 + $0x6c] sm:$0xf]
  %v300 = vld [vmem:[%s5 + $0x70] sm:$0xf]
  %v301 = vld [vmem:[%s5 + $0x74] sm:$0xf]
  %v302 = vld [vmem:[%s5 + $0x78] sm:$0xf]
  %v303 = vld [vmem:[%s5 + $0x7c] sm:$0xf]
  %v336 = vunpack.c.l.b16 %v272
  %v337 = vunpack.c.l.b16 %v273
  %v338 = vunpack.c.l.b16 %v274
  %v339 = vunpack.c.l.b16 %v275
  %v340 = vunpack.c.l.b16 %v276
  %v341 = vunpack.c.l.b16 %v277
  %v342 = vunpack.c.l.b16 %v278
  %v343 = vunpack.c.l.b16 %v279
  %v344 = vunpack.c.l.b16 %v280
  %v345 = vunpack.c.l.b16 %v281
  %v346 = vunpack.c.l.b16 %v282
  %v347 = vunpack.c.l.b16 %v283
  %v348 = vunpack.c.l.b16 %v284
  %v349 = vunpack.c.l.b16 %v285
  %v350 = vunpack.c.l.b16 %v286
  %v351 = vunpack.c.l.b16 %v287
  %v352 = vunpack.c.l.b16 %v288
  %v353 = vunpack.c.l.b16 %v289
  %v354 = vunpack.c.l.b16 %v290
  %v355 = vunpack.c.l.b16 %v291
  %v356 = vunpack.c.l.b16 %v292
  %v357 = vunpack.c.l.b16 %v293
  %v358 = vunpack.c.l.b16 %v294
  %v359 = vunpack.c.l.b16 %v295
  %v360 = vunpack.c.l.b16 %v296
  %v361 = vunpack.c.l.b16 %v297
  %v362 = vunpack.c.l.b16 %v298
  %v363 = vunpack.c.l.b16 %v299
  %v364 = vunpack.c.l.b16 %v300
  %v365 = vunpack.c.l.b16 %v301
  %v366 = vunpack.c.l.b16 %v302
  %v367 = vunpack.c.l.b16 %v303
  %v368 = vpack.c.b16 %v337, %v336
  %v369 = vpack.c.b16 %v339, %v338
  %v370 = vpack.c.b16 %v341, %v340
  %v371 = vpack.c.b16 %v343, %v342
  %v372 = vpack.c.b16 %v345, %v344
  %v373 = vpack.c.b16 %v347, %v346
  %v374 = vpack.c.b16 %v349, %v348
  %v375 = vpack.c.b16 %v351, %v350
  %v376 = vpack.c.b16 %v353, %v352
  %v377 = vpack.c.b16 %v355, %v354
  %v378 = vpack.c.b16 %v357, %v356
  %v379 = vpack.c.b16 %v359, %v358
  %v380 = vpack.c.b16 %v361, %v360
  %v381 = vpack.c.b16 %v363, %v362
  %v382 = vpack.c.b16 %v365, %v364
  %v383 = vpack.c.b16 %v367, %v366
  %400 = vmatprep.subr.bf16.mxu0 0
  %401 = vmatpush1.bf16.msra.mxu0 %v375
  %402 = vmatprep.subr.bf16.mxu0 0
  %403 = vmatpush1.bf16.msra.mxu0 %v374
  %404 = vmatprep.subr.bf16.mxu0 0
  %405 = vmatpush1.bf16.msra.mxu0 %v373
  %406 = vmatprep.subr.bf16.mxu0 0
  %407 = vmatpush1.bf16.msra.mxu0 %v372
  %408 = vmatprep.subr.bf16.mxu0 0
  %409 = vmatpush1.bf16.msra.mxu0 %v371
  %410 = vmatprep.subr.bf16.mxu0 0
  %411 = vmatpush1.bf16.msra.mxu0 %v370
  %412 = vmatprep.subr.bf16.mxu0 0
  %413 = vmatpush1.bf16.msra.mxu0 %v369
  %414 = vmatprep.subr.bf16.mxu0 0
  %415 = vmatpush1.bf16.msra.mxu0 %v368
  %416 = vmatprep.subr.bf16.mxu0 0
  %417 = vmatpush2.bf16.msra.mxu0 %v383
  %418 = vmatprep.subr.bf16.mxu0 0
  %419 = vmatpush2.bf16.msra.mxu0 %v382
  %420 = vmatprep.subr.bf16.mxu0 0
  %421 = vmatpush2.bf16.msra.mxu0 %v381
  %422 = vmatprep.subr.bf16.mxu0 0
  %423 = vmatpush2.bf16.msra.mxu0 %v380
  %424 = vmatprep.subr.bf16.mxu0 0
  %425 = vmatpush2.bf16.msra.mxu0 %v379
  %426 = vmatprep.subr.bf16.mxu0 0
  %427 = vmatpush2.bf16.msra.mxu0 %v378
  %428 = vmatprep.subr.bf16.mxu0 0
  %429 = vmatpush2.bf16.msra.mxu0 %v377
  %430 = vmatprep.subr.bf16.mxu0 0
  %431 = vmatpush2.bf16.msra.mxu0 %v376
  %432 = vmatprep.mubr.bf16.mxu0 %v269
  %433 = vmatmul.mubr.bf16.gmra.mxu0 %v268
  %v434 = vpop.f32.mrf.mxu0
  %v435 = vadd.f32 0.0, %v434
  %v436 = vpop.f32.mrf.mxu0
  %v437 = vpop.f32.mrf.mxu0
  %v438 = vadd.f32 0.0, %v437
  %v439 = vpop.f32.mrf.mxu0
  %440 = vmatprep.mubr.bf16.mxu0 %v271
  %441 = vmatmul.mubr.bf16.gmra.mxu0 %v270
  %v442 = vpop.f32.mrf.mxu0
  %v443 = vadd.f32 0.0, %v442
  %v444 = vpop.f32.mrf.mxu0
  %v445 = vpop.f32.mrf.mxu0
  %v446 = vadd.f32 0.0, %v445
  %v447 = vpop.f32.mrf.mxu0
  %448 = vdwg.mxu0
  %p449 = scmp.eq.s32.totalorder 0, 0
  // Predicated region
  $region30: #{swin_forward.32} parent=0 // pred_check
    %p450 = pneg %p449
  $region31: #{swin_forward.32} parent=0 // pred_check_branch
    %452 = sbr.rel (%p450) target = $region33
  $region32: #{swin_forward.32} parent=0 // pred_region
    %v453 = vld [vmem:[%s6] sm:$0x1]
    %v455 = vlaneseq
    %v456 = vshrl.u32 %v455, 7
    %v457 = vsub.s32 0, %v456
    %v458 = vrot.slane %v453, %v457
    %v460 = vadd.f32 %v27, %v458
    %v461 = vadd.f32 %v28, %v458
    %v462 = vadd.f32 %v29, %v458
    %v463 = vadd.f32 %v30, %v458
    %464 = vst.msk [vmem:[#allocation2] sm:$0xff] %vm31, %v460
    %465 = vst.msk [vmem:[#allocation2 + $0x8] sm:$0xff] %vm31, %v461
    %466 = vst.msk [vmem:[#allocation2 + $0x10] sm:$0xff] %vm31, %v462
    %467 = vst.msk [vmem:[#allocation2 + $0x18] sm:$0xff] %vm31, %v463
  $region33: #{swin_forward.32} parent=0 // pred_fallthru
    _
  %v468 = vld [vmem:[#allocation2] sm:$0xff]
  %v469 = vld [vmem:[#allocation2 + $0x8] sm:$0xff]
  %v470 = vld [vmem:[#allocation2 + $0x10] sm:$0xff]
  %v471 = vld [vmem:[#allocation2 + $0x18] sm:$0xff]
  %v472 = vadd.f32 %v468, %v435
  %v473 = vadd.f32 %v469, %v438
  %v474 = vadd.f32 %v470, %v443
  %v475 = vadd.f32 %v471, %v446
  %476 = vst.msk [vmem:[#allocation2] sm:$0xff] %vm31, %v472
  %477 = vst.msk [vmem:[#allocation2 + $0x8] sm:$0xff] %vm31, %v473
  %478 = vst.msk [vmem:[#allocation2 + $0x10] sm:$0xff] %vm31, %v474
  %479 = vst.msk [vmem:[#allocation2 + $0x18] sm:$0xff] %vm31, %v475
  // Predicated region
  $region34: #{swin_forward.32} parent=0 // pred_check
    %p480 = pneg %p449
  $region35: #{swin_forward.32} parent=0 // pred_check_branch
    %482 = sbr.rel (%p480) target = $region37
  $region36: #{swin_forward.32} parent=0 // pred_region
    %v483 = vld [vmem:[#allocation2] sm:$0xff]
    %v484 = vld [vmem:[#allocation2 + $0x8] sm:$0xff]
    %v485 = vld [vmem:[#allocation2 + $0x10] sm:$0xff]
    %v486 = vld [vmem:[#allocation2 + $0x18] sm:$0xff]
    %487 = vst.msk [vmem:[%s7] sm:$0xff] %vm31, %v483
    %488 = vst.msk [vmem:[%s7 + $0x8] sm:$0xff] %vm31, %v484
    %489 = vst.msk [vmem:[%s7 + $0x10] sm:$0xff] %vm31, %v485
    %490 = vst.msk [vmem:[%s7 + $0x18] sm:$0xff] %vm31, %v486
  $region37: #{swin_forward.32} parent=0 // pred_fallthru
    _
  // Predicated region
  $region38: #{swin_forward.32} parent=0 // pred_check
    _
  $region39: #{swin_forward.32} parent=0 // pred_check_branch
    %492 = sbr.rel (0) target = $region41
  $region40: #{swin_forward.32} parent=0 // pred_region
    _
  $region41: #{swin_forward.32} parent=0 // pred_fallthru
    _
  // Predicated region
  $region42: #{swin_forward.32} parent=0 // pred_check
    _
  $region43: #{swin_forward.32} parent=0 // pred_check_branch
    %494 = sbr.rel (0) target = $region45
  $region44: #{swin_forward.32} parent=0 // pred_region
    _
  $region45: #{swin_forward.32} parent=0 // pred_fallthru
    _

// kernel: swin_forward.34
$region0: #{swin_forward.34}
  #allocation0 [shape = 'u32[]', space=smem, size = 0x4, offset = 0x4, fixed_abs, tag = 'smem constant byte address 0x4 - core index']
  #allocation1 [shape = 'u32[144,128]{1,0:T(1,128)}', space=vmem, size = 0x12000, scoped, tag = 'internal scratch']
  %s0 = inlined_call_operand.vmem [shape: bf16[3,4,2,16,16], index: 0, kind: input, shape index: {}]
  %s1 = inlined_call_operand.vmem [shape: f32[4,16,16], index: 1, kind: input, shape index: {}]
  %s2 = inlined_call_operand.vmem [shape: f32[2,16,16], index: 2, kind: input, shape index: {}]
  %s3 = inlined_call_operand.vmem [shape: bf16[4,2,16,16], index: 3, kind: output, shape index: {}]
  %s4 = sld [smem:[#allocation0]]
  $region86: #{swin_forward.34} parent=0
    _
  %s6 = ssub.s32 1, %s4
  %s7 = scalar_select 0, %s6, %s4
  $region1: #{swin_forward.34} parent=0
    #allocation2 [shape = 'u8[49152]{0}', space=vmem, size = 0xc000, scoped, tag = 'input window, operand 0']
    loop: start=0, step=1, limit=6
    $region2: #{swin_forward.34} parent=1 // loop_pre_header
      _
    $region3: #{swin_forward.34} parent=1 // loop_header
      %s9 = sphi 0, %s13
      %p10 = scmp.ge.s32.totalorder %s9, 6
      %s16 = sphi 0, %s28
      %s17 = sphi 0, %s24
      %s18 = sphi 0, %s16
      %s19 = sphi 0, %s17
      %s20 = sphi 0, %s18
      %s21 = sphi 0, %s19
      %s33 = sphi 0, %s35
      %s36 = sphi 0, %s33
      %s37 = sphi 0, %s36
      %s53 = sphi 0, %s37
      %s59 = sphi 0, %s61
      %s62 = sphi 0, %s59
      %s63 = sphi 0, %s62
      %s79 = sphi 0, %s63
      %s83 = sphi 0, %s83
      %s85 = sphi 0, %s83
      %s86 = sphi 0, %s85
      %s100 = sphi 0, %s86
      %s108 = sphi 0, %s110
      %s111 = sphi 0, %s108
      %s112 = sphi 0, %s111
      %s128 = sphi 0, %s112
    $region4: #{swin_forward.34} parent=1 // loop_header_branch
      %12 = sbr.rel (%p10) target = $region8
    $region5: #{swin_forward.34} parent=1 // loop_body
      %s14 = ssub.s32 %s9, 1
      %s15 = ssub.s32 %s9, 2
      %s22 = sadd.s32 1, %s17
      %p23 = scmp.ge.s32.totalorder %s22, 4
      %s24 = scalar_select %p23, 0, %s22
      %s25 = sadd.s32 1, %s16
      %s26 = scalar_select %p23, %s25, %s16
      %p27 = scmp.ge.s32.totalorder %s26, 1
      %s28 = scalar_select %p27, 0, %s26
      %s29 = ssub.s32 %s17, %s24
      %s30 = ssub.s32 %s16, %s28
      %s31 = sor.u32 %s29, %s30
      %p32 = scmp.eq.s32.totalorder %s31, 0
      %s34 = sadd.s32 %s33, 1
      %s35 = scalar_select %p32, %s33, %s34
      %p38 = pneg %p32
      %p39 = scmp.eq.s32.totalorder %s9, 3
      %p40 = por %p38, %p39
      %p41 = scmp.ne.s32.totalorder %s33, %s36
      %p42 = scmp.eq.s32.totalorder %s9, 0
      %p43 = por %p41, %p42
      %p44 = scmp.ne.s32.totalorder %s33, %s36
      %p45 = scmp.eq.s32.totalorder %s14, 3
      %p46 = por %p44, %p45
      %p47 = scmp.ne.s32.totalorder %s36, %s37
      %p48 = scmp.eq.s32.totalorder %s14, 0
      %p49 = por %p47, %p48
      %p50 = scmp.ne.s32.totalorder %s36, %s37
      %p51 = scmp.eq.s32.totalorder %s15, 3
      %p52 = por %p50, %p51
      %p54 = scmp.ne.s32.totalorder %s37, %s53
      %p55 = scmp.eq.s32.totalorder %s15, 0
      %p56 = por %p54, %p55
      %s57 = ssub.s32 %s17, %s24
      %p58 = scmp.eq.s32.totalorder %s57, 0
      %s60 = sadd.s32 %s59, 1
      %s61 = scalar_select %p58, %s59, %s60
      %p64 = pneg %p58
      %p65 = scmp.eq.s32.totalorder %s9, 3
      %p66 = por %p64, %p65
      %p67 = scmp.ne.s32.totalorder %s59, %s62
      %p68 = scmp.eq.s32.totalorder %s9, 0
      %p69 = por %p67, %p68
      %p70 = scmp.ne.s32.totalorder %s59, %s62
      %p71 = scmp.eq.s32.totalorder %s14, 3
      %p72 = por %p70, %p71
      %p73 = scmp.ne.s32.totalorder %s62, %s63
      %p74 = scmp.eq.s32.totalorder %s14, 0
      %p75 = por %p73, %p74
      %p76 = scmp.ne.s32.totalorder %s62, %s63
      %p77 = scmp.eq.s32.totalorder %s15, 3
      %p78 = por %p76, %p77
      %p80 = scmp.ne.s32.totalorder %s63, %s79
      %p81 = scmp.eq.s32.totalorder %s15, 0
      %p82 = por %p80, %p81
      %s84 = sadd.s32 %s83, 1
      %p87 = scmp.eq.s32.totalorder %s9, 3
      %p88 = scmp.ne.s32.totalorder %s83, %s85
      %p89 = scmp.eq.s32.totalorder %s9, 0
      %p90 = por %p88, %p89
      %p91 = scmp.ne.s32.totalorder %s83, %s85
      %p92 = scmp.eq.s32.totalorder %s14, 3
      %p93 = por %p91, %p92
      %p94 = scmp.ne.s32.totalorder %s85, %s86
      %p95 = scmp.eq.s32.totalorder %s14, 0
      %p96 = por %p94, %p95
      %p97 = scmp.ne.s32.totalorder %s85, %s86
      %p98 = scmp.eq.s32.totalorder %s15, 3
      %p99 = por %p97, %p98
      %p101 = scmp.ne.s32.totalorder %s86, %s100
      %p102 = scmp.eq.s32.totalorder %s15, 0
      %p103 = por %p101, %p102
      %s104 = ssub.s32 %s17, %s24
      %s105 = ssub.s32 %s16, %s28
      %s106 = sor.u32 %s104, %s105
      %p107 = scmp.eq.s32.totalorder %s106, 0
      %s109 = sadd.s32 %s108, 1
      %s110 = scalar_select %p107, %s108, %s109
      %p113 = pneg %p107
      %p114 = scmp.eq.s32.totalorder %s9, 3
      %p115 = por %p113, %p114
      %p116 = scmp.ne.s32.totalorder %s108, %s111
      %p117 = scmp.eq.s32.totalorder %s9, 0
      %p118 = por %p116, %p117
      %p119 = scmp.ne.s32.totalorder %s108, %s111
      %p120 = scmp.eq.s32.totalorder %s14, 3
      %p121 = por %p119, %p120
      %p122 = scmp.ne.s32.totalorder %s111, %s112
      %p123 = scmp.eq.s32.totalorder %s14, 0
      %p124 = por %p122, %p123
      %p125 = scmp.ne.s32.totalorder %s111, %s112
      %p126 = scmp.eq.s32.totalorder %s15, 3
      %p127 = por %p125, %p126
      %p129 = scmp.ne.s32.totalorder %s112, %s128
      %p130 = scmp.eq.s32.totalorder %s15, 0
      %p131 = por %p129, %p130
      %p132 = scmp.le.s32.totalorder 1, %s9
      %p133 = scmp.lt.s32.totalorder %s9, 5
      %p134 = pnand %p132, %p133
      %p135 = pneg %p134
      // Predicated region
      $region9: #{swin_forward.34} parent=5 // pred_check
        _
      $region10: #{swin_forward.34} parent=5 // pred_check_branch
        %137 = sbr.rel (%p134) target = $region12
      $region11: #{swin_forward.34} parent=5 // pred_region
        %s138 = ssub.s32 %s9, 1
        // Predicated region
        $region13: #{swin_forward.34} parent=11 // pred_check
          %p139 = pneg %p96
        $region14: #{swin_forward.34} parent=11 // pred_check_branch
          %141 = sbr.rel (%p139) target = $region16
        $region15: #{swin_forward.34} parent=11 // pred_region
          _
        $region16: #{swin_forward.34} parent=11 // pred_fallthru
          _
      $region12: #{swin_forward.34} parent=5 // pred_fallthru
        _
      %p142 = scmp.lt.s32.totalorder %s9, 4
      // Predicated region
      $region17: #{swin_forward.34} parent=5 // pred_check
        %p143 = pneg %p142
      $region18: #{swin_forward.34} parent=5 // pred_check_branch
        %145 = sbr.rel (%p143) target = $region20
      $region19: #{swin_forward.34} parent=5 // pred_region
        // Predicated region
        $region21: #{swin_forward.34} parent=19 // pred_check
          %p146 = pneg %p43
        $region22: #{swin_forward.34} parent=19 // pred_check_branch
          %148 = sbr.rel (%p146) target = $region24
        $region23: #{swin_forward.34} parent=19 // pred_region
          %s149 = sand.u32 %s33, 1
          %s150 = sand.u32 %s33, 1
          %s151 = smul.addr %s150, 48
          %s152 = scalar_lea.vmem [#allocation2], %s151
          %s153 = smul.u32 2, %s16
          %s154 = smul.addr %s153, 2
          %s155 = smul.addr %s17, 4
          %s156 = sadd.s32 %s154, %s155
          %s157 = smul.addr %s156, 4
          %s158 = scalar_lea.vmem %s0, %s157
          // Predicated region
          $region25: #{swin_forward.34} parent=23 // pred_check
            _
          $region26: #{swin_forward.34} parent=23 // pred_check_branch
            %160 = sbr.rel (0) target = $region28
          $region27: #{swin_forward.34} parent=23 // pred_region
            // Predicated region
            $region29: #{swin_forward.34} parent=27 // pred_check
              _
            $region30: #{swin_forward.34} parent=27 // pred_check_branch
              %162 = sbr.rel target = $region32
            $region31: #{swin_forward.34} parent=27 // pred_region
              // Predicated region
              $region44: #{swin_forward.34} parent=31 // pred_check
                _
              $region45: #{swin_forward.34} parent=31 // pred_check_branch
                %200 = sbr.rel (0) target = $region47
              $region46: #{swin_forward.34} parent=31 // pred_region
                loop: start=0, step=1, limit=1
                $region48: #{swin_forward.34} parent=46 // loop_pre_header
                  _
                $region49: #{swin_forward.34} parent=46 // loop_header
                  %s202 = sphi 0, %s206
                  %p203 = scmp.ge.s32.totalorder %s202, 1
                  %s207 = sphi %s158, %s158
                  %s208 = sphi %s152, %s152
                $region50: #{swin_forward.34} parent=46 // loop_header_branch
                  %205 = sbr.rel (%p203) target = $region54
                $region51: #{swin_forward.34} parent=46 // loop_body
                  _
                $region52: #{swin_forward.34} parent=46 // loop_footer
                  %s206 = sadd.s32 1, %s202
                $region53: #{swin_forward.34} parent=46 // loop_footer_branch
                  %201 = sbr.rel target = $region49
                $region54: #{swin_forward.34} parent=46 // loop_exit
                  _
                %s210 = ssub.s32 16, 1
                loop: start=0, step=1, limit=1
                $region55: #{swin_forward.34} parent=46 // loop_pre_header
                  _
                $region56: #{swin_forward.34} parent=46 // loop_header
                  %s212 = sphi 0, %s216
                  %p213 = scmp.ge.s32.totalorder %s212, 1
                  %s217 = sphi %s158, %s158
                  %s218 = sphi %s152, %s152
                $region57: #{swin_forward.34} parent=46 // loop_header_branch
                  %215 = sbr.rel (%p213) target = $region61
                $region58: #{swin_forward.34} parent=46 // loop_body
                  %v219 = vld [vmem:[%s217] sm:%s210]
                  %220 = vst [vmem:[%s218] sm:%s210] %v219
                  %v221 = vld [vmem:[%s217 + $0x4] sm:%s210]
                  %222 = vst [vmem:[%s218 + $0x4] sm:%s210] %v221
                  %v223 = vld [vmem:[%s217 + $0x8] sm:%s210]
                  %224 = vst [vmem:[%s218 + $0x8] sm:%s210] %v223
                  %v225 = vld [vmem:[%s217 + $0xc] sm:%s210]
                  %226 = vst [vmem:[%s218 + $0xc] sm:%s210] %v225
                  %v227 = vld [vmem:[%s217 + $0x40] sm:%s210]
                  %228 = vst [vmem:[%s218 + $0x10] sm:%s210] %v227
                  %v229 = vld [vmem:[%s217 + $0x44] sm:%s210]
                  %230 = vst [vmem:[%s218 + $0x14] sm:%s210] %v229
                  %v231 = vld [vmem:[%s217 + $0x48] sm:%s210]
                  %232 = vst [vmem:[%s218 + $0x18] sm:%s210] %v231
                  %v233 = vld [vmem:[%s217 + $0x4c] sm:%s210]
                  %234 = vst [vmem:[%s218 + $0x1c] sm:%s210] %v233
                  %v235 = vld [vmem:[%s217 + $0x80] sm:%s210]
                  %236 = vst [vmem:[%s218 + $0x20] sm:%s210] %v235
                  %v237 = vld [vmem:[%s217 + $0x84] sm:%s210]
                  %238 = vst [vmem:[%s218 + $0x24] sm:%s210] %v237
                  %v239 = vld [vmem:[%s217 + $0x88] sm:%s210]
                  %240 = vst [vmem:[%s218 + $0x28] sm:%s210] %v239
                  %v241 = vld [vmem:[%s217 + $0x8c] sm:%s210]
                  %242 = vst [vmem:[%s218 + $0x2c] sm:%s210] %v241
                $region59: #{swin_forward.34} parent=46 // loop_footer
                  %s216 = sadd.s32 1, %s212
                $region60: #{swin_forward.34} parent=46 // loop_footer_branch
                  %211 = sbr.rel target = $region56
                $region61: #{swin_forward.34} parent=46 // loop_exit
                  _
              $region47: #{swin_forward.34} parent=31 // pred_fallthru
                _
            $region32: #{swin_forward.34} parent=27 // pred_fallthru
              _
            // Predicated region
            $region33: #{swin_forward.34} parent=27 // pred_check
              _
            $region34: #{swin_forward.34} parent=27 // pred_check_branch
              %164 = sbr.rel (0) target = $region36
            $region35: #{swin_forward.34} parent=27 // pred_region
              %s166 = ssub.s32 16, 1
              loop: start=0, step=1, limit=1
              $region37: #{swin_forward.34} parent=35 // loop_pre_header
                _
              $region38: #{swin_forward.34} parent=35 // loop_header
                %s168 = sphi 0, %s172
                %p169 = scmp.ge.s32.totalorder %s168, 1
                %s173 = sphi %s158, %s158
                %s174 = sphi %s152, %s152
              $region39: #{swin_forward.34} parent=35 // loop_header_branch
                %171 = sbr.rel (%p169) target = $region43
              $region40: #{swin_forward.34} parent=35 // loop_body
                %v175 = vld [vmem:[%s173] sm:%s166]
                %176 = vst [vmem:[%s174] sm:%s166] %v175
                %v177 = vld [vmem:[%s173 + $0x4] sm:%s166]
                %178 = vst [vmem:[%s174 + $0x4] sm:%s166] %v177
                %v179 = vld [vmem:[%s173 + $0x8] sm:%s166]
                %180 = vst [vmem:[%s174 + $0x8] sm:%s166] %v179
                %v181 = vld [vmem:[%s173 + $0xc] sm:%s166]
                %182 = vst [vmem:[%s174 + $0xc] sm:%s166] %v181
                %v183 = vld [vmem:[%s173 + $0x40] sm:%s166]
                %184 = vst [vmem:[%s174 + $0x10] sm:%s166] %v183
                %v185 = vld [vmem:[%s173 + $0x44] sm:%s166]
                %186 = vst [vmem:[%s174 + $0x14] sm:%s166] %v185
                %v187 = vld [vmem:[%s173 + $0x48] sm:%s166]
                %188 = vst [vmem:[%s174 + $0x18] sm:%s166] %v187
                %v189 = vld [vmem:[%s173 + $0x4c] sm:%s166]
                %190 = vst [vmem:[%s174 + $0x1c] sm:%s166] %v189
                %v191 = vld [vmem:[%s173 + $0x80] sm:%s166]
                %192 = vst [vmem:[%s174 + $0x20] sm:%s166] %v191
                %v193 = vld [vmem:[%s173 + $0x84] sm:%s166]
                %194 = vst [vmem:[%s174 + $0x24] sm:%s166] %v193
                %v195 = vld [vmem:[%s173 + $0x88] sm:%s166]
                %196 = vst [vmem:[%s174 + $0x28] sm:%s166] %v195
                %v197 = vld [vmem:[%s173 + $0x8c] sm:%s166]
                %198 = vst [vmem:[%s174 + $0x2c] sm:%s166] %v197
              $region41: #{swin_forward.34} parent=35 // loop_footer
                %s172 = sadd.s32 1, %s168
              $region42: #{swin_forward.34} parent=35 // loop_footer_branch
                %167 = sbr.rel target = $region38
              $region43: #{swin_forward.34} parent=35 // loop_exit
                _
            $region36: #{swin_forward.34} parent=27 // pred_fallthru
              _
          $region28: #{swin_forward.34} parent=23 // pred_fallthru
            _
          %243 = vnop
        $region24: #{swin_forward.34} parent=19 // pred_fallthru
          _
        // Predicated region
        $region62: #{swin_forward.34} parent=19 // pred_check
          %p244 = pneg %p69
        $region63: #{swin_forward.34} parent=19 // pred_check_branch
          %246 = sbr.rel (%p244) target = $region65
        $region64: #{swin_forward.34} parent=19 // pred_region
          %p247 = scmp.lt.s32.totalorder %s17, 3
          %s248 = scalar_select %p247, %s17, 3
          %s249 = smul.addr %s248, 2
          %s250 = smul.addr %s249, 8
          %s251 = scalar_lea.vmem %s1, %s250
        $region65: #{swin_forward.34} parent=19 // pred_fallthru
          _
      $region20: #{swin_forward.34} parent=5 // pred_fallthru
        _
      %p252 = scmp.le.s32.totalorder 1, %s9
      %p253 = scmp.lt.s32.totalorder %s9, 5
      %p254 = pnand %p252, %p253
      %p255 = pneg %p254
      // Predicated region
      $region66: #{swin_forward.34} parent=5 // pred_check
        _
      $region67: #{swin_forward.34} parent=5 // pred_check_branch
        %257 = sbr.rel (%p254) target = $region69
      $region68: #{swin_forward.34} parent=5 // pred_region
        %s258 = ssub.s32 %s9, 1
        %s259 = sand.u32 %s36, 1
        %s260 = sand.u32 %s36, 1
        %s261 = smul.addr %s260, 48
        %s262 = scalar_lea.vmem [#allocation2], %s261
        // Predicated region
        $region70: #{swin_forward.34} parent=68 // pred_check
          %p263 = pneg %p49
        $region71: #{swin_forward.34} parent=68 // pred_check_branch
          %265 = sbr.rel (%p263) target = $region73
        $region72: #{swin_forward.34} parent=68 // pred_region
          _
        $region73: #{swin_forward.34} parent=68 // pred_fallthru
          _
        %s266 = sand.u32 %s36, 1
        %s267 = sand.u32 %s36, 1
        %s268 = smul.addr %s267, 48
        %s269 = scalar_lea.vmem [#allocation2], %s268
        %p270 = pneg %p49
        %p271 = pneg %p46
        %p272 = scmp.lt.s32.totalorder %s19, 3
        %s273 = scalar_select %p272, %s19, 3
        %s274 = smul.addr %s273, 2
        %s275 = smul.addr %s274, 8
        %s276 = scalar_lea.vmem %s1, %s275
        %p277 = pneg %p75
        %p278 = pneg %p72
        %p279 = pneg %p96
        %p280 = pneg %p93
        %p281 = pneg %p124
        %p282 = pneg %p121
        %s283 = smul.u32 2, %s18
        %p284 = scmp.lt.s32.totalorder %s19, 3
        %s285 = scalar_select %p284, %s19, 3
        %p286 = scmp.lt.s32.totalorder %s283, 1
        %s287 = scalar_select %p286, %s283, 1
        %s288 = smul.addr %s287, 2
        %s289 = smul.addr %s285, 4
        %s290 = sadd.s32 %s288, %s289
        %s291 = smul.addr %s290, 4
        %s292 = scalar_lea.vmem %s3, %s291
        %s293 = smul.u32 2, %s18
        %p294 = scmp.lt.s32.totalorder %s19, 3
        %s295 = scalar_select %p294, %s19, 3
        %s296 = smul.addr %s295, 2
        %s297 = smul.addr %s296, 8
        %s298 = scalar_lea.vmem %s1, %s297
        %s299 = smul.u32 2, %s18
        %p300 = scmp.lt.s32.totalorder %s19, 3
        %s301 = scalar_select %p300, %s19, 3
        %p302 = scmp.lt.s32.totalorder %s299, 1
        %s303 = scalar_select %p302, %s299, 1
        %s304 = smul.addr %s303, 2
        %s305 = smul.addr %s301, 4
        %s306 = sadd.s32 %s304, %s305
        %s307 = smul.addr %s306, 4
        %s308 = scalar_lea.vmem %s3, %s307
        %s309 = smul.u32 2, %s18
        %v311 = vld [vmem:[%s262] sm:$0xf]
        %v312 = vld [vmem:[%s262 + $0x4] sm:$0xf]
        %v313 = vld [vmem:[%s262 + $0x8] sm:$0xf]
        %v314 = vld [vmem:[%s262 + $0xc] sm:$0xf]
        %s315 = scalar_lea.vmem %s262, 16 [#allocation2]
        %v316 = vld [vmem:[%s315] sm:$0xf]
        %v317 = vld [vmem:[%s315 + $0x4] sm:$0xf]
        %v318 = vld [vmem:[%s315 + $0x8] sm:$0xf]
        %v319 = vld [vmem:[%s315 + $0xc] sm:$0xf]
        %s320 = scalar_lea.vmem %s262, 32 [#allocation2]
        %v321 = vld [vmem:[%s320] sm:$0xf]
        %v322 = vld [vmem:[%s320 + $0x4] sm:$0xf]
        %v323 = vld [vmem:[%s320 + $0x8] sm:$0xf]
        %v324 = vld [vmem:[%s320 + $0xc] sm:$0xf]
        %v327 = vunpack.c.l.b16 %v311
        %v328 = vunpack.c.l.b16 %v312
        %v329 = vpack.c.b16 %v328, %v327
        %v332 = vunpack.c.l.b16 %v316
        %v333 = vunpack.c.l.b16 %v317
        %v334 = vpack.c.b16 %v333, %v332
        %vm335 = vcmask 130048
        %v337 = vsel %vm335, %v329, 0
        %v340 = vsel %vm335, %v334, 0
        %342 = vmatprep.subr.bf16.mxu0 0
        %343 = vmatpush1.bf16.xpose.msra.mxu0 0
        %344 = vmatprep.subr.bf16.mxu0 0
        %345 = vmatpush1.bf16.xpose.msra.mxu0 0
        %346 = vmatprep.subr.bf16.mxu0 0
        %347 = vmatpush1.bf16.xpose.msra.mxu0 0
        %348 = vmatprep.subr.bf16.mxu0 0
        %349 = vmatpush1.bf16.xpose.msra.mxu0 0
        %350 = vmatprep.subr.bf16.mxu0 0
        %351 = vmatpush1.bf16.xpose.msra.mxu0 0
        %352 = vmatprep.subr.bf16.mxu0 0
        %353 = vmatpush1.bf16.xpose.msra.mxu0 0
        %354 = vmatprep.subr.bf16.mxu0 0
        %355 = vmatpush1.bf16.xpose.msra.mxu0 0
        %356 = vmatprep.subr.bf16.mxu0 0
        %357 = vmatpush1.bf16.xpose.msra.mxu0 %v340
        %358 = vmatprep.subr.bf16.mxu0 0
        %359 = vmatpush2.bf16.xpose.msra.mxu0 0
        %360 = vmatprep.subr.bf16.mxu0 0
        %361 = vmatpush2.bf16.xpose.msra.mxu0 0
        %362 = vmatprep.subr.bf16.mxu0 0
        %363 = vmatpush2.bf16.xpose.msra.mxu0 0
        %364 = vmatprep.subr.bf16.mxu0 0
        %365 = vmatpush2.bf16.xpose.msra.mxu0 0
        %366 = vmatprep.subr.bf16.mxu0 0
        %367 = vmatpush2.bf16.xpose.msra.mxu0 0
        %368 = vmatprep.subr.bf16.mxu0 0
        %369 = vmatpush2.bf16.xpose.msra.mxu0 0
        %370 = vmatprep.subr.bf16.mxu0 0
        %371 = vmatpush2.bf16.xpose.msra.mxu0 0
        %372 = vmatprep.subr.bf16.mxu0 0
        %373 = vmatpush2.bf16.xpose.msra.mxu0 0
        %374 = vmatprep.mubr.bf16.mxu0 0
        %375 = vmatmul.mubr.bf16.gmra.mxu0 %v337
        %v376 = vpop.f32.mrf.mxu0
        %v377 = vadd.f32 0.0, %v376
        %v378 = vpop.f32.mrf.mxu0
        %v379 = vpop.f32.mrf.mxu0
        %v380 = vadd.f32 0.0, %v379
        %v381 = vpop.f32.mrf.mxu0
        %382 = vdwg.mxu0
        %v385 = vunpack.c.l.b16 %v313
        %v386 = vunpack.c.l.b16 %v314
        %v387 = vpack.c.b16 %v386, %v385
        %v390 = vunpack.c.l.b16 %v318
        %v391 = vunpack.c.l.b16 %v319
        %v392 = vpack.c.b16 %v391, %v390
        %v394 = vsel %vm335, %v387, 0
        %v397 = vsel %vm335, %v392, 0
        %399 = vmatprep.subr.bf16.mxu0 0
        %400 = vmatpush1.bf16.xpose.msra.mxu0 0
        %401 = vmatprep.subr.bf16.mxu0 0
        %402 = vmatpush1.bf16.xpose.msra.mxu0 0
        %403 = vmatprep.subr.bf16.mxu0 0
        %404 = vmatpush1.bf16.xpose.msra.mxu0 0
        %405 = vmatprep.subr.bf16.mxu0 0
        %406 = vmatpush1.bf16.xpose.msra.mxu0 0
        %407 = vmatprep.subr.bf16.mxu0 0
        %408 = vmatpush1.bf16.xpose.msra.mxu0 0
        %409 = vmatprep.subr.bf16.mxu0 0
        %410 = vmatpush1.bf16.xpose.msra.mxu0 0
        %411 = vmatprep.subr.bf16.mxu0 0
        %412 = vmatpush1.bf16.xpose.msra.mxu0 0
        %413 = vmatprep.subr.bf16.mxu0 0
        %414 = vmatpush1.bf16.xpose.msra.mxu0 %v397
        %415 = vmatprep.subr.bf16.mxu0 0
        %416 = vmatpush2.bf16.xpose.msra.mxu0 0
        %417 = vmatprep.subr.bf16.mxu0 0
        %418 = vmatpush2.bf16.xpose.msra.mxu0 0
        %419 = vmatprep.subr.bf16.mxu0 0
        %420 = vmatpush2.bf16.xpose.msra.mxu0 0
        %421 = vmatprep.subr.bf16.mxu0 0
        %422 = vmatpush2.bf16.xpose.msra.mxu0 0
        %423 = vmatprep.subr.bf16.mxu0 0
        %424 = vmatpush2.bf16.xpose.msra.mxu0 0
        %425 = vmatprep.subr.bf16.mxu0 0
        %426 = vmatpush2.bf16.xpose.msra.mxu0 0
        %427 = vmatprep.subr.bf16.mxu0 0
        %428 = vmatpush2.bf16.xpose.msra.mxu0 0
        %429 = vmatprep.subr.bf16.mxu0 0
        %430 = vmatpush2.bf16.xpose.msra.mxu0 0
        %431 = vmatprep.mubr.bf16.mxu0 0
        %432 = vmatmul.mubr.bf16.gmra.mxu0 %v394
        %v433 = vpop.f32.mrf.mxu0
        %v434 = vadd.f32 0.0, %v433
        %v435 = vpop.f32.mrf.mxu0
        %v436 = vpop.f32.mrf.mxu0
        %v437 = vadd.f32 0.0, %v436
        %v438 = vpop.f32.mrf.mxu0
        %439 = vdwg.mxu0
        %v440 = vmul.f32 %v377, 0.25
        %v441 = vmul.f32 %v380, 0.25
        %v442 = vmul.f32 %v434, 0.25
        %v443 = vmul.f32 %v437, 0.25
        %v444 = vld [vmem:[%s298] sm:$0xff]
        %v445 = vld [vmem:[%s298 + $0x8] sm:$0xff]
        %v446 = vadd.f32 %v440, %v444
        %v447 = vadd.f32 %v441, %v445
        %v448 = vadd.f32 %v442, %v444
        %v449 = vadd.f32 %v443, %v445
        %v450 = vld [vmem:[%s2] sm:$0xff]
        %v451 = vld [vmem:[%s2 + $0x8] sm:$0xff]
        %v452 = vld [vmem:[%s2 + $0x10] sm:$0xff]
        %v453 = vld [vmem:[%s2 + $0x18] sm:$0xff]
        %v454 = vadd.f32 %v446, %v450
        %v455 = vadd.f32 %v447, %v451
        %v456 = vadd.f32 %v448, %v452
        %v457 = vadd.f32 %v449, %v453
        %v458 = vsel %vm335, %v454, -inf
        %459 = vmax.xlane.f32.xlu0 %v458
        %v460 = vpop.xlane.xlu0 %459
        %v461 = vsel %vm335, %v455, -inf
        %462 = vmax.xlane.f32.xlu0 %v461
        %v463 = vpop.xlane.xlu0 %462
        %v464 = vsel %vm335, %v456, -inf
        %465 = vmax.xlane.f32.xlu0 %v464
        %v466 = vpop.xlane.xlu0 %465
        %v467 = vsel %vm335, %v457, -inf
        %468 = vmax.xlane.f32.xlu0 %v467
        %v469 = vpop.xlane.xlu0 %468
        %v470 = vsub.f32 %v454, %v460
        %v471 = vsub.f32 %v455, %v463
        %v472 = vsub.f32 %v456, %v466
        %v473 = vsub.f32 %v457, %v469
        %v474 = vmul.f32 %v470, 1.442695
        %v475 = vpow.pop %v474
        %v476 = vmul.f32 %v471, 1.442695
        %v477 = vpow.pop %v476
        %v478 = vmul.f32 %v472, 1.442695
        %v479 = vpow.pop %v478
        %v480 = vmul.f32 %v473, 1.442695
        %v481 = vpow.pop %v480
        %v482 = vsel %vm335, %v475, 0.0
        %483 = vadd.xlane.f32.xlu0 %v482
        %v484 = vpop.xlane.xlu0 %483
        %v485 = vsel %vm335, %v477, 0.0
        %486 = vadd.xlane.f32.xlu0 %v485
        %v487 = vpop.xlane.xlu0 %486
        %v488 = vsel %vm335, %v479, 0.0
        %489 = vadd.xlane.f32.xlu0 %v488
        %v490 = vpop.xlane.xlu0 %489
        %v491 = vsel %vm335, %v481, 0.0
        %492 = vadd.xlane.f32.xlu0 %v491
        %v493 = vpop.xlane.xlu0 %492
        %v494 = vrcp.pop %v484
        %v495 = vrcp.pop %v487
        %v496 = vrcp.pop %v490
        %v497 = vrcp.pop %v493
        %v498 = vmul.f32 %v475, %v494
        %v499 = vmul.f32 %v477, %v495
        %v500 = vmul.f32 %v479, %v496
        %v501 = vmul.f32 %v481, %v497
        %v502 = vpack.c.bf16 %v499, %v498
        %v503 = vpack.c.bf16 %v501, %v500
        %v506 = vunpack.c.l.b16 %v321
        %v507 = vunpack.c.l.b16 %v322
        %v508 = vpack.c.b16 %v507, %v506
        %v511 = vsel %vm335, %v502, 0
        %513 = vmatprep.subr.bf16.mxu0 0
        %514 = vmatpush1.bf16.msra.mxu0 0
        %515 = vmatprep.subr.bf16.mxu0 0
        %516 = vmatpush1.bf16.msra.mxu0 0
        %517 = vmatprep.subr.bf16.mxu0 0
        %518 = vmatpush1.bf16.msra.mxu0 0
        %519 = vmatprep.subr.bf16.mxu0 0
        %520 = vmatpush1.bf16.msra.mxu0 0
        %521 = vmatprep.subr.bf16.mxu0 0
        %522 = vmatpush1.bf16.msra.mxu0 0
        %523 = vmatprep.subr.bf16.mxu0 0
        %524 = vmatpush1.bf16.msra.mxu0 0
        %525 = vmatprep.subr.bf16.mxu0 0
        %526 = vmatpush1.bf16.msra.mxu0 0
        %527 = vmatprep.subr.bf16.mxu0 0
        %528 = vmatpush1.bf16.msra.mxu0 %v508
        %529 = vmatprep.subr.bf16.mxu0 0
        %530 = vmatpush2.bf16.msra.mxu0 0
        %531 = vmatprep.subr.bf16.mxu0 0
        %532 = vmatpush2.bf16.msra.mxu0 0
        %533 = vmatprep.subr.bf16.mxu0 0
        %534 = vmatpush2.bf16.msra.mxu0 0
        %535 = vmatprep.subr.bf16.mxu0 0
        %536 = vmatpush2.bf16.msra.mxu0 0
        %537 = vmatprep.subr.bf16.mxu0 0
        %538 = vmatpush2.bf16.msra.mxu0 0
        %539 = vmatprep.subr.bf16.mxu0 0
        %540 = vmatpush2.bf16.msra.mxu0 0
        %541 = vmatprep.subr.bf16.mxu0 0
        %542 = vmatpush2.bf16.msra.mxu0 0
        %543 = vmatprep.subr.bf16.mxu0 0
        %544 = vmatpush2.bf16.msra.mxu0 0
        %545 = vmatprep.mubr.bf16.mxu0 0
        %546 = vmatmul.mubr.bf16.gmra.mxu0 %v511
        %v547 = vpop.f32.mrf.mxu0
        %v548 = vadd.f32 0.0, %v547
        %v549 = vpop.f32.mrf.mxu0
        %v550 = vpop.f32.mrf.mxu0
        %v551 = vadd.f32 0.0, %v550
        %v552 = vpop.f32.mrf.mxu0
        %553 = vdwg.mxu0
        %v556 = vunpack.c.l.b16 %v323
        %v557 = vunpack.c.l.b16 %v324
        %v558 = vpack.c.b16 %v557, %v556
        %v561 = vsel %vm335, %v503, 0
        %563 = vmatprep.subr.bf16.mxu0 0
        %564 = vmatpush1.bf16.msra.mxu0 0
        %565 = vmatprep.subr.bf16.mxu0 0
        %566 = vmatpush1.bf16.msra.mxu0 0
        %567 = vmatprep.subr.bf16.mxu0 0
        %568 = vmatpush1.bf16.msra.mxu0 0
        %569 = vmatprep.subr.bf16.mxu0 0
        %570 = vmatpush1.bf16.msra.mxu0 0
        %571 = vmatprep.subr.bf16.mxu0 0
        %572 = vmatpush1.bf16.msra.mxu0 0
        %573 = vmatprep.subr.bf16.mxu0 0
        %574 = vmatpush1.bf16.msra.mxu0 0
        %575 = vmatprep.subr.bf16.mxu0 0
        %576 = vmatpush1.bf16.msra.mxu0 0
        %577 = vmatprep.subr.bf16.mxu0 0
        %578 = vmatpush1.bf16.msra.mxu0 %v558
        %579 = vmatprep.subr.bf16.mxu0 0
        %580 = vmatpush2.bf16.msra.mxu0 0
        %581 = vmatprep.subr.bf16.mxu0 0
        %582 = vmatpush2.bf16.msra.mxu0 0
        %583 = vmatprep.subr.bf16.mxu0 0
        %584 = vmatpush2.bf16.msra.mxu0 0
        %585 = vmatprep.subr.bf16.mxu0 0
        %586 = vmatpush2.bf16.msra.mxu0 0
        %587 = vmatprep.subr.bf16.mxu0 0
        %588 = vmatpush2.bf16.msra.mxu0 0
        %589 = vmatprep.subr.bf16.mxu0 0
        %590 = vmatpush2.bf16.msra.mxu0 0
        %591 = vmatprep.subr.bf16.mxu0 0
        %592 = vmatpush2.bf16.msra.mxu0 0
        %593 = vmatprep.subr.bf16.mxu0 0
        %594 = vmatpush2.bf16.msra.mxu0 0
        %595 = vmatprep.mubr.bf16.mxu0 0
        %596 = vmatmul.mubr.bf16.gmra.mxu0 %v561
        %v597 = vpop.f32.mrf.mxu0
        %v598 = vadd.f32 0.0, %v597
        %v599 = vpop.f32.mrf.mxu0
        %v600 = vpop.f32.mrf.mxu0
        %v601 = vadd.f32 0.0, %v600
        %v602 = vpop.f32.mrf.mxu0
        %603 = vdwg.mxu0
        %v604 = vpack.c.bf16 %v551, %v548
        %v605 = vpack.c.bf16 %v601, %v598
        %v608 = vunpack.c.l.b16 %v604
        %v609 = vunpack.c.h.b16 %v604
        %v610 = vunpack.c.l.b16 %v605
        %v611 = vunpack.c.h.b16 %v605
        %v612 = vpack.c.b16 %v608, %v608
        %v613 = vpack.c.b16 %v609, %v609
        %v614 = vpack.c.b16 %v610, %v610
        %v615 = vpack.c.b16 %v611, %v611
        %vm620 = vcmask 125952
        %621 = vst.msk [vmem:[%s308] sm:$0xf] %vm620, %v612
        %622 = vst.msk [vmem:[%s308 + $0x4] sm:$0xf] %vm620, %v613
        %623 = vst.msk [vmem:[%s308 + $0x8] sm:$0xf] %vm620, %v614
        %624 = vst.msk [vmem:[%s308 + $0xc] sm:$0xf] %vm620, %v615
        %s625 = smul.u32 2, %s18
        %p626 = scmp.lt.s32.totalorder %s19, 3
        %s627 = scalar_select %p626, %s19, 3
        %p628 = scmp.lt.s32.totalorder %s625, 1
        %s629 = scalar_select %p628, %s625, 1
        %s630 = smul.addr %s629, 2
        %s631 = smul.addr %s627, 4
        %s632 = sadd.s32 %s630, %s631
        %s633 = smul.addr %s632, 4
        %s634 = scalar_lea.vmem %s3, %s633
        // Predicated region
        $region74: #{swin_forward.34} parent=68 // pred_check
          %p635 = pneg %p121
        $region75: #{swin_forward.34} parent=68 // pred_check_branch
          %637 = sbr.rel (%p635) target = $region77
        $region76: #{swin_forward.34} parent=68 // pred_region
          %s638 = smul.u32 2, %s18
        $region77: #{swin_forward.34} parent=68 // pred_fallthru
          _
      $region69: #{swin_forward.34} parent=5 // pred_fallthru
        _
      %p639 = scmp.le.s32.totalorder 2, %s9
      // Predicated region
      $region78: #{swin_forward.34} parent=5 // pred_check
        %p640 = pneg %p639
      $region79: #{swin_forward.34} parent=5 // pred_check_branch
        %642 = sbr.rel (%p640) target = $region81
      $region80: #{swin_forward.34} parent=5 // pred_region
        %s643 = ssub.s32 %s9, 2
        // Predicated region
        $region82: #{swin_forward.34} parent=80 // pred_check
          %p644 = pneg %p127
        $region83: #{swin_forward.34} parent=80 // pred_check_branch
          %646 = sbr.rel (%p644) target = $region85
        $region84: #{swin_forward.34} parent=80 // pred_region
          %s647 = smul.u32 2, %s20
          %p648 = scmp.lt.s32.totalorder %s21, 3
          %s649 = scalar_select %p648, %s21, 3
          %p650 = scmp.lt.s32.totalorder %s647, 1
          %s651 = scalar_select %p650, %s647, 1
          %s652 = smul.addr %s651, 2
          %s653 = smul.addr %s649, 4
          %s654 = sadd.s32 %s652, %s653
          %s655 = smul.addr %s654, 4
          %s656 = scalar_lea.vmem %s3, %s655
        $region85: #{swin_forward.34} parent=80 // pred_fallthru
          _
      $region81: #{swin_forward.34} parent=5 // pred_fallthru
        _
    $region6: #{swin_forward.34} parent=1 // loop_footer
      %s13 = sadd.s32 1, %s9
    $region7: #{swin_forward.34} parent=1 // loop_footer_branch
      %8 = sbr.rel target = $region3
    $region8: #{swin_forward.34} parent=1 // loop_exit
      _

// kernel: swin_forward.37
$region0: #{swin_forward.37}
  #allocation0 [shape = 'u32[]', space=smem, size = 0x4, offset = 0x4, fixed_abs, tag = 'smem constant byte address 0x4 - core index']
  #allocation1 [shape = 'u32[144,128]{1,0:T(1,128)}', space=vmem, size = 0x12000, scoped, tag = 'internal scratch']
  %s0 = inlined_call_operand.vmem [shape: f32[2,16,64], index: 0, kind: input, shape index: {}]
  %s1 = inlined_call_operand.vmem [shape: f32[1,64], index: 1, kind: input, shape index: {}]
  %s2 = inlined_call_operand.vmem [shape: f32[1,64], index: 2, kind: input, shape index: {}]
  %s3 = inlined_call_operand.vmem [shape: bf16[64,128], index: 3, kind: input, shape index: {}]
  %s4 = inlined_call_operand.vmem [shape: f32[1,128], index: 4, kind: input, shape index: {}]
  %s5 = inlined_call_operand.hbm [shape: f32[2,128], index: 5, kind: output, shape index: {}]
  %s6 = sld [smem:[#allocation0]]
  $region30: #{swin_forward.37} parent=0
    _
  %s8 = ssub.s32 1, %s6
  %s9 = scalar_select 0, %s8, %s6
  $region1: #{swin_forward.37} parent=0
    #allocation2 [shape = 'u8[1024]{0}', space=vmem, size = 0x400, scoped, tag = 'output window, operand 0, single buffered']
    #allocation3 [shape = 's32[1]{0}', space=sflag, size = 0x4, scoped, tag = 'scoped memory for swin_forward.37']
    %10 = vsyncpa [#allocation3], 0
    // Predicated region
    $region2: #{swin_forward.37} parent=1 // pred_check
      _
    $region3: #{swin_forward.37} parent=1 // pred_check_branch
      %12 = sbr.rel (0) target = $region5
    $region4: #{swin_forward.37} parent=1 // pred_region
      _
    $region5: #{swin_forward.37} parent=1 // pred_fallthru
      _
    // Predicated region
    $region6: #{swin_forward.37} parent=1 // pred_check
      _
    $region7: #{swin_forward.37} parent=1 // pred_check_branch
      %14 = sbr.rel (0) target = $region9
    $region8: #{swin_forward.37} parent=1 // pred_region
      _
    $region9: #{swin_forward.37} parent=1 // pred_fallthru
      _
    // Predicated region
    $region10: #{swin_forward.37} parent=1 // pred_check
      _
    $region11: #{swin_forward.37} parent=1 // pred_check_branch
      %16 = sbr.rel (0) target = $region13
    $region12: #{swin_forward.37} parent=1 // pred_region
      _
    $region13: #{swin_forward.37} parent=1 // pred_fallthru
      _
    // Predicated region
    $region14: #{swin_forward.37} parent=1 // pred_check
      _
    $region15: #{swin_forward.37} parent=1 // pred_check_branch
      %18 = sbr.rel (0) target = $region17
    $region16: #{swin_forward.37} parent=1 // pred_region
      _
    $region17: #{swin_forward.37} parent=1 // pred_fallthru
      _
    // Predicated region
    $region18: #{swin_forward.37} parent=1 // pred_check
      _
    $region19: #{swin_forward.37} parent=1 // pred_check_branch
      %20 = sbr.rel (0) target = $region21
    $region20: #{swin_forward.37} parent=1 // pred_region
      _
    $region21: #{swin_forward.37} parent=1 // pred_fallthru
      _
    %v22 = vld [vmem:[%s0] sm:$0xff]
    %v23 = vld [vmem:[%s0 + $0x8] sm:$0xff]
    %v24 = vld [vmem:[%s0 + $0x10] sm:$0xff]
    %v25 = vld [vmem:[%s0 + $0x18] sm:$0xff]
    %vm26 = vcmask 523264
    %v27 = vsel %vm26, %v22, 0.0
    %28 = vadd.xlane.f32.xlu0 %v27
    %v29 = vpop.xlane.xlu0 %28
    %v30 = vsel %vm26, %v23, 0.0
    %31 = vadd.xlane.f32.xlu0 %v30
    %v32 = vpop.xlane.xlu0 %31
    %v33 = vsel %vm26, %v24, 0.0
    %34 = vadd.xlane.f32.xlu0 %v33
    %v35 = vpop.xlane.xlu0 %34
    %v36 = vsel %vm26, %v25, 0.0
    %37 = vadd.xlane.f32.xlu0 %v36
    %v38 = vpop.xlane.xlu0 %37
    %v39 = vrcp.pop 64.0
    %v40 = vmul.f32 %v29, %v39
    %v41 = vmul.f32 %v32, %v39
    %v42 = vmul.f32 %v35, %v39
    %v43 = vmul.f32 %v38, %v39
    %v44 = vsub.f32 %v22, %v40
    %v45 = vsub.f32 %v23, %v41
    %v46 = vsub.f32 %v24, %v42
    %v47 = vsub.f32 %v25, %v43
    %v48 = vmul.f32 %v44, %v44
    %v49 = vmul.f32 %v45, %v45
    %v50 = vmul.f32 %v46, %v46
    %v51 = vmul.f32 %v47, %v47
    %v52 = vsel %vm26, %v48, 0.0
    %53 = vadd.xlane.f32.xlu0 %v52
    %v54 = vpop.xlane.xlu0 %53
    %v55 = vsel %vm26, %v49, 0.0
    %56 = vadd.xlane.f32.xlu0 %v55
    %v57 = vpop.xlane.xlu0 %56
    %v58 = vsel %vm26, %v50, 0.0
    %59 = vadd.xlane.f32.xlu0 %v58
    %v60 = vpop.xlane.xlu0 %59
    %v61 = vsel %vm26, %v51, 0.0
    %62 = vadd.xlane.f32.xlu0 %v61
    %v63 = vpop.xlane.xlu0 %62
    %v64 = vmul.f32 %v54, %v39
    %v65 = vmul.f32 %v57, %v39
    %v66 = vmul.f32 %v60, %v39
    %v67 = vmul.f32 %v63, %v39
    %v68 = vadd.f32 %v64, 1e-05
    %v69 = vadd.f32 %v65, 1e-05
    %v70 = vadd.f32 %v66, 1e-05
    %v71 = vadd.f32 %v67, 1e-05
    %v72 = vrsqrt.pop %v68
    %v73 = vrsqrt.pop %v69
    %v74 = vrsqrt.pop %v70
    %v75 = vrsqrt.pop %v71
    %v76 = vmul.f32 %v44, %v72
    %v77 = vmul.f32 %v45, %v73
    %v78 = vmul.f32 %v46, %v74
    %v79 = vmul.f32 %v47, %v75
    %v80 = vld [vmem:[%s1] sm:$0x1]
    %v82 = vlaneseq
    %v83 = vshrl.u32 %v82, 7
    %v84 = vsub.s32 0, %v83
    %v85 = vrot.slane %v80, %v84
    %v87 = vmul.f32 %v76, %v85
    %v88 = vmul.f32 %v77, %v85
    %v89 = vmul.f32 %v78, %v85
    %v90 = vmul.f32 %v79, %v85
    %v91 = vld [vmem:[%s2] sm:$0x1]
    %v93 = vlaneseq
    %v94 = vshrl.u32 %v93, 7
    %v95 = vsub.s32 0, %v94
    %v96 = vrot.slane %v91, %v95
    %v98 = vadd.f32 %v87, %v96
    %v99 = vadd.f32 %v88, %v96
    %v100 = vadd.f32 %v89, %v96
    %v101 = vadd.f32 %v90, %v96
    %v102 = vsel %vm26, %v98, 0.0
    %v103 = vsel %vm26, %v99, 0.0
    %v104 = vadd.f32 %v102, %v103
    %v105 = vrot.slane %v104, 4
    %v106 = vadd.f32 %v104, %v105
    %v107 = vrot.slane %v106, 2
    %v108 = vadd.f32 %v106, %v107
    %v109 = vrot.slane %v108, 1
    %v110 = vadd.f32 %v108, %v109
    %v111 = vsel %vm26, %v100, 0.0
    %v112 = vsel %vm26, %v101, 0.0
    %v113 = vadd.f32 %v111, %v112
    %v114 = vrot.slane %v113, 4
    %v115 = vadd.f32 %v113, %v114
    %v116 = vrot.slane %v115, 2
    %v117 = vadd.f32 %v115, %v116
    %v118 = vrot.slane %v117, 1
    %v119 = vadd.f32 %v117, %v118
    %v120 = vrcp.pop 16.0
    %v121 = vmul.f32 %v110, %v120
    %v122 = vmul.f32 %v119, %v120
    %v123 = vpack.c.bf16 %v121, %v121
    %v124 = vpack.c.bf16 %v122, %v122
    %v125 = vld [vmem:[%s3] sm:$0xf]
    %v126 = vld [vmem:[%s3 + $0x4] sm:$0xf]
    %v127 = vld [vmem:[%s3 + $0x8] sm:$0xf]
    %v128 = vld [vmem:[%s3 + $0xc] sm:$0xf]
    %v129 = vld [vmem:[%s3 + $0x10] sm:$0xf]
    %v130 = vld [vmem:[%s3 + $0x14] sm:$0xf]
    %v131 = vld [vmem:[%s3 + $0x18] sm:$0xf]
    %v132 = vld [vmem:[%s3 + $0x1c] sm:$0xf]
    %v133 = vld [vmem:[%s4] sm:$0x1]
    %v135 = vlaneseq
    %v136 = vshrl.u32 %v135, 7
    %v137 = vsub.s32 0, %v136
    %v138 = vrot.slane %v133, %v137
    %v142 = vunpack.c.l.b16 %v123
    %v143 = vunpack.c.l.b16 %v124
    %vm144 = vcmask 1041409
    %v145 = vsel %vm144, %v143, %v142
    %v146 = vpack.c.b16 %v145, %v145
    %v155 = vunpack.c.l.b16 %v125
    %v156 = vunpack.c.l.b16 %v126
    %v157 = vunpack.c.l.b16 %v127
    %v158 = vunpack.c.l.b16 %v128
    %v159 = vunpack.c.l.b16 %v129
    %v160 = vunpack.c.l.b16 %v130
    %v161 = vunpack.c.l.b16 %v131
    %v162 = vunpack.c.l.b16 %v132
    %v163 = vpack.c.b16 %v156, %v155
    %v164 = vpack.c.b16 %v158, %v157
    %v165 = vpack.c.b16 %v160, %v159
    %v166 = vpack.c.b16 %v162, %v161
    %v172 = vsel %vm26, %v146, 0
    %174 = vmatprep.subr.bf16.mxu0 0
    %175 = vmatpush1.bf16.msra.mxu0 0
    %176 = vmatprep.subr.bf16.mxu0 0
    %177 = vmatpush1.bf16.msra.mxu0 0
    %178 = vmatprep.subr.bf16.mxu0 0
    %179 = vmatpush1.bf16.msra.mxu0 0
    %180 = vmatprep.subr.bf16.mxu0 0
    %181 = vmatpush1.bf16.msra.mxu0 0
    %182 = vmatprep.subr.bf16.mxu0 0
    %183 = vmatpush1.bf16.msra.mxu0 %v166
    %184 = vmatprep.subr.bf16.mxu0 0
    %185 = vmatpush1.bf16.msra.mxu0 %v165
    %186 = vmatprep.subr.bf16.mxu0 0
    %187 = vmatpush1.bf16.msra.mxu0 %v164
    %188 = vmatprep.subr.bf16.mxu0 0
    %189 = vmatpush1.bf16.msra.mxu0 %v163
    %190 = vmatprep.subr.bf16.mxu0 0
    %191 = vmatpush2.bf16.msra.mxu0 0
    %192 = vmatprep.subr.bf16.mxu0 0
    %193 = vmatpush2.bf16.msra.mxu0 0
    %194 = vmatprep.subr.bf16.mxu0 0
    %195 = vmatpush2.bf16.msra.mxu0 0
    %196 = vmatprep.subr.bf16.mxu0 0
    %197 = vmatpush2.bf16.msra.mxu0 0
    %198 = vmatprep.subr.bf16.mxu0 0
    %199 = vmatpush2.bf16.msra.mxu0 0
    %200 = vmatprep.subr.bf16.mxu0 0
    %201 = vmatpush2.bf16.msra.mxu0 0
    %202 = vmatprep.subr.bf16.mxu0 0
    %203 = vmatpush2.bf16.msra.mxu0 0
    %204 = vmatprep.subr.bf16.mxu0 0
    %205 = vmatpush2.bf16.msra.mxu0 0
    %206 = vmatprep.mubr.bf16.mxu0 0
    %207 = vmatmul.mubr.bf16.gmra.mxu0 %v172
    %v208 = vpop.f32.mrf.mxu0
    %v209 = vadd.f32 %v138, %v208
    %v210 = vpop.f32.mrf.mxu0
    %v211 = vpop.f32.mrf.mxu0
    %v212 = vpop.f32.mrf.mxu0
    %213 = vdwg.mxu0
    %214 = vst [vmem:[#allocation2] sm:$0x3] %v209
    // Predicated region
    $region22: #{swin_forward.37} parent=1 // pred_check
      _
    $region23: #{swin_forward.37} parent=1 // pred_check_branch
      %216 = sbr.rel (0) target = $region25
    $region24: #{swin_forward.37} parent=1 // pred_region
      %s218 = ssub.s32 32, 32
      %219 = vsyncadd [#allocation3], %s218
      %s221 = sshll.u32 [#allocation2], 4
      %s222 = int_to_ptr.vmem [resolvable:$true] %s221
      %224 = dma.vmem_to_hbm [thread:$0]  %s222, 32, %s5, [#allocation3]
    $region25: #{swin_forward.37} parent=1 // pred_fallthru
      _
    // Predicated region
    $region26: #{swin_forward.37} parent=1 // pred_check
      _
    $region27: #{swin_forward.37} parent=1 // pred_check_branch
      %226 = sbr.rel (0) target = $region29
    $region28: #{swin_forward.37} parent=1 // pred_region
      %227 = dma.done [#allocation3], 32
    $region29: #{swin_forward.37} parent=1 // pred_fallthru
      _
    %228 = vsyncpa [#allocation3], 1

</llo_original>
